<compile_context>
chip_gen: v7x
topology: tpu7x:2x2x1
jax: 0.10.0
libtpu: 0.0.40
codegen_flags: <defaults>
</compile_context>

<pallas_src>
import jax
import jax.numpy as jnp
from jax.experimental import pallas as pl
from jax.experimental.pallas import tpu as pltpu


NEG_SLOPE = 0.01
BN_EPS = 1e-5


def _make_stacked_kernel(H, W, Cp, num_blocks):
    """Fused num_blocks x (conv3x3 + folded bias/BN + LeakyReLU) kernel.

    Refs (per grid step = one image):
      x_ref            : (1, H*W, Cp)         lane-dense, channel-padded input
      [w_i, sh_i] * n  : (9, Cp, Cp), (1, Cp) BN-folded per-tap weights / shift
      o_ref            : (1, H*W, Cp)         lane-dense output (padded chans)
      act_ref (scratch): ((H+2)*W, Cp)        H-padded activation, reused by
                                              all blocks; rows [0, W) and
                                              [W+H*W, (H+2)*W) are the zero
                                              halo and are never written by
                                              the interior stores.
    """
    HW = H * W
    RP = (H + 2) * W

    def kernel(*refs):
        x_ref = refs[0]
        w_refs = [refs[1 + 2 * i] for i in range(num_blocks)]
        sh_refs = [refs[2 + 2 * i] for i in range(num_blocks)]
        o_ref = refs[1 + 2 * num_blocks]
        act_ref = refs[2 + 2 * num_blocks]

        # Zero ONLY the 2*W halo rows: the interior is fully rewritten every
        # step, so re-zeroing it would be pure wasted vector-store traffic.
        # Done every step (not under @pl.when(program_id==0)) so megacore
        # sharding of the batch grid axis stays correct.
        zero_rows = jnp.zeros((W, Cp), jnp.float32)
        act_ref[0:W, :] = zero_rows
        act_ref[W + HW:RP, :] = zero_rows

        # Block-0 input: offset-0, full-lane (unmasked) store into the interior.
        act_ref[W:W + HW, :] = x_ref[0]

        # Column masks for the kw = -1 / +1 taps: after the circular roll the
        # wrapped-around column must become the conv zero padding. Built once
        # per step and reused by every block (same shape for all blocks).
        wcol = jax.lax.broadcasted_iota(jnp.int32, (H + 2, W, Cp), 1)
        wcol = wcol.reshape(RP, Cp)
        not_first_col = (wcol != 0).astype(jnp.float32)      # kill w == 0
        not_last_col = (wcol != W - 1).astype(jnp.float32)   # kill w == W-1

        y = None
        for i in range(num_blocks):
            xc = act_ref[...]                                  # (RP, Cp)
            # kw taps via sublane roll (XLU slot) + mask (VPU) -- no im2col.
            xl = pltpu.roll(xc, shift=1, axis=0) * not_first_col      # x[.,w-1]
            xr = pltpu.roll(xc, shift=RP - 1, axis=0) * not_last_col  # x[.,w+1]

            acc = jnp.zeros((HW, Cp), jnp.float32)
            for kw, xv in ((0, xl), (1, xc), (2, xr)):
                for kh in range(3):
                    # kh tap = aligned row slice of the H-padded activation.
                    lhs = xv[kh * W:kh * W + HW, :]
                    acc += jnp.dot(lhs, w_refs[i][3 * kh + kw],
                                   preferred_element_type=jnp.float32)

            # Dropout2d(p=0.5) is identity in eval mode (deterministic fwd).
            y = acc + sh_refs[i][...]           # conv bias + BN affine (folded)
            y = jnp.where(y >= 0, y, NEG_SLOPE * y)            # LeakyReLU(0.01)
            if i + 1 < num_blocks:
                # Next block's input stays in VMEM (no HBM round-trip);
                # offset-0 aligned full-lane store.
                act_ref[W:W + HW, :] = y

        o_ref[0] = y                                           # full-lane vst

    return kernel


def stacked_conv_layers(x_nchw, params):
    """StackedConvLayers forward (eval mode). (N, Cin, H, W) -> (N, Cout, H, W).

    params: list of (w_oihw, bias, gamma, beta, running_mean, running_var),
    one tuple per ConvDropoutNormNonlin block.
    """
    N, Cin, H, W = x_nchw.shape
    num_blocks = len(params)
    max_c = max([Cin] + [int(p[0].shape[0]) for p in params])
    Cp = 128 * ((max_c + 127) // 128)       # lane-dense channel padding

    # NCHW -> NHWC -> (N, H*W, Cp): channels on lanes (zero-padded to a full
    # 128-lane tile), flattened spatial on sublanes.
    x = jnp.transpose(x_nchw, (0, 2, 3, 1)).reshape(N, H * W, Cin)
    x = jnp.pad(x.astype(jnp.float32), ((0, 0), (0, 0), (0, Cp - Cin)))

    inputs = [x]
    in_specs = [pl.BlockSpec((1, H * W, Cp), lambda n: (n, 0, 0))]
    couts = []
    for (w_oihw, bias, gamma, beta, r_mean, r_var) in params:
        cout, cin = int(w_oihw.shape[0]), int(w_oihw.shape[1])
        couts.append(cout)
        # Fold BN (eval) and conv bias in f32:
        #   y = (conv(x, w) + b - mean) * g/sqrt(var+eps) + beta
        #     = conv(x, w * scale) + ((b - mean) * scale + beta)
        scale = (gamma.astype(jnp.float32)
                 / jnp.sqrt(r_var.astype(jnp.float32) + BN_EPS))
        shift = ((bias.astype(jnp.float32) - r_mean.astype(jnp.float32)) * scale
                 + beta.astype(jnp.float32))
        w = jnp.transpose(w_oihw.astype(jnp.float32), (2, 3, 1, 0)) * scale
        w = w.reshape(9, cin, cout)                        # tap index = 3*kh+kw
        w = jnp.pad(w, ((0, 0), (0, Cp - cin), (0, Cp - cout)))
        sh = jnp.pad(shift, (0, Cp - cout)).reshape(1, Cp)
        inputs += [w, sh]
        in_specs += [pl.BlockSpec((9, Cp, Cp), lambda n: (0, 0, 0)),
                     pl.BlockSpec((1, Cp), lambda n: (0, 0))]

    out = pl.pallas_call(
        _make_stacked_kernel(H, W, Cp, num_blocks),
        out_shape=jax.ShapeDtypeStruct((N, H * W, Cp), jnp.float32),
        grid_spec=pltpu.PrefetchScalarGridSpec(
            num_scalar_prefetch=0,
            grid=(N,),
            in_specs=in_specs,
            out_specs=pl.BlockSpec((1, H * W, Cp), lambda n: (n, 0, 0)),
            scratch_shapes=[pltpu.VMEM(((H + 2) * W, Cp), jnp.float32)],
        ),
        compiler_params=pltpu.CompilerParams(
            dimension_semantics=("parallel",),
        ),
    )(*inputs)

    cout = couts[-1]
    out = out[:, :, :cout].reshape(N, H, W, cout)          # drop channel pad
    return jnp.transpose(out, (0, 3, 1, 2))                # NHWC -> NCHW


# ---------------- pure-JAX reference (NCHW, mirrors PyTorch eval forward) ----
def _ref_block(x, w, b, gamma, beta, r_mean, r_var):
    y = jax.lax.conv_general_dilated(
        x, w, window_strides=(1, 1), padding=((1, 1), (1, 1)),
        dimension_numbers=("NCHW", "OIHW", "NCHW"),
    )
    y = y + b[None, :, None, None]
    scale = gamma / jnp.sqrt(r_var + BN_EPS)
    y = (y - r_mean[None, :, None, None]) * scale[None, :, None, None] \
        + beta[None, :, None, None]
    return jnp.where(y >= 0, y, NEG_SLOPE * y)


def _ref_stacked(x, params):
    for p in params:
        x = _ref_block(x, *p)
    return x


def _make_block_params(key, cin, cout):
    k = jax.random.split(key, 6)
    w = jax.random.normal(k[0], (cout, cin, 3, 3), jnp.float32) * 0.2
    b = jax.random.normal(k[1], (cout,), jnp.float32) * 0.1
    gamma = 1.0 + 0.1 * jax.random.normal(k[2], (cout,), jnp.float32)
    beta = 0.1 * jax.random.normal(k[3], (cout,), jnp.float32)
    r_mean = 0.1 * jax.random.normal(k[4], (cout,), jnp.float32)
    r_var = jnp.abs(jax.random.normal(k[5], (cout,), jnp.float32)) + 0.5
    return (w, b, gamma, beta, r_mean, r_var)


if __name__ == "__main__":
    # StackedConvLayers(input=4, output=8, num_convs=2), first_stride=None.
    N, Cin, H, W = 2, 4, 16, 16
    Cout = 8

    key = jax.random.PRNGKey(0)
    kx, k1, k2 = jax.random.split(key, 3)

    x = jax.random.normal(kx, (N, Cin, H, W), jnp.float32)
    params = [
        _make_block_params(k1, Cin, Cout),   # block 0: Cin  -> Cout
        _make_block_params(k2, Cout, Cout),  # block 1: Cout -> Cout
    ]

    out = jax.block_until_ready(stacked_conv_layers(x, params))
    ref = jax.block_until_ready(_ref_stacked(x, params))

    assert out.shape == (N, Cout, H, W), out.shape
    assert jnp.allclose(out, ref, rtol=1e-4, atol=1e-4), \
        float(jnp.max(jnp.abs(out - ref)))

    print("KERNEL_OK")
</pallas_src>

<mosaic_0001>
module attributes {stable_mosaic.version = 11 : i64} {
  func.func @kernel(%arg0: i32, %arg1: memref<1x256x128xf32, #tpu.memory_space<vmem>>, %arg2: memref<9x128x128xf32, #tpu.memory_space<vmem>>, %arg3: memref<1x128xf32, #tpu.memory_space<vmem>>, %arg4: memref<9x128x128xf32, #tpu.memory_space<vmem>>, %arg5: memref<1x128xf32, #tpu.memory_space<vmem>>, %arg6: memref<1x256x128xf32, #tpu.memory_space<vmem>>, %arg7: memref<288x128xf32, #tpu.memory_space<vmem>>) attributes {dimension_semantics = [#tpu.dimension_semantics<parallel>], iteration_bounds = array<i64: 2>, scalar_prefetch = 0 : i64, scratch_operands = 1 : i64, tpu.core_type = #tpu.core_type<tc>, window_params = [{transform_indices = @transform_0, window_bounds = array<i64: 1, 256, 128>}, {pipeline_mode = #tpu.pipeline_mode<synchronous>, transform_indices = @transform_1, window_bounds = array<i64: 9, 128, 128>}, {pipeline_mode = #tpu.pipeline_mode<synchronous>, transform_indices = @transform_2, window_bounds = array<i64: 1, 128>}, {pipeline_mode = #tpu.pipeline_mode<synchronous>, transform_indices = @transform_3, window_bounds = array<i64: 9, 128, 128>}, {pipeline_mode = #tpu.pipeline_mode<synchronous>, transform_indices = @transform_4, window_bounds = array<i64: 1, 128>}, {transform_indices = @transform_5, window_bounds = array<i64: 1, 256, 128>}]} {
    %cst = arith.constant 0.000000e+00 : f32
    %0 = vector.broadcast %cst : f32 to vector<16x128xf32>
    %c0 = arith.constant 0 : index
    %c0_0 = arith.constant 0 : index
    %1 = vector.load %arg7[%c0, %c0_0] : memref<288x128xf32, #tpu.memory_space<vmem>>, vector<16x128xf32>
    tpu.vector_store %arg7[%c0, %c0_0], %0 {strides = array<i32>} : memref<288x128xf32, #tpu.memory_space<vmem>>, vector<16x128xf32>,
    %c272 = arith.constant 272 : index
    %c0_1 = arith.constant 0 : index
    %2 = vector.load %arg7[%c272, %c0_1] : memref<288x128xf32, #tpu.memory_space<vmem>>, vector<16x128xf32>
    tpu.vector_store %arg7[%c272, %c0_1], %0 {strides = array<i32>} : memref<288x128xf32, #tpu.memory_space<vmem>>, vector<16x128xf32>,
    %c0_2 = arith.constant 0 : index
    %c0_3 = arith.constant 0 : index
    %c0_4 = arith.constant 0 : index
    %3 = vector.load %arg1[%c0_2, %c0_3, %c0_4] : memref<1x256x128xf32, #tpu.memory_space<vmem>>, vector<1x256x128xf32>
    %4 = vector.shape_cast %3 : vector<1x256x128xf32> to vector<256x128xf32>
    %c16 = arith.constant 16 : index
    %c0_5 = arith.constant 0 : index
    %5 = vector.load %arg7[%c16, %c0_5] : memref<288x128xf32, #tpu.memory_space<vmem>>, vector<256x128xf32>
    tpu.vector_store %arg7[%c16, %c0_5], %4 {strides = array<i32>} : memref<288x128xf32, #tpu.memory_space<vmem>>, vector<256x128xf32>,
    %6 = tpu.iota {dimensions = array<i32: 1>} : vector<18x16x128xi32>
    %7 = vector.shape_cast %6 : vector<18x16x128xi32> to vector<288x128xi32>
    %c0_i32 = arith.constant 0 : i32
    %8 = vector.broadcast %c0_i32 : i32 to vector<288x128xi32>
    %9 = arith.cmpi ne, %7, %8 : vector<288x128xi32>
    %10 = arith.extui %9 : vector<288x128xi1> to vector<288x128xi32>
    %11 = arith.sitofp %10 : vector<288x128xi32> to vector<288x128xf32>
    %c15_i32 = arith.constant 15 : i32
    %12 = vector.broadcast %c15_i32 : i32 to vector<288x128xi32>
    %13 = arith.cmpi ne, %7, %12 : vector<288x128xi32>
    %14 = arith.extui %13 : vector<288x128xi1> to vector<288x128xi32>
    %15 = arith.sitofp %14 : vector<288x128xi32> to vector<288x128xf32>
    %c0_6 = arith.constant 0 : index
    %c0_7 = arith.constant 0 : index
    %16 = vector.load %arg7[%c0_6, %c0_7] : memref<288x128xf32, #tpu.memory_space<vmem>>, vector<288x128xf32>
    %c1_i32 = arith.constant 1 : i32
    %17 = tpu.dynamic_rotate %16 by %c1_i32 dim 0 : vector<288x128xf32>, i32 -> vector<288x128xf32>
    %18 = arith.mulf %17, %11 : vector<288x128xf32>
    %c287_i32 = arith.constant 287 : i32
    %19 = tpu.dynamic_rotate %16 by %c287_i32 dim 0 : vector<288x128xf32>, i32 -> vector<288x128xf32>
    %20 = arith.mulf %19, %15 : vector<288x128xf32>
    %cst_8 = arith.constant 0.000000e+00 : f32
    %21 = vector.broadcast %cst_8 : f32 to vector<256x128xf32>
    %22 = vector.extract_strided_slice %18 {offsets = [0, 0], sizes = [256, 128], strides = [1, 1]} : vector<288x128xf32> to vector<256x128xf32>
    %c0_9 = arith.constant 0 : index
    %c0_10 = arith.constant 0 : index
    %c0_11 = arith.constant 0 : index
    %23 = vector.load %arg2[%c0_9, %c0_10, %c0_11] : memref<9x128x128xf32, #tpu.memory_space<vmem>>, vector<1x128x128xf32>
    %24 = vector.shape_cast %23 : vector<1x128x128xf32> to vector<128x128xf32>
    %cst_12 = arith.constant dense<0.000000e+00> : vector<256x128xf32>
    %25 = tpu.matmul %22, %24, %cst_12 {dimension_numbers = #tpu.dot_dimension_numbers<[1], [0], [0], [1], [0, 0, 1, 1], [], []>} : vector<256x128xf32>, vector<128x128xf32>, vector<256x128xf32> -> vector<256x128xf32>
    %26 = arith.addf %21, %25 : vector<256x128xf32>
    %27 = vector.extract_strided_slice %18 {offsets = [16, 0], sizes = [256, 128], strides = [1, 1]} : vector<288x128xf32> to vector<256x128xf32>
    %c3 = arith.constant 3 : index
    %c0_13 = arith.constant 0 : index
    %c0_14 = arith.constant 0 : index
    %28 = vector.load %arg2[%c3, %c0_13, %c0_14] : memref<9x128x128xf32, #tpu.memory_space<vmem>>, vector<1x128x128xf32>
    %29 = vector.shape_cast %28 : vector<1x128x128xf32> to vector<128x128xf32>
    %cst_15 = arith.constant dense<0.000000e+00> : vector<256x128xf32>
    %30 = tpu.matmul %27, %29, %cst_15 {dimension_numbers = #tpu.dot_dimension_numbers<[1], [0], [0], [1], [0, 0, 1, 1], [], []>} : vector<256x128xf32>, vector<128x128xf32>, vector<256x128xf32> -> vector<256x128xf32>
    %31 = arith.addf %26, %30 : vector<256x128xf32>
    %32 = vector.extract_strided_slice %18 {offsets = [32, 0], sizes = [256, 128], strides = [1, 1]} : vector<288x128xf32> to vector<256x128xf32>
    %c6 = arith.constant 6 : index
    %c0_16 = arith.constant 0 : index
    %c0_17 = arith.constant 0 : index
    %33 = vector.load %arg2[%c6, %c0_16, %c0_17] : memref<9x128x128xf32, #tpu.memory_space<vmem>>, vector<1x128x128xf32>
    %34 = vector.shape_cast %33 : vector<1x128x128xf32> to vector<128x128xf32>
    %cst_18 = arith.constant dense<0.000000e+00> : vector<256x128xf32>
    %35 = tpu.matmul %32, %34, %cst_18 {dimension_numbers = #tpu.dot_dimension_numbers<[1], [0], [0], [1], [0, 0, 1, 1], [], []>} : vector<256x128xf32>, vector<128x128xf32>, vector<256x128xf32> -> vector<256x128xf32>
    %36 = arith.addf %31, %35 : vector<256x128xf32>
    %37 = vector.extract_strided_slice %16 {offsets = [0, 0], sizes = [256, 128], strides = [1, 1]} : vector<288x128xf32> to vector<256x128xf32>
    %c1 = arith.constant 1 : index
    %c0_19 = arith.constant 0 : index
    %c0_20 = arith.constant 0 : index
    %38 = vector.load %arg2[%c1, %c0_19, %c0_20] : memref<9x128x128xf32, #tpu.memory_space<vmem>>, vector<1x128x128xf32>
    %39 = vector.shape_cast %38 : vector<1x128x128xf32> to vector<128x128xf32>
    %cst_21 = arith.constant dense<0.000000e+00> : vector<256x128xf32>
    %40 = tpu.matmul %37, %39, %cst_21 {dimension_numbers = #tpu.dot_dimension_numbers<[1], [0], [0], [1], [0, 0, 1, 1], [], []>} : vector<256x128xf32>, vector<128x128xf32>, vector<256x128xf32> -> vector<256x128xf32>
    %41 = arith.addf %36, %40 : vector<256x128xf32>
    %42 = vector.extract_strided_slice %16 {offsets = [16, 0], sizes = [256, 128], strides = [1, 1]} : vector<288x128xf32> to vector<256x128xf32>
    %c4 = arith.constant 4 : index
    %c0_22 = arith.constant 0 : index
    %c0_23 = arith.constant 0 : index
    %43 = vector.load %arg2[%c4, %c0_22, %c0_23] : memref<9x128x128xf32, #tpu.memory_space<vmem>>, vector<1x128x128xf32>
    %44 = vector.shape_cast %43 : vector<1x128x128xf32> to vector<128x128xf32>
    %cst_24 = arith.constant dense<0.000000e+00> : vector<256x128xf32>
    %45 = tpu.matmul %42, %44, %cst_24 {dimension_numbers = #tpu.dot_dimension_numbers<[1], [0], [0], [1], [0, 0, 1, 1], [], []>} : vector<256x128xf32>, vector<128x128xf32>, vector<256x128xf32> -> vector<256x128xf32>
    %46 = arith.addf %41, %45 : vector<256x128xf32>
    %47 = vector.extract_strided_slice %16 {offsets = [32, 0], sizes = [256, 128], strides = [1, 1]} : vector<288x128xf32> to vector<256x128xf32>
    %c7 = arith.constant 7 : index
    %c0_25 = arith.constant 0 : index
    %c0_26 = arith.constant 0 : index
    %48 = vector.load %arg2[%c7, %c0_25, %c0_26] : memref<9x128x128xf32, #tpu.memory_space<vmem>>, vector<1x128x128xf32>
    %49 = vector.shape_cast %48 : vector<1x128x128xf32> to vector<128x128xf32>
    %cst_27 = arith.constant dense<0.000000e+00> : vector<256x128xf32>
    %50 = tpu.matmul %47, %49, %cst_27 {dimension_numbers = #tpu.dot_dimension_numbers<[1], [0], [0], [1], [0, 0, 1, 1], [], []>} : vector<256x128xf32>, vector<128x128xf32>, vector<256x128xf32> -> vector<256x128xf32>
    %51 = arith.addf %46, %50 : vector<256x128xf32>
    %52 = vector.extract_strided_slice %20 {offsets = [0, 0], sizes = [256, 128], strides = [1, 1]} : vector<288x128xf32> to vector<256x128xf32>
    %c2 = arith.constant 2 : index
    %c0_28 = arith.constant 0 : index
    %c0_29 = arith.constant 0 : index
    %53 = vector.load %arg2[%c2, %c0_28, %c0_29] : memref<9x128x128xf32, #tpu.memory_space<vmem>>, vector<1x128x128xf32>
    %54 = vector.shape_cast %53 : vector<1x128x128xf32> to vector<128x128xf32>
    %cst_30 = arith.constant dense<0.000000e+00> : vector<256x128xf32>
    %55 = tpu.matmul %52, %54, %cst_30 {dimension_numbers = #tpu.dot_dimension_numbers<[1], [0], [0], [1], [0, 0, 1, 1], [], []>} : vector<256x128xf32>, vector<128x128xf32>, vector<256x128xf32> -> vector<256x128xf32>
    %56 = arith.addf %51, %55 : vector<256x128xf32>
    %57 = vector.extract_strided_slice %20 {offsets = [16, 0], sizes = [256, 128], strides = [1, 1]} : vector<288x128xf32> to vector<256x128xf32>
    %c5 = arith.constant 5 : index
    %c0_31 = arith.constant 0 : index
    %c0_32 = arith.constant 0 : index
    %58 = vector.load %arg2[%c5, %c0_31, %c0_32] : memref<9x128x128xf32, #tpu.memory_space<vmem>>, vector<1x128x128xf32>
    %59 = vector.shape_cast %58 : vector<1x128x128xf32> to vector<128x128xf32>
    %cst_33 = arith.constant dense<0.000000e+00> : vector<256x128xf32>
    %60 = tpu.matmul %57, %59, %cst_33 {dimension_numbers = #tpu.dot_dimension_numbers<[1], [0], [0], [1], [0, 0, 1, 1], [], []>} : vector<256x128xf32>, vector<128x128xf32>, vector<256x128xf32> -> vector<256x128xf32>
    %61 = arith.addf %56, %60 : vector<256x128xf32>
    %62 = vector.extract_strided_slice %20 {offsets = [32, 0], sizes = [256, 128], strides = [1, 1]} : vector<288x128xf32> to vector<256x128xf32>
    %c8 = arith.constant 8 : index
    %c0_34 = arith.constant 0 : index
    %c0_35 = arith.constant 0 : index
    %63 = vector.load %arg2[%c8, %c0_34, %c0_35] : memref<9x128x128xf32, #tpu.memory_space<vmem>>, vector<1x128x128xf32>
    %64 = vector.shape_cast %63 : vector<1x128x128xf32> to vector<128x128xf32>
    %cst_36 = arith.constant dense<0.000000e+00> : vector<256x128xf32>
    %65 = tpu.matmul %62, %64, %cst_36 {dimension_numbers = #tpu.dot_dimension_numbers<[1], [0], [0], [1], [0, 0, 1, 1], [], []>} : vector<256x128xf32>, vector<128x128xf32>, vector<256x128xf32> -> vector<256x128xf32>
    %66 = arith.addf %61, %65 : vector<256x128xf32>
    %c0_37 = arith.constant 0 : index
    %c0_38 = arith.constant 0 : index
    %67 = vector.load %arg3[%c0_37, %c0_38] : memref<1x128xf32, #tpu.memory_space<vmem>>, vector<1x128xf32>
    %68 = vector.broadcast %67 : vector<1x128xf32> to vector<256x128xf32>
    %69 = arith.addf %66, %68 : vector<256x128xf32>
    %cst_39 = arith.constant 0.000000e+00 : f32
    %70 = vector.broadcast %cst_39 : f32 to vector<256x128xf32>
    %71 = arith.cmpf oge, %69, %70 : vector<256x128xf32>
    %cst_40 = arith.constant 0.00999999977 : f32
    %72 = vector.broadcast %cst_40 : f32 to vector<256x128xf32>
    %73 = arith.mulf %72, %69 : vector<256x128xf32>
    %74 = arith.select %71, %69, %73 : vector<256x128xi1>, vector<256x128xf32>
    %c16_41 = arith.constant 16 : index
    %c0_42 = arith.constant 0 : index
    %75 = vector.load %arg7[%c16_41, %c0_42] : memref<288x128xf32, #tpu.memory_space<vmem>>, vector<256x128xf32>
    tpu.vector_store %arg7[%c16_41, %c0_42], %74 {strides = array<i32>} : memref<288x128xf32, #tpu.memory_space<vmem>>, vector<256x128xf32>,
    %c0_43 = arith.constant 0 : index
    %c0_44 = arith.constant 0 : index
    %76 = vector.load %arg7[%c0_43, %c0_44] : memref<288x128xf32, #tpu.memory_space<vmem>>, vector<288x128xf32>
    %c1_i32_45 = arith.constant 1 : i32
    %77 = tpu.dynamic_rotate %76 by %c1_i32_45 dim 0 : vector<288x128xf32>, i32 -> vector<288x128xf32>
    %78 = arith.mulf %77, %11 : vector<288x128xf32>
    %c287_i32_46 = arith.constant 287 : i32
    %79 = tpu.dynamic_rotate %76 by %c287_i32_46 dim 0 : vector<288x128xf32>, i32 -> vector<288x128xf32>
    %80 = arith.mulf %79, %15 : vector<288x128xf32>
    %cst_47 = arith.constant 0.000000e+00 : f32
    %81 = vector.broadcast %cst_47 : f32 to vector<256x128xf32>
    %82 = vector.extract_strided_slice %78 {offsets = [0, 0], sizes = [256, 128], strides = [1, 1]} : vector<288x128xf32> to vector<256x128xf32>
    %c0_48 = arith.constant 0 : index
    %c0_49 = arith.constant 0 : index
    %c0_50 = arith.constant 0 : index
    %83 = vector.load %arg4[%c0_48, %c0_49, %c0_50] : memref<9x128x128xf32, #tpu.memory_space<vmem>>, vector<1x128x128xf32>
    %84 = vector.shape_cast %83 : vector<1x128x128xf32> to vector<128x128xf32>
    %cst_51 = arith.constant dense<0.000000e+00> : vector<256x128xf32>
    %85 = tpu.matmul %82, %84, %cst_51 {dimension_numbers = #tpu.dot_dimension_numbers<[1], [0], [0], [1], [0, 0, 1, 1], [], []>} : vector<256x128xf32>, vector<128x128xf32>, vector<256x128xf32> -> vector<256x128xf32>
    %86 = arith.addf %81, %85 : vector<256x128xf32>
    %87 = vector.extract_strided_slice %78 {offsets = [16, 0], sizes = [256, 128], strides = [1, 1]} : vector<288x128xf32> to vector<256x128xf32>
    %c3_52 = arith.constant 3 : index
    %c0_53 = arith.constant 0 : index
    %c0_54 = arith.constant 0 : index
    %88 = vector.load %arg4[%c3_52, %c0_53, %c0_54] : memref<9x128x128xf32, #tpu.memory_space<vmem>>, vector<1x128x128xf32>
    %89 = vector.shape_cast %88 : vector<1x128x128xf32> to vector<128x128xf32>
    %cst_55 = arith.constant dense<0.000000e+00> : vector<256x128xf32>
    %90 = tpu.matmul %87, %89, %cst_55 {dimension_numbers = #tpu.dot_dimension_numbers<[1], [0], [0], [1], [0, 0, 1, 1], [], []>} : vector<256x128xf32>, vector<128x128xf32>, vector<256x128xf32> -> vector<256x128xf32>
    %91 = arith.addf %86, %90 : vector<256x128xf32>
    %92 = vector.extract_strided_slice %78 {offsets = [32, 0], sizes = [256, 128], strides = [1, 1]} : vector<288x128xf32> to vector<256x128xf32>
    %c6_56 = arith.constant 6 : index
    %c0_57 = arith.constant 0 : index
    %c0_58 = arith.constant 0 : index
    %93 = vector.load %arg4[%c6_56, %c0_57, %c0_58] : memref<9x128x128xf32, #tpu.memory_space<vmem>>, vector<1x128x128xf32>
    %94 = vector.shape_cast %93 : vector<1x128x128xf32> to vector<128x128xf32>
    %cst_59 = arith.constant dense<0.000000e+00> : vector<256x128xf32>
    %95 = tpu.matmul %92, %94, %cst_59 {dimension_numbers = #tpu.dot_dimension_numbers<[1], [0], [0], [1], [0, 0, 1, 1], [], []>} : vector<256x128xf32>, vector<128x128xf32>, vector<256x128xf32> -> vector<256x128xf32>
    %96 = arith.addf %91, %95 : vector<256x128xf32>
    %97 = vector.extract_strided_slice %76 {offsets = [0, 0], sizes = [256, 128], strides = [1, 1]} : vector<288x128xf32> to vector<256x128xf32>
    %c1_60 = arith.constant 1 : index
    %c0_61 = arith.constant 0 : index
    %c0_62 = arith.constant 0 : index
    %98 = vector.load %arg4[%c1_60, %c0_61, %c0_62] : memref<9x128x128xf32, #tpu.memory_space<vmem>>, vector<1x128x128xf32>
    %99 = vector.shape_cast %98 : vector<1x128x128xf32> to vector<128x128xf32>
    %cst_63 = arith.constant dense<0.000000e+00> : vector<256x128xf32>
    %100 = tpu.matmul %97, %99, %cst_63 {dimension_numbers = #tpu.dot_dimension_numbers<[1], [0], [0], [1], [0, 0, 1, 1], [], []>} : vector<256x128xf32>, vector<128x128xf32>, vector<256x128xf32> -> vector<256x128xf32>
    %101 = arith.addf %96, %100 : vector<256x128xf32>
    %102 = vector.extract_strided_slice %76 {offsets = [16, 0], sizes = [256, 128], strides = [1, 1]} : vector<288x128xf32> to vector<256x128xf32>
    %c4_64 = arith.constant 4 : index
    %c0_65 = arith.constant 0 : index
    %c0_66 = arith.constant 0 : index
    %103 = vector.load %arg4[%c4_64, %c0_65, %c0_66] : memref<9x128x128xf32, #tpu.memory_space<vmem>>, vector<1x128x128xf32>
    %104 = vector.shape_cast %103 : vector<1x128x128xf32> to vector<128x128xf32>
    %cst_67 = arith.constant dense<0.000000e+00> : vector<256x128xf32>
    %105 = tpu.matmul %102, %104, %cst_67 {dimension_numbers = #tpu.dot_dimension_numbers<[1], [0], [0], [1], [0, 0, 1, 1], [], []>} : vector<256x128xf32>, vector<128x128xf32>, vector<256x128xf32> -> vector<256x128xf32>
    %106 = arith.addf %101, %105 : vector<256x128xf32>
    %107 = vector.extract_strided_slice %76 {offsets = [32, 0], sizes = [256, 128], strides = [1, 1]} : vector<288x128xf32> to vector<256x128xf32>
    %c7_68 = arith.constant 7 : index
    %c0_69 = arith.constant 0 : index
    %c0_70 = arith.constant 0 : index
    %108 = vector.load %arg4[%c7_68, %c0_69, %c0_70] : memref<9x128x128xf32, #tpu.memory_space<vmem>>, vector<1x128x128xf32>
    %109 = vector.shape_cast %108 : vector<1x128x128xf32> to vector<128x128xf32>
    %cst_71 = arith.constant dense<0.000000e+00> : vector<256x128xf32>
    %110 = tpu.matmul %107, %109, %cst_71 {dimension_numbers = #tpu.dot_dimension_numbers<[1], [0], [0], [1], [0, 0, 1, 1], [], []>} : vector<256x128xf32>, vector<128x128xf32>, vector<256x128xf32> -> vector<256x128xf32>
    %111 = arith.addf %106, %110 : vector<256x128xf32>
    %112 = vector.extract_strided_slice %80 {offsets = [0, 0], sizes = [256, 128], strides = [1, 1]} : vector<288x128xf32> to vector<256x128xf32>
    %c2_72 = arith.constant 2 : index
    %c0_73 = arith.constant 0 : index
    %c0_74 = arith.constant 0 : index
    %113 = vector.load %arg4[%c2_72, %c0_73, %c0_74] : memref<9x128x128xf32, #tpu.memory_space<vmem>>, vector<1x128x128xf32>
    %114 = vector.shape_cast %113 : vector<1x128x128xf32> to vector<128x128xf32>
    %cst_75 = arith.constant dense<0.000000e+00> : vector<256x128xf32>
    %115 = tpu.matmul %112, %114, %cst_75 {dimension_numbers = #tpu.dot_dimension_numbers<[1], [0], [0], [1], [0, 0, 1, 1], [], []>} : vector<256x128xf32>, vector<128x128xf32>, vector<256x128xf32> -> vector<256x128xf32>
    %116 = arith.addf %111, %115 : vector<256x128xf32>
    %117 = vector.extract_strided_slice %80 {offsets = [16, 0], sizes = [256, 128], strides = [1, 1]} : vector<288x128xf32> to vector<256x128xf32>
    %c5_76 = arith.constant 5 : index
    %c0_77 = arith.constant 0 : index
    %c0_78 = arith.constant 0 : index
    %118 = vector.load %arg4[%c5_76, %c0_77, %c0_78] : memref<9x128x128xf32, #tpu.memory_space<vmem>>, vector<1x128x128xf32>
    %119 = vector.shape_cast %118 : vector<1x128x128xf32> to vector<128x128xf32>
    %cst_79 = arith.constant dense<0.000000e+00> : vector<256x128xf32>
    %120 = tpu.matmul %117, %119, %cst_79 {dimension_numbers = #tpu.dot_dimension_numbers<[1], [0], [0], [1], [0, 0, 1, 1], [], []>} : vector<256x128xf32>, vector<128x128xf32>, vector<256x128xf32> -> vector<256x128xf32>
    %121 = arith.addf %116, %120 : vector<256x128xf32>
    %122 = vector.extract_strided_slice %80 {offsets = [32, 0], sizes = [256, 128], strides = [1, 1]} : vector<288x128xf32> to vector<256x128xf32>
    %c8_80 = arith.constant 8 : index
    %c0_81 = arith.constant 0 : index
    %c0_82 = arith.constant 0 : index
    %123 = vector.load %arg4[%c8_80, %c0_81, %c0_82] : memref<9x128x128xf32, #tpu.memory_space<vmem>>, vector<1x128x128xf32>
    %124 = vector.shape_cast %123 : vector<1x128x128xf32> to vector<128x128xf32>
    %cst_83 = arith.constant dense<0.000000e+00> : vector<256x128xf32>
    %125 = tpu.matmul %122, %124, %cst_83 {dimension_numbers = #tpu.dot_dimension_numbers<[1], [0], [0], [1], [0, 0, 1, 1], [], []>} : vector<256x128xf32>, vector<128x128xf32>, vector<256x128xf32> -> vector<256x128xf32>
    %126 = arith.addf %121, %125 : vector<256x128xf32>
    %c0_84 = arith.constant 0 : index
    %c0_85 = arith.constant 0 : index
    %127 = vector.load %arg5[%c0_84, %c0_85] : memref<1x128xf32, #tpu.memory_space<vmem>>, vector<1x128xf32>
    %128 = vector.broadcast %127 : vector<1x128xf32> to vector<256x128xf32>
    %129 = arith.addf %126, %128 : vector<256x128xf32>
    %cst_86 = arith.constant 0.000000e+00 : f32
    %130 = vector.broadcast %cst_86 : f32 to vector<256x128xf32>
    %131 = arith.cmpf oge, %129, %130 : vector<256x128xf32>
    %cst_87 = arith.constant 0.00999999977 : f32
    %132 = vector.broadcast %cst_87 : f32 to vector<256x128xf32>
    %133 = arith.mulf %132, %129 : vector<256x128xf32>
    %134 = arith.select %131, %129, %133 : vector<256x128xi1>, vector<256x128xf32>
    %c0_88 = arith.constant 0 : index
    %c0_89 = arith.constant 0 : index
    %c0_90 = arith.constant 0 : index
    %135 = vector.load %arg6[%c0_88, %c0_89, %c0_90] : memref<1x256x128xf32, #tpu.memory_space<vmem>>, vector<1x256x128xf32>
    %136 = vector.shape_cast %135 : vector<1x256x128xf32> to vector<256x128xf32>
    %137 = vector.shape_cast %134 : vector<256x128xf32> to vector<1x256x128xf32>
    tpu.vector_store %arg6[%c0_88, %c0_89, %c0_90], %137 {strides = array<i32>} : memref<1x256x128xf32, #tpu.memory_space<vmem>>, vector<1x256x128xf32>,
    return
  }
  func.func @transform_0(%arg0: i32) -> (i32, i32, i32) {
    %c0_i32 = arith.constant 0 : i32
    %c0_i32_0 = arith.constant 0 : i32
    %c0_i32_1 = arith.constant 0 : i32
    return %arg0, %c0_i32, %c0_i32_0 : i32, i32, i32
  }
  func.func @transform_1(%arg0: i32) -> (i32, i32, i32) {
    %c0_i32 = arith.constant 0 : i32
    %c0_i32_0 = arith.constant 0 : i32
    %c0_i32_1 = arith.constant 0 : i32
    %c0_i32_2 = arith.constant 0 : i32
    return %c0_i32, %c0_i32_0, %c0_i32_1 : i32, i32, i32
  }
  func.func @transform_2(%arg0: i32) -> (i32, i32) {
    %c0_i32 = arith.constant 0 : i32
    %c0_i32_0 = arith.constant 0 : i32
    %c0_i32_1 = arith.constant 0 : i32
    return %c0_i32, %c0_i32_0 : i32, i32
  }
  func.func @transform_3(%arg0: i32) -> (i32, i32, i32) {
    %c0_i32 = arith.constant 0 : i32
    %c0_i32_0 = arith.constant 0 : i32
    %c0_i32_1 = arith.constant 0 : i32
    %c0_i32_2 = arith.constant 0 : i32
    return %c0_i32, %c0_i32_0, %c0_i32_1 : i32, i32, i32
  }
  func.func @transform_4(%arg0: i32) -> (i32, i32) {
    %c0_i32 = arith.constant 0 : i32
    %c0_i32_0 = arith.constant 0 : i32
    %c0_i32_1 = arith.constant 0 : i32
    return %c0_i32, %c0_i32_0 : i32, i32
  }
  func.func @transform_5(%arg0: i32) -> (i32, i32, i32) {
    %c0_i32 = arith.constant 0 : i32
    %c0_i32_0 = arith.constant 0 : i32
    %c0_i32_1 = arith.constant 0 : i32
    return %arg0, %c0_i32, %c0_i32_0 : i32, i32, i32
  }
}

</mosaic_0001>

<llo_original>
// kernel: tpu_custom_call.1
$region0: #{tpu_custom_call.1}
  #allocation0 [shape = 'u32[]', space=smem, size = 0x4, offset = 0x4, fixed_abs, tag = 'smem constant byte address 0x4 - core index']
  #allocation1 [shape = 'u32[144,128]{1,0:T(1,128)}', space=vmem, size = 0x12000, scoped, tag = 'internal scratch']
  #allocation2 [shape = 'f32[288,128]{1,0:T(8,128)}', space=vmem, size = 0x24000, scoped, tag = 'scratch operand']
  %s0 = inlined_call_operand.hbm [shape: f32[2,256,128], index: 0, kind: input, shape index: {}]
  %s1 = inlined_call_operand.hbm [shape: f32[9,128,128], index: 1, kind: input, shape index: {}]
  %s2 = inlined_call_operand.vmem [shape: f32[1,128], index: 2, kind: input, shape index: {}]
  %s3 = inlined_call_operand.hbm [shape: f32[9,128,128], index: 3, kind: input, shape index: {}]
  %s4 = inlined_call_operand.vmem [shape: f32[1,128], index: 4, kind: input, shape index: {}]
  %s5 = inlined_call_operand.hbm [shape: f32[2,256,128], index: 5, kind: output, shape index: {}]
  %s6 = sld [smem:[#allocation0]]
  $region65: #{tpu_custom_call.1} parent=0
    _
  %s8 = ssub.s32 1, %s6
  %s9 = scalar_select 0, %s8, %s6
  $region1: #{tpu_custom_call.1} parent=0
    #allocation3 [shape = 'u8[262144]{0}', space=vmem, size = 0x40000, scoped, tag = 'input window, operand 0']
    #allocation4 [shape = 's32[2]{0}', space=sflag, size = 0x8, scoped, tag = 'scoped memory for tpu_custom_call.1']
    #allocation5 [shape = 's32[2]{0}', space=sflag, size = 0x8, scoped, tag = 'scoped memory for tpu_custom_call.1']
    #allocation6 [shape = 'u8[589824]{0}', space=vmem, size = 0x90000, scoped, tag = 'input window, operand 1, single buffered']
    #allocation7 [shape = 's32[1]{0}', space=sflag, size = 0x4, scoped, tag = 'scoped memory for tpu_custom_call.1']
    #allocation8 [shape = 'u8[589824]{0}', space=vmem, size = 0x90000, scoped, tag = 'input window, operand 3, single buffered']
    #allocation9 [shape = 'u8[262144]{0}', space=vmem, size = 0x40000, scoped, tag = 'output window, operand 0']
    %10 = vsyncpa [#allocation4], 0
    %s11 = scalar_lea.sflag [#allocation4], 1
    %12 = vsyncpa %s11, 0
    %13 = vsyncpa [#allocation7], 0
    %14 = vsyncpa [#allocation5], 0
    %s15 = scalar_lea.sflag [#allocation5], 1
    %16 = vsyncpa %s15, 0
    loop: start=0, step=1, limit=4
    $region2: #{tpu_custom_call.1} parent=1 // loop_pre_header
      _
    $region3: #{tpu_custom_call.1} parent=1 // loop_header
      %s18 = sphi 0, %s22
      %p19 = scmp.ge.s32.totalorder %s18, 4
      %s28 = sphi 0, %s30
      %s31 = sphi 0, %s28
      %s32 = sphi 0, %s31
      %s48 = sphi 0, %s32
      %s52 = sphi 0, %s52
      %s54 = sphi 0, %s52
      %s55 = sphi 0, %s54
      %s69 = sphi 0, %s55
      %s73 = sphi 0, %s73
      %s75 = sphi 0, %s73
      %s76 = sphi 0, %s75
      %s90 = sphi 0, %s76
      %s94 = sphi 0, %s94
      %s96 = sphi 0, %s94
      %s97 = sphi 0, %s96
      %s111 = sphi 0, %s97
      %s115 = sphi 0, %s115
      %s117 = sphi 0, %s115
      %s118 = sphi 0, %s117
      %s132 = sphi 0, %s118
      %s138 = sphi 0, %s140
      %s141 = sphi 0, %s138
      %s142 = sphi 0, %s141
      %s158 = sphi 0, %s142
    $region4: #{tpu_custom_call.1} parent=1 // loop_header_branch
      %21 = sbr.rel (%p19) target = $region8
    $region5: #{tpu_custom_call.1} parent=1 // loop_body
      %s23 = ssub.s32 %s18, 1
      %s24 = ssub.s32 %s18, 2
      %s25 = sadd.s32 %s18, 1
      %s26 = ssub.s32 %s18, %s25
      %p27 = scmp.eq.s32.totalorder %s26, 0
      %s29 = sadd.s32 %s28, 1
      %s30 = scalar_select %p27, %s28, %s29
      %p33 = pneg %p27
      %p34 = scmp.eq.s32.totalorder %s18, 1
      %p35 = por %p33, %p34
      %p36 = scmp.ne.s32.totalorder %s28, %s31
      %p37 = scmp.eq.s32.totalorder %s18, 0
      %p38 = por %p36, %p37
      %p39 = scmp.ne.s32.totalorder %s28, %s31
      %p40 = scmp.eq.s32.totalorder %s23, 1
      %p41 = por %p39, %p40
      %p42 = scmp.ne.s32.totalorder %s31, %s32
      %p43 = scmp.eq.s32.totalorder %s23, 0
      %p44 = por %p42, %p43
      %p45 = scmp.ne.s32.totalorder %s31, %s32
      %p46 = scmp.eq.s32.totalorder %s24, 1
      %p47 = por %p45, %p46
      %p49 = scmp.ne.s32.totalorder %s32, %s48
      %p50 = scmp.eq.s32.totalorder %s24, 0
      %p51 = por %p49, %p50
      %s53 = sadd.s32 %s52, 1
      %p56 = scmp.eq.s32.totalorder %s18, 1
      %p57 = scmp.ne.s32.totalorder %s52, %s54
      %p58 = scmp.eq.s32.totalorder %s18, 0
      %p59 = por %p57, %p58
      %p60 = scmp.ne.s32.totalorder %s52, %s54
      %p61 = scmp.eq.s32.totalorder %s23, 1
      %p62 = por %p60, %p61
      %p63 = scmp.ne.s32.totalorder %s54, %s55
      %p64 = scmp.eq.s32.totalorder %s23, 0
      %p65 = por %p63, %p64
      %p66 = scmp.ne.s32.totalorder %s54, %s55
      %p67 = scmp.eq.s32.totalorder %s24, 1
      %p68 = por %p66, %p67
      %p70 = scmp.ne.s32.totalorder %s55, %s69
      %p71 = scmp.eq.s32.totalorder %s24, 0
      %p72 = por %p70, %p71
      %s74 = sadd.s32 %s73, 1
      %p77 = scmp.eq.s32.totalorder %s18, 1
      %p78 = scmp.ne.s32.totalorder %s73, %s75
      %p79 = scmp.eq.s32.totalorder %s18, 0
      %p80 = por %p78, %p79
      %p81 = scmp.ne.s32.totalorder %s73, %s75
      %p82 = scmp.eq.s32.totalorder %s23, 1
      %p83 = por %p81, %p82
      %p84 = scmp.ne.s32.totalorder %s75, %s76
      %p85 = scmp.eq.s32.totalorder %s23, 0
      %p86 = por %p84, %p85
      %p87 = scmp.ne.s32.totalorder %s75, %s76
      %p88 = scmp.eq.s32.totalorder %s24, 1
      %p89 = por %p87, %p88
      %p91 = scmp.ne.s32.totalorder %s76, %s90
      %p92 = scmp.eq.s32.totalorder %s24, 0
      %p93 = por %p91, %p92
      %s95 = sadd.s32 %s94, 1
      %p98 = scmp.eq.s32.totalorder %s18, 1
      %p99 = scmp.ne.s32.totalorder %s94, %s96
      %p100 = scmp.eq.s32.totalorder %s18, 0
      %p101 = por %p99, %p100
      %p102 = scmp.ne.s32.totalorder %s94, %s96
      %p103 = scmp.eq.s32.totalorder %s23, 1
      %p104 = por %p102, %p103
      %p105 = scmp.ne.s32.totalorder %s96, %s97
      %p106 = scmp.eq.s32.totalorder %s23, 0
      %p107 = por %p105, %p106
      %p108 = scmp.ne.s32.totalorder %s96, %s97
      %p109 = scmp.eq.s32.totalorder %s24, 1
      %p110 = por %p108, %p109
      %p112 = scmp.ne.s32.totalorder %s97, %s111
      %p113 = scmp.eq.s32.totalorder %s24, 0
      %p114 = por %p112, %p113
      %s116 = sadd.s32 %s115, 1
      %p119 = scmp.eq.s32.totalorder %s18, 1
      %p120 = scmp.ne.s32.totalorder %s115, %s117
      %p121 = scmp.eq.s32.totalorder %s18, 0
      %p122 = por %p120, %p121
      %p123 = scmp.ne.s32.totalorder %s115, %s117
      %p124 = scmp.eq.s32.totalorder %s23, 1
      %p125 = por %p123, %p124
      %p126 = scmp.ne.s32.totalorder %s117, %s118
      %p127 = scmp.eq.s32.totalorder %s23, 0
      %p128 = por %p126, %p127
      %p129 = scmp.ne.s32.totalorder %s117, %s118
      %p130 = scmp.eq.s32.totalorder %s24, 1
      %p131 = por %p129, %p130
      %p133 = scmp.ne.s32.totalorder %s118, %s132
      %p134 = scmp.eq.s32.totalorder %s24, 0
      %p135 = por %p133, %p134
      %s136 = ssub.s32 %s18, %s25
      %p137 = scmp.eq.s32.totalorder %s136, 0
      %s139 = sadd.s32 %s138, 1
      %s140 = scalar_select %p137, %s138, %s139
      %p143 = pneg %p137
      %p144 = scmp.eq.s32.totalorder %s18, 1
      %p145 = por %p143, %p144
      %p146 = scmp.ne.s32.totalorder %s138, %s141
      %p147 = scmp.eq.s32.totalorder %s18, 0
      %p148 = por %p146, %p147
      %p149 = scmp.ne.s32.totalorder %s138, %s141
      %p150 = scmp.eq.s32.totalorder %s23, 1
      %p151 = por %p149, %p150
      %p152 = scmp.ne.s32.totalorder %s141, %s142
      %p153 = scmp.eq.s32.totalorder %s23, 0
      %p154 = por %p152, %p153
      %p155 = scmp.ne.s32.totalorder %s141, %s142
      %p156 = scmp.eq.s32.totalorder %s24, 1
      %p157 = por %p155, %p156
      %p159 = scmp.ne.s32.totalorder %s142, %s158
      %p160 = scmp.eq.s32.totalorder %s24, 0
      %p161 = por %p159, %p160
      %p162 = scmp.le.s32.totalorder 1, %s18
      %p163 = scmp.lt.s32.totalorder %s18, 3
      %p164 = pnand %p162, %p163
      %p165 = pneg %p164
      // Predicated region
      $region9: #{tpu_custom_call.1} parent=5 // pred_check
        _
      $region10: #{tpu_custom_call.1} parent=5 // pred_check_branch
        %167 = sbr.rel (%p164) target = $region12
      $region11: #{tpu_custom_call.1} parent=5 // pred_region
        %s168 = ssub.s32 %s18, 1
        // Predicated region
        $region13: #{tpu_custom_call.1} parent=11 // pred_check
          %p169 = pneg %p65
        $region14: #{tpu_custom_call.1} parent=11 // pred_check_branch
          %171 = sbr.rel (%p169) target = $region16
        $region15: #{tpu_custom_call.1} parent=11 // pred_region
          %s173 = ssub.s32 18432, 18432
          %174 = vsyncadd [#allocation7], %s173
          %s175 = sshll.u32 [#allocation6], 4
          %s176 = int_to_ptr.vmem [resolvable:$true] %s175
          %181 = dma.hbm_to_vmem [thread:$0]  %s1, 18432, %s176, [#allocation7], 128, 128, 8
        $region16: #{tpu_custom_call.1} parent=11 // pred_fallthru
          _
        // Predicated region
        $region17: #{tpu_custom_call.1} parent=11 // pred_check
          %p182 = pneg %p86
        $region18: #{tpu_custom_call.1} parent=11 // pred_check_branch
          %184 = sbr.rel (%p182) target = $region20
        $region19: #{tpu_custom_call.1} parent=11 // pred_region
          _
        $region20: #{tpu_custom_call.1} parent=11 // pred_fallthru
          _
        // Predicated region
        $region21: #{tpu_custom_call.1} parent=11 // pred_check
          %p185 = pneg %p107
        $region22: #{tpu_custom_call.1} parent=11 // pred_check_branch
          %187 = sbr.rel (%p185) target = $region24
        $region23: #{tpu_custom_call.1} parent=11 // pred_region
          %s189 = ssub.s32 18432, 18432
          %190 = vsyncadd [#allocation7], %s189
          %s191 = sshll.u32 [#allocation8], 4
          %s192 = int_to_ptr.vmem [resolvable:$true] %s191
          %197 = dma.hbm_to_vmem [thread:$0]  %s3, 18432, %s192, [#allocation7], 128, 128, 8
        $region24: #{tpu_custom_call.1} parent=11 // pred_fallthru
          _
        // Predicated region
        $region25: #{tpu_custom_call.1} parent=11 // pred_check
          %p198 = pneg %p128
        $region26: #{tpu_custom_call.1} parent=11 // pred_check_branch
          %200 = sbr.rel (%p198) target = $region28
        $region27: #{tpu_custom_call.1} parent=11 // pred_region
          _
        $region28: #{tpu_custom_call.1} parent=11 // pred_fallthru
          _
      $region12: #{tpu_custom_call.1} parent=5 // pred_fallthru
        _
      %p201 = scmp.lt.s32.totalorder %s18, 2
      // Predicated region
      $region29: #{tpu_custom_call.1} parent=5 // pred_check
        %p202 = pneg %p201
      $region30: #{tpu_custom_call.1} parent=5 // pred_check_branch
        %204 = sbr.rel (%p202) target = $region32
      $region31: #{tpu_custom_call.1} parent=5 // pred_region
        // Predicated region
        $region33: #{tpu_custom_call.1} parent=31 // pred_check
          %p205 = pneg %p38
        $region34: #{tpu_custom_call.1} parent=31 // pred_check_branch
          %207 = sbr.rel (%p205) target = $region36
        $region35: #{tpu_custom_call.1} parent=31 // pred_region
          %s208 = sand.u32 %s28, 1
          %s209 = scalar_lea.sflag [#allocation4], %s208
          %s210 = sand.u32 %s28, 1
          %s211 = smul.addr %s210, 256
          %s212 = scalar_lea.vmem [#allocation3], %s211
          %s214 = ssub.s32 4096, 4096
          %215 = vsyncadd %s209, %s214
          %s216 = smul.addr %s18, 32
          %s217 = smul.addr %s216, 128
          %s218 = scalar_lea.hbm %s0, %s217
          %s219 = sshll.u32 %s212, 4
          %s220 = int_to_ptr.vmem [resolvable:$true] %s219
          %225 = dma.hbm_to_vmem [thread:$0]  %s218, 4096, %s220, %s209, 128, 128, 8
        $region36: #{tpu_custom_call.1} parent=31 // pred_fallthru
          _
      $region32: #{tpu_custom_call.1} parent=5 // pred_fallthru
        _
      %p226 = scmp.le.s32.totalorder 1, %s18
      %p227 = scmp.lt.s32.totalorder %s18, 3
      %p228 = pnand %p226, %p227
      %p229 = pneg %p228
      // Predicated region
      $region37: #{tpu_custom_call.1} parent=5 // pred_check
        _
      $region38: #{tpu_custom_call.1} parent=5 // pred_check_branch
        %231 = sbr.rel (%p228) target = $region40
      $region39: #{tpu_custom_call.1} parent=5 // pred_region
        %s232 = ssub.s32 %s18, 1
        %s233 = sand.u32 %s31, 1
        %s234 = scalar_lea.sflag [#allocation4], %s233
        %s235 = sand.u32 %s31, 1
        %s236 = smul.addr %s235, 256
        %s237 = scalar_lea.vmem [#allocation3], %s236
        // Predicated region
        $region41: #{tpu_custom_call.1} parent=39 // pred_check
          %p238 = pneg %p44
        $region42: #{tpu_custom_call.1} parent=39 // pred_check_branch
          %240 = sbr.rel (%p238) target = $region44
        $region43: #{tpu_custom_call.1} parent=39 // pred_region
          %241 = dma.done %s234, 4096
        $region44: #{tpu_custom_call.1} parent=39 // pred_fallthru
          _
        // Predicated region
        $region45: #{tpu_custom_call.1} parent=39 // pred_check
          %p242 = pneg %p65
        $region46: #{tpu_custom_call.1} parent=39 // pred_check_branch
          %244 = sbr.rel (%p242) target = $region48
        $region47: #{tpu_custom_call.1} parent=39 // pred_region
          %245 = dma.done [#allocation7], 18432
        $region48: #{tpu_custom_call.1} parent=39 // pred_fallthru
          _
        // Predicated region
        $region49: #{tpu_custom_call.1} parent=39 // pred_check
          %p246 = pneg %p107
        $region50: #{tpu_custom_call.1} parent=39 // pred_check_branch
          %248 = sbr.rel (%p246) target = $region52
        $region51: #{tpu_custom_call.1} parent=39 // pred_region
          %249 = dma.done [#allocation7], 18432
        $region52: #{tpu_custom_call.1} parent=39 // pred_fallthru
          _
        %s250 = sand.u32 %s31, 1
        %s251 = scalar_lea.sflag [#allocation4], %s250
        %s252 = sand.u32 %s31, 1
        %s253 = smul.addr %s252, 256
        %s254 = scalar_lea.vmem [#allocation3], %s253
        %p255 = pneg %p44
        %p256 = pneg %p41
        %p257 = pneg %p65
        %p258 = pneg %p62
        %p259 = pneg %p86
        %p260 = pneg %p83
        %p261 = pneg %p107
        %p262 = pneg %p104
        %p263 = pneg %p128
        %p264 = pneg %p125
        %p265 = pneg %p154
        %p266 = pneg %p151
        %s267 = sand.u32 %s141, 1
        %s268 = scalar_lea.sflag [#allocation5], %s267
        %s269 = sand.u32 %s141, 1
        %s270 = smul.addr %s269, 256
        %s271 = scalar_lea.vmem [#allocation9], %s270
        %272 = vst [vmem:[#allocation2] sm:$0xff] 0.0
        %273 = vst [vmem:[#allocation2 + $0x8] sm:$0xff] 0.0
        %274 = vst [vmem:[#allocation2 + $0x110] sm:$0xff] 0.0
        %275 = vst [vmem:[#allocation2 + $0x118] sm:$0xff] 0.0
        %v276 = vld [vmem:[%s237] sm:$0xff]
        %v277 = vld [vmem:[%s237 + $0x8] sm:$0xff]
        %v278 = vld [vmem:[%s237 + $0x10] sm:$0xff]
        %v279 = vld [vmem:[%s237 + $0x18] sm:$0xff]
        %v280 = vld [vmem:[%s237 + $0x20] sm:$0xff]
        %v281 = vld [vmem:[%s237 + $0x28] sm:$0xff]
        %v282 = vld [vmem:[%s237 + $0x30] sm:$0xff]
        %v283 = vld [vmem:[%s237 + $0x38] sm:$0xff]
        %v284 = vld [vmem:[%s237 + $0x40] sm:$0xff]
        %v285 = vld [vmem:[%s237 + $0x48] sm:$0xff]
        %v286 = vld [vmem:[%s237 + $0x50] sm:$0xff]
        %v287 = vld [vmem:[%s237 + $0x58] sm:$0xff]
        %v288 = vld [vmem:[%s237 + $0x60] sm:$0xff]
        %v289 = vld [vmem:[%s237 + $0x68] sm:$0xff]
        %v290 = vld [vmem:[%s237 + $0x70] sm:$0xff]
        %v291 = vld [vmem:[%s237 + $0x78] sm:$0xff]
        %v292 = vld [vmem:[%s237 + $0x80] sm:$0xff]
        %v293 = vld [vmem:[%s237 + $0x88] sm:$0xff]
        %v294 = vld [vmem:[%s237 + $0x90] sm:$0xff]
        %v295 = vld [vmem:[%s237 + $0x98] sm:$0xff]
        %v296 = vld [vmem:[%s237 + $0xa0] sm:$0xff]
        %v297 = vld [vmem:[%s237 + $0xa8] sm:$0xff]
        %v298 = vld [vmem:[%s237 + $0xb0] sm:$0xff]
        %v299 = vld [vmem:[%s237 + $0xb8] sm:$0xff]
        %v300 = vld [vmem:[%s237 + $0xc0] sm:$0xff]
        %v301 = vld [vmem:[%s237 + $0xc8] sm:$0xff]
        %v302 = vld [vmem:[%s237 + $0xd0] sm:$0xff]
        %v303 = vld [vmem:[%s237 + $0xd8] sm:$0xff]
        %v304 = vld [vmem:[%s237 + $0xe0] sm:$0xff]
        %v305 = vld [vmem:[%s237 + $0xe8] sm:$0xff]
        %v306 = vld [vmem:[%s237 + $0xf0] sm:$0xff]
        %v307 = vld [vmem:[%s237 + $0xf8] sm:$0xff]
        %308 = vst [vmem:[#allocation2 + $0x10] sm:$0xff] %v276
        %309 = vst [vmem:[#allocation2 + $0x18] sm:$0xff] %v277
        %310 = vst [vmem:[#allocation2 + $0x20] sm:$0xff] %v278
        %311 = vst [vmem:[#allocation2 + $0x28] sm:$0xff] %v279
        %312 = vst [vmem:[#allocation2 + $0x30] sm:$0xff] %v280
        %313 = vst [vmem:[#allocation2 + $0x38] sm:$0xff] %v281
        %314 = vst [vmem:[#allocation2 + $0x40] sm:$0xff] %v282
        %315 = vst [vmem:[#allocation2 + $0x48] sm:$0xff] %v283
        %316 = vst [vmem:[#allocation2 + $0x50] sm:$0xff] %v284
        %317 = vst [vmem:[#allocation2 + $0x58] sm:$0xff] %v285
        %318 = vst [vmem:[#allocation2 + $0x60] sm:$0xff] %v286
        %319 = vst [vmem:[#allocation2 + $0x68] sm:$0xff] %v287
        %320 = vst [vmem:[#allocation2 + $0x70] sm:$0xff] %v288
        %321 = vst [vmem:[#allocation2 + $0x78] sm:$0xff] %v289
        %322 = vst [vmem:[#allocation2 + $0x80] sm:$0xff] %v290
        %323 = vst [vmem:[#allocation2 + $0x88] sm:$0xff] %v291
        %324 = vst [vmem:[#allocation2 + $0x90] sm:$0xff] %v292
        %325 = vst [vmem:[#allocation2 + $0x98] sm:$0xff] %v293
        %326 = vst [vmem:[#allocation2 + $0xa0] sm:$0xff] %v294
        %327 = vst [vmem:[#allocation2 + $0xa8] sm:$0xff] %v295
        %328 = vst [vmem:[#allocation2 + $0xb0] sm:$0xff] %v296
        %329 = vst [vmem:[#allocation2 + $0xb8] sm:$0xff] %v297
        %330 = vst [vmem:[#allocation2 + $0xc0] sm:$0xff] %v298
        %331 = vst [vmem:[#allocation2 + $0xc8] sm:$0xff] %v299
        %332 = vst [vmem:[#allocation2 + $0xd0] sm:$0xff] %v300
        %333 = vst [vmem:[#allocation2 + $0xd8] sm:$0xff] %v301
        %334 = vst [vmem:[#allocation2 + $0xe0] sm:$0xff] %v302
        %335 = vst [vmem:[#allocation2 + $0xe8] sm:$0xff] %v303
        %336 = vst [vmem:[#allocation2 + $0xf0] sm:$0xff] %v304
        %337 = vst [vmem:[#allocation2 + $0xf8] sm:$0xff] %v305
        %338 = vst [vmem:[#allocation2 + $0x100] sm:$0xff] %v306
        %339 = vst [vmem:[#allocation2 + $0x108] sm:$0xff] %v307
        %v340 = vlaneseq
        %v341 = vshrl.u32 %v340, 7
        %v342 = vadd.s32 %v341, 8
        %vm343 = vcmp.ne.s32.totalorder %v341, 0
        %vm344 = vcmp.ne.s32.totalorder %v342, 0
        %v345 = vsel %vm343, 1, 0
        %v346 = vsel %vm344, 1, 0
        %v347 = vcvt.s32.f32 %v345
        %v348 = vcvt.s32.f32 %v346
        %vm349 = vcmp.ne.s32.totalorder %v341, 15
        %vm350 = vcmp.ne.s32.totalorder %v342, 15
        %v351 = vsel %vm349, 1, 0
        %v352 = vsel %vm350, 1, 0
        %v353 = vcvt.s32.f32 %v351
        %v354 = vcvt.s32.f32 %v352
        %v355 = vld [vmem:[#allocation2] sm:$0xff]
        %v356 = vld [vmem:[#allocation2 + $0x8] sm:$0xff]
        %v357 = vld [vmem:[#allocation2 + $0x10] sm:$0xff]
        %v358 = vld [vmem:[#allocation2 + $0x18] sm:$0xff]
        %v359 = vld [vmem:[#allocation2 + $0x20] sm:$0xff]
        %v360 = vld [vmem:[#allocation2 + $0x28] sm:$0xff]
        %v361 = vld [vmem:[#allocation2 + $0x30] sm:$0xff]
        %v362 = vld [vmem:[#allocation2 + $0x38] sm:$0xff]
        %v363 = vld [vmem:[#allocation2 + $0x40] sm:$0xff]
        %v364 = vld [vmem:[#allocation2 + $0x48] sm:$0xff]
        %v365 = vld [vmem:[#allocation2 + $0x50] sm:$0xff]
        %v366 = vld [vmem:[#allocation2 + $0x58] sm:$0xff]
        %v367 = vld [vmem:[#allocation2 + $0x60] sm:$0xff]
        %v368 = vld [vmem:[#allocation2 + $0x68] sm:$0xff]
        %v369 = vld [vmem:[#allocation2 + $0x70] sm:$0xff]
        %v370 = vld [vmem:[#allocation2 + $0x78] sm:$0xff]
        %v371 = vld [vmem:[#allocation2 + $0x80] sm:$0xff]
        %v372 = vld [vmem:[#allocation2 + $0x88] sm:$0xff]
        %v373 = vld [vmem:[#allocation2 + $0x90] sm:$0xff]
        %v374 = vld [vmem:[#allocation2 + $0x98] sm:$0xff]
        %v375 = vld [vmem:[#allocation2 + $0xa0] sm:$0xff]
        %v376 = vld [vmem:[#allocation2 + $0xa8] sm:$0xff]
        %v377 = vld [vmem:[#allocation2 + $0xb0] sm:$0xff]
        %v378 = vld [vmem:[#allocation2 + $0xb8] sm:$0xff]
        %v379 = vld [vmem:[#allocation2 + $0xc0] sm:$0xff]
        %v380 = vld [vmem:[#allocation2 + $0xc8] sm:$0xff]
        %v381 = vld [vmem:[#allocation2 + $0xd0] sm:$0xff]
        %v382 = vld [vmem:[#allocation2 + $0xd8] sm:$0xff]
        %v383 = vld [vmem:[#allocation2 + $0xe0] sm:$0xff]
        %v384 = vld [vmem:[#allocation2 + $0xe8] sm:$0xff]
        %v385 = vld [vmem:[#allocation2 + $0xf0] sm:$0xff]
        %v386 = vld [vmem:[#allocation2 + $0xf8] sm:$0xff]
        %v387 = vld [vmem:[#allocation2 + $0x100] sm:$0xff]
        %v388 = vld [vmem:[#allocation2 + $0x108] sm:$0xff]
        %v389 = vld [vmem:[#allocation2 + $0x110] sm:$0xff]
        %v390 = vld [vmem:[#allocation2 + $0x118] sm:$0xff]
        %v391 = vrot.slane %v355, 7
        %v392 = vrot.slane %v356, 7
        %v393 = vrot.slane %v357, 7
        %v394 = vrot.slane %v358, 7
        %v395 = vrot.slane %v359, 7
        %v396 = vrot.slane %v360, 7
        %v397 = vrot.slane %v361, 7
        %v398 = vrot.slane %v362, 7
        %v399 = vrot.slane %v363, 7
        %v400 = vrot.slane %v364, 7
        %v401 = vrot.slane %v365, 7
        %v402 = vrot.slane %v366, 7
        %v403 = vrot.slane %v367, 7
        %v404 = vrot.slane %v368, 7
        %v405 = vrot.slane %v369, 7
        %v406 = vrot.slane %v370, 7
        %v407 = vrot.slane %v371, 7
        %v408 = vrot.slane %v372, 7
        %v409 = vrot.slane %v373, 7
        %v410 = vrot.slane %v374, 7
        %v411 = vrot.slane %v375, 7
        %v412 = vrot.slane %v376, 7
        %v413 = vrot.slane %v377, 7
        %v414 = vrot.slane %v378, 7
        %v415 = vrot.slane %v379, 7
        %v416 = vrot.slane %v380, 7
        %v417 = vrot.slane %v381, 7
        %v418 = vrot.slane %v382, 7
        %v419 = vrot.slane %v383, 7
        %v420 = vrot.slane %v384, 7
        %v421 = vrot.slane %v385, 7
        %v422 = vrot.slane %v386, 7
        %v423 = vrot.slane %v387, 7
        %v424 = vrot.slane %v388, 7
        %v425 = vrot.slane %v389, 7
        %v426 = vrot.slane %v390, 7
        %vm427 = vcmp.lt.s32.totalorder %v341, 1
        %v428 = vsel %vm427, %v425, %v426
        %v429 = vsel %vm427, %v424, %v425
        %v430 = vsel %vm427, %v423, %v424
        %v431 = vsel %vm427, %v422, %v423
        %v432 = vsel %vm427, %v421, %v422
        %v433 = vsel %vm427, %v420, %v421
        %v434 = vsel %vm427, %v419, %v420
        %v435 = vsel %vm427, %v418, %v419
        %v436 = vsel %vm427, %v417, %v418
        %v437 = vsel %vm427, %v416, %v417
        %v438 = vsel %vm427, %v415, %v416
        %v439 = vsel %vm427, %v414, %v415
        %v440 = vsel %vm427, %v413, %v414
        %v441 = vsel %vm427, %v412, %v413
        %v442 = vsel %vm427, %v411, %v412
        %v443 = vsel %vm427, %v410, %v411
        %v444 = vsel %vm427, %v409, %v410
        %v445 = vsel %vm427, %v408, %v409
        %v446 = vsel %vm427, %v407, %v408
        %v447 = vsel %vm427, %v406, %v407
        %v448 = vsel %vm427, %v405, %v406
        %v449 = vsel %vm427, %v404, %v405
        %v450 = vsel %vm427, %v403, %v404
        %v451 = vsel %vm427, %v402, %v403
        %v452 = vsel %vm427, %v401, %v402
        %v453 = vsel %vm427, %v400, %v401
        %v454 = vsel %vm427, %v399, %v400
        %v455 = vsel %vm427, %v398, %v399
        %v456 = vsel %vm427, %v397, %v398
        %v457 = vsel %vm427, %v396, %v397
        %v458 = vsel %vm427, %v395, %v396
        %v459 = vsel %vm427, %v394, %v395
        %v460 = vsel %vm427, %v393, %v394
        %v461 = vsel %vm427, %v392, %v393
        %v462 = vsel %vm427, %v391, %v392
        %v463 = vsel %vm427, %v426, %v391
        %v464 = vmul.f32 %v463, %v347
        %v465 = vmul.f32 %v462, %v348
        %v466 = vmul.f32 %v461, %v347
        %v467 = vmul.f32 %v460, %v348
        %v468 = vmul.f32 %v459, %v347
        %v469 = vmul.f32 %v458, %v348
        %v470 = vmul.f32 %v457, %v347
        %v471 = vmul.f32 %v456, %v348
        %v472 = vmul.f32 %v455, %v347
        %v473 = vmul.f32 %v454, %v348
        %v474 = vmul.f32 %v453, %v347
        %v475 = vmul.f32 %v452, %v348
        %v476 = vmul.f32 %v451, %v347
        %v477 = vmul.f32 %v450, %v348
        %v478 = vmul.f32 %v449, %v347
        %v479 = vmul.f32 %v448, %v348
        %v480 = vmul.f32 %v447, %v347
        %v481 = vmul.f32 %v446, %v348
        %v482 = vmul.f32 %v445, %v347
        %v483 = vmul.f32 %v444, %v348
        %v484 = vmul.f32 %v443, %v347
        %v485 = vmul.f32 %v442, %v348
        %v486 = vmul.f32 %v441, %v347
        %v487 = vmul.f32 %v440, %v348
        %v488 = vmul.f32 %v439, %v347
        %v489 = vmul.f32 %v438, %v348
        %v490 = vmul.f32 %v437, %v347
        %v491 = vmul.f32 %v436, %v348
        %v492 = vmul.f32 %v435, %v347
        %v493 = vmul.f32 %v434, %v348
        %v494 = vmul.f32 %v433, %v347
        %v495 = vmul.f32 %v432, %v348
        %v496 = vmul.f32 %v431, %v347
        %v497 = vmul.f32 %v430, %v348
        %v498 = vmul.f32 %v429, %v347
        %v499 = vmul.f32 %v428, %v348
        %v500 = vrot.slane %v355, 1
        %v501 = vrot.slane %v356, 1
        %v502 = vrot.slane %v357, 1
        %v503 = vrot.slane %v358, 1
        %v504 = vrot.slane %v359, 1
        %v505 = vrot.slane %v360, 1
        %v506 = vrot.slane %v361, 1
        %v507 = vrot.slane %v362, 1
        %v508 = vrot.slane %v363, 1
        %v509 = vrot.slane %v364, 1
        %v510 = vrot.slane %v365, 1
        %v511 = vrot.slane %v366, 1
        %v512 = vrot.slane %v367, 1
        %v513 = vrot.slane %v368, 1
        %v514 = vrot.slane %v369, 1
        %v515 = vrot.slane %v370, 1
        %v516 = vrot.slane %v371, 1
        %v517 = vrot.slane %v372, 1
        %v518 = vrot.slane %v373, 1
        %v519 = vrot.slane %v374, 1
        %v520 = vrot.slane %v375, 1
        %v521 = vrot.slane %v376, 1
        %v522 = vrot.slane %v377, 1
        %v523 = vrot.slane %v378, 1
        %v524 = vrot.slane %v379, 1
        %v525 = vrot.slane %v380, 1
        %v526 = vrot.slane %v381, 1
        %v527 = vrot.slane %v382, 1
        %v528 = vrot.slane %v383, 1
        %v529 = vrot.slane %v384, 1
        %v530 = vrot.slane %v385, 1
        %v531 = vrot.slane %v386, 1
        %v532 = vrot.slane %v387, 1
        %v533 = vrot.slane %v388, 1
        %v534 = vrot.slane %v389, 1
        %v535 = vrot.slane %v390, 1
        %vm536 = vcmp.lt.s32.totalorder %v341, 7
        %v537 = vsel %vm536, %v534, %v535
        %v538 = vsel %vm536, %v533, %v534
        %v539 = vsel %vm536, %v532, %v533
        %v540 = vsel %vm536, %v531, %v532
        %v541 = vsel %vm536, %v530, %v531
        %v542 = vsel %vm536, %v529, %v530
        %v543 = vsel %vm536, %v528, %v529
        %v544 = vsel %vm536, %v527, %v528
        %v545 = vsel %vm536, %v526, %v527
        %v546 = vsel %vm536, %v525, %v526
        %v547 = vsel %vm536, %v524, %v525
        %v548 = vsel %vm536, %v523, %v524
        %v549 = vsel %vm536, %v522, %v523
        %v550 = vsel %vm536, %v521, %v522
        %v551 = vsel %vm536, %v520, %v521
        %v552 = vsel %vm536, %v519, %v520
        %v553 = vsel %vm536, %v518, %v519
        %v554 = vsel %vm536, %v517, %v518
        %v555 = vsel %vm536, %v516, %v517
        %v556 = vsel %vm536, %v515, %v516
        %v557 = vsel %vm536, %v514, %v515
        %v558 = vsel %vm536, %v513, %v514
        %v559 = vsel %vm536, %v512, %v513
        %v560 = vsel %vm536, %v511, %v512
        %v561 = vsel %vm536, %v510, %v511
        %v562 = vsel %vm536, %v509, %v510
        %v563 = vsel %vm536, %v508, %v509
        %v564 = vsel %vm536, %v507, %v508
        %v565 = vsel %vm536, %v506, %v507
        %v566 = vsel %vm536, %v505, %v506
        %v567 = vsel %vm536, %v504, %v505
        %v568 = vsel %vm536, %v503, %v504
        %v569 = vsel %vm536, %v502, %v503
        %v570 = vsel %vm536, %v501, %v502
        %v571 = vsel %vm536, %v500, %v501
        %v572 = vsel %vm536, %v535, %v500
        %v573 = vmul.f32 %v571, %v353
        %v574 = vmul.f32 %v570, %v354
        %v575 = vmul.f32 %v569, %v353
        %v576 = vmul.f32 %v568, %v354
        %v577 = vmul.f32 %v567, %v353
        %v578 = vmul.f32 %v566, %v354
        %v579 = vmul.f32 %v565, %v353
        %v580 = vmul.f32 %v564, %v354
        %v581 = vmul.f32 %v563, %v353
        %v582 = vmul.f32 %v562, %v354
        %v583 = vmul.f32 %v561, %v353
        %v584 = vmul.f32 %v560, %v354
        %v585 = vmul.f32 %v559, %v353
        %v586 = vmul.f32 %v558, %v354
        %v587 = vmul.f32 %v557, %v353
        %v588 = vmul.f32 %v556, %v354
        %v589 = vmul.f32 %v555, %v353
        %v590 = vmul.f32 %v554, %v354
        %v591 = vmul.f32 %v553, %v353
        %v592 = vmul.f32 %v552, %v354
        %v593 = vmul.f32 %v551, %v353
        %v594 = vmul.f32 %v550, %v354
        %v595 = vmul.f32 %v549, %v353
        %v596 = vmul.f32 %v548, %v354
        %v597 = vmul.f32 %v547, %v353
        %v598 = vmul.f32 %v546, %v354
        %v599 = vmul.f32 %v545, %v353
        %v600 = vmul.f32 %v544, %v354
        %v601 = vmul.f32 %v543, %v353
        %v602 = vmul.f32 %v542, %v354
        %v603 = vmul.f32 %v541, %v353
        %v604 = vmul.f32 %v540, %v354
        %v605 = vmul.f32 %v539, %v353
        %v606 = vmul.f32 %v538, %v354
        %v607 = vmul.f32 %v537, %v353
        %v608 = vmul.f32 %v572, %v354
        %v609 = vld [vmem:[#allocation6] sm:$0xff]
        %v610 = vld [vmem:[#allocation6 + $0x8] sm:$0xff]
        %v611 = vld [vmem:[#allocation6 + $0x10] sm:$0xff]
        %v612 = vld [vmem:[#allocation6 + $0x18] sm:$0xff]
        %v613 = vld [vmem:[#allocation6 + $0x20] sm:$0xff]
        %v614 = vld [vmem:[#allocation6 + $0x28] sm:$0xff]
        %v615 = vld [vmem:[#allocation6 + $0x30] sm:$0xff]
        %v616 = vld [vmem:[#allocation6 + $0x38] sm:$0xff]
        %v617 = vld [vmem:[#allocation6 + $0x40] sm:$0xff]
        %v618 = vld [vmem:[#allocation6 + $0x48] sm:$0xff]
        %v619 = vld [vmem:[#allocation6 + $0x50] sm:$0xff]
        %v620 = vld [vmem:[#allocation6 + $0x58] sm:$0xff]
        %v621 = vld [vmem:[#allocation6 + $0x60] sm:$0xff]
        %v622 = vld [vmem:[#allocation6 + $0x68] sm:$0xff]
        %v623 = vld [vmem:[#allocation6 + $0x70] sm:$0xff]
        %v624 = vld [vmem:[#allocation6 + $0x78] sm:$0xff]
        %s625 = scalar_lea.vmem [#allocation6], 384
        %v626 = vld [vmem:[%s625] sm:$0xff]
        %v627 = vld [vmem:[%s625 + $0x8] sm:$0xff]
        %v628 = vld [vmem:[%s625 + $0x10] sm:$0xff]
        %v629 = vld [vmem:[%s625 + $0x18] sm:$0xff]
        %v630 = vld [vmem:[%s625 + $0x20] sm:$0xff]
        %v631 = vld [vmem:[%s625 + $0x28] sm:$0xff]
        %v632 = vld [vmem:[%s625 + $0x30] sm:$0xff]
        %v633 = vld [vmem:[%s625 + $0x38] sm:$0xff]
        %v634 = vld [vmem:[%s625 + $0x40] sm:$0xff]
        %v635 = vld [vmem:[%s625 + $0x48] sm:$0xff]
        %v636 = vld [vmem:[%s625 + $0x50] sm:$0xff]
        %v637 = vld [vmem:[%s625 + $0x58] sm:$0xff]
        %v638 = vld [vmem:[%s625 + $0x60] sm:$0xff]
        %v639 = vld [vmem:[%s625 + $0x68] sm:$0xff]
        %v640 = vld [vmem:[%s625 + $0x70] sm:$0xff]
        %v641 = vld [vmem:[%s625 + $0x78] sm:$0xff]
        %642 = vmatprep.subr.mxu0 0.0
        %643 = vmatpush1.msra.mxu0 %v626
        %644 = vmatprep.subr.mxu0 0.0
        %645 = vmatpush1.msra.mxu0 %v627
        %646 = vmatprep.subr.mxu0 0.0
        %647 = vmatpush1.msra.mxu0 %v628
        %648 = vmatprep.subr.mxu0 0.0
        %649 = vmatpush1.msra.mxu0 %v629
        %650 = vmatprep.subr.mxu0 0.0
        %651 = vmatpush1.msra.mxu0 %v630
        %652 = vmatprep.subr.mxu0 0.0
        %653 = vmatpush1.msra.mxu0 %v631
        %654 = vmatprep.subr.mxu0 0.0
        %655 = vmatpush1.msra.mxu0 %v632
        %656 = vmatprep.subr.mxu0 0.0
        %657 = vmatpush1.msra.mxu0 %v633
        %658 = vmatprep.subr.mxu0 0.0
        %659 = vmatpush1.msra.mxu0 %v634
        %660 = vmatprep.subr.mxu0 0.0
        %661 = vmatpush1.msra.mxu0 %v635
        %662 = vmatprep.subr.mxu0 0.0
        %663 = vmatpush1.msra.mxu0 %v636
        %664 = vmatprep.subr.mxu0 0.0
        %665 = vmatpush1.msra.mxu0 %v637
        %666 = vmatprep.subr.mxu0 0.0
        %667 = vmatpush1.msra.mxu0 %v638
        %668 = vmatprep.subr.mxu0 0.0
        %669 = vmatpush1.msra.mxu0 %v639
        %670 = vmatprep.subr.mxu0 0.0
        %671 = vmatpush1.msra.mxu0 %v640
        %672 = vmatprep.subr.mxu0 0.0
        %673 = vmatpush1.msra.mxu0 %v641
        %674 = vmatprep.subr.mxu0 0.0
        %675 = vmatpush1.msra.mxu0 0.0
        %676 = vmatprep.subr.mxu0 0.0
        %677 = vmatpush1.msra.mxu0 0.0
        %678 = vmatprep.subr.mxu0 0.0
        %679 = vmatpush1.msra.mxu0 0.0
        %680 = vmatprep.subr.mxu0 0.0
        %681 = vmatpush1.msra.mxu0 0.0
        %682 = vmatprep.subr.mxu0 0.0
        %683 = vmatpush1.msra.mxu0 0.0
        %684 = vmatprep.subr.mxu0 0.0
        %685 = vmatpush1.msra.mxu0 0.0
        %686 = vmatprep.subr.mxu0 0.0
        %687 = vmatpush1.msra.mxu0 0.0
        %688 = vmatprep.subr.mxu0 0.0
        %689 = vmatpush1.msra.mxu0 0.0
        %690 = vmatprep.subr.mxu0 0.0
        %691 = vmatpush1.msra.mxu0 0.0
        %692 = vmatprep.subr.mxu0 0.0
        %693 = vmatpush1.msra.mxu0 0.0
        %694 = vmatprep.subr.mxu0 0.0
        %695 = vmatpush1.msra.mxu0 0.0
        %696 = vmatprep.subr.mxu0 0.0
        %697 = vmatpush1.msra.mxu0 0.0
        %698 = vmatprep.subr.mxu0 0.0
        %699 = vmatpush1.msra.mxu0 0.0
        %700 = vmatprep.subr.mxu0 0.0
        %701 = vmatpush1.msra.mxu0 0.0
        %702 = vmatprep.subr.mxu0 0.0
        %703 = vmatpush1.msra.mxu0 0.0
        %704 = vmatprep.subr.mxu0 0.0
        %705 = vmatpush1.msra.mxu0 0.0
        %706 = vmatprep.mubr.f32.mxu0 0.0
        %707 = vmatmul.mubr.f32.gmra.mrb[0].mxu0 %v466
        %v708 = vpop.f32.mrb[0].mxu0
        %v709 = vadd.f32 0.0, %v708
        %v710 = vpop.f32.mrb[0].mxu0
        %711 = vmatprep.mubr.f32.mxu0 0.0
        %712 = vmatmul.mubr.f32.gmra.mrb[0].mxu0 %v467
        %v713 = vpop.f32.mrb[0].mxu0
        %v714 = vadd.f32 0.0, %v713
        %v715 = vpop.f32.mrb[0].mxu0
        %716 = vmatprep.mubr.f32.mxu0 0.0
        %717 = vmatmul.mubr.f32.gmra.mrb[0].mxu0 %v468
        %v718 = vpop.f32.mrb[0].mxu0
        %v719 = vadd.f32 0.0, %v718
        %v720 = vpop.f32.mrb[0].mxu0
        %721 = vmatprep.mubr.f32.mxu0 0.0
        %722 = vmatmul.mubr.f32.gmra.mrb[0].mxu0 %v469
        %v723 = vpop.f32.mrb[0].mxu0
        %v724 = vadd.f32 0.0, %v723
        %v725 = vpop.f32.mrb[0].mxu0
        %726 = vmatprep.mubr.f32.mxu0 0.0
        %727 = vmatmul.mubr.f32.gmra.mrb[0].mxu0 %v470
        %v728 = vpop.f32.mrb[0].mxu0
        %v729 = vadd.f32 0.0, %v728
        %v730 = vpop.f32.mrb[0].mxu0
        %731 = vmatprep.mubr.f32.mxu0 0.0
        %732 = vmatmul.mubr.f32.gmra.mrb[0].mxu0 %v471
        %v733 = vpop.f32.mrb[0].mxu0
        %v734 = vadd.f32 0.0, %v733
        %v735 = vpop.f32.mrb[0].mxu0
        %736 = vmatprep.mubr.f32.mxu0 0.0
        %737 = vmatmul.mubr.f32.gmra.mrb[0].mxu0 %v472
        %v738 = vpop.f32.mrb[0].mxu0
        %v739 = vadd.f32 0.0, %v738
        %v740 = vpop.f32.mrb[0].mxu0
        %741 = vmatprep.mubr.f32.mxu0 0.0
        %742 = vmatmul.mubr.f32.gmra.mrb[0].mxu0 %v473
        %v743 = vpop.f32.mrb[0].mxu0
        %v744 = vadd.f32 0.0, %v743
        %v745 = vpop.f32.mrb[0].mxu0
        %746 = vmatprep.mubr.f32.mxu0 0.0
        %747 = vmatmul.mubr.f32.gmra.mrb[0].mxu0 %v474
        %v748 = vpop.f32.mrb[0].mxu0
        %v749 = vadd.f32 0.0, %v748
        %v750 = vpop.f32.mrb[0].mxu0
        %751 = vmatprep.mubr.f32.mxu0 0.0
        %752 = vmatmul.mubr.f32.gmra.mrb[0].mxu0 %v475
        %v753 = vpop.f32.mrb[0].mxu0
        %v754 = vadd.f32 0.0, %v753
        %v755 = vpop.f32.mrb[0].mxu0
        %756 = vmatprep.mubr.f32.mxu0 0.0
        %757 = vmatmul.mubr.f32.gmra.mrb[0].mxu0 %v476
        %v758 = vpop.f32.mrb[0].mxu0
        %v759 = vadd.f32 0.0, %v758
        %v760 = vpop.f32.mrb[0].mxu0
        %761 = vmatprep.mubr.f32.mxu0 0.0
        %762 = vmatmul.mubr.f32.gmra.mrb[0].mxu0 %v477
        %v763 = vpop.f32.mrb[0].mxu0
        %v764 = vadd.f32 0.0, %v763
        %v765 = vpop.f32.mrb[0].mxu0
        %766 = vmatprep.mubr.f32.mxu0 0.0
        %767 = vmatmul.mubr.f32.gmra.mrb[0].mxu0 %v478
        %v768 = vpop.f32.mrb[0].mxu0
        %v769 = vadd.f32 0.0, %v768
        %v770 = vpop.f32.mrb[0].mxu0
        %771 = vmatprep.mubr.f32.mxu0 0.0
        %772 = vmatmul.mubr.f32.gmra.mrb[0].mxu0 %v479
        %v773 = vpop.f32.mrb[0].mxu0
        %v774 = vadd.f32 0.0, %v773
        %v775 = vpop.f32.mrb[0].mxu0
        %776 = vmatprep.mubr.f32.mxu0 0.0
        %777 = vmatmul.mubr.f32.gmra.mrb[0].mxu0 %v480
        %v778 = vpop.f32.mrb[0].mxu0
        %v779 = vadd.f32 0.0, %v778
        %v780 = vpop.f32.mrb[0].mxu0
        %781 = vmatprep.mubr.f32.mxu0 0.0
        %782 = vmatmul.mubr.f32.gmra.mrb[0].mxu0 %v481
        %v783 = vpop.f32.mrb[0].mxu0
        %v784 = vadd.f32 0.0, %v783
        %v785 = vpop.f32.mrb[0].mxu0
        %786 = vmatprep.mubr.f32.mxu0 0.0
        %787 = vmatmul.mubr.f32.gmra.mrb[0].mxu0 %v482
        %v788 = vpop.f32.mrb[0].mxu0
        %v789 = vadd.f32 0.0, %v788
        %v790 = vpop.f32.mrb[0].mxu0
        %791 = vmatprep.mubr.f32.mxu0 0.0
        %792 = vmatmul.mubr.f32.gmra.mrb[0].mxu0 %v483
        %v793 = vpop.f32.mrb[0].mxu0
        %v794 = vadd.f32 0.0, %v793
        %v795 = vpop.f32.mrb[0].mxu0
        %796 = vmatprep.mubr.f32.mxu0 0.0
        %797 = vmatmul.mubr.f32.gmra.mrb[0].mxu0 %v484
        %v798 = vpop.f32.mrb[0].mxu0
        %v799 = vadd.f32 0.0, %v798
        %v800 = vpop.f32.mrb[0].mxu0
        %801 = vmatprep.mubr.f32.mxu0 0.0
        %802 = vmatmul.mubr.f32.gmra.mrb[0].mxu0 %v485
        %v803 = vpop.f32.mrb[0].mxu0
        %v804 = vadd.f32 0.0, %v803
        %v805 = vpop.f32.mrb[0].mxu0
        %806 = vmatprep.mubr.f32.mxu0 0.0
        %807 = vmatmul.mubr.f32.gmra.mrb[0].mxu0 %v486
        %v808 = vpop.f32.mrb[0].mxu0
        %v809 = vadd.f32 0.0, %v808
        %v810 = vpop.f32.mrb[0].mxu0
        %811 = vmatprep.mubr.f32.mxu0 0.0
        %812 = vmatmul.mubr.f32.gmra.mrb[0].mxu0 %v487
        %v813 = vpop.f32.mrb[0].mxu0
        %v814 = vadd.f32 0.0, %v813
        %v815 = vpop.f32.mrb[0].mxu0
        %816 = vmatprep.mubr.f32.mxu0 0.0
        %817 = vmatmul.mubr.f32.gmra.mrb[0].mxu0 %v488
        %v818 = vpop.f32.mrb[0].mxu0
        %v819 = vadd.f32 0.0, %v818
        %v820 = vpop.f32.mrb[0].mxu0
        %821 = vmatprep.mubr.f32.mxu0 0.0
        %822 = vmatmul.mubr.f32.gmra.mrb[0].mxu0 %v489
        %v823 = vpop.f32.mrb[0].mxu0
        %v824 = vadd.f32 0.0, %v823
        %v825 = vpop.f32.mrb[0].mxu0
        %826 = vmatprep.mubr.f32.mxu0 0.0
        %827 = vmatmul.mubr.f32.gmra.mrb[0].mxu0 %v490
        %v828 = vpop.f32.mrb[0].mxu0
        %v829 = vadd.f32 0.0, %v828
        %v830 = vpop.f32.mrb[0].mxu0
        %831 = vmatprep.mubr.f32.mxu0 0.0
        %832 = vmatmul.mubr.f32.gmra.mrb[0].mxu0 %v491
        %v833 = vpop.f32.mrb[0].mxu0
        %v834 = vadd.f32 0.0, %v833
        %v835 = vpop.f32.mrb[0].mxu0
        %836 = vmatprep.mubr.f32.mxu0 0.0
        %837 = vmatmul.mubr.f32.gmra.mrb[0].mxu0 %v492
        %v838 = vpop.f32.mrb[0].mxu0
        %v839 = vadd.f32 0.0, %v838
        %v840 = vpop.f32.mrb[0].mxu0
        %841 = vmatprep.mubr.f32.mxu0 0.0
        %842 = vmatmul.mubr.f32.gmra.mrb[0].mxu0 %v493
        %v843 = vpop.f32.mrb[0].mxu0
        %v844 = vadd.f32 0.0, %v843
        %v845 = vpop.f32.mrb[0].mxu0
        %846 = vmatprep.mubr.f32.mxu0 0.0
        %847 = vmatmul.mubr.f32.gmra.mrb[0].mxu0 %v494
        %v848 = vpop.f32.mrb[0].mxu0
        %v849 = vadd.f32 0.0, %v848
        %v850 = vpop.f32.mrb[0].mxu0
        %851 = vmatprep.mubr.f32.mxu0 0.0
        %852 = vmatmul.mubr.f32.gmra.mrb[0].mxu0 %v495
        %v853 = vpop.f32.mrb[0].mxu0
        %v854 = vadd.f32 0.0, %v853
        %v855 = vpop.f32.mrb[0].mxu0
        %856 = vmatprep.mubr.f32.mxu0 0.0
        %857 = vmatmul.mubr.f32.gmra.mrb[0].mxu0 %v496
        %v858 = vpop.f32.mrb[0].mxu0
        %v859 = vadd.f32 0.0, %v858
        %v860 = vpop.f32.mrb[0].mxu0
        %861 = vmatprep.mubr.f32.mxu0 0.0
        %862 = vmatmul.mubr.f32.gmra.mrb[0].mxu0 %v497
        %v863 = vpop.f32.mrb[0].mxu0
        %v864 = vadd.f32 0.0, %v863
        %v865 = vpop.f32.mrb[0].mxu0
        %866 = vdwg.mxu0
        %867 = vmatprep.subr.mxu0 0.0
        %868 = vmatpush1.msra.mxu0 %v609
        %869 = vmatprep.subr.mxu0 0.0
        %870 = vmatpush1.msra.mxu0 %v610
        %871 = vmatprep.subr.mxu0 0.0
        %872 = vmatpush1.msra.mxu0 %v611
        %873 = vmatprep.subr.mxu0 0.0
        %874 = vmatpush1.msra.mxu0 %v612
        %875 = vmatprep.subr.mxu0 0.0
        %876 = vmatpush1.msra.mxu0 %v613
        %877 = vmatprep.subr.mxu0 0.0
        %878 = vmatpush1.msra.mxu0 %v614
        %879 = vmatprep.subr.mxu0 0.0
        %880 = vmatpush1.msra.mxu0 %v615
        %881 = vmatprep.subr.mxu0 0.0
        %882 = vmatpush1.msra.mxu0 %v616
        %883 = vmatprep.subr.mxu0 0.0
        %884 = vmatpush1.msra.mxu0 %v617
        %885 = vmatprep.subr.mxu0 0.0
        %886 = vmatpush1.msra.mxu0 %v618
        %887 = vmatprep.subr.mxu0 0.0
        %888 = vmatpush1.msra.mxu0 %v619
        %889 = vmatprep.subr.mxu0 0.0
        %890 = vmatpush1.msra.mxu0 %v620
        %891 = vmatprep.subr.mxu0 0.0
        %892 = vmatpush1.msra.mxu0 %v621
        %893 = vmatprep.subr.mxu0 0.0
        %894 = vmatpush1.msra.mxu0 %v622
        %895 = vmatprep.subr.mxu0 0.0
        %896 = vmatpush1.msra.mxu0 %v623
        %897 = vmatprep.subr.mxu0 0.0
        %898 = vmatpush1.msra.mxu0 %v624
        %899 = vmatprep.subr.mxu0 0.0
        %900 = vmatpush1.msra.mxu0 0.0
        %901 = vmatprep.subr.mxu0 0.0
        %902 = vmatpush1.msra.mxu0 0.0
        %903 = vmatprep.subr.mxu0 0.0
        %904 = vmatpush1.msra.mxu0 0.0
        %905 = vmatprep.subr.mxu0 0.0
        %906 = vmatpush1.msra.mxu0 0.0
        %907 = vmatprep.subr.mxu0 0.0
        %908 = vmatpush1.msra.mxu0 0.0
        %909 = vmatprep.subr.mxu0 0.0
        %910 = vmatpush1.msra.mxu0 0.0
        %911 = vmatprep.subr.mxu0 0.0
        %912 = vmatpush1.msra.mxu0 0.0
        %913 = vmatprep.subr.mxu0 0.0
        %914 = vmatpush1.msra.mxu0 0.0
        %915 = vmatprep.subr.mxu0 0.0
        %916 = vmatpush1.msra.mxu0 0.0
        %917 = vmatprep.subr.mxu0 0.0
        %918 = vmatpush1.msra.mxu0 0.0
        %919 = vmatprep.subr.mxu0 0.0
        %920 = vmatpush1.msra.mxu0 0.0
        %921 = vmatprep.subr.mxu0 0.0
        %922 = vmatpush1.msra.mxu0 0.0
        %923 = vmatprep.subr.mxu0 0.0
        %924 = vmatpush1.msra.mxu0 0.0
        %925 = vmatprep.subr.mxu0 0.0
        %926 = vmatpush1.msra.mxu0 0.0
        %927 = vmatprep.subr.mxu0 0.0
        %928 = vmatpush1.msra.mxu0 0.0
        %929 = vmatprep.subr.mxu0 0.0
        %930 = vmatpush1.msra.mxu0 0.0
        %931 = vmatprep.mubr.f32.mxu0 0.0
        %932 = vmatmul.mubr.f32.gmra.mrb[0].mxu0 %v464
        %v933 = vpop.f32.mrb[0].mxu0
        %v934 = vadd.f32 %v709, %v933
        %v935 = vpop.f32.mrb[0].mxu0
        %936 = vmatprep.mubr.f32.mxu0 0.0
        %937 = vmatmul.mubr.f32.gmra.mrb[0].mxu0 %v465
        %v938 = vpop.f32.mrb[0].mxu0
        %v939 = vadd.f32 %v714, %v938
        %v940 = vpop.f32.mrb[0].mxu0
        %941 = vmatprep.mubr.f32.mxu0 0.0
        %942 = vmatmul.mubr.f32.gmra.mrb[0].mxu0 %v466
        %v943 = vpop.f32.mrb[0].mxu0
        %v944 = vadd.f32 %v719, %v943
        %v945 = vpop.f32.mrb[0].mxu0
        %946 = vmatprep.mubr.f32.mxu0 0.0
        %947 = vmatmul.mubr.f32.gmra.mrb[0].mxu0 %v467
        %v948 = vpop.f32.mrb[0].mxu0
        %v949 = vadd.f32 %v724, %v948
        %v950 = vpop.f32.mrb[0].mxu0
        %951 = vmatprep.mubr.f32.mxu0 0.0
        %952 = vmatmul.mubr.f32.gmra.mrb[0].mxu0 %v468
        %v953 = vpop.f32.mrb[0].mxu0
        %v954 = vadd.f32 %v729, %v953
        %v955 = vpop.f32.mrb[0].mxu0
        %956 = vmatprep.mubr.f32.mxu0 0.0
        %957 = vmatmul.mubr.f32.gmra.mrb[0].mxu0 %v469
        %v958 = vpop.f32.mrb[0].mxu0
        %v959 = vadd.f32 %v734, %v958
        %v960 = vpop.f32.mrb[0].mxu0
        %961 = vmatprep.mubr.f32.mxu0 0.0
        %962 = vmatmul.mubr.f32.gmra.mrb[0].mxu0 %v470
        %v963 = vpop.f32.mrb[0].mxu0
        %v964 = vadd.f32 %v739, %v963
        %v965 = vpop.f32.mrb[0].mxu0
        %966 = vmatprep.mubr.f32.mxu0 0.0
        %967 = vmatmul.mubr.f32.gmra.mrb[0].mxu0 %v471
        %v968 = vpop.f32.mrb[0].mxu0
        %v969 = vadd.f32 %v744, %v968
        %v970 = vpop.f32.mrb[0].mxu0
        %971 = vmatprep.mubr.f32.mxu0 0.0
        %972 = vmatmul.mubr.f32.gmra.mrb[0].mxu0 %v472
        %v973 = vpop.f32.mrb[0].mxu0
        %v974 = vadd.f32 %v749, %v973
        %v975 = vpop.f32.mrb[0].mxu0
        %976 = vmatprep.mubr.f32.mxu0 0.0
        %977 = vmatmul.mubr.f32.gmra.mrb[0].mxu0 %v473
        %v978 = vpop.f32.mrb[0].mxu0
        %v979 = vadd.f32 %v754, %v978
        %v980 = vpop.f32.mrb[0].mxu0
        %981 = vmatprep.mubr.f32.mxu0 0.0
        %982 = vmatmul.mubr.f32.gmra.mrb[0].mxu0 %v474
        %v983 = vpop.f32.mrb[0].mxu0
        %v984 = vadd.f32 %v759, %v983
        %v985 = vpop.f32.mrb[0].mxu0
        %986 = vmatprep.mubr.f32.mxu0 0.0
        %987 = vmatmul.mubr.f32.gmra.mrb[0].mxu0 %v475
        %v988 = vpop.f32.mrb[0].mxu0
        %v989 = vadd.f32 %v764, %v988
        %v990 = vpop.f32.mrb[0].mxu0
        %991 = vmatprep.mubr.f32.mxu0 0.0
        %992 = vmatmul.mubr.f32.gmra.mrb[0].mxu0 %v476
        %v993 = vpop.f32.mrb[0].mxu0
        %v994 = vadd.f32 %v769, %v993
        %v995 = vpop.f32.mrb[0].mxu0
        %996 = vmatprep.mubr.f32.mxu0 0.0
        %997 = vmatmul.mubr.f32.gmra.mrb[0].mxu0 %v477
        %v998 = vpop.f32.mrb[0].mxu0
        %v999 = vadd.f32 %v774, %v998
        %v1000 = vpop.f32.mrb[0].mxu0
        %1001 = vmatprep.mubr.f32.mxu0 0.0
        %1002 = vmatmul.mubr.f32.gmra.mrb[0].mxu0 %v478
        %v1003 = vpop.f32.mrb[0].mxu0
        %v1004 = vadd.f32 %v779, %v1003
        %v1005 = vpop.f32.mrb[0].mxu0
        %1006 = vmatprep.mubr.f32.mxu0 0.0
        %1007 = vmatmul.mubr.f32.gmra.mrb[0].mxu0 %v479
        %v1008 = vpop.f32.mrb[0].mxu0
        %v1009 = vadd.f32 %v784, %v1008
        %v1010 = vpop.f32.mrb[0].mxu0
        %1011 = vmatprep.mubr.f32.mxu0 0.0
        %1012 = vmatmul.mubr.f32.gmra.mrb[0].mxu0 %v480
        %v1013 = vpop.f32.mrb[0].mxu0
        %v1014 = vadd.f32 %v789, %v1013
        %v1015 = vpop.f32.mrb[0].mxu0
        %1016 = vmatprep.mubr.f32.mxu0 0.0
        %1017 = vmatmul.mubr.f32.gmra.mrb[0].mxu0 %v481
        %v1018 = vpop.f32.mrb[0].mxu0
        %v1019 = vadd.f32 %v794, %v1018
        %v1020 = vpop.f32.mrb[0].mxu0
        %1021 = vmatprep.mubr.f32.mxu0 0.0
        %1022 = vmatmul.mubr.f32.gmra.mrb[0].mxu0 %v482
        %v1023 = vpop.f32.mrb[0].mxu0
        %v1024 = vadd.f32 %v799, %v1023
        %v1025 = vpop.f32.mrb[0].mxu0
        %1026 = vmatprep.mubr.f32.mxu0 0.0
        %1027 = vmatmul.mubr.f32.gmra.mrb[0].mxu0 %v483
        %v1028 = vpop.f32.mrb[0].mxu0
        %v1029 = vadd.f32 %v804, %v1028
        %v1030 = vpop.f32.mrb[0].mxu0
        %1031 = vmatprep.mubr.f32.mxu0 0.0
        %1032 = vmatmul.mubr.f32.gmra.mrb[0].mxu0 %v484
        %v1033 = vpop.f32.mrb[0].mxu0
        %v1034 = vadd.f32 %v809, %v1033
        %v1035 = vpop.f32.mrb[0].mxu0
        %1036 = vmatprep.mubr.f32.mxu0 0.0
        %1037 = vmatmul.mubr.f32.gmra.mrb[0].mxu0 %v485
        %v1038 = vpop.f32.mrb[0].mxu0
        %v1039 = vadd.f32 %v814, %v1038
        %v1040 = vpop.f32.mrb[0].mxu0
        %1041 = vmatprep.mubr.f32.mxu0 0.0
        %1042 = vmatmul.mubr.f32.gmra.mrb[0].mxu0 %v486
        %v1043 = vpop.f32.mrb[0].mxu0
        %v1044 = vadd.f32 %v819, %v1043
        %v1045 = vpop.f32.mrb[0].mxu0
        %1046 = vmatprep.mubr.f32.mxu0 0.0
        %1047 = vmatmul.mubr.f32.gmra.mrb[0].mxu0 %v487
        %v1048 = vpop.f32.mrb[0].mxu0
        %v1049 = vadd.f32 %v824, %v1048
        %v1050 = vpop.f32.mrb[0].mxu0
        %1051 = vmatprep.mubr.f32.mxu0 0.0
        %1052 = vmatmul.mubr.f32.gmra.mrb[0].mxu0 %v488
        %v1053 = vpop.f32.mrb[0].mxu0
        %v1054 = vadd.f32 %v829, %v1053
        %v1055 = vpop.f32.mrb[0].mxu0
        %1056 = vmatprep.mubr.f32.mxu0 0.0
        %1057 = vmatmul.mubr.f32.gmra.mrb[0].mxu0 %v489
        %v1058 = vpop.f32.mrb[0].mxu0
        %v1059 = vadd.f32 %v834, %v1058
        %v1060 = vpop.f32.mrb[0].mxu0
        %1061 = vmatprep.mubr.f32.mxu0 0.0
        %1062 = vmatmul.mubr.f32.gmra.mrb[0].mxu0 %v490
        %v1063 = vpop.f32.mrb[0].mxu0
        %v1064 = vadd.f32 %v839, %v1063
        %v1065 = vpop.f32.mrb[0].mxu0
        %1066 = vmatprep.mubr.f32.mxu0 0.0
        %1067 = vmatmul.mubr.f32.gmra.mrb[0].mxu0 %v491
        %v1068 = vpop.f32.mrb[0].mxu0
        %v1069 = vadd.f32 %v844, %v1068
        %v1070 = vpop.f32.mrb[0].mxu0
        %1071 = vmatprep.mubr.f32.mxu0 0.0
        %1072 = vmatmul.mubr.f32.gmra.mrb[0].mxu0 %v492
        %v1073 = vpop.f32.mrb[0].mxu0
        %v1074 = vadd.f32 %v849, %v1073
        %v1075 = vpop.f32.mrb[0].mxu0
        %1076 = vmatprep.mubr.f32.mxu0 0.0
        %1077 = vmatmul.mubr.f32.gmra.mrb[0].mxu0 %v493
        %v1078 = vpop.f32.mrb[0].mxu0
        %v1079 = vadd.f32 %v854, %v1078
        %v1080 = vpop.f32.mrb[0].mxu0
        %1081 = vmatprep.mubr.f32.mxu0 0.0
        %1082 = vmatmul.mubr.f32.gmra.mrb[0].mxu0 %v494
        %v1083 = vpop.f32.mrb[0].mxu0
        %v1084 = vadd.f32 %v859, %v1083
        %v1085 = vpop.f32.mrb[0].mxu0
        %1086 = vmatprep.mubr.f32.mxu0 0.0
        %1087 = vmatmul.mubr.f32.gmra.mrb[0].mxu0 %v495
        %v1088 = vpop.f32.mrb[0].mxu0
        %v1089 = vadd.f32 %v864, %v1088
        %v1090 = vpop.f32.mrb[0].mxu0
        %1091 = vdwg.mxu0
        %s1092 = scalar_lea.vmem [#allocation6], 768
        %v1093 = vld [vmem:[%s1092] sm:$0xff]
        %v1094 = vld [vmem:[%s1092 + $0x8] sm:$0xff]
        %v1095 = vld [vmem:[%s1092 + $0x10] sm:$0xff]
        %v1096 = vld [vmem:[%s1092 + $0x18] sm:$0xff]
        %v1097 = vld [vmem:[%s1092 + $0x20] sm:$0xff]
        %v1098 = vld [vmem:[%s1092 + $0x28] sm:$0xff]
        %v1099 = vld [vmem:[%s1092 + $0x30] sm:$0xff]
        %v1100 = vld [vmem:[%s1092 + $0x38] sm:$0xff]
        %v1101 = vld [vmem:[%s1092 + $0x40] sm:$0xff]
        %v1102 = vld [vmem:[%s1092 + $0x48] sm:$0xff]
        %v1103 = vld [vmem:[%s1092 + $0x50] sm:$0xff]
        %v1104 = vld [vmem:[%s1092 + $0x58] sm:$0xff]
        %v1105 = vld [vmem:[%s1092 + $0x60] sm:$0xff]
        %v1106 = vld [vmem:[%s1092 + $0x68] sm:$0xff]
        %v1107 = vld [vmem:[%s1092 + $0x70] sm:$0xff]
        %v1108 = vld [vmem:[%s1092 + $0x78] sm:$0xff]
        %1109 = vmatprep.subr.mxu0 0.0
        %1110 = vmatpush1.msra.mxu0 %v1093
        %1111 = vmatprep.subr.mxu0 0.0
        %1112 = vmatpush1.msra.mxu0 %v1094
        %1113 = vmatprep.subr.mxu0 0.0
        %1114 = vmatpush1.msra.mxu0 %v1095
        %1115 = vmatprep.subr.mxu0 0.0
        %1116 = vmatpush1.msra.mxu0 %v1096
        %1117 = vmatprep.subr.mxu0 0.0
        %1118 = vmatpush1.msra.mxu0 %v1097
        %1119 = vmatprep.subr.mxu0 0.0
        %1120 = vmatpush1.msra.mxu0 %v1098
        %1121 = vmatprep.subr.mxu0 0.0
        %1122 = vmatpush1.msra.mxu0 %v1099
        %1123 = vmatprep.subr.mxu0 0.0
        %1124 = vmatpush1.msra.mxu0 %v1100
        %1125 = vmatprep.subr.mxu0 0.0
        %1126 = vmatpush1.msra.mxu0 %v1101
        %1127 = vmatprep.subr.mxu0 0.0
        %1128 = vmatpush1.msra.mxu0 %v1102
        %1129 = vmatprep.subr.mxu0 0.0
        %1130 = vmatpush1.msra.mxu0 %v1103
        %1131 = vmatprep.subr.mxu0 0.0
        %1132 = vmatpush1.msra.mxu0 %v1104
        %1133 = vmatprep.subr.mxu0 0.0
        %1134 = vmatpush1.msra.mxu0 %v1105
        %1135 = vmatprep.subr.mxu0 0.0
        %1136 = vmatpush1.msra.mxu0 %v1106
        %1137 = vmatprep.subr.mxu0 0.0
        %1138 = vmatpush1.msra.mxu0 %v1107
        %1139 = vmatprep.subr.mxu0 0.0
        %1140 = vmatpush1.msra.mxu0 %v1108
        %1141 = vmatprep.subr.mxu0 0.0
        %1142 = vmatpush1.msra.mxu0 0.0
        %1143 = vmatprep.subr.mxu0 0.0
        %1144 = vmatpush1.msra.mxu0 0.0
        %1145 = vmatprep.subr.mxu0 0.0
        %1146 = vmatpush1.msra.mxu0 0.0
        %1147 = vmatprep.subr.mxu0 0.0
        %1148 = vmatpush1.msra.mxu0 0.0
        %1149 = vmatprep.subr.mxu0 0.0
        %1150 = vmatpush1.msra.mxu0 0.0
        %1151 = vmatprep.subr.mxu0 0.0
        %1152 = vmatpush1.msra.mxu0 0.0
        %1153 = vmatprep.subr.mxu0 0.0
        %1154 = vmatpush1.msra.mxu0 0.0
        %1155 = vmatprep.subr.mxu0 0.0
        %1156 = vmatpush1.msra.mxu0 0.0
        %1157 = vmatprep.subr.mxu0 0.0
        %1158 = vmatpush1.msra.mxu0 0.0
        %1159 = vmatprep.subr.mxu0 0.0
        %1160 = vmatpush1.msra.mxu0 0.0
        %1161 = vmatprep.subr.mxu0 0.0
        %1162 = vmatpush1.msra.mxu0 0.0
        %1163 = vmatprep.subr.mxu0 0.0
        %1164 = vmatpush1.msra.mxu0 0.0
        %1165 = vmatprep.subr.mxu0 0.0
        %1166 = vmatpush1.msra.mxu0 0.0
        %1167 = vmatprep.subr.mxu0 0.0
        %1168 = vmatpush1.msra.mxu0 0.0
        %1169 = vmatprep.subr.mxu0 0.0
        %1170 = vmatpush1.msra.mxu0 0.0
        %1171 = vmatprep.subr.mxu0 0.0
        %1172 = vmatpush1.msra.mxu0 0.0
        %1173 = vmatprep.mubr.f32.mxu0 0.0
        %1174 = vmatmul.mubr.f32.gmra.mrb[0].mxu0 %v468
        %v1175 = vpop.f32.mrb[0].mxu0
        %v1176 = vadd.f32 0.0, %v1175
        %v1177 = vpop.f32.mrb[0].mxu0
        %1178 = vmatprep.mubr.f32.mxu0 0.0
        %1179 = vmatmul.mubr.f32.gmra.mrb[0].mxu0 %v469
        %v1180 = vpop.f32.mrb[0].mxu0
        %v1181 = vadd.f32 0.0, %v1180
        %v1182 = vpop.f32.mrb[0].mxu0
        %1183 = vmatprep.mubr.f32.mxu0 0.0
        %1184 = vmatmul.mubr.f32.gmra.mrb[0].mxu0 %v470
        %v1185 = vpop.f32.mrb[0].mxu0
        %v1186 = vadd.f32 0.0, %v1185
        %v1187 = vpop.f32.mrb[0].mxu0
        %1188 = vmatprep.mubr.f32.mxu0 0.0
        %1189 = vmatmul.mubr.f32.gmra.mrb[0].mxu0 %v471
        %v1190 = vpop.f32.mrb[0].mxu0
        %v1191 = vadd.f32 0.0, %v1190
        %v1192 = vpop.f32.mrb[0].mxu0
        %1193 = vmatprep.mubr.f32.mxu0 0.0
        %1194 = vmatmul.mubr.f32.gmra.mrb[0].mxu0 %v472
        %v1195 = vpop.f32.mrb[0].mxu0
        %v1196 = vadd.f32 0.0, %v1195
        %v1197 = vpop.f32.mrb[0].mxu0
        %1198 = vmatprep.mubr.f32.mxu0 0.0
        %1199 = vmatmul.mubr.f32.gmra.mrb[0].mxu0 %v473
        %v1200 = vpop.f32.mrb[0].mxu0
        %v1201 = vadd.f32 0.0, %v1200
        %v1202 = vpop.f32.mrb[0].mxu0
        %1203 = vmatprep.mubr.f32.mxu0 0.0
        %1204 = vmatmul.mubr.f32.gmra.mrb[0].mxu0 %v474
        %v1205 = vpop.f32.mrb[0].mxu0
        %v1206 = vadd.f32 0.0, %v1205
        %v1207 = vpop.f32.mrb[0].mxu0
        %1208 = vmatprep.mubr.f32.mxu0 0.0
        %1209 = vmatmul.mubr.f32.gmra.mrb[0].mxu0 %v475
        %v1210 = vpop.f32.mrb[0].mxu0
        %v1211 = vadd.f32 0.0, %v1210
        %v1212 = vpop.f32.mrb[0].mxu0
        %1213 = vmatprep.mubr.f32.mxu0 0.0
        %1214 = vmatmul.mubr.f32.gmra.mrb[0].mxu0 %v476
        %v1215 = vpop.f32.mrb[0].mxu0
        %v1216 = vadd.f32 0.0, %v1215
        %v1217 = vpop.f32.mrb[0].mxu0
        %1218 = vmatprep.mubr.f32.mxu0 0.0
        %1219 = vmatmul.mubr.f32.gmra.mrb[0].mxu0 %v477
        %v1220 = vpop.f32.mrb[0].mxu0
        %v1221 = vadd.f32 0.0, %v1220
        %v1222 = vpop.f32.mrb[0].mxu0
        %1223 = vmatprep.mubr.f32.mxu0 0.0
        %1224 = vmatmul.mubr.f32.gmra.mrb[0].mxu0 %v478
        %v1225 = vpop.f32.mrb[0].mxu0
        %v1226 = vadd.f32 0.0, %v1225
        %v1227 = vpop.f32.mrb[0].mxu0
        %1228 = vmatprep.mubr.f32.mxu0 0.0
        %1229 = vmatmul.mubr.f32.gmra.mrb[0].mxu0 %v479
        %v1230 = vpop.f32.mrb[0].mxu0
        %v1231 = vadd.f32 0.0, %v1230
        %v1232 = vpop.f32.mrb[0].mxu0
        %1233 = vmatprep.mubr.f32.mxu0 0.0
        %1234 = vmatmul.mubr.f32.gmra.mrb[0].mxu0 %v480
        %v1235 = vpop.f32.mrb[0].mxu0
        %v1236 = vadd.f32 0.0, %v1235
        %v1237 = vpop.f32.mrb[0].mxu0
        %1238 = vmatprep.mubr.f32.mxu0 0.0
        %1239 = vmatmul.mubr.f32.gmra.mrb[0].mxu0 %v481
        %v1240 = vpop.f32.mrb[0].mxu0
        %v1241 = vadd.f32 0.0, %v1240
        %v1242 = vpop.f32.mrb[0].mxu0
        %1243 = vmatprep.mubr.f32.mxu0 0.0
        %1244 = vmatmul.mubr.f32.gmra.mrb[0].mxu0 %v482
        %v1245 = vpop.f32.mrb[0].mxu0
        %v1246 = vadd.f32 0.0, %v1245
        %v1247 = vpop.f32.mrb[0].mxu0
        %1248 = vmatprep.mubr.f32.mxu0 0.0
        %1249 = vmatmul.mubr.f32.gmra.mrb[0].mxu0 %v483
        %v1250 = vpop.f32.mrb[0].mxu0
        %v1251 = vadd.f32 0.0, %v1250
        %v1252 = vpop.f32.mrb[0].mxu0
        %1253 = vmatprep.mubr.f32.mxu0 0.0
        %1254 = vmatmul.mubr.f32.gmra.mrb[0].mxu0 %v484
        %v1255 = vpop.f32.mrb[0].mxu0
        %v1256 = vadd.f32 0.0, %v1255
        %v1257 = vpop.f32.mrb[0].mxu0
        %1258 = vmatprep.mubr.f32.mxu0 0.0
        %1259 = vmatmul.mubr.f32.gmra.mrb[0].mxu0 %v485
        %v1260 = vpop.f32.mrb[0].mxu0
        %v1261 = vadd.f32 0.0, %v1260
        %v1262 = vpop.f32.mrb[0].mxu0
        %1263 = vmatprep.mubr.f32.mxu0 0.0
        %1264 = vmatmul.mubr.f32.gmra.mrb[0].mxu0 %v486
        %v1265 = vpop.f32.mrb[0].mxu0
        %v1266 = vadd.f32 0.0, %v1265
        %v1267 = vpop.f32.mrb[0].mxu0
        %1268 = vmatprep.mubr.f32.mxu0 0.0
        %1269 = vmatmul.mubr.f32.gmra.mrb[0].mxu0 %v487
        %v1270 = vpop.f32.mrb[0].mxu0
        %v1271 = vadd.f32 0.0, %v1270
        %v1272 = vpop.f32.mrb[0].mxu0
        %1273 = vmatprep.mubr.f32.mxu0 0.0
        %1274 = vmatmul.mubr.f32.gmra.mrb[0].mxu0 %v488
        %v1275 = vpop.f32.mrb[0].mxu0
        %v1276 = vadd.f32 0.0, %v1275
        %v1277 = vpop.f32.mrb[0].mxu0
        %1278 = vmatprep.mubr.f32.mxu0 0.0
        %1279 = vmatmul.mubr.f32.gmra.mrb[0].mxu0 %v489
        %v1280 = vpop.f32.mrb[0].mxu0
        %v1281 = vadd.f32 0.0, %v1280
        %v1282 = vpop.f32.mrb[0].mxu0
        %1283 = vmatprep.mubr.f32.mxu0 0.0
        %1284 = vmatmul.mubr.f32.gmra.mrb[0].mxu0 %v490
        %v1285 = vpop.f32.mrb[0].mxu0
        %v1286 = vadd.f32 0.0, %v1285
        %v1287 = vpop.f32.mrb[0].mxu0
        %1288 = vmatprep.mubr.f32.mxu0 0.0
        %1289 = vmatmul.mubr.f32.gmra.mrb[0].mxu0 %v491
        %v1290 = vpop.f32.mrb[0].mxu0
        %v1291 = vadd.f32 0.0, %v1290
        %v1292 = vpop.f32.mrb[0].mxu0
        %1293 = vmatprep.mubr.f32.mxu0 0.0
        %1294 = vmatmul.mubr.f32.gmra.mrb[0].mxu0 %v492
        %v1295 = vpop.f32.mrb[0].mxu0
        %v1296 = vadd.f32 0.0, %v1295
        %v1297 = vpop.f32.mrb[0].mxu0
        %1298 = vmatprep.mubr.f32.mxu0 0.0
        %1299 = vmatmul.mubr.f32.gmra.mrb[0].mxu0 %v493
        %v1300 = vpop.f32.mrb[0].mxu0
        %v1301 = vadd.f32 0.0, %v1300
        %v1302 = vpop.f32.mrb[0].mxu0
        %1303 = vmatprep.mubr.f32.mxu0 0.0
        %1304 = vmatmul.mubr.f32.gmra.mrb[0].mxu0 %v494
        %v1305 = vpop.f32.mrb[0].mxu0
        %v1306 = vadd.f32 0.0, %v1305
        %v1307 = vpop.f32.mrb[0].mxu0
        %1308 = vmatprep.mubr.f32.mxu0 0.0
        %1309 = vmatmul.mubr.f32.gmra.mrb[0].mxu0 %v495
        %v1310 = vpop.f32.mrb[0].mxu0
        %v1311 = vadd.f32 0.0, %v1310
        %v1312 = vpop.f32.mrb[0].mxu0
        %1313 = vmatprep.mubr.f32.mxu0 0.0
        %1314 = vmatmul.mubr.f32.gmra.mrb[0].mxu0 %v496
        %v1315 = vpop.f32.mrb[0].mxu0
        %v1316 = vadd.f32 0.0, %v1315
        %v1317 = vpop.f32.mrb[0].mxu0
        %1318 = vmatprep.mubr.f32.mxu0 0.0
        %1319 = vmatmul.mubr.f32.gmra.mrb[0].mxu0 %v497
        %v1320 = vpop.f32.mrb[0].mxu0
        %v1321 = vadd.f32 0.0, %v1320
        %v1322 = vpop.f32.mrb[0].mxu0
        %1323 = vmatprep.mubr.f32.mxu0 0.0
        %1324 = vmatmul.mubr.f32.gmra.mrb[0].mxu0 %v498
        %v1325 = vpop.f32.mrb[0].mxu0
        %v1326 = vadd.f32 0.0, %v1325
        %v1327 = vpop.f32.mrb[0].mxu0
        %1328 = vmatprep.mubr.f32.mxu0 0.0
        %1329 = vmatmul.mubr.f32.gmra.mrb[0].mxu0 %v499
        %v1330 = vpop.f32.mrb[0].mxu0
        %v1331 = vadd.f32 0.0, %v1330
        %v1332 = vpop.f32.mrb[0].mxu0
        %1333 = vdwg.mxu0
        %v1334 = vadd.f32 %v934, %v1176
        %v1335 = vadd.f32 %v939, %v1181
        %v1336 = vadd.f32 %v944, %v1186
        %v1337 = vadd.f32 %v949, %v1191
        %v1338 = vadd.f32 %v954, %v1196
        %v1339 = vadd.f32 %v959, %v1201
        %v1340 = vadd.f32 %v964, %v1206
        %v1341 = vadd.f32 %v969, %v1211
        %v1342 = vadd.f32 %v974, %v1216
        %v1343 = vadd.f32 %v979, %v1221
        %v1344 = vadd.f32 %v984, %v1226
        %v1345 = vadd.f32 %v989, %v1231
        %v1346 = vadd.f32 %v994, %v1236
        %v1347 = vadd.f32 %v999, %v1241
        %v1348 = vadd.f32 %v1004, %v1246
        %v1349 = vadd.f32 %v1009, %v1251
        %v1350 = vadd.f32 %v1014, %v1256
        %v1351 = vadd.f32 %v1019, %v1261
        %v1352 = vadd.f32 %v1024, %v1266
        %v1353 = vadd.f32 %v1029, %v1271
        %v1354 = vadd.f32 %v1034, %v1276
        %v1355 = vadd.f32 %v1039, %v1281
        %v1356 = vadd.f32 %v1044, %v1286
        %v1357 = vadd.f32 %v1049, %v1291
        %v1358 = vadd.f32 %v1054, %v1296
        %v1359 = vadd.f32 %v1059, %v1301
        %v1360 = vadd.f32 %v1064, %v1306
        %v1361 = vadd.f32 %v1069, %v1311
        %v1362 = vadd.f32 %v1074, %v1316
        %v1363 = vadd.f32 %v1079, %v1321
        %v1364 = vadd.f32 %v1084, %v1326
        %v1365 = vadd.f32 %v1089, %v1331
        %s1366 = scalar_lea.vmem [#allocation6], 128
        %v1367 = vld [vmem:[%s1366] sm:$0xff]
        %v1368 = vld [vmem:[%s1366 + $0x8] sm:$0xff]
        %v1369 = vld [vmem:[%s1366 + $0x10] sm:$0xff]
        %v1370 = vld [vmem:[%s1366 + $0x18] sm:$0xff]
        %v1371 = vld [vmem:[%s1366 + $0x20] sm:$0xff]
        %v1372 = vld [vmem:[%s1366 + $0x28] sm:$0xff]
        %v1373 = vld [vmem:[%s1366 + $0x30] sm:$0xff]
        %v1374 = vld [vmem:[%s1366 + $0x38] sm:$0xff]
        %v1375 = vld [vmem:[%s1366 + $0x40] sm:$0xff]
        %v1376 = vld [vmem:[%s1366 + $0x48] sm:$0xff]
        %v1377 = vld [vmem:[%s1366 + $0x50] sm:$0xff]
        %v1378 = vld [vmem:[%s1366 + $0x58] sm:$0xff]
        %v1379 = vld [vmem:[%s1366 + $0x60] sm:$0xff]
        %v1380 = vld [vmem:[%s1366 + $0x68] sm:$0xff]
        %v1381 = vld [vmem:[%s1366 + $0x70] sm:$0xff]
        %v1382 = vld [vmem:[%s1366 + $0x78] sm:$0xff]
        %1383 = vmatprep.subr.mxu0 0.0
        %1384 = vmatpush1.msra.mxu0 %v1367
        %1385 = vmatprep.subr.mxu0 0.0
        %1386 = vmatpush1.msra.mxu0 %v1368
        %1387 = vmatprep.subr.mxu0 0.0
        %1388 = vmatpush1.msra.mxu0 %v1369
        %1389 = vmatprep.subr.mxu0 0.0
        %1390 = vmatpush1.msra.mxu0 %v1370
        %1391 = vmatprep.subr.mxu0 0.0
        %1392 = vmatpush1.msra.mxu0 %v1371
        %1393 = vmatprep.subr.mxu0 0.0
        %1394 = vmatpush1.msra.mxu0 %v1372
        %1395 = vmatprep.subr.mxu0 0.0
        %1396 = vmatpush1.msra.mxu0 %v1373
        %1397 = vmatprep.subr.mxu0 0.0
        %1398 = vmatpush1.msra.mxu0 %v1374
        %1399 = vmatprep.subr.mxu0 0.0
        %1400 = vmatpush1.msra.mxu0 %v1375
        %1401 = vmatprep.subr.mxu0 0.0
        %1402 = vmatpush1.msra.mxu0 %v1376
        %1403 = vmatprep.subr.mxu0 0.0
        %1404 = vmatpush1.msra.mxu0 %v1377
        %1405 = vmatprep.subr.mxu0 0.0
        %1406 = vmatpush1.msra.mxu0 %v1378
        %1407 = vmatprep.subr.mxu0 0.0
        %1408 = vmatpush1.msra.mxu0 %v1379
        %1409 = vmatprep.subr.mxu0 0.0
        %1410 = vmatpush1.msra.mxu0 %v1380
        %1411 = vmatprep.subr.mxu0 0.0
        %1412 = vmatpush1.msra.mxu0 %v1381
        %1413 = vmatprep.subr.mxu0 0.0
        %1414 = vmatpush1.msra.mxu0 %v1382
        %1415 = vmatprep.subr.mxu0 0.0
        %1416 = vmatpush1.msra.mxu0 0.0
        %1417 = vmatprep.subr.mxu0 0.0
        %1418 = vmatpush1.msra.mxu0 0.0
        %1419 = vmatprep.subr.mxu0 0.0
        %1420 = vmatpush1.msra.mxu0 0.0
        %1421 = vmatprep.subr.mxu0 0.0
        %1422 = vmatpush1.msra.mxu0 0.0
        %1423 = vmatprep.subr.mxu0 0.0
        %1424 = vmatpush1.msra.mxu0 0.0
        %1425 = vmatprep.subr.mxu0 0.0
        %1426 = vmatpush1.msra.mxu0 0.0
        %1427 = vmatprep.subr.mxu0 0.0
        %1428 = vmatpush1.msra.mxu0 0.0
        %1429 = vmatprep.subr.mxu0 0.0
        %1430 = vmatpush1.msra.mxu0 0.0
        %1431 = vmatprep.subr.mxu0 0.0
        %1432 = vmatpush1.msra.mxu0 0.0
        %1433 = vmatprep.subr.mxu0 0.0
        %1434 = vmatpush1.msra.mxu0 0.0
        %1435 = vmatprep.subr.mxu0 0.0
        %1436 = vmatpush1.msra.mxu0 0.0
        %1437 = vmatprep.subr.mxu0 0.0
        %1438 = vmatpush1.msra.mxu0 0.0
        %1439 = vmatprep.subr.mxu0 0.0
        %1440 = vmatpush1.msra.mxu0 0.0
        %1441 = vmatprep.subr.mxu0 0.0
        %1442 = vmatpush1.msra.mxu0 0.0
        %1443 = vmatprep.subr.mxu0 0.0
        %1444 = vmatpush1.msra.mxu0 0.0
        %1445 = vmatprep.subr.mxu0 0.0
        %1446 = vmatpush1.msra.mxu0 0.0
        %1447 = vmatprep.mubr.f32.mxu0 0.0
        %1448 = vmatmul.mubr.f32.gmra.mrb[0].mxu0 %v355
        %v1449 = vpop.f32.mrb[0].mxu0
        %v1450 = vadd.f32 0.0, %v1449
        %v1451 = vpop.f32.mrb[0].mxu0
        %1452 = vmatprep.mubr.f32.mxu0 0.0
        %1453 = vmatmul.mubr.f32.gmra.mrb[0].mxu0 %v356
        %v1454 = vpop.f32.mrb[0].mxu0
        %v1455 = vadd.f32 0.0, %v1454
        %v1456 = vpop.f32.mrb[0].mxu0
        %1457 = vmatprep.mubr.f32.mxu0 0.0
        %1458 = vmatmul.mubr.f32.gmra.mrb[0].mxu0 %v357
        %v1459 = vpop.f32.mrb[0].mxu0
        %v1460 = vadd.f32 0.0, %v1459
        %v1461 = vpop.f32.mrb[0].mxu0
        %1462 = vmatprep.mubr.f32.mxu0 0.0
        %1463 = vmatmul.mubr.f32.gmra.mrb[0].mxu0 %v358
        %v1464 = vpop.f32.mrb[0].mxu0
        %v1465 = vadd.f32 0.0, %v1464
        %v1466 = vpop.f32.mrb[0].mxu0
        %1467 = vmatprep.mubr.f32.mxu0 0.0
        %1468 = vmatmul.mubr.f32.gmra.mrb[0].mxu0 %v359
        %v1469 = vpop.f32.mrb[0].mxu0
        %v1470 = vadd.f32 0.0, %v1469
        %v1471 = vpop.f32.mrb[0].mxu0
        %1472 = vmatprep.mubr.f32.mxu0 0.0
        %1473 = vmatmul.mubr.f32.gmra.mrb[0].mxu0 %v360
        %v1474 = vpop.f32.mrb[0].mxu0
        %v1475 = vadd.f32 0.0, %v1474
        %v1476 = vpop.f32.mrb[0].mxu0
        %1477 = vmatprep.mubr.f32.mxu0 0.0
        %1478 = vmatmul.mubr.f32.gmra.mrb[0].mxu0 %v361
        %v1479 = vpop.f32.mrb[0].mxu0
        %v1480 = vadd.f32 0.0, %v1479
        %v1481 = vpop.f32.mrb[0].mxu0
        %1482 = vmatprep.mubr.f32.mxu0 0.0
        %1483 = vmatmul.mubr.f32.gmra.mrb[0].mxu0 %v362
        %v1484 = vpop.f32.mrb[0].mxu0
        %v1485 = vadd.f32 0.0, %v1484
        %v1486 = vpop.f32.mrb[0].mxu0
        %1487 = vmatprep.mubr.f32.mxu0 0.0
        %1488 = vmatmul.mubr.f32.gmra.mrb[0].mxu0 %v363
        %v1489 = vpop.f32.mrb[0].mxu0
        %v1490 = vadd.f32 0.0, %v1489
        %v1491 = vpop.f32.mrb[0].mxu0
        %1492 = vmatprep.mubr.f32.mxu0 0.0
        %1493 = vmatmul.mubr.f32.gmra.mrb[0].mxu0 %v364
        %v1494 = vpop.f32.mrb[0].mxu0
        %v1495 = vadd.f32 0.0, %v1494
        %v1496 = vpop.f32.mrb[0].mxu0
        %1497 = vmatprep.mubr.f32.mxu0 0.0
        %1498 = vmatmul.mubr.f32.gmra.mrb[0].mxu0 %v365
        %v1499 = vpop.f32.mrb[0].mxu0
        %v1500 = vadd.f32 0.0, %v1499
        %v1501 = vpop.f32.mrb[0].mxu0
        %1502 = vmatprep.mubr.f32.mxu0 0.0
        %1503 = vmatmul.mubr.f32.gmra.mrb[0].mxu0 %v366
        %v1504 = vpop.f32.mrb[0].mxu0
        %v1505 = vadd.f32 0.0, %v1504
        %v1506 = vpop.f32.mrb[0].mxu0
        %1507 = vmatprep.mubr.f32.mxu0 0.0
        %1508 = vmatmul.mubr.f32.gmra.mrb[0].mxu0 %v367
        %v1509 = vpop.f32.mrb[0].mxu0
        %v1510 = vadd.f32 0.0, %v1509
        %v1511 = vpop.f32.mrb[0].mxu0
        %1512 = vmatprep.mubr.f32.mxu0 0.0
        %1513 = vmatmul.mubr.f32.gmra.mrb[0].mxu0 %v368
        %v1514 = vpop.f32.mrb[0].mxu0
        %v1515 = vadd.f32 0.0, %v1514
        %v1516 = vpop.f32.mrb[0].mxu0
        %1517 = vmatprep.mubr.f32.mxu0 0.0
        %1518 = vmatmul.mubr.f32.gmra.mrb[0].mxu0 %v369
        %v1519 = vpop.f32.mrb[0].mxu0
        %v1520 = vadd.f32 0.0, %v1519
        %v1521 = vpop.f32.mrb[0].mxu0
        %1522 = vmatprep.mubr.f32.mxu0 0.0
        %1523 = vmatmul.mubr.f32.gmra.mrb[0].mxu0 %v370
        %v1524 = vpop.f32.mrb[0].mxu0
        %v1525 = vadd.f32 0.0, %v1524
        %v1526 = vpop.f32.mrb[0].mxu0
        %1527 = vmatprep.mubr.f32.mxu0 0.0
        %1528 = vmatmul.mubr.f32.gmra.mrb[0].mxu0 %v371
        %v1529 = vpop.f32.mrb[0].mxu0
        %v1530 = vadd.f32 0.0, %v1529
        %v1531 = vpop.f32.mrb[0].mxu0
        %1532 = vmatprep.mubr.f32.mxu0 0.0
        %1533 = vmatmul.mubr.f32.gmra.mrb[0].mxu0 %v372
        %v1534 = vpop.f32.mrb[0].mxu0
        %v1535 = vadd.f32 0.0, %v1534
        %v1536 = vpop.f32.mrb[0].mxu0
        %1537 = vmatprep.mubr.f32.mxu0 0.0
        %1538 = vmatmul.mubr.f32.gmra.mrb[0].mxu0 %v373
        %v1539 = vpop.f32.mrb[0].mxu0
        %v1540 = vadd.f32 0.0, %v1539
        %v1541 = vpop.f32.mrb[0].mxu0
        %1542 = vmatprep.mubr.f32.mxu0 0.0
        %1543 = vmatmul.mubr.f32.gmra.mrb[0].mxu0 %v374
        %v1544 = vpop.f32.mrb[0].mxu0
        %v1545 = vadd.f32 0.0, %v1544
        %v1546 = vpop.f32.mrb[0].mxu0
        %1547 = vmatprep.mubr.f32.mxu0 0.0
        %1548 = vmatmul.mubr.f32.gmra.mrb[0].mxu0 %v375
        %v1549 = vpop.f32.mrb[0].mxu0
        %v1550 = vadd.f32 0.0, %v1549
        %v1551 = vpop.f32.mrb[0].mxu0
        %1552 = vmatprep.mubr.f32.mxu0 0.0
        %1553 = vmatmul.mubr.f32.gmra.mrb[0].mxu0 %v376
        %v1554 = vpop.f32.mrb[0].mxu0
        %v1555 = vadd.f32 0.0, %v1554
        %v1556 = vpop.f32.mrb[0].mxu0
        %1557 = vmatprep.mubr.f32.mxu0 0.0
        %1558 = vmatmul.mubr.f32.gmra.mrb[0].mxu0 %v377
        %v1559 = vpop.f32.mrb[0].mxu0
        %v1560 = vadd.f32 0.0, %v1559
        %v1561 = vpop.f32.mrb[0].mxu0
        %1562 = vmatprep.mubr.f32.mxu0 0.0
        %1563 = vmatmul.mubr.f32.gmra.mrb[0].mxu0 %v378
        %v1564 = vpop.f32.mrb[0].mxu0
        %v1565 = vadd.f32 0.0, %v1564
        %v1566 = vpop.f32.mrb[0].mxu0
        %1567 = vmatprep.mubr.f32.mxu0 0.0
        %1568 = vmatmul.mubr.f32.gmra.mrb[0].mxu0 %v379
        %v1569 = vpop.f32.mrb[0].mxu0
        %v1570 = vadd.f32 0.0, %v1569
        %v1571 = vpop.f32.mrb[0].mxu0
        %1572 = vmatprep.mubr.f32.mxu0 0.0
        %1573 = vmatmul.mubr.f32.gmra.mrb[0].mxu0 %v380
        %v1574 = vpop.f32.mrb[0].mxu0
        %v1575 = vadd.f32 0.0, %v1574
        %v1576 = vpop.f32.mrb[0].mxu0
        %1577 = vmatprep.mubr.f32.mxu0 0.0
        %1578 = vmatmul.mubr.f32.gmra.mrb[0].mxu0 %v381
        %v1579 = vpop.f32.mrb[0].mxu0
        %v1580 = vadd.f32 0.0, %v1579
        %v1581 = vpop.f32.mrb[0].mxu0
        %1582 = vmatprep.mubr.f32.mxu0 0.0
        %1583 = vmatmul.mubr.f32.gmra.mrb[0].mxu0 %v382
        %v1584 = vpop.f32.mrb[0].mxu0
        %v1585 = vadd.f32 0.0, %v1584
        %v1586 = vpop.f32.mrb[0].mxu0
        %1587 = vmatprep.mubr.f32.mxu0 0.0
        %1588 = vmatmul.mubr.f32.gmra.mrb[0].mxu0 %v383
        %v1589 = vpop.f32.mrb[0].mxu0
        %v1590 = vadd.f32 0.0, %v1589
        %v1591 = vpop.f32.mrb[0].mxu0
        %1592 = vmatprep.mubr.f32.mxu0 0.0
        %1593 = vmatmul.mubr.f32.gmra.mrb[0].mxu0 %v384
        %v1594 = vpop.f32.mrb[0].mxu0
        %v1595 = vadd.f32 0.0, %v1594
        %v1596 = vpop.f32.mrb[0].mxu0
        %1597 = vmatprep.mubr.f32.mxu0 0.0
        %1598 = vmatmul.mubr.f32.gmra.mrb[0].mxu0 %v385
        %v1599 = vpop.f32.mrb[0].mxu0
        %v1600 = vadd.f32 0.0, %v1599
        %v1601 = vpop.f32.mrb[0].mxu0
        %1602 = vmatprep.mubr.f32.mxu0 0.0
        %1603 = vmatmul.mubr.f32.gmra.mrb[0].mxu0 %v386
        %v1604 = vpop.f32.mrb[0].mxu0
        %v1605 = vadd.f32 0.0, %v1604
        %v1606 = vpop.f32.mrb[0].mxu0
        %1607 = vdwg.mxu0
        %v1608 = vadd.f32 %v1334, %v1450
        %v1609 = vadd.f32 %v1335, %v1455
        %v1610 = vadd.f32 %v1336, %v1460
        %v1611 = vadd.f32 %v1337, %v1465
        %v1612 = vadd.f32 %v1338, %v1470
        %v1613 = vadd.f32 %v1339, %v1475
        %v1614 = vadd.f32 %v1340, %v1480
        %v1615 = vadd.f32 %v1341, %v1485
        %v1616 = vadd.f32 %v1342, %v1490
        %v1617 = vadd.f32 %v1343, %v1495
        %v1618 = vadd.f32 %v1344, %v1500
        %v1619 = vadd.f32 %v1345, %v1505
        %v1620 = vadd.f32 %v1346, %v1510
        %v1621 = vadd.f32 %v1347, %v1515
        %v1622 = vadd.f32 %v1348, %v1520
        %v1623 = vadd.f32 %v1349, %v1525
        %v1624 = vadd.f32 %v1350, %v1530
        %v1625 = vadd.f32 %v1351, %v1535
        %v1626 = vadd.f32 %v1352, %v1540
        %v1627 = vadd.f32 %v1353, %v1545
        %v1628 = vadd.f32 %v1354, %v1550
        %v1629 = vadd.f32 %v1355, %v1555
        %v1630 = vadd.f32 %v1356, %v1560
        %v1631 = vadd.f32 %v1357, %v1565
        %v1632 = vadd.f32 %v1358, %v1570
        %v1633 = vadd.f32 %v1359, %v1575
        %v1634 = vadd.f32 %v1360, %v1580
        %v1635 = vadd.f32 %v1361, %v1585
        %v1636 = vadd.f32 %v1362, %v1590
        %v1637 = vadd.f32 %v1363, %v1595
        %v1638 = vadd.f32 %v1364, %v1600
        %v1639 = vadd.f32 %v1365, %v1605
        %s1640 = scalar_lea.vmem [#allocation6], 512
        %v1641 = vld [vmem:[%s1640] sm:$0xff]
        %v1642 = vld [vmem:[%s1640 + $0x8] sm:$0xff]
        %v1643 = vld [vmem:[%s1640 + $0x10] sm:$0xff]
        %v1644 = vld [vmem:[%s1640 + $0x18] sm:$0xff]
        %v1645 = vld [vmem:[%s1640 + $0x20] sm:$0xff]
        %v1646 = vld [vmem:[%s1640 + $0x28] sm:$0xff]
        %v1647 = vld [vmem:[%s1640 + $0x30] sm:$0xff]
        %v1648 = vld [vmem:[%s1640 + $0x38] sm:$0xff]
        %v1649 = vld [vmem:[%s1640 + $0x40] sm:$0xff]
        %v1650 = vld [vmem:[%s1640 + $0x48] sm:$0xff]
        %v1651 = vld [vmem:[%s1640 + $0x50] sm:$0xff]
        %v1652 = vld [vmem:[%s1640 + $0x58] sm:$0xff]
        %v1653 = vld [vmem:[%s1640 + $0x60] sm:$0xff]
        %v1654 = vld [vmem:[%s1640 + $0x68] sm:$0xff]
        %v1655 = vld [vmem:[%s1640 + $0x70] sm:$0xff]
        %v1656 = vld [vmem:[%s1640 + $0x78] sm:$0xff]
        %1657 = vmatprep.subr.mxu0 0.0
        %1658 = vmatpush1.msra.mxu0 %v1641
        %1659 = vmatprep.subr.mxu0 0.0
        %1660 = vmatpush1.msra.mxu0 %v1642
        %1661 = vmatprep.subr.mxu0 0.0
        %1662 = vmatpush1.msra.mxu0 %v1643
        %1663 = vmatprep.subr.mxu0 0.0
        %1664 = vmatpush1.msra.mxu0 %v1644
        %1665 = vmatprep.subr.mxu0 0.0
        %1666 = vmatpush1.msra.mxu0 %v1645
        %1667 = vmatprep.subr.mxu0 0.0
        %1668 = vmatpush1.msra.mxu0 %v1646
        %1669 = vmatprep.subr.mxu0 0.0
        %1670 = vmatpush1.msra.mxu0 %v1647
        %1671 = vmatprep.subr.mxu0 0.0
        %1672 = vmatpush1.msra.mxu0 %v1648
        %1673 = vmatprep.subr.mxu0 0.0
        %1674 = vmatpush1.msra.mxu0 %v1649
        %1675 = vmatprep.subr.mxu0 0.0
        %1676 = vmatpush1.msra.mxu0 %v1650
        %1677 = vmatprep.subr.mxu0 0.0
        %1678 = vmatpush1.msra.mxu0 %v1651
        %1679 = vmatprep.subr.mxu0 0.0
        %1680 = vmatpush1.msra.mxu0 %v1652
        %1681 = vmatprep.subr.mxu0 0.0
        %1682 = vmatpush1.msra.mxu0 %v1653
        %1683 = vmatprep.subr.mxu0 0.0
        %1684 = vmatpush1.msra.mxu0 %v1654
        %1685 = vmatprep.subr.mxu0 0.0
        %1686 = vmatpush1.msra.mxu0 %v1655
        %1687 = vmatprep.subr.mxu0 0.0
        %1688 = vmatpush1.msra.mxu0 %v1656
        %1689 = vmatprep.subr.mxu0 0.0
        %1690 = vmatpush1.msra.mxu0 0.0
        %1691 = vmatprep.subr.mxu0 0.0
        %1692 = vmatpush1.msra.mxu0 0.0
        %1693 = vmatprep.subr.mxu0 0.0
        %1694 = vmatpush1.msra.mxu0 0.0
        %1695 = vmatprep.subr.mxu0 0.0
        %1696 = vmatpush1.msra.mxu0 0.0
        %1697 = vmatprep.subr.mxu0 0.0
        %1698 = vmatpush1.msra.mxu0 0.0
        %1699 = vmatprep.subr.mxu0 0.0
        %1700 = vmatpush1.msra.mxu0 0.0
        %1701 = vmatprep.subr.mxu0 0.0
        %1702 = vmatpush1.msra.mxu0 0.0
        %1703 = vmatprep.subr.mxu0 0.0
        %1704 = vmatpush1.msra.mxu0 0.0
        %1705 = vmatprep.subr.mxu0 0.0
        %1706 = vmatpush1.msra.mxu0 0.0
        %1707 = vmatprep.subr.mxu0 0.0
        %1708 = vmatpush1.msra.mxu0 0.0
        %1709 = vmatprep.subr.mxu0 0.0
        %1710 = vmatpush1.msra.mxu0 0.0
        %1711 = vmatprep.subr.mxu0 0.0
        %1712 = vmatpush1.msra.mxu0 0.0
        %1713 = vmatprep.subr.mxu0 0.0
        %1714 = vmatpush1.msra.mxu0 0.0
        %1715 = vmatprep.subr.mxu0 0.0
        %1716 = vmatpush1.msra.mxu0 0.0
        %1717 = vmatprep.subr.mxu0 0.0
        %1718 = vmatpush1.msra.mxu0 0.0
        %1719 = vmatprep.subr.mxu0 0.0
        %1720 = vmatpush1.msra.mxu0 0.0
        %1721 = vmatprep.mubr.f32.mxu0 0.0
        %1722 = vmatmul.mubr.f32.gmra.mrb[0].mxu0 %v357
        %v1723 = vpop.f32.mrb[0].mxu0
        %v1724 = vadd.f32 0.0, %v1723
        %v1725 = vpop.f32.mrb[0].mxu0
        %1726 = vmatprep.mubr.f32.mxu0 0.0
        %1727 = vmatmul.mubr.f32.gmra.mrb[0].mxu0 %v358
        %v1728 = vpop.f32.mrb[0].mxu0
        %v1729 = vadd.f32 0.0, %v1728
        %v1730 = vpop.f32.mrb[0].mxu0
        %1731 = vmatprep.mubr.f32.mxu0 0.0
        %1732 = vmatmul.mubr.f32.gmra.mrb[0].mxu0 %v359
        %v1733 = vpop.f32.mrb[0].mxu0
        %v1734 = vadd.f32 0.0, %v1733
        %v1735 = vpop.f32.mrb[0].mxu0
        %1736 = vmatprep.mubr.f32.mxu0 0.0
        %1737 = vmatmul.mubr.f32.gmra.mrb[0].mxu0 %v360
        %v1738 = vpop.f32.mrb[0].mxu0
        %v1739 = vadd.f32 0.0, %v1738
        %v1740 = vpop.f32.mrb[0].mxu0
        %1741 = vmatprep.mubr.f32.mxu0 0.0
        %1742 = vmatmul.mubr.f32.gmra.mrb[0].mxu0 %v361
        %v1743 = vpop.f32.mrb[0].mxu0
        %v1744 = vadd.f32 0.0, %v1743
        %v1745 = vpop.f32.mrb[0].mxu0
        %1746 = vmatprep.mubr.f32.mxu0 0.0
        %1747 = vmatmul.mubr.f32.gmra.mrb[0].mxu0 %v362
        %v1748 = vpop.f32.mrb[0].mxu0
        %v1749 = vadd.f32 0.0, %v1748
        %v1750 = vpop.f32.mrb[0].mxu0
        %1751 = vmatprep.mubr.f32.mxu0 0.0
        %1752 = vmatmul.mubr.f32.gmra.mrb[0].mxu0 %v363
        %v1753 = vpop.f32.mrb[0].mxu0
        %v1754 = vadd.f32 0.0, %v1753
        %v1755 = vpop.f32.mrb[0].mxu0
        %1756 = vmatprep.mubr.f32.mxu0 0.0
        %1757 = vmatmul.mubr.f32.gmra.mrb[0].mxu0 %v364
        %v1758 = vpop.f32.mrb[0].mxu0
        %v1759 = vadd.f32 0.0, %v1758
        %v1760 = vpop.f32.mrb[0].mxu0
        %1761 = vmatprep.mubr.f32.mxu0 0.0
        %1762 = vmatmul.mubr.f32.gmra.mrb[0].mxu0 %v365
        %v1763 = vpop.f32.mrb[0].mxu0
        %v1764 = vadd.f32 0.0, %v1763
        %v1765 = vpop.f32.mrb[0].mxu0
        %1766 = vmatprep.mubr.f32.mxu0 0.0
        %1767 = vmatmul.mubr.f32.gmra.mrb[0].mxu0 %v366
        %v1768 = vpop.f32.mrb[0].mxu0
        %v1769 = vadd.f32 0.0, %v1768
        %v1770 = vpop.f32.mrb[0].mxu0
        %1771 = vmatprep.mubr.f32.mxu0 0.0
        %1772 = vmatmul.mubr.f32.gmra.mrb[0].mxu0 %v367
        %v1773 = vpop.f32.mrb[0].mxu0
        %v1774 = vadd.f32 0.0, %v1773
        %v1775 = vpop.f32.mrb[0].mxu0
        %1776 = vmatprep.mubr.f32.mxu0 0.0
        %1777 = vmatmul.mubr.f32.gmra.mrb[0].mxu0 %v368
        %v1778 = vpop.f32.mrb[0].mxu0
        %v1779 = vadd.f32 0.0, %v1778
        %v1780 = vpop.f32.mrb[0].mxu0
        %1781 = vmatprep.mubr.f32.mxu0 0.0
        %1782 = vmatmul.mubr.f32.gmra.mrb[0].mxu0 %v369
        %v1783 = vpop.f32.mrb[0].mxu0
        %v1784 = vadd.f32 0.0, %v1783
        %v1785 = vpop.f32.mrb[0].mxu0
        %1786 = vmatprep.mubr.f32.mxu0 0.0
        %1787 = vmatmul.mubr.f32.gmra.mrb[0].mxu0 %v370
        %v1788 = vpop.f32.mrb[0].mxu0
        %v1789 = vadd.f32 0.0, %v1788
        %v1790 = vpop.f32.mrb[0].mxu0
        %1791 = vmatprep.mubr.f32.mxu0 0.0
        %1792 = vmatmul.mubr.f32.gmra.mrb[0].mxu0 %v371
        %v1793 = vpop.f32.mrb[0].mxu0
        %v1794 = vadd.f32 0.0, %v1793
        %v1795 = vpop.f32.mrb[0].mxu0
        %1796 = vmatprep.mubr.f32.mxu0 0.0
        %1797 = vmatmul.mubr.f32.gmra.mrb[0].mxu0 %v372
        %v1798 = vpop.f32.mrb[0].mxu0
        %v1799 = vadd.f32 0.0, %v1798
        %v1800 = vpop.f32.mrb[0].mxu0
        %1801 = vmatprep.mubr.f32.mxu0 0.0
        %1802 = vmatmul.mubr.f32.gmra.mrb[0].mxu0 %v373
        %v1803 = vpop.f32.mrb[0].mxu0
        %v1804 = vadd.f32 0.0, %v1803
        %v1805 = vpop.f32.mrb[0].mxu0
        %1806 = vmatprep.mubr.f32.mxu0 0.0
        %1807 = vmatmul.mubr.f32.gmra.mrb[0].mxu0 %v374
        %v1808 = vpop.f32.mrb[0].mxu0
        %v1809 = vadd.f32 0.0, %v1808
        %v1810 = vpop.f32.mrb[0].mxu0
        %1811 = vmatprep.mubr.f32.mxu0 0.0
        %1812 = vmatmul.mubr.f32.gmra.mrb[0].mxu0 %v375
        %v1813 = vpop.f32.mrb[0].mxu0
        %v1814 = vadd.f32 0.0, %v1813
        %v1815 = vpop.f32.mrb[0].mxu0
        %1816 = vmatprep.mubr.f32.mxu0 0.0
        %1817 = vmatmul.mubr.f32.gmra.mrb[0].mxu0 %v376
        %v1818 = vpop.f32.mrb[0].mxu0
        %v1819 = vadd.f32 0.0, %v1818
        %v1820 = vpop.f32.mrb[0].mxu0
        %1821 = vmatprep.mubr.f32.mxu0 0.0
        %1822 = vmatmul.mubr.f32.gmra.mrb[0].mxu0 %v377
        %v1823 = vpop.f32.mrb[0].mxu0
        %v1824 = vadd.f32 0.0, %v1823
        %v1825 = vpop.f32.mrb[0].mxu0
        %1826 = vmatprep.mubr.f32.mxu0 0.0
        %1827 = vmatmul.mubr.f32.gmra.mrb[0].mxu0 %v378
        %v1828 = vpop.f32.mrb[0].mxu0
        %v1829 = vadd.f32 0.0, %v1828
        %v1830 = vpop.f32.mrb[0].mxu0
        %1831 = vmatprep.mubr.f32.mxu0 0.0
        %1832 = vmatmul.mubr.f32.gmra.mrb[0].mxu0 %v379
        %v1833 = vpop.f32.mrb[0].mxu0
        %v1834 = vadd.f32 0.0, %v1833
        %v1835 = vpop.f32.mrb[0].mxu0
        %1836 = vmatprep.mubr.f32.mxu0 0.0
        %1837 = vmatmul.mubr.f32.gmra.mrb[0].mxu0 %v380
        %v1838 = vpop.f32.mrb[0].mxu0
        %v1839 = vadd.f32 0.0, %v1838
        %v1840 = vpop.f32.mrb[0].mxu0
        %1841 = vmatprep.mubr.f32.mxu0 0.0
        %1842 = vmatmul.mubr.f32.gmra.mrb[0].mxu0 %v381
        %v1843 = vpop.f32.mrb[0].mxu0
        %v1844 = vadd.f32 0.0, %v1843
        %v1845 = vpop.f32.mrb[0].mxu0
        %1846 = vmatprep.mubr.f32.mxu0 0.0
        %1847 = vmatmul.mubr.f32.gmra.mrb[0].mxu0 %v382
        %v1848 = vpop.f32.mrb[0].mxu0
        %v1849 = vadd.f32 0.0, %v1848
        %v1850 = vpop.f32.mrb[0].mxu0
        %1851 = vmatprep.mubr.f32.mxu0 0.0
        %1852 = vmatmul.mubr.f32.gmra.mrb[0].mxu0 %v383
        %v1853 = vpop.f32.mrb[0].mxu0
        %v1854 = vadd.f32 0.0, %v1853
        %v1855 = vpop.f32.mrb[0].mxu0
        %1856 = vmatprep.mubr.f32.mxu0 0.0
        %1857 = vmatmul.mubr.f32.gmra.mrb[0].mxu0 %v384
        %v1858 = vpop.f32.mrb[0].mxu0
        %v1859 = vadd.f32 0.0, %v1858
        %v1860 = vpop.f32.mrb[0].mxu0
        %1861 = vmatprep.mubr.f32.mxu0 0.0
        %1862 = vmatmul.mubr.f32.gmra.mrb[0].mxu0 %v385
        %v1863 = vpop.f32.mrb[0].mxu0
        %v1864 = vadd.f32 0.0, %v1863
        %v1865 = vpop.f32.mrb[0].mxu0
        %1866 = vmatprep.mubr.f32.mxu0 0.0
        %1867 = vmatmul.mubr.f32.gmra.mrb[0].mxu0 %v386
        %v1868 = vpop.f32.mrb[0].mxu0
        %v1869 = vadd.f32 0.0, %v1868
        %v1870 = vpop.f32.mrb[0].mxu0
        %1871 = vmatprep.mubr.f32.mxu0 0.0
        %1872 = vmatmul.mubr.f32.gmra.mrb[0].mxu0 %v387
        %v1873 = vpop.f32.mrb[0].mxu0
        %v1874 = vadd.f32 0.0, %v1873
        %v1875 = vpop.f32.mrb[0].mxu0
        %1876 = vmatprep.mubr.f32.mxu0 0.0
        %1877 = vmatmul.mubr.f32.gmra.mrb[0].mxu0 %v388
        %v1878 = vpop.f32.mrb[0].mxu0
        %v1879 = vadd.f32 0.0, %v1878
        %v1880 = vpop.f32.mrb[0].mxu0
        %1881 = vdwg.mxu0
        %v1882 = vadd.f32 %v1608, %v1724
        %v1883 = vadd.f32 %v1609, %v1729
        %v1884 = vadd.f32 %v1610, %v1734
        %v1885 = vadd.f32 %v1611, %v1739
        %v1886 = vadd.f32 %v1612, %v1744
        %v1887 = vadd.f32 %v1613, %v1749
        %v1888 = vadd.f32 %v1614, %v1754
        %v1889 = vadd.f32 %v1615, %v1759
        %v1890 = vadd.f32 %v1616, %v1764
        %v1891 = vadd.f32 %v1617, %v1769
        %v1892 = vadd.f32 %v1618, %v1774
        %v1893 = vadd.f32 %v1619, %v1779
        %v1894 = vadd.f32 %v1620, %v1784
        %v1895 = vadd.f32 %v1621, %v1789
        %v1896 = vadd.f32 %v1622, %v1794
        %v1897 = vadd.f32 %v1623, %v1799
        %v1898 = vadd.f32 %v1624, %v1804
        %v1899 = vadd.f32 %v1625, %v1809
        %v1900 = vadd.f32 %v1626, %v1814
        %v1901 = vadd.f32 %v1627, %v1819
        %v1902 = vadd.f32 %v1628, %v1824
        %v1903 = vadd.f32 %v1629, %v1829
        %v1904 = vadd.f32 %v1630, %v1834
        %v1905 = vadd.f32 %v1631, %v1839
        %v1906 = vadd.f32 %v1632, %v1844
        %v1907 = vadd.f32 %v1633, %v1849
        %v1908 = vadd.f32 %v1634, %v1854
        %v1909 = vadd.f32 %v1635, %v1859
        %v1910 = vadd.f32 %v1636, %v1864
        %v1911 = vadd.f32 %v1637, %v1869
        %v1912 = vadd.f32 %v1638, %v1874
        %v1913 = vadd.f32 %v1639, %v1879
        %s1914 = scalar_lea.vmem [#allocation6], 896
        %v1915 = vld [vmem:[%s1914] sm:$0xff]
        %v1916 = vld [vmem:[%s1914 + $0x8] sm:$0xff]
        %v1917 = vld [vmem:[%s1914 + $0x10] sm:$0xff]
        %v1918 = vld [vmem:[%s1914 + $0x18] sm:$0xff]
        %v1919 = vld [vmem:[%s1914 + $0x20] sm:$0xff]
        %v1920 = vld [vmem:[%s1914 + $0x28] sm:$0xff]
        %v1921 = vld [vmem:[%s1914 + $0x30] sm:$0xff]
        %v1922 = vld [vmem:[%s1914 + $0x38] sm:$0xff]
        %v1923 = vld [vmem:[%s1914 + $0x40] sm:$0xff]
        %v1924 = vld [vmem:[%s1914 + $0x48] sm:$0xff]
        %v1925 = vld [vmem:[%s1914 + $0x50] sm:$0xff]
        %v1926 = vld [vmem:[%s1914 + $0x58] sm:$0xff]
        %v1927 = vld [vmem:[%s1914 + $0x60] sm:$0xff]
        %v1928 = vld [vmem:[%s1914 + $0x68] sm:$0xff]
        %v1929 = vld [vmem:[%s1914 + $0x70] sm:$0xff]
        %v1930 = vld [vmem:[%s1914 + $0x78] sm:$0xff]
        %1931 = vmatprep.subr.mxu0 0.0
        %1932 = vmatpush1.msra.mxu0 %v1915
        %1933 = vmatprep.subr.mxu0 0.0
        %1934 = vmatpush1.msra.mxu0 %v1916
        %1935 = vmatprep.subr.mxu0 0.0
        %1936 = vmatpush1.msra.mxu0 %v1917
        %1937 = vmatprep.subr.mxu0 0.0
        %1938 = vmatpush1.msra.mxu0 %v1918
        %1939 = vmatprep.subr.mxu0 0.0
        %1940 = vmatpush1.msra.mxu0 %v1919
        %1941 = vmatprep.subr.mxu0 0.0
        %1942 = vmatpush1.msra.mxu0 %v1920
        %1943 = vmatprep.subr.mxu0 0.0
        %1944 = vmatpush1.msra.mxu0 %v1921
        %1945 = vmatprep.subr.mxu0 0.0
        %1946 = vmatpush1.msra.mxu0 %v1922
        %1947 = vmatprep.subr.mxu0 0.0
        %1948 = vmatpush1.msra.mxu0 %v1923
        %1949 = vmatprep.subr.mxu0 0.0
        %1950 = vmatpush1.msra.mxu0 %v1924
        %1951 = vmatprep.subr.mxu0 0.0
        %1952 = vmatpush1.msra.mxu0 %v1925
        %1953 = vmatprep.subr.mxu0 0.0
        %1954 = vmatpush1.msra.mxu0 %v1926
        %1955 = vmatprep.subr.mxu0 0.0
        %1956 = vmatpush1.msra.mxu0 %v1927
        %1957 = vmatprep.subr.mxu0 0.0
        %1958 = vmatpush1.msra.mxu0 %v1928
        %1959 = vmatprep.subr.mxu0 0.0
        %1960 = vmatpush1.msra.mxu0 %v1929
        %1961 = vmatprep.subr.mxu0 0.0
        %1962 = vmatpush1.msra.mxu0 %v1930
        %1963 = vmatprep.subr.mxu0 0.0
        %1964 = vmatpush1.msra.mxu0 0.0
        %1965 = vmatprep.subr.mxu0 0.0
        %1966 = vmatpush1.msra.mxu0 0.0
        %1967 = vmatprep.subr.mxu0 0.0
        %1968 = vmatpush1.msra.mxu0 0.0
        %1969 = vmatprep.subr.mxu0 0.0
        %1970 = vmatpush1.msra.mxu0 0.0
        %1971 = vmatprep.subr.mxu0 0.0
        %1972 = vmatpush1.msra.mxu0 0.0
        %1973 = vmatprep.subr.mxu0 0.0
        %1974 = vmatpush1.msra.mxu0 0.0
        %1975 = vmatprep.subr.mxu0 0.0
        %1976 = vmatpush1.msra.mxu0 0.0
        %1977 = vmatprep.subr.mxu0 0.0
        %1978 = vmatpush1.msra.mxu0 0.0
        %1979 = vmatprep.subr.mxu0 0.0
        %1980 = vmatpush1.msra.mxu0 0.0
        %1981 = vmatprep.subr.mxu0 0.0
        %1982 = vmatpush1.msra.mxu0 0.0
        %1983 = vmatprep.subr.mxu0 0.0
        %1984 = vmatpush1.msra.mxu0 0.0
        %1985 = vmatprep.subr.mxu0 0.0
        %1986 = vmatpush1.msra.mxu0 0.0
        %1987 = vmatprep.subr.mxu0 0.0
        %1988 = vmatpush1.msra.mxu0 0.0
        %1989 = vmatprep.subr.mxu0 0.0
        %1990 = vmatpush1.msra.mxu0 0.0
        %1991 = vmatprep.subr.mxu0 0.0
        %1992 = vmatpush1.msra.mxu0 0.0
        %1993 = vmatprep.subr.mxu0 0.0
        %1994 = vmatpush1.msra.mxu0 0.0
        %1995 = vmatprep.mubr.f32.mxu0 0.0
        %1996 = vmatmul.mubr.f32.gmra.mrb[0].mxu0 %v359
        %v1997 = vpop.f32.mrb[0].mxu0
        %v1998 = vadd.f32 0.0, %v1997
        %v1999 = vpop.f32.mrb[0].mxu0
        %2000 = vmatprep.mubr.f32.mxu0 0.0
        %2001 = vmatmul.mubr.f32.gmra.mrb[0].mxu0 %v360
        %v2002 = vpop.f32.mrb[0].mxu0
        %v2003 = vadd.f32 0.0, %v2002
        %v2004 = vpop.f32.mrb[0].mxu0
        %2005 = vmatprep.mubr.f32.mxu0 0.0
        %2006 = vmatmul.mubr.f32.gmra.mrb[0].mxu0 %v361
        %v2007 = vpop.f32.mrb[0].mxu0
        %v2008 = vadd.f32 0.0, %v2007
        %v2009 = vpop.f32.mrb[0].mxu0
        %2010 = vmatprep.mubr.f32.mxu0 0.0
        %2011 = vmatmul.mubr.f32.gmra.mrb[0].mxu0 %v362
        %v2012 = vpop.f32.mrb[0].mxu0
        %v2013 = vadd.f32 0.0, %v2012
        %v2014 = vpop.f32.mrb[0].mxu0
        %2015 = vmatprep.mubr.f32.mxu0 0.0
        %2016 = vmatmul.mubr.f32.gmra.mrb[0].mxu0 %v363
        %v2017 = vpop.f32.mrb[0].mxu0
        %v2018 = vadd.f32 0.0, %v2017
        %v2019 = vpop.f32.mrb[0].mxu0
        %2020 = vmatprep.mubr.f32.mxu0 0.0
        %2021 = vmatmul.mubr.f32.gmra.mrb[0].mxu0 %v364
        %v2022 = vpop.f32.mrb[0].mxu0
        %v2023 = vadd.f32 0.0, %v2022
        %v2024 = vpop.f32.mrb[0].mxu0
        %2025 = vmatprep.mubr.f32.mxu0 0.0
        %2026 = vmatmul.mubr.f32.gmra.mrb[0].mxu0 %v365
        %v2027 = vpop.f32.mrb[0].mxu0
        %v2028 = vadd.f32 0.0, %v2027
        %v2029 = vpop.f32.mrb[0].mxu0
        %2030 = vmatprep.mubr.f32.mxu0 0.0
        %2031 = vmatmul.mubr.f32.gmra.mrb[0].mxu0 %v366
        %v2032 = vpop.f32.mrb[0].mxu0
        %v2033 = vadd.f32 0.0, %v2032
        %v2034 = vpop.f32.mrb[0].mxu0
        %2035 = vmatprep.mubr.f32.mxu0 0.0
        %2036 = vmatmul.mubr.f32.gmra.mrb[0].mxu0 %v367
        %v2037 = vpop.f32.mrb[0].mxu0
        %v2038 = vadd.f32 0.0, %v2037
        %v2039 = vpop.f32.mrb[0].mxu0
        %2040 = vmatprep.mubr.f32.mxu0 0.0
        %2041 = vmatmul.mubr.f32.gmra.mrb[0].mxu0 %v368
        %v2042 = vpop.f32.mrb[0].mxu0
        %v2043 = vadd.f32 0.0, %v2042
        %v2044 = vpop.f32.mrb[0].mxu0
        %2045 = vmatprep.mubr.f32.mxu0 0.0
        %2046 = vmatmul.mubr.f32.gmra.mrb[0].mxu0 %v369
        %v2047 = vpop.f32.mrb[0].mxu0
        %v2048 = vadd.f32 0.0, %v2047
        %v2049 = vpop.f32.mrb[0].mxu0
        %2050 = vmatprep.mubr.f32.mxu0 0.0
        %2051 = vmatmul.mubr.f32.gmra.mrb[0].mxu0 %v370
        %v2052 = vpop.f32.mrb[0].mxu0
        %v2053 = vadd.f32 0.0, %v2052
        %v2054 = vpop.f32.mrb[0].mxu0
        %2055 = vmatprep.mubr.f32.mxu0 0.0
        %2056 = vmatmul.mubr.f32.gmra.mrb[0].mxu0 %v371
        %v2057 = vpop.f32.mrb[0].mxu0
        %v2058 = vadd.f32 0.0, %v2057
        %v2059 = vpop.f32.mrb[0].mxu0
        %2060 = vmatprep.mubr.f32.mxu0 0.0
        %2061 = vmatmul.mubr.f32.gmra.mrb[0].mxu0 %v372
        %v2062 = vpop.f32.mrb[0].mxu0
        %v2063 = vadd.f32 0.0, %v2062
        %v2064 = vpop.f32.mrb[0].mxu0
        %2065 = vmatprep.mubr.f32.mxu0 0.0
        %2066 = vmatmul.mubr.f32.gmra.mrb[0].mxu0 %v373
        %v2067 = vpop.f32.mrb[0].mxu0
        %v2068 = vadd.f32 0.0, %v2067
        %v2069 = vpop.f32.mrb[0].mxu0
        %2070 = vmatprep.mubr.f32.mxu0 0.0
        %2071 = vmatmul.mubr.f32.gmra.mrb[0].mxu0 %v374
        %v2072 = vpop.f32.mrb[0].mxu0
        %v2073 = vadd.f32 0.0, %v2072
        %v2074 = vpop.f32.mrb[0].mxu0
        %2075 = vmatprep.mubr.f32.mxu0 0.0
        %2076 = vmatmul.mubr.f32.gmra.mrb[0].mxu0 %v375
        %v2077 = vpop.f32.mrb[0].mxu0
        %v2078 = vadd.f32 0.0, %v2077
        %v2079 = vpop.f32.mrb[0].mxu0
        %2080 = vmatprep.mubr.f32.mxu0 0.0
        %2081 = vmatmul.mubr.f32.gmra.mrb[0].mxu0 %v376
        %v2082 = vpop.f32.mrb[0].mxu0
        %v2083 = vadd.f32 0.0, %v2082
        %v2084 = vpop.f32.mrb[0].mxu0
        %2085 = vmatprep.mubr.f32.mxu0 0.0
        %2086 = vmatmul.mubr.f32.gmra.mrb[0].mxu0 %v377
        %v2087 = vpop.f32.mrb[0].mxu0
        %v2088 = vadd.f32 0.0, %v2087
        %v2089 = vpop.f32.mrb[0].mxu0
        %2090 = vmatprep.mubr.f32.mxu0 0.0
        %2091 = vmatmul.mubr.f32.gmra.mrb[0].mxu0 %v378
        %v2092 = vpop.f32.mrb[0].mxu0
        %v2093 = vadd.f32 0.0, %v2092
        %v2094 = vpop.f32.mrb[0].mxu0
        %2095 = vmatprep.mubr.f32.mxu0 0.0
        %2096 = vmatmul.mubr.f32.gmra.mrb[0].mxu0 %v379
        %v2097 = vpop.f32.mrb[0].mxu0
        %v2098 = vadd.f32 0.0, %v2097
        %v2099 = vpop.f32.mrb[0].mxu0
        %2100 = vmatprep.mubr.f32.mxu0 0.0
        %2101 = vmatmul.mubr.f32.gmra.mrb[0].mxu0 %v380
        %v2102 = vpop.f32.mrb[0].mxu0
        %v2103 = vadd.f32 0.0, %v2102
        %v2104 = vpop.f32.mrb[0].mxu0
        %2105 = vmatprep.mubr.f32.mxu0 0.0
        %2106 = vmatmul.mubr.f32.gmra.mrb[0].mxu0 %v381
        %v2107 = vpop.f32.mrb[0].mxu0
        %v2108 = vadd.f32 0.0, %v2107
        %v2109 = vpop.f32.mrb[0].mxu0
        %2110 = vmatprep.mubr.f32.mxu0 0.0
        %2111 = vmatmul.mubr.f32.gmra.mrb[0].mxu0 %v382
        %v2112 = vpop.f32.mrb[0].mxu0
        %v2113 = vadd.f32 0.0, %v2112
        %v2114 = vpop.f32.mrb[0].mxu0
        %2115 = vmatprep.mubr.f32.mxu0 0.0
        %2116 = vmatmul.mubr.f32.gmra.mrb[0].mxu0 %v383
        %v2117 = vpop.f32.mrb[0].mxu0
        %v2118 = vadd.f32 0.0, %v2117
        %v2119 = vpop.f32.mrb[0].mxu0
        %2120 = vmatprep.mubr.f32.mxu0 0.0
        %2121 = vmatmul.mubr.f32.gmra.mrb[0].mxu0 %v384
        %v2122 = vpop.f32.mrb[0].mxu0
        %v2123 = vadd.f32 0.0, %v2122
        %v2124 = vpop.f32.mrb[0].mxu0
        %2125 = vmatprep.mubr.f32.mxu0 0.0
        %2126 = vmatmul.mubr.f32.gmra.mrb[0].mxu0 %v385
        %v2127 = vpop.f32.mrb[0].mxu0
        %v2128 = vadd.f32 0.0, %v2127
        %v2129 = vpop.f32.mrb[0].mxu0
        %2130 = vmatprep.mubr.f32.mxu0 0.0
        %2131 = vmatmul.mubr.f32.gmra.mrb[0].mxu0 %v386
        %v2132 = vpop.f32.mrb[0].mxu0
        %v2133 = vadd.f32 0.0, %v2132
        %v2134 = vpop.f32.mrb[0].mxu0
        %2135 = vmatprep.mubr.f32.mxu0 0.0
        %2136 = vmatmul.mubr.f32.gmra.mrb[0].mxu0 %v387
        %v2137 = vpop.f32.mrb[0].mxu0
        %v2138 = vadd.f32 0.0, %v2137
        %v2139 = vpop.f32.mrb[0].mxu0
        %2140 = vmatprep.mubr.f32.mxu0 0.0
        %2141 = vmatmul.mubr.f32.gmra.mrb[0].mxu0 %v388
        %v2142 = vpop.f32.mrb[0].mxu0
        %v2143 = vadd.f32 0.0, %v2142
        %v2144 = vpop.f32.mrb[0].mxu0
        %2145 = vmatprep.mubr.f32.mxu0 0.0
        %2146 = vmatmul.mubr.f32.gmra.mrb[0].mxu0 %v389
        %v2147 = vpop.f32.mrb[0].mxu0
        %v2148 = vadd.f32 0.0, %v2147
        %v2149 = vpop.f32.mrb[0].mxu0
        %2150 = vmatprep.mubr.f32.mxu0 0.0
        %2151 = vmatmul.mubr.f32.gmra.mrb[0].mxu0 %v390
        %v2152 = vpop.f32.mrb[0].mxu0
        %v2153 = vadd.f32 0.0, %v2152
        %v2154 = vpop.f32.mrb[0].mxu0
        %2155 = vdwg.mxu0
        %v2156 = vadd.f32 %v1882, %v1998
        %v2157 = vadd.f32 %v1883, %v2003
        %v2158 = vadd.f32 %v1884, %v2008
        %v2159 = vadd.f32 %v1885, %v2013
        %v2160 = vadd.f32 %v1886, %v2018
        %v2161 = vadd.f32 %v1887, %v2023
        %v2162 = vadd.f32 %v1888, %v2028
        %v2163 = vadd.f32 %v1889, %v2033
        %v2164 = vadd.f32 %v1890, %v2038
        %v2165 = vadd.f32 %v1891, %v2043
        %v2166 = vadd.f32 %v1892, %v2048
        %v2167 = vadd.f32 %v1893, %v2053
        %v2168 = vadd.f32 %v1894, %v2058
        %v2169 = vadd.f32 %v1895, %v2063
        %v2170 = vadd.f32 %v1896, %v2068
        %v2171 = vadd.f32 %v1897, %v2073
        %v2172 = vadd.f32 %v1898, %v2078
        %v2173 = vadd.f32 %v1899, %v2083
        %v2174 = vadd.f32 %v1900, %v2088
        %v2175 = vadd.f32 %v1901, %v2093
        %v2176 = vadd.f32 %v1902, %v2098
        %v2177 = vadd.f32 %v1903, %v2103
        %v2178 = vadd.f32 %v1904, %v2108
        %v2179 = vadd.f32 %v1905, %v2113
        %v2180 = vadd.f32 %v1906, %v2118
        %v2181 = vadd.f32 %v1907, %v2123
        %v2182 = vadd.f32 %v1908, %v2128
        %v2183 = vadd.f32 %v1909, %v2133
        %v2184 = vadd.f32 %v1910, %v2138
        %v2185 = vadd.f32 %v1911, %v2143
        %v2186 = vadd.f32 %v1912, %v2148
        %v2187 = vadd.f32 %v1913, %v2153
        %s2188 = scalar_lea.vmem [#allocation6], 256
        %v2189 = vld [vmem:[%s2188] sm:$0xff]
        %v2190 = vld [vmem:[%s2188 + $0x8] sm:$0xff]
        %v2191 = vld [vmem:[%s2188 + $0x10] sm:$0xff]
        %v2192 = vld [vmem:[%s2188 + $0x18] sm:$0xff]
        %v2193 = vld [vmem:[%s2188 + $0x20] sm:$0xff]
        %v2194 = vld [vmem:[%s2188 + $0x28] sm:$0xff]
        %v2195 = vld [vmem:[%s2188 + $0x30] sm:$0xff]
        %v2196 = vld [vmem:[%s2188 + $0x38] sm:$0xff]
        %v2197 = vld [vmem:[%s2188 + $0x40] sm:$0xff]
        %v2198 = vld [vmem:[%s2188 + $0x48] sm:$0xff]
        %v2199 = vld [vmem:[%s2188 + $0x50] sm:$0xff]
        %v2200 = vld [vmem:[%s2188 + $0x58] sm:$0xff]
        %v2201 = vld [vmem:[%s2188 + $0x60] sm:$0xff]
        %v2202 = vld [vmem:[%s2188 + $0x68] sm:$0xff]
        %v2203 = vld [vmem:[%s2188 + $0x70] sm:$0xff]
        %v2204 = vld [vmem:[%s2188 + $0x78] sm:$0xff]
        %2205 = vmatprep.subr.mxu0 0.0
        %2206 = vmatpush1.msra.mxu0 %v2189
        %2207 = vmatprep.subr.mxu0 0.0
        %2208 = vmatpush1.msra.mxu0 %v2190
        %2209 = vmatprep.subr.mxu0 0.0
        %2210 = vmatpush1.msra.mxu0 %v2191
        %2211 = vmatprep.subr.mxu0 0.0
        %2212 = vmatpush1.msra.mxu0 %v2192
        %2213 = vmatprep.subr.mxu0 0.0
        %2214 = vmatpush1.msra.mxu0 %v2193
        %2215 = vmatprep.subr.mxu0 0.0
        %2216 = vmatpush1.msra.mxu0 %v2194
        %2217 = vmatprep.subr.mxu0 0.0
        %2218 = vmatpush1.msra.mxu0 %v2195
        %2219 = vmatprep.subr.mxu0 0.0
        %2220 = vmatpush1.msra.mxu0 %v2196
        %2221 = vmatprep.subr.mxu0 0.0
        %2222 = vmatpush1.msra.mxu0 %v2197
        %2223 = vmatprep.subr.mxu0 0.0
        %2224 = vmatpush1.msra.mxu0 %v2198
        %2225 = vmatprep.subr.mxu0 0.0
        %2226 = vmatpush1.msra.mxu0 %v2199
        %2227 = vmatprep.subr.mxu0 0.0
        %2228 = vmatpush1.msra.mxu0 %v2200
        %2229 = vmatprep.subr.mxu0 0.0
        %2230 = vmatpush1.msra.mxu0 %v2201
        %2231 = vmatprep.subr.mxu0 0.0
        %2232 = vmatpush1.msra.mxu0 %v2202
        %2233 = vmatprep.subr.mxu0 0.0
        %2234 = vmatpush1.msra.mxu0 %v2203
        %2235 = vmatprep.subr.mxu0 0.0
        %2236 = vmatpush1.msra.mxu0 %v2204
        %2237 = vmatprep.subr.mxu0 0.0
        %2238 = vmatpush1.msra.mxu0 0.0
        %2239 = vmatprep.subr.mxu0 0.0
        %2240 = vmatpush1.msra.mxu0 0.0
        %2241 = vmatprep.subr.mxu0 0.0
        %2242 = vmatpush1.msra.mxu0 0.0
        %2243 = vmatprep.subr.mxu0 0.0
        %2244 = vmatpush1.msra.mxu0 0.0
        %2245 = vmatprep.subr.mxu0 0.0
        %2246 = vmatpush1.msra.mxu0 0.0
        %2247 = vmatprep.subr.mxu0 0.0
        %2248 = vmatpush1.msra.mxu0 0.0
        %2249 = vmatprep.subr.mxu0 0.0
        %2250 = vmatpush1.msra.mxu0 0.0
        %2251 = vmatprep.subr.mxu0 0.0
        %2252 = vmatpush1.msra.mxu0 0.0
        %2253 = vmatprep.subr.mxu0 0.0
        %2254 = vmatpush1.msra.mxu0 0.0
        %2255 = vmatprep.subr.mxu0 0.0
        %2256 = vmatpush1.msra.mxu0 0.0
        %2257 = vmatprep.subr.mxu0 0.0
        %2258 = vmatpush1.msra.mxu0 0.0
        %2259 = vmatprep.subr.mxu0 0.0
        %2260 = vmatpush1.msra.mxu0 0.0
        %2261 = vmatprep.subr.mxu0 0.0
        %2262 = vmatpush1.msra.mxu0 0.0
        %2263 = vmatprep.subr.mxu0 0.0
        %2264 = vmatpush1.msra.mxu0 0.0
        %2265 = vmatprep.subr.mxu0 0.0
        %2266 = vmatpush1.msra.mxu0 0.0
        %2267 = vmatprep.subr.mxu0 0.0
        %2268 = vmatpush1.msra.mxu0 0.0
        %2269 = vmatprep.mubr.f32.mxu0 0.0
        %2270 = vmatmul.mubr.f32.gmra.mrb[0].mxu0 %v573
        %v2271 = vpop.f32.mrb[0].mxu0
        %v2272 = vadd.f32 0.0, %v2271
        %v2273 = vpop.f32.mrb[0].mxu0
        %2274 = vmatprep.mubr.f32.mxu0 0.0
        %2275 = vmatmul.mubr.f32.gmra.mrb[0].mxu0 %v574
        %v2276 = vpop.f32.mrb[0].mxu0
        %v2277 = vadd.f32 0.0, %v2276
        %v2278 = vpop.f32.mrb[0].mxu0
        %2279 = vmatprep.mubr.f32.mxu0 0.0
        %2280 = vmatmul.mubr.f32.gmra.mrb[0].mxu0 %v575
        %v2281 = vpop.f32.mrb[0].mxu0
        %v2282 = vadd.f32 0.0, %v2281
        %v2283 = vpop.f32.mrb[0].mxu0
        %2284 = vmatprep.mubr.f32.mxu0 0.0
        %2285 = vmatmul.mubr.f32.gmra.mrb[0].mxu0 %v576
        %v2286 = vpop.f32.mrb[0].mxu0
        %v2287 = vadd.f32 0.0, %v2286
        %v2288 = vpop.f32.mrb[0].mxu0
        %2289 = vmatprep.mubr.f32.mxu0 0.0
        %2290 = vmatmul.mubr.f32.gmra.mrb[0].mxu0 %v577
        %v2291 = vpop.f32.mrb[0].mxu0
        %v2292 = vadd.f32 0.0, %v2291
        %v2293 = vpop.f32.mrb[0].mxu0
        %2294 = vmatprep.mubr.f32.mxu0 0.0
        %2295 = vmatmul.mubr.f32.gmra.mrb[0].mxu0 %v578
        %v2296 = vpop.f32.mrb[0].mxu0
        %v2297 = vadd.f32 0.0, %v2296
        %v2298 = vpop.f32.mrb[0].mxu0
        %2299 = vmatprep.mubr.f32.mxu0 0.0
        %2300 = vmatmul.mubr.f32.gmra.mrb[0].mxu0 %v579
        %v2301 = vpop.f32.mrb[0].mxu0
        %v2302 = vadd.f32 0.0, %v2301
        %v2303 = vpop.f32.mrb[0].mxu0
        %2304 = vmatprep.mubr.f32.mxu0 0.0
        %2305 = vmatmul.mubr.f32.gmra.mrb[0].mxu0 %v580
        %v2306 = vpop.f32.mrb[0].mxu0
        %v2307 = vadd.f32 0.0, %v2306
        %v2308 = vpop.f32.mrb[0].mxu0
        %2309 = vmatprep.mubr.f32.mxu0 0.0
        %2310 = vmatmul.mubr.f32.gmra.mrb[0].mxu0 %v581
        %v2311 = vpop.f32.mrb[0].mxu0
        %v2312 = vadd.f32 0.0, %v2311
        %v2313 = vpop.f32.mrb[0].mxu0
        %2314 = vmatprep.mubr.f32.mxu0 0.0
        %2315 = vmatmul.mubr.f32.gmra.mrb[0].mxu0 %v582
        %v2316 = vpop.f32.mrb[0].mxu0
        %v2317 = vadd.f32 0.0, %v2316
        %v2318 = vpop.f32.mrb[0].mxu0
        %2319 = vmatprep.mubr.f32.mxu0 0.0
        %2320 = vmatmul.mubr.f32.gmra.mrb[0].mxu0 %v583
        %v2321 = vpop.f32.mrb[0].mxu0
        %v2322 = vadd.f32 0.0, %v2321
        %v2323 = vpop.f32.mrb[0].mxu0
        %2324 = vmatprep.mubr.f32.mxu0 0.0
        %2325 = vmatmul.mubr.f32.gmra.mrb[0].mxu0 %v584
        %v2326 = vpop.f32.mrb[0].mxu0
        %v2327 = vadd.f32 0.0, %v2326
        %v2328 = vpop.f32.mrb[0].mxu0
        %2329 = vmatprep.mubr.f32.mxu0 0.0
        %2330 = vmatmul.mubr.f32.gmra.mrb[0].mxu0 %v585
        %v2331 = vpop.f32.mrb[0].mxu0
        %v2332 = vadd.f32 0.0, %v2331
        %v2333 = vpop.f32.mrb[0].mxu0
        %2334 = vmatprep.mubr.f32.mxu0 0.0
        %2335 = vmatmul.mubr.f32.gmra.mrb[0].mxu0 %v586
        %v2336 = vpop.f32.mrb[0].mxu0
        %v2337 = vadd.f32 0.0, %v2336
        %v2338 = vpop.f32.mrb[0].mxu0
        %2339 = vmatprep.mubr.f32.mxu0 0.0
        %2340 = vmatmul.mubr.f32.gmra.mrb[0].mxu0 %v587
        %v2341 = vpop.f32.mrb[0].mxu0
        %v2342 = vadd.f32 0.0, %v2341
        %v2343 = vpop.f32.mrb[0].mxu0
        %2344 = vmatprep.mubr.f32.mxu0 0.0
        %2345 = vmatmul.mubr.f32.gmra.mrb[0].mxu0 %v588
        %v2346 = vpop.f32.mrb[0].mxu0
        %v2347 = vadd.f32 0.0, %v2346
        %v2348 = vpop.f32.mrb[0].mxu0
        %2349 = vmatprep.mubr.f32.mxu0 0.0
        %2350 = vmatmul.mubr.f32.gmra.mrb[0].mxu0 %v589
        %v2351 = vpop.f32.mrb[0].mxu0
        %v2352 = vadd.f32 0.0, %v2351
        %v2353 = vpop.f32.mrb[0].mxu0
        %2354 = vmatprep.mubr.f32.mxu0 0.0
        %2355 = vmatmul.mubr.f32.gmra.mrb[0].mxu0 %v590
        %v2356 = vpop.f32.mrb[0].mxu0
        %v2357 = vadd.f32 0.0, %v2356
        %v2358 = vpop.f32.mrb[0].mxu0
        %2359 = vmatprep.mubr.f32.mxu0 0.0
        %2360 = vmatmul.mubr.f32.gmra.mrb[0].mxu0 %v591
        %v2361 = vpop.f32.mrb[0].mxu0
        %v2362 = vadd.f32 0.0, %v2361
        %v2363 = vpop.f32.mrb[0].mxu0
        %2364 = vmatprep.mubr.f32.mxu0 0.0
        %2365 = vmatmul.mubr.f32.gmra.mrb[0].mxu0 %v592
        %v2366 = vpop.f32.mrb[0].mxu0
        %v2367 = vadd.f32 0.0, %v2366
        %v2368 = vpop.f32.mrb[0].mxu0
        %2369 = vmatprep.mubr.f32.mxu0 0.0
        %2370 = vmatmul.mubr.f32.gmra.mrb[0].mxu0 %v593
        %v2371 = vpop.f32.mrb[0].mxu0
        %v2372 = vadd.f32 0.0, %v2371
        %v2373 = vpop.f32.mrb[0].mxu0
        %2374 = vmatprep.mubr.f32.mxu0 0.0
        %2375 = vmatmul.mubr.f32.gmra.mrb[0].mxu0 %v594
        %v2376 = vpop.f32.mrb[0].mxu0
        %v2377 = vadd.f32 0.0, %v2376
        %v2378 = vpop.f32.mrb[0].mxu0
        %2379 = vmatprep.mubr.f32.mxu0 0.0
        %2380 = vmatmul.mubr.f32.gmra.mrb[0].mxu0 %v595
        %v2381 = vpop.f32.mrb[0].mxu0
        %v2382 = vadd.f32 0.0, %v2381
        %v2383 = vpop.f32.mrb[0].mxu0
        %2384 = vmatprep.mubr.f32.mxu0 0.0
        %2385 = vmatmul.mubr.f32.gmra.mrb[0].mxu0 %v596
        %v2386 = vpop.f32.mrb[0].mxu0
        %v2387 = vadd.f32 0.0, %v2386
        %v2388 = vpop.f32.mrb[0].mxu0
        %2389 = vmatprep.mubr.f32.mxu0 0.0
        %2390 = vmatmul.mubr.f32.gmra.mrb[0].mxu0 %v597
        %v2391 = vpop.f32.mrb[0].mxu0
        %v2392 = vadd.f32 0.0, %v2391
        %v2393 = vpop.f32.mrb[0].mxu0
        %2394 = vmatprep.mubr.f32.mxu0 0.0
        %2395 = vmatmul.mubr.f32.gmra.mrb[0].mxu0 %v598
        %v2396 = vpop.f32.mrb[0].mxu0
        %v2397 = vadd.f32 0.0, %v2396
        %v2398 = vpop.f32.mrb[0].mxu0
        %2399 = vmatprep.mubr.f32.mxu0 0.0
        %2400 = vmatmul.mubr.f32.gmra.mrb[0].mxu0 %v599
        %v2401 = vpop.f32.mrb[0].mxu0
        %v2402 = vadd.f32 0.0, %v2401
        %v2403 = vpop.f32.mrb[0].mxu0
        %2404 = vmatprep.mubr.f32.mxu0 0.0
        %2405 = vmatmul.mubr.f32.gmra.mrb[0].mxu0 %v600
        %v2406 = vpop.f32.mrb[0].mxu0
        %v2407 = vadd.f32 0.0, %v2406
        %v2408 = vpop.f32.mrb[0].mxu0
        %2409 = vmatprep.mubr.f32.mxu0 0.0
        %2410 = vmatmul.mubr.f32.gmra.mrb[0].mxu0 %v601
        %v2411 = vpop.f32.mrb[0].mxu0
        %v2412 = vadd.f32 0.0, %v2411
        %v2413 = vpop.f32.mrb[0].mxu0
        %2414 = vmatprep.mubr.f32.mxu0 0.0
        %2415 = vmatmul.mubr.f32.gmra.mrb[0].mxu0 %v602
        %v2416 = vpop.f32.mrb[0].mxu0
        %v2417 = vadd.f32 0.0, %v2416
        %v2418 = vpop.f32.mrb[0].mxu0
        %2419 = vmatprep.mubr.f32.mxu0 0.0
        %2420 = vmatmul.mubr.f32.gmra.mrb[0].mxu0 %v603
        %v2421 = vpop.f32.mrb[0].mxu0
        %v2422 = vadd.f32 0.0, %v2421
        %v2423 = vpop.f32.mrb[0].mxu0
        %2424 = vmatprep.mubr.f32.mxu0 0.0
        %2425 = vmatmul.mubr.f32.gmra.mrb[0].mxu0 %v604
        %v2426 = vpop.f32.mrb[0].mxu0
        %v2427 = vadd.f32 0.0, %v2426
        %v2428 = vpop.f32.mrb[0].mxu0
        %2429 = vdwg.mxu0
        %v2430 = vadd.f32 %v2156, %v2272
        %v2431 = vadd.f32 %v2157, %v2277
        %v2432 = vadd.f32 %v2158, %v2282
        %v2433 = vadd.f32 %v2159, %v2287
        %v2434 = vadd.f32 %v2160, %v2292
        %v2435 = vadd.f32 %v2161, %v2297
        %v2436 = vadd.f32 %v2162, %v2302
        %v2437 = vadd.f32 %v2163, %v2307
        %v2438 = vadd.f32 %v2164, %v2312
        %v2439 = vadd.f32 %v2165, %v2317
        %v2440 = vadd.f32 %v2166, %v2322
        %v2441 = vadd.f32 %v2167, %v2327
        %v2442 = vadd.f32 %v2168, %v2332
        %v2443 = vadd.f32 %v2169, %v2337
        %v2444 = vadd.f32 %v2170, %v2342
        %v2445 = vadd.f32 %v2171, %v2347
        %v2446 = vadd.f32 %v2172, %v2352
        %v2447 = vadd.f32 %v2173, %v2357
        %v2448 = vadd.f32 %v2174, %v2362
        %v2449 = vadd.f32 %v2175, %v2367
        %v2450 = vadd.f32 %v2176, %v2372
        %v2451 = vadd.f32 %v2177, %v2377
        %v2452 = vadd.f32 %v2178, %v2382
        %v2453 = vadd.f32 %v2179, %v2387
        %v2454 = vadd.f32 %v2180, %v2392
        %v2455 = vadd.f32 %v2181, %v2397
        %v2456 = vadd.f32 %v2182, %v2402
        %v2457 = vadd.f32 %v2183, %v2407
        %v2458 = vadd.f32 %v2184, %v2412
        %v2459 = vadd.f32 %v2185, %v2417
        %v2460 = vadd.f32 %v2186, %v2422
        %v2461 = vadd.f32 %v2187, %v2427
        %s2462 = scalar_lea.vmem [#allocation6], 640
        %v2463 = vld [vmem:[%s2462] sm:$0xff]
        %v2464 = vld [vmem:[%s2462 + $0x8] sm:$0xff]
        %v2465 = vld [vmem:[%s2462 + $0x10] sm:$0xff]
        %v2466 = vld [vmem:[%s2462 + $0x18] sm:$0xff]
        %v2467 = vld [vmem:[%s2462 + $0x20] sm:$0xff]
        %v2468 = vld [vmem:[%s2462 + $0x28] sm:$0xff]
        %v2469 = vld [vmem:[%s2462 + $0x30] sm:$0xff]
        %v2470 = vld [vmem:[%s2462 + $0x38] sm:$0xff]
        %v2471 = vld [vmem:[%s2462 + $0x40] sm:$0xff]
        %v2472 = vld [vmem:[%s2462 + $0x48] sm:$0xff]
        %v2473 = vld [vmem:[%s2462 + $0x50] sm:$0xff]
        %v2474 = vld [vmem:[%s2462 + $0x58] sm:$0xff]
        %v2475 = vld [vmem:[%s2462 + $0x60] sm:$0xff]
        %v2476 = vld [vmem:[%s2462 + $0x68] sm:$0xff]
        %v2477 = vld [vmem:[%s2462 + $0x70] sm:$0xff]
        %v2478 = vld [vmem:[%s2462 + $0x78] sm:$0xff]
        %2479 = vmatprep.subr.mxu0 0.0
        %2480 = vmatpush1.msra.mxu0 %v2463
        %2481 = vmatprep.subr.mxu0 0.0
        %2482 = vmatpush1.msra.mxu0 %v2464
        %2483 = vmatprep.subr.mxu0 0.0
        %2484 = vmatpush1.msra.mxu0 %v2465
        %2485 = vmatprep.subr.mxu0 0.0
        %2486 = vmatpush1.msra.mxu0 %v2466
        %2487 = vmatprep.subr.mxu0 0.0
        %2488 = vmatpush1.msra.mxu0 %v2467
        %2489 = vmatprep.subr.mxu0 0.0
        %2490 = vmatpush1.msra.mxu0 %v2468
        %2491 = vmatprep.subr.mxu0 0.0
        %2492 = vmatpush1.msra.mxu0 %v2469
        %2493 = vmatprep.subr.mxu0 0.0
        %2494 = vmatpush1.msra.mxu0 %v2470
        %2495 = vmatprep.subr.mxu0 0.0
        %2496 = vmatpush1.msra.mxu0 %v2471
        %2497 = vmatprep.subr.mxu0 0.0
        %2498 = vmatpush1.msra.mxu0 %v2472
        %2499 = vmatprep.subr.mxu0 0.0
        %2500 = vmatpush1.msra.mxu0 %v2473
        %2501 = vmatprep.subr.mxu0 0.0
        %2502 = vmatpush1.msra.mxu0 %v2474
        %2503 = vmatprep.subr.mxu0 0.0
        %2504 = vmatpush1.msra.mxu0 %v2475
        %2505 = vmatprep.subr.mxu0 0.0
        %2506 = vmatpush1.msra.mxu0 %v2476
        %2507 = vmatprep.subr.mxu0 0.0
        %2508 = vmatpush1.msra.mxu0 %v2477
        %2509 = vmatprep.subr.mxu0 0.0
        %2510 = vmatpush1.msra.mxu0 %v2478
        %2511 = vmatprep.subr.mxu0 0.0
        %2512 = vmatpush1.msra.mxu0 0.0
        %2513 = vmatprep.subr.mxu0 0.0
        %2514 = vmatpush1.msra.mxu0 0.0
        %2515 = vmatprep.subr.mxu0 0.0
        %2516 = vmatpush1.msra.mxu0 0.0
        %2517 = vmatprep.subr.mxu0 0.0
        %2518 = vmatpush1.msra.mxu0 0.0
        %2519 = vmatprep.subr.mxu0 0.0
        %2520 = vmatpush1.msra.mxu0 0.0
        %2521 = vmatprep.subr.mxu0 0.0
        %2522 = vmatpush1.msra.mxu0 0.0
        %2523 = vmatprep.subr.mxu0 0.0
        %2524 = vmatpush1.msra.mxu0 0.0
        %2525 = vmatprep.subr.mxu0 0.0
        %2526 = vmatpush1.msra.mxu0 0.0
        %2527 = vmatprep.subr.mxu0 0.0
        %2528 = vmatpush1.msra.mxu0 0.0
        %2529 = vmatprep.subr.mxu0 0.0
        %2530 = vmatpush1.msra.mxu0 0.0
        %2531 = vmatprep.subr.mxu0 0.0
        %2532 = vmatpush1.msra.mxu0 0.0
        %2533 = vmatprep.subr.mxu0 0.0
        %2534 = vmatpush1.msra.mxu0 0.0
        %2535 = vmatprep.subr.mxu0 0.0
        %2536 = vmatpush1.msra.mxu0 0.0
        %2537 = vmatprep.subr.mxu0 0.0
        %2538 = vmatpush1.msra.mxu0 0.0
        %2539 = vmatprep.subr.mxu0 0.0
        %2540 = vmatpush1.msra.mxu0 0.0
        %2541 = vmatprep.subr.mxu0 0.0
        %2542 = vmatpush1.msra.mxu0 0.0
        %2543 = vmatprep.mubr.f32.mxu0 0.0
        %2544 = vmatmul.mubr.f32.gmra.mrb[0].mxu0 %v575
        %v2545 = vpop.f32.mrb[0].mxu0
        %v2546 = vadd.f32 0.0, %v2545
        %v2547 = vpop.f32.mrb[0].mxu0
        %2548 = vmatprep.mubr.f32.mxu0 0.0
        %2549 = vmatmul.mubr.f32.gmra.mrb[0].mxu0 %v576
        %v2550 = vpop.f32.mrb[0].mxu0
        %v2551 = vadd.f32 0.0, %v2550
        %v2552 = vpop.f32.mrb[0].mxu0
        %2553 = vmatprep.mubr.f32.mxu0 0.0
        %2554 = vmatmul.mubr.f32.gmra.mrb[0].mxu0 %v577
        %v2555 = vpop.f32.mrb[0].mxu0
        %v2556 = vadd.f32 0.0, %v2555
        %v2557 = vpop.f32.mrb[0].mxu0
        %2558 = vmatprep.mubr.f32.mxu0 0.0
        %2559 = vmatmul.mubr.f32.gmra.mrb[0].mxu0 %v578
        %v2560 = vpop.f32.mrb[0].mxu0
        %v2561 = vadd.f32 0.0, %v2560
        %v2562 = vpop.f32.mrb[0].mxu0
        %2563 = vmatprep.mubr.f32.mxu0 0.0
        %2564 = vmatmul.mubr.f32.gmra.mrb[0].mxu0 %v579
        %v2565 = vpop.f32.mrb[0].mxu0
        %v2566 = vadd.f32 0.0, %v2565
        %v2567 = vpop.f32.mrb[0].mxu0
        %2568 = vmatprep.mubr.f32.mxu0 0.0
        %2569 = vmatmul.mubr.f32.gmra.mrb[0].mxu0 %v580
        %v2570 = vpop.f32.mrb[0].mxu0
        %v2571 = vadd.f32 0.0, %v2570
        %v2572 = vpop.f32.mrb[0].mxu0
        %2573 = vmatprep.mubr.f32.mxu0 0.0
        %2574 = vmatmul.mubr.f32.gmra.mrb[0].mxu0 %v581
        %v2575 = vpop.f32.mrb[0].mxu0
        %v2576 = vadd.f32 0.0, %v2575
        %v2577 = vpop.f32.mrb[0].mxu0
        %2578 = vmatprep.mubr.f32.mxu0 0.0
        %2579 = vmatmul.mubr.f32.gmra.mrb[0].mxu0 %v582
        %v2580 = vpop.f32.mrb[0].mxu0
        %v2581 = vadd.f32 0.0, %v2580
        %v2582 = vpop.f32.mrb[0].mxu0
        %2583 = vmatprep.mubr.f32.mxu0 0.0
        %2584 = vmatmul.mubr.f32.gmra.mrb[0].mxu0 %v583
        %v2585 = vpop.f32.mrb[0].mxu0
        %v2586 = vadd.f32 0.0, %v2585
        %v2587 = vpop.f32.mrb[0].mxu0
        %2588 = vmatprep.mubr.f32.mxu0 0.0
        %2589 = vmatmul.mubr.f32.gmra.mrb[0].mxu0 %v584
        %v2590 = vpop.f32.mrb[0].mxu0
        %v2591 = vadd.f32 0.0, %v2590
        %v2592 = vpop.f32.mrb[0].mxu0
        %2593 = vmatprep.mubr.f32.mxu0 0.0
        %2594 = vmatmul.mubr.f32.gmra.mrb[0].mxu0 %v585
        %v2595 = vpop.f32.mrb[0].mxu0
        %v2596 = vadd.f32 0.0, %v2595
        %v2597 = vpop.f32.mrb[0].mxu0
        %2598 = vmatprep.mubr.f32.mxu0 0.0
        %2599 = vmatmul.mubr.f32.gmra.mrb[0].mxu0 %v586
        %v2600 = vpop.f32.mrb[0].mxu0
        %v2601 = vadd.f32 0.0, %v2600
        %v2602 = vpop.f32.mrb[0].mxu0
        %2603 = vmatprep.mubr.f32.mxu0 0.0
        %2604 = vmatmul.mubr.f32.gmra.mrb[0].mxu0 %v587
        %v2605 = vpop.f32.mrb[0].mxu0
        %v2606 = vadd.f32 0.0, %v2605
        %v2607 = vpop.f32.mrb[0].mxu0
        %2608 = vmatprep.mubr.f32.mxu0 0.0
        %2609 = vmatmul.mubr.f32.gmra.mrb[0].mxu0 %v588
        %v2610 = vpop.f32.mrb[0].mxu0
        %v2611 = vadd.f32 0.0, %v2610
        %v2612 = vpop.f32.mrb[0].mxu0
        %2613 = vmatprep.mubr.f32.mxu0 0.0
        %2614 = vmatmul.mubr.f32.gmra.mrb[0].mxu0 %v589
        %v2615 = vpop.f32.mrb[0].mxu0
        %v2616 = vadd.f32 0.0, %v2615
        %v2617 = vpop.f32.mrb[0].mxu0
        %2618 = vmatprep.mubr.f32.mxu0 0.0
        %2619 = vmatmul.mubr.f32.gmra.mrb[0].mxu0 %v590
        %v2620 = vpop.f32.mrb[0].mxu0
        %v2621 = vadd.f32 0.0, %v2620
        %v2622 = vpop.f32.mrb[0].mxu0
        %2623 = vmatprep.mubr.f32.mxu0 0.0
        %2624 = vmatmul.mubr.f32.gmra.mrb[0].mxu0 %v591
        %v2625 = vpop.f32.mrb[0].mxu0
        %v2626 = vadd.f32 0.0, %v2625
        %v2627 = vpop.f32.mrb[0].mxu0
        %2628 = vmatprep.mubr.f32.mxu0 0.0
        %2629 = vmatmul.mubr.f32.gmra.mrb[0].mxu0 %v592
        %v2630 = vpop.f32.mrb[0].mxu0
        %v2631 = vadd.f32 0.0, %v2630
        %v2632 = vpop.f32.mrb[0].mxu0
        %2633 = vmatprep.mubr.f32.mxu0 0.0
        %2634 = vmatmul.mubr.f32.gmra.mrb[0].mxu0 %v593
        %v2635 = vpop.f32.mrb[0].mxu0
        %v2636 = vadd.f32 0.0, %v2635
        %v2637 = vpop.f32.mrb[0].mxu0
        %2638 = vmatprep.mubr.f32.mxu0 0.0
        %2639 = vmatmul.mubr.f32.gmra.mrb[0].mxu0 %v594
        %v2640 = vpop.f32.mrb[0].mxu0
        %v2641 = vadd.f32 0.0, %v2640
        %v2642 = vpop.f32.mrb[0].mxu0
        %2643 = vmatprep.mubr.f32.mxu0 0.0
        %2644 = vmatmul.mubr.f32.gmra.mrb[0].mxu0 %v595
        %v2645 = vpop.f32.mrb[0].mxu0
        %v2646 = vadd.f32 0.0, %v2645
        %v2647 = vpop.f32.mrb[0].mxu0
        %2648 = vmatprep.mubr.f32.mxu0 0.0
        %2649 = vmatmul.mubr.f32.gmra.mrb[0].mxu0 %v596
        %v2650 = vpop.f32.mrb[0].mxu0
        %v2651 = vadd.f32 0.0, %v2650
        %v2652 = vpop.f32.mrb[0].mxu0
        %2653 = vmatprep.mubr.f32.mxu0 0.0
        %2654 = vmatmul.mubr.f32.gmra.mrb[0].mxu0 %v597
        %v2655 = vpop.f32.mrb[0].mxu0
        %v2656 = vadd.f32 0.0, %v2655
        %v2657 = vpop.f32.mrb[0].mxu0
        %2658 = vmatprep.mubr.f32.mxu0 0.0
        %2659 = vmatmul.mubr.f32.gmra.mrb[0].mxu0 %v598
        %v2660 = vpop.f32.mrb[0].mxu0
        %v2661 = vadd.f32 0.0, %v2660
        %v2662 = vpop.f32.mrb[0].mxu0
        %2663 = vmatprep.mubr.f32.mxu0 0.0
        %2664 = vmatmul.mubr.f32.gmra.mrb[0].mxu0 %v599
        %v2665 = vpop.f32.mrb[0].mxu0
        %v2666 = vadd.f32 0.0, %v2665
        %v2667 = vpop.f32.mrb[0].mxu0
        %2668 = vmatprep.mubr.f32.mxu0 0.0
        %2669 = vmatmul.mubr.f32.gmra.mrb[0].mxu0 %v600
        %v2670 = vpop.f32.mrb[0].mxu0
        %v2671 = vadd.f32 0.0, %v2670
        %v2672 = vpop.f32.mrb[0].mxu0
        %2673 = vmatprep.mubr.f32.mxu0 0.0
        %2674 = vmatmul.mubr.f32.gmra.mrb[0].mxu0 %v601
        %v2675 = vpop.f32.mrb[0].mxu0
        %v2676 = vadd.f32 0.0, %v2675
        %v2677 = vpop.f32.mrb[0].mxu0
        %2678 = vmatprep.mubr.f32.mxu0 0.0
        %2679 = vmatmul.mubr.f32.gmra.mrb[0].mxu0 %v602
        %v2680 = vpop.f32.mrb[0].mxu0
        %v2681 = vadd.f32 0.0, %v2680
        %v2682 = vpop.f32.mrb[0].mxu0
        %2683 = vmatprep.mubr.f32.mxu0 0.0
        %2684 = vmatmul.mubr.f32.gmra.mrb[0].mxu0 %v603
        %v2685 = vpop.f32.mrb[0].mxu0
        %v2686 = vadd.f32 0.0, %v2685
        %v2687 = vpop.f32.mrb[0].mxu0
        %2688 = vmatprep.mubr.f32.mxu0 0.0
        %2689 = vmatmul.mubr.f32.gmra.mrb[0].mxu0 %v604
        %v2690 = vpop.f32.mrb[0].mxu0
        %v2691 = vadd.f32 0.0, %v2690
        %v2692 = vpop.f32.mrb[0].mxu0
        %2693 = vmatprep.mubr.f32.mxu0 0.0
        %2694 = vmatmul.mubr.f32.gmra.mrb[0].mxu0 %v605
        %v2695 = vpop.f32.mrb[0].mxu0
        %v2696 = vadd.f32 0.0, %v2695
        %v2697 = vpop.f32.mrb[0].mxu0
        %2698 = vmatprep.mubr.f32.mxu0 0.0
        %2699 = vmatmul.mubr.f32.gmra.mrb[0].mxu0 %v606
        %v2700 = vpop.f32.mrb[0].mxu0
        %v2701 = vadd.f32 0.0, %v2700
        %v2702 = vpop.f32.mrb[0].mxu0
        %2703 = vdwg.mxu0
        %v2704 = vadd.f32 %v2430, %v2546
        %v2705 = vadd.f32 %v2431, %v2551
        %v2706 = vadd.f32 %v2432, %v2556
        %v2707 = vadd.f32 %v2433, %v2561
        %v2708 = vadd.f32 %v2434, %v2566
        %v2709 = vadd.f32 %v2435, %v2571
        %v2710 = vadd.f32 %v2436, %v2576
        %v2711 = vadd.f32 %v2437, %v2581
        %v2712 = vadd.f32 %v2438, %v2586
        %v2713 = vadd.f32 %v2439, %v2591
        %v2714 = vadd.f32 %v2440, %v2596
        %v2715 = vadd.f32 %v2441, %v2601
        %v2716 = vadd.f32 %v2442, %v2606
        %v2717 = vadd.f32 %v2443, %v2611
        %v2718 = vadd.f32 %v2444, %v2616
        %v2719 = vadd.f32 %v2445, %v2621
        %v2720 = vadd.f32 %v2446, %v2626
        %v2721 = vadd.f32 %v2447, %v2631
        %v2722 = vadd.f32 %v2448, %v2636
        %v2723 = vadd.f32 %v2449, %v2641
        %v2724 = vadd.f32 %v2450, %v2646
        %v2725 = vadd.f32 %v2451, %v2651
        %v2726 = vadd.f32 %v2452, %v2656
        %v2727 = vadd.f32 %v2453, %v2661
        %v2728 = vadd.f32 %v2454, %v2666
        %v2729 = vadd.f32 %v2455, %v2671
        %v2730 = vadd.f32 %v2456, %v2676
        %v2731 = vadd.f32 %v2457, %v2681
        %v2732 = vadd.f32 %v2458, %v2686
        %v2733 = vadd.f32 %v2459, %v2691
        %v2734 = vadd.f32 %v2460, %v2696
        %v2735 = vadd.f32 %v2461, %v2701
        %s2736 = scalar_lea.vmem [#allocation6], 1024
        %v2737 = vld [vmem:[%s2736] sm:$0xff]
        %v2738 = vld [vmem:[%s2736 + $0x8] sm:$0xff]
        %v2739 = vld [vmem:[%s2736 + $0x10] sm:$0xff]
        %v2740 = vld [vmem:[%s2736 + $0x18] sm:$0xff]
        %v2741 = vld [vmem:[%s2736 + $0x20] sm:$0xff]
        %v2742 = vld [vmem:[%s2736 + $0x28] sm:$0xff]
        %v2743 = vld [vmem:[%s2736 + $0x30] sm:$0xff]
        %v2744 = vld [vmem:[%s2736 + $0x38] sm:$0xff]
        %v2745 = vld [vmem:[%s2736 + $0x40] sm:$0xff]
        %v2746 = vld [vmem:[%s2736 + $0x48] sm:$0xff]
        %v2747 = vld [vmem:[%s2736 + $0x50] sm:$0xff]
        %v2748 = vld [vmem:[%s2736 + $0x58] sm:$0xff]
        %v2749 = vld [vmem:[%s2736 + $0x60] sm:$0xff]
        %v2750 = vld [vmem:[%s2736 + $0x68] sm:$0xff]
        %v2751 = vld [vmem:[%s2736 + $0x70] sm:$0xff]
        %v2752 = vld [vmem:[%s2736 + $0x78] sm:$0xff]
        %2753 = vmatprep.subr.mxu0 0.0
        %2754 = vmatpush1.msra.mxu0 %v2737
        %2755 = vmatprep.subr.mxu0 0.0
        %2756 = vmatpush1.msra.mxu0 %v2738
        %2757 = vmatprep.subr.mxu0 0.0
        %2758 = vmatpush1.msra.mxu0 %v2739
        %2759 = vmatprep.subr.mxu0 0.0
        %2760 = vmatpush1.msra.mxu0 %v2740
        %2761 = vmatprep.subr.mxu0 0.0
        %2762 = vmatpush1.msra.mxu0 %v2741
        %2763 = vmatprep.subr.mxu0 0.0
        %2764 = vmatpush1.msra.mxu0 %v2742
        %2765 = vmatprep.subr.mxu0 0.0
        %2766 = vmatpush1.msra.mxu0 %v2743
        %2767 = vmatprep.subr.mxu0 0.0
        %2768 = vmatpush1.msra.mxu0 %v2744
        %2769 = vmatprep.subr.mxu0 0.0
        %2770 = vmatpush1.msra.mxu0 %v2745
        %2771 = vmatprep.subr.mxu0 0.0
        %2772 = vmatpush1.msra.mxu0 %v2746
        %2773 = vmatprep.subr.mxu0 0.0
        %2774 = vmatpush1.msra.mxu0 %v2747
        %2775 = vmatprep.subr.mxu0 0.0
        %2776 = vmatpush1.msra.mxu0 %v2748
        %2777 = vmatprep.subr.mxu0 0.0
        %2778 = vmatpush1.msra.mxu0 %v2749
        %2779 = vmatprep.subr.mxu0 0.0
        %2780 = vmatpush1.msra.mxu0 %v2750
        %2781 = vmatprep.subr.mxu0 0.0
        %2782 = vmatpush1.msra.mxu0 %v2751
        %2783 = vmatprep.subr.mxu0 0.0
        %2784 = vmatpush1.msra.mxu0 %v2752
        %2785 = vmatprep.subr.mxu0 0.0
        %2786 = vmatpush1.msra.mxu0 0.0
        %2787 = vmatprep.subr.mxu0 0.0
        %2788 = vmatpush1.msra.mxu0 0.0
        %2789 = vmatprep.subr.mxu0 0.0
        %2790 = vmatpush1.msra.mxu0 0.0
        %2791 = vmatprep.subr.mxu0 0.0
        %2792 = vmatpush1.msra.mxu0 0.0
        %2793 = vmatprep.subr.mxu0 0.0
        %2794 = vmatpush1.msra.mxu0 0.0
        %2795 = vmatprep.subr.mxu0 0.0
        %2796 = vmatpush1.msra.mxu0 0.0
        %2797 = vmatprep.subr.mxu0 0.0
        %2798 = vmatpush1.msra.mxu0 0.0
        %2799 = vmatprep.subr.mxu0 0.0
        %2800 = vmatpush1.msra.mxu0 0.0
        %2801 = vmatprep.subr.mxu0 0.0
        %2802 = vmatpush1.msra.mxu0 0.0
        %2803 = vmatprep.subr.mxu0 0.0
        %2804 = vmatpush1.msra.mxu0 0.0
        %2805 = vmatprep.subr.mxu0 0.0
        %2806 = vmatpush1.msra.mxu0 0.0
        %2807 = vmatprep.subr.mxu0 0.0
        %2808 = vmatpush1.msra.mxu0 0.0
        %2809 = vmatprep.subr.mxu0 0.0
        %2810 = vmatpush1.msra.mxu0 0.0
        %2811 = vmatprep.subr.mxu0 0.0
        %2812 = vmatpush1.msra.mxu0 0.0
        %2813 = vmatprep.subr.mxu0 0.0
        %2814 = vmatpush1.msra.mxu0 0.0
        %2815 = vmatprep.subr.mxu0 0.0
        %2816 = vmatpush1.msra.mxu0 0.0
        %2817 = vmatprep.mubr.f32.mxu0 0.0
        %2818 = vmatmul.mubr.f32.gmra.mrb[0].mxu0 %v577
        %v2819 = vpop.f32.mrb[0].mxu0
        %v2820 = vadd.f32 0.0, %v2819
        %v2821 = vpop.f32.mrb[0].mxu0
        %2822 = vmatprep.mubr.f32.mxu0 0.0
        %2823 = vmatmul.mubr.f32.gmra.mrb[0].mxu0 %v578
        %v2824 = vpop.f32.mrb[0].mxu0
        %v2825 = vadd.f32 0.0, %v2824
        %v2826 = vpop.f32.mrb[0].mxu0
        %2827 = vmatprep.mubr.f32.mxu0 0.0
        %2828 = vmatmul.mubr.f32.gmra.mrb[0].mxu0 %v579
        %v2829 = vpop.f32.mrb[0].mxu0
        %v2830 = vadd.f32 0.0, %v2829
        %v2831 = vpop.f32.mrb[0].mxu0
        %2832 = vmatprep.mubr.f32.mxu0 0.0
        %2833 = vmatmul.mubr.f32.gmra.mrb[0].mxu0 %v580
        %v2834 = vpop.f32.mrb[0].mxu0
        %v2835 = vadd.f32 0.0, %v2834
        %v2836 = vpop.f32.mrb[0].mxu0
        %2837 = vmatprep.mubr.f32.mxu0 0.0
        %2838 = vmatmul.mubr.f32.gmra.mrb[0].mxu0 %v581
        %v2839 = vpop.f32.mrb[0].mxu0
        %v2840 = vadd.f32 0.0, %v2839
        %v2841 = vpop.f32.mrb[0].mxu0
        %2842 = vmatprep.mubr.f32.mxu0 0.0
        %2843 = vmatmul.mubr.f32.gmra.mrb[0].mxu0 %v582
        %v2844 = vpop.f32.mrb[0].mxu0
        %v2845 = vadd.f32 0.0, %v2844
        %v2846 = vpop.f32.mrb[0].mxu0
        %2847 = vmatprep.mubr.f32.mxu0 0.0
        %2848 = vmatmul.mubr.f32.gmra.mrb[0].mxu0 %v583
        %v2849 = vpop.f32.mrb[0].mxu0
        %v2850 = vadd.f32 0.0, %v2849
        %v2851 = vpop.f32.mrb[0].mxu0
        %2852 = vmatprep.mubr.f32.mxu0 0.0
        %2853 = vmatmul.mubr.f32.gmra.mrb[0].mxu0 %v584
        %v2854 = vpop.f32.mrb[0].mxu0
        %v2855 = vadd.f32 0.0, %v2854
        %v2856 = vpop.f32.mrb[0].mxu0
        %2857 = vmatprep.mubr.f32.mxu0 0.0
        %2858 = vmatmul.mubr.f32.gmra.mrb[0].mxu0 %v585
        %v2859 = vpop.f32.mrb[0].mxu0
        %v2860 = vadd.f32 0.0, %v2859
        %v2861 = vpop.f32.mrb[0].mxu0
        %2862 = vmatprep.mubr.f32.mxu0 0.0
        %2863 = vmatmul.mubr.f32.gmra.mrb[0].mxu0 %v586
        %v2864 = vpop.f32.mrb[0].mxu0
        %v2865 = vadd.f32 0.0, %v2864
        %v2866 = vpop.f32.mrb[0].mxu0
        %2867 = vmatprep.mubr.f32.mxu0 0.0
        %2868 = vmatmul.mubr.f32.gmra.mrb[0].mxu0 %v587
        %v2869 = vpop.f32.mrb[0].mxu0
        %v2870 = vadd.f32 0.0, %v2869
        %v2871 = vpop.f32.mrb[0].mxu0
        %2872 = vmatprep.mubr.f32.mxu0 0.0
        %2873 = vmatmul.mubr.f32.gmra.mrb[0].mxu0 %v588
        %v2874 = vpop.f32.mrb[0].mxu0
        %v2875 = vadd.f32 0.0, %v2874
        %v2876 = vpop.f32.mrb[0].mxu0
        %2877 = vmatprep.mubr.f32.mxu0 0.0
        %2878 = vmatmul.mubr.f32.gmra.mrb[0].mxu0 %v589
        %v2879 = vpop.f32.mrb[0].mxu0
        %v2880 = vadd.f32 0.0, %v2879
        %v2881 = vpop.f32.mrb[0].mxu0
        %2882 = vmatprep.mubr.f32.mxu0 0.0
        %2883 = vmatmul.mubr.f32.gmra.mrb[0].mxu0 %v590
        %v2884 = vpop.f32.mrb[0].mxu0
        %v2885 = vadd.f32 0.0, %v2884
        %v2886 = vpop.f32.mrb[0].mxu0
        %2887 = vmatprep.mubr.f32.mxu0 0.0
        %2888 = vmatmul.mubr.f32.gmra.mrb[0].mxu0 %v591
        %v2889 = vpop.f32.mrb[0].mxu0
        %v2890 = vadd.f32 0.0, %v2889
        %v2891 = vpop.f32.mrb[0].mxu0
        %2892 = vmatprep.mubr.f32.mxu0 0.0
        %2893 = vmatmul.mubr.f32.gmra.mrb[0].mxu0 %v592
        %v2894 = vpop.f32.mrb[0].mxu0
        %v2895 = vadd.f32 0.0, %v2894
        %v2896 = vpop.f32.mrb[0].mxu0
        %2897 = vmatprep.mubr.f32.mxu0 0.0
        %2898 = vmatmul.mubr.f32.gmra.mrb[0].mxu0 %v593
        %v2899 = vpop.f32.mrb[0].mxu0
        %v2900 = vadd.f32 0.0, %v2899
        %v2901 = vpop.f32.mrb[0].mxu0
        %2902 = vmatprep.mubr.f32.mxu0 0.0
        %2903 = vmatmul.mubr.f32.gmra.mrb[0].mxu0 %v594
        %v2904 = vpop.f32.mrb[0].mxu0
        %v2905 = vadd.f32 0.0, %v2904
        %v2906 = vpop.f32.mrb[0].mxu0
        %2907 = vmatprep.mubr.f32.mxu0 0.0
        %2908 = vmatmul.mubr.f32.gmra.mrb[0].mxu0 %v595
        %v2909 = vpop.f32.mrb[0].mxu0
        %v2910 = vadd.f32 0.0, %v2909
        %v2911 = vpop.f32.mrb[0].mxu0
        %2912 = vmatprep.mubr.f32.mxu0 0.0
        %2913 = vmatmul.mubr.f32.gmra.mrb[0].mxu0 %v596
        %v2914 = vpop.f32.mrb[0].mxu0
        %v2915 = vadd.f32 0.0, %v2914
        %v2916 = vpop.f32.mrb[0].mxu0
        %2917 = vmatprep.mubr.f32.mxu0 0.0
        %2918 = vmatmul.mubr.f32.gmra.mrb[0].mxu0 %v597
        %v2919 = vpop.f32.mrb[0].mxu0
        %v2920 = vadd.f32 0.0, %v2919
        %v2921 = vpop.f32.mrb[0].mxu0
        %2922 = vmatprep.mubr.f32.mxu0 0.0
        %2923 = vmatmul.mubr.f32.gmra.mrb[0].mxu0 %v598
        %v2924 = vpop.f32.mrb[0].mxu0
        %v2925 = vadd.f32 0.0, %v2924
        %v2926 = vpop.f32.mrb[0].mxu0
        %2927 = vmatprep.mubr.f32.mxu0 0.0
        %2928 = vmatmul.mubr.f32.gmra.mrb[0].mxu0 %v599
        %v2929 = vpop.f32.mrb[0].mxu0
        %v2930 = vadd.f32 0.0, %v2929
        %v2931 = vpop.f32.mrb[0].mxu0
        %2932 = vmatprep.mubr.f32.mxu0 0.0
        %2933 = vmatmul.mubr.f32.gmra.mrb[0].mxu0 %v600
        %v2934 = vpop.f32.mrb[0].mxu0
        %v2935 = vadd.f32 0.0, %v2934
        %v2936 = vpop.f32.mrb[0].mxu0
        %2937 = vmatprep.mubr.f32.mxu0 0.0
        %2938 = vmatmul.mubr.f32.gmra.mrb[0].mxu0 %v601
        %v2939 = vpop.f32.mrb[0].mxu0
        %v2940 = vadd.f32 0.0, %v2939
        %v2941 = vpop.f32.mrb[0].mxu0
        %2942 = vmatprep.mubr.f32.mxu0 0.0
        %2943 = vmatmul.mubr.f32.gmra.mrb[0].mxu0 %v602
        %v2944 = vpop.f32.mrb[0].mxu0
        %v2945 = vadd.f32 0.0, %v2944
        %v2946 = vpop.f32.mrb[0].mxu0
        %2947 = vmatprep.mubr.f32.mxu0 0.0
        %2948 = vmatmul.mubr.f32.gmra.mrb[0].mxu0 %v603
        %v2949 = vpop.f32.mrb[0].mxu0
        %v2950 = vadd.f32 0.0, %v2949
        %v2951 = vpop.f32.mrb[0].mxu0
        %2952 = vmatprep.mubr.f32.mxu0 0.0
        %2953 = vmatmul.mubr.f32.gmra.mrb[0].mxu0 %v604
        %v2954 = vpop.f32.mrb[0].mxu0
        %v2955 = vadd.f32 0.0, %v2954
        %v2956 = vpop.f32.mrb[0].mxu0
        %2957 = vmatprep.mubr.f32.mxu0 0.0
        %2958 = vmatmul.mubr.f32.gmra.mrb[0].mxu0 %v605
        %v2959 = vpop.f32.mrb[0].mxu0
        %v2960 = vadd.f32 0.0, %v2959
        %v2961 = vpop.f32.mrb[0].mxu0
        %2962 = vmatprep.mubr.f32.mxu0 0.0
        %2963 = vmatmul.mubr.f32.gmra.mrb[0].mxu0 %v606
        %v2964 = vpop.f32.mrb[0].mxu0
        %v2965 = vadd.f32 0.0, %v2964
        %v2966 = vpop.f32.mrb[0].mxu0
        %2967 = vmatprep.mubr.f32.mxu0 0.0
        %2968 = vmatmul.mubr.f32.gmra.mrb[0].mxu0 %v607
        %v2969 = vpop.f32.mrb[0].mxu0
        %v2970 = vadd.f32 0.0, %v2969
        %v2971 = vpop.f32.mrb[0].mxu0
        %2972 = vmatprep.mubr.f32.mxu0 0.0
        %2973 = vmatmul.mubr.f32.gmra.mrb[0].mxu0 %v608
        %v2974 = vpop.f32.mrb[0].mxu0
        %v2975 = vadd.f32 0.0, %v2974
        %v2976 = vpop.f32.mrb[0].mxu0
        %2977 = vdwg.mxu0
        %v2978 = vadd.f32 %v2704, %v2820
        %v2979 = vadd.f32 %v2705, %v2825
        %v2980 = vadd.f32 %v2706, %v2830
        %v2981 = vadd.f32 %v2707, %v2835
        %v2982 = vadd.f32 %v2708, %v2840
        %v2983 = vadd.f32 %v2709, %v2845
        %v2984 = vadd.f32 %v2710, %v2850
        %v2985 = vadd.f32 %v2711, %v2855
        %v2986 = vadd.f32 %v2712, %v2860
        %v2987 = vadd.f32 %v2713, %v2865
        %v2988 = vadd.f32 %v2714, %v2870
        %v2989 = vadd.f32 %v2715, %v2875
        %v2990 = vadd.f32 %v2716, %v2880
        %v2991 = vadd.f32 %v2717, %v2885
        %v2992 = vadd.f32 %v2718, %v2890
        %v2993 = vadd.f32 %v2719, %v2895
        %v2994 = vadd.f32 %v2720, %v2900
        %v2995 = vadd.f32 %v2721, %v2905
        %v2996 = vadd.f32 %v2722, %v2910
        %v2997 = vadd.f32 %v2723, %v2915
        %v2998 = vadd.f32 %v2724, %v2920
        %v2999 = vadd.f32 %v2725, %v2925
        %v3000 = vadd.f32 %v2726, %v2930
        %v3001 = vadd.f32 %v2727, %v2935
        %v3002 = vadd.f32 %v2728, %v2940
        %v3003 = vadd.f32 %v2729, %v2945
        %v3004 = vadd.f32 %v2730, %v2950
        %v3005 = vadd.f32 %v2731, %v2955
        %v3006 = vadd.f32 %v2732, %v2960
        %v3007 = vadd.f32 %v2733, %v2965
        %v3008 = vadd.f32 %v2734, %v2970
        %v3009 = vadd.f32 %v2735, %v2975
        %v3010 = vld [vmem:[%s2] sm:$0x1]
        %v3012 = vlaneseq
        %v3013 = vshrl.u32 %v3012, 7
        %v3014 = vsub.s32 0, %v3013
        %v3015 = vrot.slane %v3010, %v3014
        %v3017 = vadd.f32 %v2978, %v3015
        %v3018 = vadd.f32 %v2979, %v3015
        %v3019 = vadd.f32 %v2980, %v3015
        %v3020 = vadd.f32 %v2981, %v3015
        %v3021 = vadd.f32 %v2982, %v3015
        %v3022 = vadd.f32 %v2983, %v3015
        %v3023 = vadd.f32 %v2984, %v3015
        %v3024 = vadd.f32 %v2985, %v3015
        %v3025 = vadd.f32 %v2986, %v3015
        %v3026 = vadd.f32 %v2987, %v3015
        %v3027 = vadd.f32 %v2988, %v3015
        %v3028 = vadd.f32 %v2989, %v3015
        %v3029 = vadd.f32 %v2990, %v3015
        %v3030 = vadd.f32 %v2991, %v3015
        %v3031 = vadd.f32 %v2992, %v3015
        %v3032 = vadd.f32 %v2993, %v3015
        %v3033 = vadd.f32 %v2994, %v3015
        %v3034 = vadd.f32 %v2995, %v3015
        %v3035 = vadd.f32 %v2996, %v3015
        %v3036 = vadd.f32 %v2997, %v3015
        %v3037 = vadd.f32 %v2998, %v3015
        %v3038 = vadd.f32 %v2999, %v3015
        %v3039 = vadd.f32 %v3000, %v3015
        %v3040 = vadd.f32 %v3001, %v3015
        %v3041 = vadd.f32 %v3002, %v3015
        %v3042 = vadd.f32 %v3003, %v3015
        %v3043 = vadd.f32 %v3004, %v3015
        %v3044 = vadd.f32 %v3005, %v3015
        %v3045 = vadd.f32 %v3006, %v3015
        %v3046 = vadd.f32 %v3007, %v3015
        %v3047 = vadd.f32 %v3008, %v3015
        %v3048 = vadd.f32 %v3009, %v3015
        %vm3049 = vcmp.ge.f32.partialorder %v3017, 0.0
        %vm3050 = vcmp.ge.f32.partialorder %v3018, 0.0
        %vm3051 = vcmp.ge.f32.partialorder %v3019, 0.0
        %vm3052 = vcmp.ge.f32.partialorder %v3020, 0.0
        %vm3053 = vcmp.ge.f32.partialorder %v3021, 0.0
        %vm3054 = vcmp.ge.f32.partialorder %v3022, 0.0
        %vm3055 = vcmp.ge.f32.partialorder %v3023, 0.0
        %vm3056 = vcmp.ge.f32.partialorder %v3024, 0.0
        %vm3057 = vcmp.ge.f32.partialorder %v3025, 0.0
        %vm3058 = vcmp.ge.f32.partialorder %v3026, 0.0
        %vm3059 = vcmp.ge.f32.partialorder %v3027, 0.0
        %vm3060 = vcmp.ge.f32.partialorder %v3028, 0.0
        %vm3061 = vcmp.ge.f32.partialorder %v3029, 0.0
        %vm3062 = vcmp.ge.f32.partialorder %v3030, 0.0
        %vm3063 = vcmp.ge.f32.partialorder %v3031, 0.0
        %vm3064 = vcmp.ge.f32.partialorder %v3032, 0.0
        %vm3065 = vcmp.ge.f32.partialorder %v3033, 0.0
        %vm3066 = vcmp.ge.f32.partialorder %v3034, 0.0
        %vm3067 = vcmp.ge.f32.partialorder %v3035, 0.0
        %vm3068 = vcmp.ge.f32.partialorder %v3036, 0.0
        %vm3069 = vcmp.ge.f32.partialorder %v3037, 0.0
        %vm3070 = vcmp.ge.f32.partialorder %v3038, 0.0
        %vm3071 = vcmp.ge.f32.partialorder %v3039, 0.0
        %vm3072 = vcmp.ge.f32.partialorder %v3040, 0.0
        %vm3073 = vcmp.ge.f32.partialorder %v3041, 0.0
        %vm3074 = vcmp.ge.f32.partialorder %v3042, 0.0
        %vm3075 = vcmp.ge.f32.partialorder %v3043, 0.0
        %vm3076 = vcmp.ge.f32.partialorder %v3044, 0.0
        %vm3077 = vcmp.ge.f32.partialorder %v3045, 0.0
        %vm3078 = vcmp.ge.f32.partialorder %v3046, 0.0
        %vm3079 = vcmp.ge.f32.partialorder %v3047, 0.0
        %vm3080 = vcmp.ge.f32.partialorder %v3048, 0.0
        %v3081 = vmul.f32 %v3017, 0.01
        %v3082 = vmul.f32 %v3018, 0.01
        %v3083 = vmul.f32 %v3019, 0.01
        %v3084 = vmul.f32 %v3020, 0.01
        %v3085 = vmul.f32 %v3021, 0.01
        %v3086 = vmul.f32 %v3022, 0.01
        %v3087 = vmul.f32 %v3023, 0.01
        %v3088 = vmul.f32 %v3024, 0.01
        %v3089 = vmul.f32 %v3025, 0.01
        %v3090 = vmul.f32 %v3026, 0.01
        %v3091 = vmul.f32 %v3027, 0.01
        %v3092 = vmul.f32 %v3028, 0.01
        %v3093 = vmul.f32 %v3029, 0.01
        %v3094 = vmul.f32 %v3030, 0.01
        %v3095 = vmul.f32 %v3031, 0.01
        %v3096 = vmul.f32 %v3032, 0.01
        %v3097 = vmul.f32 %v3033, 0.01
        %v3098 = vmul.f32 %v3034, 0.01
        %v3099 = vmul.f32 %v3035, 0.01
        %v3100 = vmul.f32 %v3036, 0.01
        %v3101 = vmul.f32 %v3037, 0.01
        %v3102 = vmul.f32 %v3038, 0.01
        %v3103 = vmul.f32 %v3039, 0.01
        %v3104 = vmul.f32 %v3040, 0.01
        %v3105 = vmul.f32 %v3041, 0.01
        %v3106 = vmul.f32 %v3042, 0.01
        %v3107 = vmul.f32 %v3043, 0.01
        %v3108 = vmul.f32 %v3044, 0.01
        %v3109 = vmul.f32 %v3045, 0.01
        %v3110 = vmul.f32 %v3046, 0.01
        %v3111 = vmul.f32 %v3047, 0.01
        %v3112 = vmul.f32 %v3048, 0.01
        %v3113 = vsel %vm3049, %v3017, %v3081
        %v3114 = vsel %vm3050, %v3018, %v3082
        %v3115 = vsel %vm3051, %v3019, %v3083
        %v3116 = vsel %vm3052, %v3020, %v3084
        %v3117 = vsel %vm3053, %v3021, %v3085
        %v3118 = vsel %vm3054, %v3022, %v3086
        %v3119 = vsel %vm3055, %v3023, %v3087
        %v3120 = vsel %vm3056, %v3024, %v3088
        %v3121 = vsel %vm3057, %v3025, %v3089
        %v3122 = vsel %vm3058, %v3026, %v3090
        %v3123 = vsel %vm3059, %v3027, %v3091
        %v3124 = vsel %vm3060, %v3028, %v3092
        %v3125 = vsel %vm3061, %v3029, %v3093
        %v3126 = vsel %vm3062, %v3030, %v3094
        %v3127 = vsel %vm3063, %v3031, %v3095
        %v3128 = vsel %vm3064, %v3032, %v3096
        %v3129 = vsel %vm3065, %v3033, %v3097
        %v3130 = vsel %vm3066, %v3034, %v3098
        %v3131 = vsel %vm3067, %v3035, %v3099
        %v3132 = vsel %vm3068, %v3036, %v3100
        %v3133 = vsel %vm3069, %v3037, %v3101
        %v3134 = vsel %vm3070, %v3038, %v3102
        %v3135 = vsel %vm3071, %v3039, %v3103
        %v3136 = vsel %vm3072, %v3040, %v3104
        %v3137 = vsel %vm3073, %v3041, %v3105
        %v3138 = vsel %vm3074, %v3042, %v3106
        %v3139 = vsel %vm3075, %v3043, %v3107
        %v3140 = vsel %vm3076, %v3044, %v3108
        %v3141 = vsel %vm3077, %v3045, %v3109
        %v3142 = vsel %vm3078, %v3046, %v3110
        %v3143 = vsel %vm3079, %v3047, %v3111
        %v3144 = vsel %vm3080, %v3048, %v3112
        %3145 = vst [vmem:[#allocation2 + $0x10] sm:$0xff] %v3113
        %3146 = vst [vmem:[#allocation2 + $0x18] sm:$0xff] %v3114
        %3147 = vst [vmem:[#allocation2 + $0x20] sm:$0xff] %v3115
        %3148 = vst [vmem:[#allocation2 + $0x28] sm:$0xff] %v3116
        %3149 = vst [vmem:[#allocation2 + $0x30] sm:$0xff] %v3117
        %3150 = vst [vmem:[#allocation2 + $0x38] sm:$0xff] %v3118
        %3151 = vst [vmem:[#allocation2 + $0x40] sm:$0xff] %v3119
        %3152 = vst [vmem:[#allocation2 + $0x48] sm:$0xff] %v3120
        %3153 = vst [vmem:[#allocation2 + $0x50] sm:$0xff] %v3121
        %3154 = vst [vmem:[#allocation2 + $0x58] sm:$0xff] %v3122
        %3155 = vst [vmem:[#allocation2 + $0x60] sm:$0xff] %v3123
        %3156 = vst [vmem:[#allocation2 + $0x68] sm:$0xff] %v3124
        %3157 = vst [vmem:[#allocation2 + $0x70] sm:$0xff] %v3125
        %3158 = vst [vmem:[#allocation2 + $0x78] sm:$0xff] %v3126
        %3159 = vst [vmem:[#allocation2 + $0x80] sm:$0xff] %v3127
        %3160 = vst [vmem:[#allocation2 + $0x88] sm:$0xff] %v3128
        %3161 = vst [vmem:[#allocation2 + $0x90] sm:$0xff] %v3129
        %3162 = vst [vmem:[#allocation2 + $0x98] sm:$0xff] %v3130
        %3163 = vst [vmem:[#allocation2 + $0xa0] sm:$0xff] %v3131
        %3164 = vst [vmem:[#allocation2 + $0xa8] sm:$0xff] %v3132
        %3165 = vst [vmem:[#allocation2 + $0xb0] sm:$0xff] %v3133
        %3166 = vst [vmem:[#allocation2 + $0xb8] sm:$0xff] %v3134
        %3167 = vst [vmem:[#allocation2 + $0xc0] sm:$0xff] %v3135
        %3168 = vst [vmem:[#allocation2 + $0xc8] sm:$0xff] %v3136
        %3169 = vst [vmem:[#allocation2 + $0xd0] sm:$0xff] %v3137
        %3170 = vst [vmem:[#allocation2 + $0xd8] sm:$0xff] %v3138
        %3171 = vst [vmem:[#allocation2 + $0xe0] sm:$0xff] %v3139
        %3172 = vst [vmem:[#allocation2 + $0xe8] sm:$0xff] %v3140
        %3173 = vst [vmem:[#allocation2 + $0xf0] sm:$0xff] %v3141
        %3174 = vst [vmem:[#allocation2 + $0xf8] sm:$0xff] %v3142
        %3175 = vst [vmem:[#allocation2 + $0x100] sm:$0xff] %v3143
        %3176 = vst [vmem:[#allocation2 + $0x108] sm:$0xff] %v3144
        %v3177 = vld [vmem:[#allocation2] sm:$0xff]
        %v3178 = vld [vmem:[#allocation2 + $0x8] sm:$0xff]
        %v3179 = vld [vmem:[#allocation2 + $0x10] sm:$0xff]
        %v3180 = vld [vmem:[#allocation2 + $0x18] sm:$0xff]
        %v3181 = vld [vmem:[#allocation2 + $0x20] sm:$0xff]
        %v3182 = vld [vmem:[#allocation2 + $0x28] sm:$0xff]
        %v3183 = vld [vmem:[#allocation2 + $0x30] sm:$0xff]
        %v3184 = vld [vmem:[#allocation2 + $0x38] sm:$0xff]
        %v3185 = vld [vmem:[#allocation2 + $0x40] sm:$0xff]
        %v3186 = vld [vmem:[#allocation2 + $0x48] sm:$0xff]
        %v3187 = vld [vmem:[#allocation2 + $0x50] sm:$0xff]
        %v3188 = vld [vmem:[#allocation2 + $0x58] sm:$0xff]
        %v3189 = vld [vmem:[#allocation2 + $0x60] sm:$0xff]
        %v3190 = vld [vmem:[#allocation2 + $0x68] sm:$0xff]
        %v3191 = vld [vmem:[#allocation2 + $0x70] sm:$0xff]
        %v3192 = vld [vmem:[#allocation2 + $0x78] sm:$0xff]
        %v3193 = vld [vmem:[#allocation2 + $0x80] sm:$0xff]
        %v3194 = vld [vmem:[#allocation2 + $0x88] sm:$0xff]
        %v3195 = vld [vmem:[#allocation2 + $0x90] sm:$0xff]
        %v3196 = vld [vmem:[#allocation2 + $0x98] sm:$0xff]
        %v3197 = vld [vmem:[#allocation2 + $0xa0] sm:$0xff]
        %v3198 = vld [vmem:[#allocation2 + $0xa8] sm:$0xff]
        %v3199 = vld [vmem:[#allocation2 + $0xb0] sm:$0xff]
        %v3200 = vld [vmem:[#allocation2 + $0xb8] sm:$0xff]
        %v3201 = vld [vmem:[#allocation2 + $0xc0] sm:$0xff]
        %v3202 = vld [vmem:[#allocation2 + $0xc8] sm:$0xff]
        %v3203 = vld [vmem:[#allocation2 + $0xd0] sm:$0xff]
        %v3204 = vld [vmem:[#allocation2 + $0xd8] sm:$0xff]
        %v3205 = vld [vmem:[#allocation2 + $0xe0] sm:$0xff]
        %v3206 = vld [vmem:[#allocation2 + $0xe8] sm:$0xff]
        %v3207 = vld [vmem:[#allocation2 + $0xf0] sm:$0xff]
        %v3208 = vld [vmem:[#allocation2 + $0xf8] sm:$0xff]
        %v3209 = vld [vmem:[#allocation2 + $0x100] sm:$0xff]
        %v3210 = vld [vmem:[#allocation2 + $0x108] sm:$0xff]
        %v3211 = vld [vmem:[#allocation2 + $0x110] sm:$0xff]
        %v3212 = vld [vmem:[#allocation2 + $0x118] sm:$0xff]
        %v3213 = vrot.slane %v3177, 7
        %v3214 = vrot.slane %v3178, 7
        %v3215 = vrot.slane %v3179, 7
        %v3216 = vrot.slane %v3180, 7
        %v3217 = vrot.slane %v3181, 7
        %v3218 = vrot.slane %v3182, 7
        %v3219 = vrot.slane %v3183, 7
        %v3220 = vrot.slane %v3184, 7
        %v3221 = vrot.slane %v3185, 7
        %v3222 = vrot.slane %v3186, 7
        %v3223 = vrot.slane %v3187, 7
        %v3224 = vrot.slane %v3188, 7
        %v3225 = vrot.slane %v3189, 7
        %v3226 = vrot.slane %v3190, 7
        %v3227 = vrot.slane %v3191, 7
        %v3228 = vrot.slane %v3192, 7
        %v3229 = vrot.slane %v3193, 7
        %v3230 = vrot.slane %v3194, 7
        %v3231 = vrot.slane %v3195, 7
        %v3232 = vrot.slane %v3196, 7
        %v3233 = vrot.slane %v3197, 7
        %v3234 = vrot.slane %v3198, 7
        %v3235 = vrot.slane %v3199, 7
        %v3236 = vrot.slane %v3200, 7
        %v3237 = vrot.slane %v3201, 7
        %v3238 = vrot.slane %v3202, 7
        %v3239 = vrot.slane %v3203, 7
        %v3240 = vrot.slane %v3204, 7
        %v3241 = vrot.slane %v3205, 7
        %v3242 = vrot.slane %v3206, 7
        %v3243 = vrot.slane %v3207, 7
        %v3244 = vrot.slane %v3208, 7
        %v3245 = vrot.slane %v3209, 7
        %v3246 = vrot.slane %v3210, 7
        %v3247 = vrot.slane %v3211, 7
        %v3248 = vrot.slane %v3212, 7
        %v3249 = vsel %vm427, %v3247, %v3248
        %v3250 = vsel %vm427, %v3246, %v3247
        %v3251 = vsel %vm427, %v3245, %v3246
        %v3252 = vsel %vm427, %v3244, %v3245
        %v3253 = vsel %vm427, %v3243, %v3244
        %v3254 = vsel %vm427, %v3242, %v3243
        %v3255 = vsel %vm427, %v3241, %v3242
        %v3256 = vsel %vm427, %v3240, %v3241
        %v3257 = vsel %vm427, %v3239, %v3240
        %v3258 = vsel %vm427, %v3238, %v3239
        %v3259 = vsel %vm427, %v3237, %v3238
        %v3260 = vsel %vm427, %v3236, %v3237
        %v3261 = vsel %vm427, %v3235, %v3236
        %v3262 = vsel %vm427, %v3234, %v3235
        %v3263 = vsel %vm427, %v3233, %v3234
        %v3264 = vsel %vm427, %v3232, %v3233
        %v3265 = vsel %vm427, %v3231, %v3232
        %v3266 = vsel %vm427, %v3230, %v3231
        %v3267 = vsel %vm427, %v3229, %v3230
        %v3268 = vsel %vm427, %v3228, %v3229
        %v3269 = vsel %vm427, %v3227, %v3228
        %v3270 = vsel %vm427, %v3226, %v3227
        %v3271 = vsel %vm427, %v3225, %v3226
        %v3272 = vsel %vm427, %v3224, %v3225
        %v3273 = vsel %vm427, %v3223, %v3224
        %v3274 = vsel %vm427, %v3222, %v3223
        %v3275 = vsel %vm427, %v3221, %v3222
        %v3276 = vsel %vm427, %v3220, %v3221
        %v3277 = vsel %vm427, %v3219, %v3220
        %v3278 = vsel %vm427, %v3218, %v3219
        %v3279 = vsel %vm427, %v3217, %v3218
        %v3280 = vsel %vm427, %v3216, %v3217
        %v3281 = vsel %vm427, %v3215, %v3216
        %v3282 = vsel %vm427, %v3214, %v3215
        %v3283 = vsel %vm427, %v3213, %v3214
        %v3284 = vsel %vm427, %v3248, %v3213
        %v3285 = vmul.f32 %v3284, %v347
        %v3286 = vmul.f32 %v3283, %v348
        %v3287 = vmul.f32 %v3282, %v347
        %v3288 = vmul.f32 %v3281, %v348
        %v3289 = vmul.f32 %v3280, %v347
        %v3290 = vmul.f32 %v3279, %v348
        %v3291 = vmul.f32 %v3278, %v347
        %v3292 = vmul.f32 %v3277, %v348
        %v3293 = vmul.f32 %v3276, %v347
        %v3294 = vmul.f32 %v3275, %v348
        %v3295 = vmul.f32 %v3274, %v347
        %v3296 = vmul.f32 %v3273, %v348
        %v3297 = vmul.f32 %v3272, %v347
        %v3298 = vmul.f32 %v3271, %v348
        %v3299 = vmul.f32 %v3270, %v347
        %v3300 = vmul.f32 %v3269, %v348
        %v3301 = vmul.f32 %v3268, %v347
        %v3302 = vmul.f32 %v3267, %v348
        %v3303 = vmul.f32 %v3266, %v347
        %v3304 = vmul.f32 %v3265, %v348
        %v3305 = vmul.f32 %v3264, %v347
        %v3306 = vmul.f32 %v3263, %v348
        %v3307 = vmul.f32 %v3262, %v347
        %v3308 = vmul.f32 %v3261, %v348
        %v3309 = vmul.f32 %v3260, %v347
        %v3310 = vmul.f32 %v3259, %v348
        %v3311 = vmul.f32 %v3258, %v347
        %v3312 = vmul.f32 %v3257, %v348
        %v3313 = vmul.f32 %v3256, %v347
        %v3314 = vmul.f32 %v3255, %v348
        %v3315 = vmul.f32 %v3254, %v347
        %v3316 = vmul.f32 %v3253, %v348
        %v3317 = vmul.f32 %v3252, %v347
        %v3318 = vmul.f32 %v3251, %v348
        %v3319 = vmul.f32 %v3250, %v347
        %v3320 = vmul.f32 %v3249, %v348
        %v3321 = vrot.slane %v3177, 1
        %v3322 = vrot.slane %v3178, 1
        %v3323 = vrot.slane %v3179, 1
        %v3324 = vrot.slane %v3180, 1
        %v3325 = vrot.slane %v3181, 1
        %v3326 = vrot.slane %v3182, 1
        %v3327 = vrot.slane %v3183, 1
        %v3328 = vrot.slane %v3184, 1
        %v3329 = vrot.slane %v3185, 1
        %v3330 = vrot.slane %v3186, 1
        %v3331 = vrot.slane %v3187, 1
        %v3332 = vrot.slane %v3188, 1
        %v3333 = vrot.slane %v3189, 1
        %v3334 = vrot.slane %v3190, 1
        %v3335 = vrot.slane %v3191, 1
        %v3336 = vrot.slane %v3192, 1
        %v3337 = vrot.slane %v3193, 1
        %v3338 = vrot.slane %v3194, 1
        %v3339 = vrot.slane %v3195, 1
        %v3340 = vrot.slane %v3196, 1
        %v3341 = vrot.slane %v3197, 1
        %v3342 = vrot.slane %v3198, 1
        %v3343 = vrot.slane %v3199, 1
        %v3344 = vrot.slane %v3200, 1
        %v3345 = vrot.slane %v3201, 1
        %v3346 = vrot.slane %v3202, 1
        %v3347 = vrot.slane %v3203, 1
        %v3348 = vrot.slane %v3204, 1
        %v3349 = vrot.slane %v3205, 1
        %v3350 = vrot.slane %v3206, 1
        %v3351 = vrot.slane %v3207, 1
        %v3352 = vrot.slane %v3208, 1
        %v3353 = vrot.slane %v3209, 1
        %v3354 = vrot.slane %v3210, 1
        %v3355 = vrot.slane %v3211, 1
        %v3356 = vrot.slane %v3212, 1
        %v3357 = vsel %vm536, %v3355, %v3356
        %v3358 = vsel %vm536, %v3354, %v3355
        %v3359 = vsel %vm536, %v3353, %v3354
        %v3360 = vsel %vm536, %v3352, %v3353
        %v3361 = vsel %vm536, %v3351, %v3352
        %v3362 = vsel %vm536, %v3350, %v3351
        %v3363 = vsel %vm536, %v3349, %v3350
        %v3364 = vsel %vm536, %v3348, %v3349
        %v3365 = vsel %vm536, %v3347, %v3348
        %v3366 = vsel %vm536, %v3346, %v3347
        %v3367 = vsel %vm536, %v3345, %v3346
        %v3368 = vsel %vm536, %v3344, %v3345
        %v3369 = vsel %vm536, %v3343, %v3344
        %v3370 = vsel %vm536, %v3342, %v3343
        %v3371 = vsel %vm536, %v3341, %v3342
        %v3372 = vsel %vm536, %v3340, %v3341
        %v3373 = vsel %vm536, %v3339, %v3340
        %v3374 = vsel %vm536, %v3338, %v3339
        %v3375 = vsel %vm536, %v3337, %v3338
        %v3376 = vsel %vm536, %v3336, %v3337
        %v3377 = vsel %vm536, %v3335, %v3336
        %v3378 = vsel %vm536, %v3334, %v3335
        %v3379 = vsel %vm536, %v3333, %v3334
        %v3380 = vsel %vm536, %v3332, %v3333
        %v3381 = vsel %vm536, %v3331, %v3332
        %v3382 = vsel %vm536, %v3330, %v3331
        %v3383 = vsel %vm536, %v3329, %v3330
        %v3384 = vsel %vm536, %v3328, %v3329
        %v3385 = vsel %vm536, %v3327, %v3328
        %v3386 = vsel %vm536, %v3326, %v3327
        %v3387 = vsel %vm536, %v3325, %v3326
        %v3388 = vsel %vm536, %v3324, %v3325
        %v3389 = vsel %vm536, %v3323, %v3324
        %v3390 = vsel %vm536, %v3322, %v3323
        %v3391 = vsel %vm536, %v3321, %v3322
        %v3392 = vsel %vm536, %v3356, %v3321
        %v3393 = vmul.f32 %v3391, %v353
        %v3394 = vmul.f32 %v3390, %v354
        %v3395 = vmul.f32 %v3389, %v353
        %v3396 = vmul.f32 %v3388, %v354
        %v3397 = vmul.f32 %v3387, %v353
        %v3398 = vmul.f32 %v3386, %v354
        %v3399 = vmul.f32 %v3385, %v353
        %v3400 = vmul.f32 %v3384, %v354
        %v3401 = vmul.f32 %v3383, %v353
        %v3402 = vmul.f32 %v3382, %v354
        %v3403 = vmul.f32 %v3381, %v353
        %v3404 = vmul.f32 %v3380, %v354
        %v3405 = vmul.f32 %v3379, %v353
        %v3406 = vmul.f32 %v3378, %v354
        %v3407 = vmul.f32 %v3377, %v353
        %v3408 = vmul.f32 %v3376, %v354
        %v3409 = vmul.f32 %v3375, %v353
        %v3410 = vmul.f32 %v3374, %v354
        %v3411 = vmul.f32 %v3373, %v353
        %v3412 = vmul.f32 %v3372, %v354
        %v3413 = vmul.f32 %v3371, %v353
        %v3414 = vmul.f32 %v3370, %v354
        %v3415 = vmul.f32 %v3369, %v353
        %v3416 = vmul.f32 %v3368, %v354
        %v3417 = vmul.f32 %v3367, %v353
        %v3418 = vmul.f32 %v3366, %v354
        %v3419 = vmul.f32 %v3365, %v353
        %v3420 = vmul.f32 %v3364, %v354
        %v3421 = vmul.f32 %v3363, %v353
        %v3422 = vmul.f32 %v3362, %v354
        %v3423 = vmul.f32 %v3361, %v353
        %v3424 = vmul.f32 %v3360, %v354
        %v3425 = vmul.f32 %v3359, %v353
        %v3426 = vmul.f32 %v3358, %v354
        %v3427 = vmul.f32 %v3357, %v353
        %v3428 = vmul.f32 %v3392, %v354
        %v3429 = vld [vmem:[#allocation8] sm:$0xff]
        %v3430 = vld [vmem:[#allocation8 + $0x8] sm:$0xff]
        %v3431 = vld [vmem:[#allocation8 + $0x10] sm:$0xff]
        %v3432 = vld [vmem:[#allocation8 + $0x18] sm:$0xff]
        %v3433 = vld [vmem:[#allocation8 + $0x20] sm:$0xff]
        %v3434 = vld [vmem:[#allocation8 + $0x28] sm:$0xff]
        %v3435 = vld [vmem:[#allocation8 + $0x30] sm:$0xff]
        %v3436 = vld [vmem:[#allocation8 + $0x38] sm:$0xff]
        %v3437 = vld [vmem:[#allocation8 + $0x40] sm:$0xff]
        %v3438 = vld [vmem:[#allocation8 + $0x48] sm:$0xff]
        %v3439 = vld [vmem:[#allocation8 + $0x50] sm:$0xff]
        %v3440 = vld [vmem:[#allocation8 + $0x58] sm:$0xff]
        %v3441 = vld [vmem:[#allocation8 + $0x60] sm:$0xff]
        %v3442 = vld [vmem:[#allocation8 + $0x68] sm:$0xff]
        %v3443 = vld [vmem:[#allocation8 + $0x70] sm:$0xff]
        %v3444 = vld [vmem:[#allocation8 + $0x78] sm:$0xff]
        %s3445 = scalar_lea.vmem [#allocation8], 384
        %v3446 = vld [vmem:[%s3445] sm:$0xff]
        %v3447 = vld [vmem:[%s3445 + $0x8] sm:$0xff]
        %v3448 = vld [vmem:[%s3445 + $0x10] sm:$0xff]
        %v3449 = vld [vmem:[%s3445 + $0x18] sm:$0xff]
        %v3450 = vld [vmem:[%s3445 + $0x20] sm:$0xff]
        %v3451 = vld [vmem:[%s3445 + $0x28] sm:$0xff]
        %v3452 = vld [vmem:[%s3445 + $0x30] sm:$0xff]
        %v3453 = vld [vmem:[%s3445 + $0x38] sm:$0xff]
        %v3454 = vld [vmem:[%s3445 + $0x40] sm:$0xff]
        %v3455 = vld [vmem:[%s3445 + $0x48] sm:$0xff]
        %v3456 = vld [vmem:[%s3445 + $0x50] sm:$0xff]
        %v3457 = vld [vmem:[%s3445 + $0x58] sm:$0xff]
        %v3458 = vld [vmem:[%s3445 + $0x60] sm:$0xff]
        %v3459 = vld [vmem:[%s3445 + $0x68] sm:$0xff]
        %v3460 = vld [vmem:[%s3445 + $0x70] sm:$0xff]
        %v3461 = vld [vmem:[%s3445 + $0x78] sm:$0xff]
        %3462 = vmatprep.subr.mxu0 0.0
        %3463 = vmatpush1.msra.mxu0 %v3446
        %3464 = vmatprep.subr.mxu0 0.0
        %3465 = vmatpush1.msra.mxu0 %v3447
        %3466 = vmatprep.subr.mxu0 0.0
        %3467 = vmatpush1.msra.mxu0 %v3448
        %3468 = vmatprep.subr.mxu0 0.0
        %3469 = vmatpush1.msra.mxu0 %v3449
        %3470 = vmatprep.subr.mxu0 0.0
        %3471 = vmatpush1.msra.mxu0 %v3450
        %3472 = vmatprep.subr.mxu0 0.0
        %3473 = vmatpush1.msra.mxu0 %v3451
        %3474 = vmatprep.subr.mxu0 0.0
        %3475 = vmatpush1.msra.mxu0 %v3452
        %3476 = vmatprep.subr.mxu0 0.0
        %3477 = vmatpush1.msra.mxu0 %v3453
        %3478 = vmatprep.subr.mxu0 0.0
        %3479 = vmatpush1.msra.mxu0 %v3454
        %3480 = vmatprep.subr.mxu0 0.0
        %3481 = vmatpush1.msra.mxu0 %v3455
        %3482 = vmatprep.subr.mxu0 0.0
        %3483 = vmatpush1.msra.mxu0 %v3456
        %3484 = vmatprep.subr.mxu0 0.0
        %3485 = vmatpush1.msra.mxu0 %v3457
        %3486 = vmatprep.subr.mxu0 0.0
        %3487 = vmatpush1.msra.mxu0 %v3458
        %3488 = vmatprep.subr.mxu0 0.0
        %3489 = vmatpush1.msra.mxu0 %v3459
        %3490 = vmatprep.subr.mxu0 0.0
        %3491 = vmatpush1.msra.mxu0 %v3460
        %3492 = vmatprep.subr.mxu0 0.0
        %3493 = vmatpush1.msra.mxu0 %v3461
        %3494 = vmatprep.subr.mxu0 0.0
        %3495 = vmatpush1.msra.mxu0 0.0
        %3496 = vmatprep.subr.mxu0 0.0
        %3497 = vmatpush1.msra.mxu0 0.0
        %3498 = vmatprep.subr.mxu0 0.0
        %3499 = vmatpush1.msra.mxu0 0.0
        %3500 = vmatprep.subr.mxu0 0.0
        %3501 = vmatpush1.msra.mxu0 0.0
        %3502 = vmatprep.subr.mxu0 0.0
        %3503 = vmatpush1.msra.mxu0 0.0
        %3504 = vmatprep.subr.mxu0 0.0
        %3505 = vmatpush1.msra.mxu0 0.0
        %3506 = vmatprep.subr.mxu0 0.0
        %3507 = vmatpush1.msra.mxu0 0.0
        %3508 = vmatprep.subr.mxu0 0.0
        %3509 = vmatpush1.msra.mxu0 0.0
        %3510 = vmatprep.subr.mxu0 0.0
        %3511 = vmatpush1.msra.mxu0 0.0
        %3512 = vmatprep.subr.mxu0 0.0
        %3513 = vmatpush1.msra.mxu0 0.0
        %3514 = vmatprep.subr.mxu0 0.0
        %3515 = vmatpush1.msra.mxu0 0.0
        %3516 = vmatprep.subr.mxu0 0.0
        %3517 = vmatpush1.msra.mxu0 0.0
        %3518 = vmatprep.subr.mxu0 0.0
        %3519 = vmatpush1.msra.mxu0 0.0
        %3520 = vmatprep.subr.mxu0 0.0
        %3521 = vmatpush1.msra.mxu0 0.0
        %3522 = vmatprep.subr.mxu0 0.0
        %3523 = vmatpush1.msra.mxu0 0.0
        %3524 = vmatprep.subr.mxu0 0.0
        %3525 = vmatpush1.msra.mxu0 0.0
        %3526 = vmatprep.mubr.f32.mxu0 0.0
        %3527 = vmatmul.mubr.f32.gmra.mrb[0].mxu0 %v3287
        %v3528 = vpop.f32.mrb[0].mxu0
        %v3529 = vadd.f32 0.0, %v3528
        %v3530 = vpop.f32.mrb[0].mxu0
        %3531 = vmatprep.mubr.f32.mxu0 0.0
        %3532 = vmatmul.mubr.f32.gmra.mrb[0].mxu0 %v3288
        %v3533 = vpop.f32.mrb[0].mxu0
        %v3534 = vadd.f32 0.0, %v3533
        %v3535 = vpop.f32.mrb[0].mxu0
        %3536 = vmatprep.mubr.f32.mxu0 0.0
        %3537 = vmatmul.mubr.f32.gmra.mrb[0].mxu0 %v3289
        %v3538 = vpop.f32.mrb[0].mxu0
        %v3539 = vadd.f32 0.0, %v3538
        %v3540 = vpop.f32.mrb[0].mxu0
        %3541 = vmatprep.mubr.f32.mxu0 0.0
        %3542 = vmatmul.mubr.f32.gmra.mrb[0].mxu0 %v3290
        %v3543 = vpop.f32.mrb[0].mxu0
        %v3544 = vadd.f32 0.0, %v3543
        %v3545 = vpop.f32.mrb[0].mxu0
        %3546 = vmatprep.mubr.f32.mxu0 0.0
        %3547 = vmatmul.mubr.f32.gmra.mrb[0].mxu0 %v3291
        %v3548 = vpop.f32.mrb[0].mxu0
        %v3549 = vadd.f32 0.0, %v3548
        %v3550 = vpop.f32.mrb[0].mxu0
        %3551 = vmatprep.mubr.f32.mxu0 0.0
        %3552 = vmatmul.mubr.f32.gmra.mrb[0].mxu0 %v3292
        %v3553 = vpop.f32.mrb[0].mxu0
        %v3554 = vadd.f32 0.0, %v3553
        %v3555 = vpop.f32.mrb[0].mxu0
        %3556 = vmatprep.mubr.f32.mxu0 0.0
        %3557 = vmatmul.mubr.f32.gmra.mrb[0].mxu0 %v3293
        %v3558 = vpop.f32.mrb[0].mxu0
        %v3559 = vadd.f32 0.0, %v3558
        %v3560 = vpop.f32.mrb[0].mxu0
        %3561 = vmatprep.mubr.f32.mxu0 0.0
        %3562 = vmatmul.mubr.f32.gmra.mrb[0].mxu0 %v3294
        %v3563 = vpop.f32.mrb[0].mxu0
        %v3564 = vadd.f32 0.0, %v3563
        %v3565 = vpop.f32.mrb[0].mxu0
        %3566 = vmatprep.mubr.f32.mxu0 0.0
        %3567 = vmatmul.mubr.f32.gmra.mrb[0].mxu0 %v3295
        %v3568 = vpop.f32.mrb[0].mxu0
        %v3569 = vadd.f32 0.0, %v3568
        %v3570 = vpop.f32.mrb[0].mxu0
        %3571 = vmatprep.mubr.f32.mxu0 0.0
        %3572 = vmatmul.mubr.f32.gmra.mrb[0].mxu0 %v3296
        %v3573 = vpop.f32.mrb[0].mxu0
        %v3574 = vadd.f32 0.0, %v3573
        %v3575 = vpop.f32.mrb[0].mxu0
        %3576 = vmatprep.mubr.f32.mxu0 0.0
        %3577 = vmatmul.mubr.f32.gmra.mrb[0].mxu0 %v3297
        %v3578 = vpop.f32.mrb[0].mxu0
        %v3579 = vadd.f32 0.0, %v3578
        %v3580 = vpop.f32.mrb[0].mxu0
        %3581 = vmatprep.mubr.f32.mxu0 0.0
        %3582 = vmatmul.mubr.f32.gmra.mrb[0].mxu0 %v3298
        %v3583 = vpop.f32.mrb[0].mxu0
        %v3584 = vadd.f32 0.0, %v3583
        %v3585 = vpop.f32.mrb[0].mxu0
        %3586 = vmatprep.mubr.f32.mxu0 0.0
        %3587 = vmatmul.mubr.f32.gmra.mrb[0].mxu0 %v3299
        %v3588 = vpop.f32.mrb[0].mxu0
        %v3589 = vadd.f32 0.0, %v3588
        %v3590 = vpop.f32.mrb[0].mxu0
        %3591 = vmatprep.mubr.f32.mxu0 0.0
        %3592 = vmatmul.mubr.f32.gmra.mrb[0].mxu0 %v3300
        %v3593 = vpop.f32.mrb[0].mxu0
        %v3594 = vadd.f32 0.0, %v3593
        %v3595 = vpop.f32.mrb[0].mxu0
        %3596 = vmatprep.mubr.f32.mxu0 0.0
        %3597 = vmatmul.mubr.f32.gmra.mrb[0].mxu0 %v3301
        %v3598 = vpop.f32.mrb[0].mxu0
        %v3599 = vadd.f32 0.0, %v3598
        %v3600 = vpop.f32.mrb[0].mxu0
        %3601 = vmatprep.mubr.f32.mxu0 0.0
        %3602 = vmatmul.mubr.f32.gmra.mrb[0].mxu0 %v3302
        %v3603 = vpop.f32.mrb[0].mxu0
        %v3604 = vadd.f32 0.0, %v3603
        %v3605 = vpop.f32.mrb[0].mxu0
        %3606 = vmatprep.mubr.f32.mxu0 0.0
        %3607 = vmatmul.mubr.f32.gmra.mrb[0].mxu0 %v3303
        %v3608 = vpop.f32.mrb[0].mxu0
        %v3609 = vadd.f32 0.0, %v3608
        %v3610 = vpop.f32.mrb[0].mxu0
        %3611 = vmatprep.mubr.f32.mxu0 0.0
        %3612 = vmatmul.mubr.f32.gmra.mrb[0].mxu0 %v3304
        %v3613 = vpop.f32.mrb[0].mxu0
        %v3614 = vadd.f32 0.0, %v3613
        %v3615 = vpop.f32.mrb[0].mxu0
        %3616 = vmatprep.mubr.f32.mxu0 0.0
        %3617 = vmatmul.mubr.f32.gmra.mrb[0].mxu0 %v3305
        %v3618 = vpop.f32.mrb[0].mxu0
        %v3619 = vadd.f32 0.0, %v3618
        %v3620 = vpop.f32.mrb[0].mxu0
        %3621 = vmatprep.mubr.f32.mxu0 0.0
        %3622 = vmatmul.mubr.f32.gmra.mrb[0].mxu0 %v3306
        %v3623 = vpop.f32.mrb[0].mxu0
        %v3624 = vadd.f32 0.0, %v3623
        %v3625 = vpop.f32.mrb[0].mxu0
        %3626 = vmatprep.mubr.f32.mxu0 0.0
        %3627 = vmatmul.mubr.f32.gmra.mrb[0].mxu0 %v3307
        %v3628 = vpop.f32.mrb[0].mxu0
        %v3629 = vadd.f32 0.0, %v3628
        %v3630 = vpop.f32.mrb[0].mxu0
        %3631 = vmatprep.mubr.f32.mxu0 0.0
        %3632 = vmatmul.mubr.f32.gmra.mrb[0].mxu0 %v3308
        %v3633 = vpop.f32.mrb[0].mxu0
        %v3634 = vadd.f32 0.0, %v3633
        %v3635 = vpop.f32.mrb[0].mxu0
        %3636 = vmatprep.mubr.f32.mxu0 0.0
        %3637 = vmatmul.mubr.f32.gmra.mrb[0].mxu0 %v3309
        %v3638 = vpop.f32.mrb[0].mxu0
        %v3639 = vadd.f32 0.0, %v3638
        %v3640 = vpop.f32.mrb[0].mxu0
        %3641 = vmatprep.mubr.f32.mxu0 0.0
        %3642 = vmatmul.mubr.f32.gmra.mrb[0].mxu0 %v3310
        %v3643 = vpop.f32.mrb[0].mxu0
        %v3644 = vadd.f32 0.0, %v3643
        %v3645 = vpop.f32.mrb[0].mxu0
        %3646 = vmatprep.mubr.f32.mxu0 0.0
        %3647 = vmatmul.mubr.f32.gmra.mrb[0].mxu0 %v3311
        %v3648 = vpop.f32.mrb[0].mxu0
        %v3649 = vadd.f32 0.0, %v3648
        %v3650 = vpop.f32.mrb[0].mxu0
        %3651 = vmatprep.mubr.f32.mxu0 0.0
        %3652 = vmatmul.mubr.f32.gmra.mrb[0].mxu0 %v3312
        %v3653 = vpop.f32.mrb[0].mxu0
        %v3654 = vadd.f32 0.0, %v3653
        %v3655 = vpop.f32.mrb[0].mxu0
        %3656 = vmatprep.mubr.f32.mxu0 0.0
        %3657 = vmatmul.mubr.f32.gmra.mrb[0].mxu0 %v3313
        %v3658 = vpop.f32.mrb[0].mxu0
        %v3659 = vadd.f32 0.0, %v3658
        %v3660 = vpop.f32.mrb[0].mxu0
        %3661 = vmatprep.mubr.f32.mxu0 0.0
        %3662 = vmatmul.mubr.f32.gmra.mrb[0].mxu0 %v3314
        %v3663 = vpop.f32.mrb[0].mxu0
        %v3664 = vadd.f32 0.0, %v3663
        %v3665 = vpop.f32.mrb[0].mxu0
        %3666 = vmatprep.mubr.f32.mxu0 0.0
        %3667 = vmatmul.mubr.f32.gmra.mrb[0].mxu0 %v3315
        %v3668 = vpop.f32.mrb[0].mxu0
        %v3669 = vadd.f32 0.0, %v3668
        %v3670 = vpop.f32.mrb[0].mxu0
        %3671 = vmatprep.mubr.f32.mxu0 0.0
        %3672 = vmatmul.mubr.f32.gmra.mrb[0].mxu0 %v3316
        %v3673 = vpop.f32.mrb[0].mxu0
        %v3674 = vadd.f32 0.0, %v3673
        %v3675 = vpop.f32.mrb[0].mxu0
        %3676 = vmatprep.mubr.f32.mxu0 0.0
        %3677 = vmatmul.mubr.f32.gmra.mrb[0].mxu0 %v3317
        %v3678 = vpop.f32.mrb[0].mxu0
        %v3679 = vadd.f32 0.0, %v3678
        %v3680 = vpop.f32.mrb[0].mxu0
        %3681 = vmatprep.mubr.f32.mxu0 0.0
        %3682 = vmatmul.mubr.f32.gmra.mrb[0].mxu0 %v3318
        %v3683 = vpop.f32.mrb[0].mxu0
        %v3684 = vadd.f32 0.0, %v3683
        %v3685 = vpop.f32.mrb[0].mxu0
        %3686 = vdwg.mxu0
        %3687 = vmatprep.subr.mxu0 0.0
        %3688 = vmatpush1.msra.mxu0 %v3429
        %3689 = vmatprep.subr.mxu0 0.0
        %3690 = vmatpush1.msra.mxu0 %v3430
        %3691 = vmatprep.subr.mxu0 0.0
        %3692 = vmatpush1.msra.mxu0 %v3431
        %3693 = vmatprep.subr.mxu0 0.0
        %3694 = vmatpush1.msra.mxu0 %v3432
        %3695 = vmatprep.subr.mxu0 0.0
        %3696 = vmatpush1.msra.mxu0 %v3433
        %3697 = vmatprep.subr.mxu0 0.0
        %3698 = vmatpush1.msra.mxu0 %v3434
        %3699 = vmatprep.subr.mxu0 0.0
        %3700 = vmatpush1.msra.mxu0 %v3435
        %3701 = vmatprep.subr.mxu0 0.0
        %3702 = vmatpush1.msra.mxu0 %v3436
        %3703 = vmatprep.subr.mxu0 0.0
        %3704 = vmatpush1.msra.mxu0 %v3437
        %3705 = vmatprep.subr.mxu0 0.0
        %3706 = vmatpush1.msra.mxu0 %v3438
        %3707 = vmatprep.subr.mxu0 0.0
        %3708 = vmatpush1.msra.mxu0 %v3439
        %3709 = vmatprep.subr.mxu0 0.0
        %3710 = vmatpush1.msra.mxu0 %v3440
        %3711 = vmatprep.subr.mxu0 0.0
        %3712 = vmatpush1.msra.mxu0 %v3441
        %3713 = vmatprep.subr.mxu0 0.0
        %3714 = vmatpush1.msra.mxu0 %v3442
        %3715 = vmatprep.subr.mxu0 0.0
        %3716 = vmatpush1.msra.mxu0 %v3443
        %3717 = vmatprep.subr.mxu0 0.0
        %3718 = vmatpush1.msra.mxu0 %v3444
        %3719 = vmatprep.subr.mxu0 0.0
        %3720 = vmatpush1.msra.mxu0 0.0
        %3721 = vmatprep.subr.mxu0 0.0
        %3722 = vmatpush1.msra.mxu0 0.0
        %3723 = vmatprep.subr.mxu0 0.0
        %3724 = vmatpush1.msra.mxu0 0.0
        %3725 = vmatprep.subr.mxu0 0.0
        %3726 = vmatpush1.msra.mxu0 0.0
        %3727 = vmatprep.subr.mxu0 0.0
        %3728 = vmatpush1.msra.mxu0 0.0
        %3729 = vmatprep.subr.mxu0 0.0
        %3730 = vmatpush1.msra.mxu0 0.0
        %3731 = vmatprep.subr.mxu0 0.0
        %3732 = vmatpush1.msra.mxu0 0.0
        %3733 = vmatprep.subr.mxu0 0.0
        %3734 = vmatpush1.msra.mxu0 0.0
        %3735 = vmatprep.subr.mxu0 0.0
        %3736 = vmatpush1.msra.mxu0 0.0
        %3737 = vmatprep.subr.mxu0 0.0
        %3738 = vmatpush1.msra.mxu0 0.0
        %3739 = vmatprep.subr.mxu0 0.0
        %3740 = vmatpush1.msra.mxu0 0.0
        %3741 = vmatprep.subr.mxu0 0.0
        %3742 = vmatpush1.msra.mxu0 0.0
        %3743 = vmatprep.subr.mxu0 0.0
        %3744 = vmatpush1.msra.mxu0 0.0
        %3745 = vmatprep.subr.mxu0 0.0
        %3746 = vmatpush1.msra.mxu0 0.0
        %3747 = vmatprep.subr.mxu0 0.0
        %3748 = vmatpush1.msra.mxu0 0.0
        %3749 = vmatprep.subr.mxu0 0.0
        %3750 = vmatpush1.msra.mxu0 0.0
        %3751 = vmatprep.mubr.f32.mxu0 0.0
        %3752 = vmatmul.mubr.f32.gmra.mrb[0].mxu0 %v3285
        %v3753 = vpop.f32.mrb[0].mxu0
        %v3754 = vadd.f32 %v3529, %v3753
        %v3755 = vpop.f32.mrb[0].mxu0
        %3756 = vmatprep.mubr.f32.mxu0 0.0
        %3757 = vmatmul.mubr.f32.gmra.mrb[0].mxu0 %v3286
        %v3758 = vpop.f32.mrb[0].mxu0
        %v3759 = vadd.f32 %v3534, %v3758
        %v3760 = vpop.f32.mrb[0].mxu0
        %3761 = vmatprep.mubr.f32.mxu0 0.0
        %3762 = vmatmul.mubr.f32.gmra.mrb[0].mxu0 %v3287
        %v3763 = vpop.f32.mrb[0].mxu0
        %v3764 = vadd.f32 %v3539, %v3763
        %v3765 = vpop.f32.mrb[0].mxu0
        %3766 = vmatprep.mubr.f32.mxu0 0.0
        %3767 = vmatmul.mubr.f32.gmra.mrb[0].mxu0 %v3288
        %v3768 = vpop.f32.mrb[0].mxu0
        %v3769 = vadd.f32 %v3544, %v3768
        %v3770 = vpop.f32.mrb[0].mxu0
        %3771 = vmatprep.mubr.f32.mxu0 0.0
        %3772 = vmatmul.mubr.f32.gmra.mrb[0].mxu0 %v3289
        %v3773 = vpop.f32.mrb[0].mxu0
        %v3774 = vadd.f32 %v3549, %v3773
        %v3775 = vpop.f32.mrb[0].mxu0
        %3776 = vmatprep.mubr.f32.mxu0 0.0
        %3777 = vmatmul.mubr.f32.gmra.mrb[0].mxu0 %v3290
        %v3778 = vpop.f32.mrb[0].mxu0
        %v3779 = vadd.f32 %v3554, %v3778
        %v3780 = vpop.f32.mrb[0].mxu0
        %3781 = vmatprep.mubr.f32.mxu0 0.0
        %3782 = vmatmul.mubr.f32.gmra.mrb[0].mxu0 %v3291
        %v3783 = vpop.f32.mrb[0].mxu0
        %v3784 = vadd.f32 %v3559, %v3783
        %v3785 = vpop.f32.mrb[0].mxu0
        %3786 = vmatprep.mubr.f32.mxu0 0.0
        %3787 = vmatmul.mubr.f32.gmra.mrb[0].mxu0 %v3292
        %v3788 = vpop.f32.mrb[0].mxu0
        %v3789 = vadd.f32 %v3564, %v3788
        %v3790 = vpop.f32.mrb[0].mxu0
        %3791 = vmatprep.mubr.f32.mxu0 0.0
        %3792 = vmatmul.mubr.f32.gmra.mrb[0].mxu0 %v3293
        %v3793 = vpop.f32.mrb[0].mxu0
        %v3794 = vadd.f32 %v3569, %v3793
        %v3795 = vpop.f32.mrb[0].mxu0
        %3796 = vmatprep.mubr.f32.mxu0 0.0
        %3797 = vmatmul.mubr.f32.gmra.mrb[0].mxu0 %v3294
        %v3798 = vpop.f32.mrb[0].mxu0
        %v3799 = vadd.f32 %v3574, %v3798
        %v3800 = vpop.f32.mrb[0].mxu0
        %3801 = vmatprep.mubr.f32.mxu0 0.0
        %3802 = vmatmul.mubr.f32.gmra.mrb[0].mxu0 %v3295
        %v3803 = vpop.f32.mrb[0].mxu0
        %v3804 = vadd.f32 %v3579, %v3803
        %v3805 = vpop.f32.mrb[0].mxu0
        %3806 = vmatprep.mubr.f32.mxu0 0.0
        %3807 = vmatmul.mubr.f32.gmra.mrb[0].mxu0 %v3296
        %v3808 = vpop.f32.mrb[0].mxu0
        %v3809 = vadd.f32 %v3584, %v3808
        %v3810 = vpop.f32.mrb[0].mxu0
        %3811 = vmatprep.mubr.f32.mxu0 0.0
        %3812 = vmatmul.mubr.f32.gmra.mrb[0].mxu0 %v3297
        %v3813 = vpop.f32.mrb[0].mxu0
        %v3814 = vadd.f32 %v3589, %v3813
        %v3815 = vpop.f32.mrb[0].mxu0
        %3816 = vmatprep.mubr.f32.mxu0 0.0
        %3817 = vmatmul.mubr.f32.gmra.mrb[0].mxu0 %v3298
        %v3818 = vpop.f32.mrb[0].mxu0
        %v3819 = vadd.f32 %v3594, %v3818
        %v3820 = vpop.f32.mrb[0].mxu0
        %3821 = vmatprep.mubr.f32.mxu0 0.0
        %3822 = vmatmul.mubr.f32.gmra.mrb[0].mxu0 %v3299
        %v3823 = vpop.f32.mrb[0].mxu0
        %v3824 = vadd.f32 %v3599, %v3823
        %v3825 = vpop.f32.mrb[0].mxu0
        %3826 = vmatprep.mubr.f32.mxu0 0.0
        %3827 = vmatmul.mubr.f32.gmra.mrb[0].mxu0 %v3300
        %v3828 = vpop.f32.mrb[0].mxu0
        %v3829 = vadd.f32 %v3604, %v3828
        %v3830 = vpop.f32.mrb[0].mxu0
        %3831 = vmatprep.mubr.f32.mxu0 0.0
        %3832 = vmatmul.mubr.f32.gmra.mrb[0].mxu0 %v3301
        %v3833 = vpop.f32.mrb[0].mxu0
        %v3834 = vadd.f32 %v3609, %v3833
        %v3835 = vpop.f32.mrb[0].mxu0
        %3836 = vmatprep.mubr.f32.mxu0 0.0
        %3837 = vmatmul.mubr.f32.gmra.mrb[0].mxu0 %v3302
        %v3838 = vpop.f32.mrb[0].mxu0
        %v3839 = vadd.f32 %v3614, %v3838
        %v3840 = vpop.f32.mrb[0].mxu0
        %3841 = vmatprep.mubr.f32.mxu0 0.0
        %3842 = vmatmul.mubr.f32.gmra.mrb[0].mxu0 %v3303
        %v3843 = vpop.f32.mrb[0].mxu0
        %v3844 = vadd.f32 %v3619, %v3843
        %v3845 = vpop.f32.mrb[0].mxu0
        %3846 = vmatprep.mubr.f32.mxu0 0.0
        %3847 = vmatmul.mubr.f32.gmra.mrb[0].mxu0 %v3304
        %v3848 = vpop.f32.mrb[0].mxu0
        %v3849 = vadd.f32 %v3624, %v3848
        %v3850 = vpop.f32.mrb[0].mxu0
        %3851 = vmatprep.mubr.f32.mxu0 0.0
        %3852 = vmatmul.mubr.f32.gmra.mrb[0].mxu0 %v3305
        %v3853 = vpop.f32.mrb[0].mxu0
        %v3854 = vadd.f32 %v3629, %v3853
        %v3855 = vpop.f32.mrb[0].mxu0
        %3856 = vmatprep.mubr.f32.mxu0 0.0
        %3857 = vmatmul.mubr.f32.gmra.mrb[0].mxu0 %v3306
        %v3858 = vpop.f32.mrb[0].mxu0
        %v3859 = vadd.f32 %v3634, %v3858
        %v3860 = vpop.f32.mrb[0].mxu0
        %3861 = vmatprep.mubr.f32.mxu0 0.0
        %3862 = vmatmul.mubr.f32.gmra.mrb[0].mxu0 %v3307
        %v3863 = vpop.f32.mrb[0].mxu0
        %v3864 = vadd.f32 %v3639, %v3863
        %v3865 = vpop.f32.mrb[0].mxu0
        %3866 = vmatprep.mubr.f32.mxu0 0.0
        %3867 = vmatmul.mubr.f32.gmra.mrb[0].mxu0 %v3308
        %v3868 = vpop.f32.mrb[0].mxu0
        %v3869 = vadd.f32 %v3644, %v3868
        %v3870 = vpop.f32.mrb[0].mxu0
        %3871 = vmatprep.mubr.f32.mxu0 0.0
        %3872 = vmatmul.mubr.f32.gmra.mrb[0].mxu0 %v3309
        %v3873 = vpop.f32.mrb[0].mxu0
        %v3874 = vadd.f32 %v3649, %v3873
        %v3875 = vpop.f32.mrb[0].mxu0
        %3876 = vmatprep.mubr.f32.mxu0 0.0
        %3877 = vmatmul.mubr.f32.gmra.mrb[0].mxu0 %v3310
        %v3878 = vpop.f32.mrb[0].mxu0
        %v3879 = vadd.f32 %v3654, %v3878
        %v3880 = vpop.f32.mrb[0].mxu0
        %3881 = vmatprep.mubr.f32.mxu0 0.0
        %3882 = vmatmul.mubr.f32.gmra.mrb[0].mxu0 %v3311
        %v3883 = vpop.f32.mrb[0].mxu0
        %v3884 = vadd.f32 %v3659, %v3883
        %v3885 = vpop.f32.mrb[0].mxu0
        %3886 = vmatprep.mubr.f32.mxu0 0.0
        %3887 = vmatmul.mubr.f32.gmra.mrb[0].mxu0 %v3312
        %v3888 = vpop.f32.mrb[0].mxu0
        %v3889 = vadd.f32 %v3664, %v3888
        %v3890 = vpop.f32.mrb[0].mxu0
        %3891 = vmatprep.mubr.f32.mxu0 0.0
        %3892 = vmatmul.mubr.f32.gmra.mrb[0].mxu0 %v3313
        %v3893 = vpop.f32.mrb[0].mxu0
        %v3894 = vadd.f32 %v3669, %v3893
        %v3895 = vpop.f32.mrb[0].mxu0
        %3896 = vmatprep.mubr.f32.mxu0 0.0
        %3897 = vmatmul.mubr.f32.gmra.mrb[0].mxu0 %v3314
        %v3898 = vpop.f32.mrb[0].mxu0
        %v3899 = vadd.f32 %v3674, %v3898
        %v3900 = vpop.f32.mrb[0].mxu0
        %3901 = vmatprep.mubr.f32.mxu0 0.0
        %3902 = vmatmul.mubr.f32.gmra.mrb[0].mxu0 %v3315
        %v3903 = vpop.f32.mrb[0].mxu0
        %v3904 = vadd.f32 %v3679, %v3903
        %v3905 = vpop.f32.mrb[0].mxu0
        %3906 = vmatprep.mubr.f32.mxu0 0.0
        %3907 = vmatmul.mubr.f32.gmra.mrb[0].mxu0 %v3316
        %v3908 = vpop.f32.mrb[0].mxu0
        %v3909 = vadd.f32 %v3684, %v3908
        %v3910 = vpop.f32.mrb[0].mxu0
        %3911 = vdwg.mxu0
        %s3912 = scalar_lea.vmem [#allocation8], 768
        %v3913 = vld [vmem:[%s3912] sm:$0xff]
        %v3914 = vld [vmem:[%s3912 + $0x8] sm:$0xff]
        %v3915 = vld [vmem:[%s3912 + $0x10] sm:$0xff]
        %v3916 = vld [vmem:[%s3912 + $0x18] sm:$0xff]
        %v3917 = vld [vmem:[%s3912 + $0x20] sm:$0xff]
        %v3918 = vld [vmem:[%s3912 + $0x28] sm:$0xff]
        %v3919 = vld [vmem:[%s3912 + $0x30] sm:$0xff]
        %v3920 = vld [vmem:[%s3912 + $0x38] sm:$0xff]
        %v3921 = vld [vmem:[%s3912 + $0x40] sm:$0xff]
        %v3922 = vld [vmem:[%s3912 + $0x48] sm:$0xff]
        %v3923 = vld [vmem:[%s3912 + $0x50] sm:$0xff]
        %v3924 = vld [vmem:[%s3912 + $0x58] sm:$0xff]
        %v3925 = vld [vmem:[%s3912 + $0x60] sm:$0xff]
        %v3926 = vld [vmem:[%s3912 + $0x68] sm:$0xff]
        %v3927 = vld [vmem:[%s3912 + $0x70] sm:$0xff]
        %v3928 = vld [vmem:[%s3912 + $0x78] sm:$0xff]
        %3929 = vmatprep.subr.mxu0 0.0
        %3930 = vmatpush1.msra.mxu0 %v3913
        %3931 = vmatprep.subr.mxu0 0.0
        %3932 = vmatpush1.msra.mxu0 %v3914
        %3933 = vmatprep.subr.mxu0 0.0
        %3934 = vmatpush1.msra.mxu0 %v3915
        %3935 = vmatprep.subr.mxu0 0.0
        %3936 = vmatpush1.msra.mxu0 %v3916
        %3937 = vmatprep.subr.mxu0 0.0
        %3938 = vmatpush1.msra.mxu0 %v3917
        %3939 = vmatprep.subr.mxu0 0.0
        %3940 = vmatpush1.msra.mxu0 %v3918
        %3941 = vmatprep.subr.mxu0 0.0
        %3942 = vmatpush1.msra.mxu0 %v3919
        %3943 = vmatprep.subr.mxu0 0.0
        %3944 = vmatpush1.msra.mxu0 %v3920
        %3945 = vmatprep.subr.mxu0 0.0
        %3946 = vmatpush1.msra.mxu0 %v3921
        %3947 = vmatprep.subr.mxu0 0.0
        %3948 = vmatpush1.msra.mxu0 %v3922
        %3949 = vmatprep.subr.mxu0 0.0
        %3950 = vmatpush1.msra.mxu0 %v3923
        %3951 = vmatprep.subr.mxu0 0.0
        %3952 = vmatpush1.msra.mxu0 %v3924
        %3953 = vmatprep.subr.mxu0 0.0
        %3954 = vmatpush1.msra.mxu0 %v3925
        %3955 = vmatprep.subr.mxu0 0.0
        %3956 = vmatpush1.msra.mxu0 %v3926
        %3957 = vmatprep.subr.mxu0 0.0
        %3958 = vmatpush1.msra.mxu0 %v3927
        %3959 = vmatprep.subr.mxu0 0.0
        %3960 = vmatpush1.msra.mxu0 %v3928
        %3961 = vmatprep.subr.mxu0 0.0
        %3962 = vmatpush1.msra.mxu0 0.0
        %3963 = vmatprep.subr.mxu0 0.0
        %3964 = vmatpush1.msra.mxu0 0.0
        %3965 = vmatprep.subr.mxu0 0.0
        %3966 = vmatpush1.msra.mxu0 0.0
        %3967 = vmatprep.subr.mxu0 0.0
        %3968 = vmatpush1.msra.mxu0 0.0
        %3969 = vmatprep.subr.mxu0 0.0
        %3970 = vmatpush1.msra.mxu0 0.0
        %3971 = vmatprep.subr.mxu0 0.0
        %3972 = vmatpush1.msra.mxu0 0.0
        %3973 = vmatprep.subr.mxu0 0.0
        %3974 = vmatpush1.msra.mxu0 0.0
        %3975 = vmatprep.subr.mxu0 0.0
        %3976 = vmatpush1.msra.mxu0 0.0
        %3977 = vmatprep.subr.mxu0 0.0
        %3978 = vmatpush1.msra.mxu0 0.0
        %3979 = vmatprep.subr.mxu0 0.0
        %3980 = vmatpush1.msra.mxu0 0.0
        %3981 = vmatprep.subr.mxu0 0.0
        %3982 = vmatpush1.msra.mxu0 0.0
        %3983 = vmatprep.subr.mxu0 0.0
        %3984 = vmatpush1.msra.mxu0 0.0
        %3985 = vmatprep.subr.mxu0 0.0
        %3986 = vmatpush1.msra.mxu0 0.0
        %3987 = vmatprep.subr.mxu0 0.0
        %3988 = vmatpush1.msra.mxu0 0.0
        %3989 = vmatprep.subr.mxu0 0.0
        %3990 = vmatpush1.msra.mxu0 0.0
        %3991 = vmatprep.subr.mxu0 0.0
        %3992 = vmatpush1.msra.mxu0 0.0
        %3993 = vmatprep.mubr.f32.mxu0 0.0
        %3994 = vmatmul.mubr.f32.gmra.mrb[0].mxu0 %v3289
        %v3995 = vpop.f32.mrb[0].mxu0
        %v3996 = vadd.f32 0.0, %v3995
        %v3997 = vpop.f32.mrb[0].mxu0
        %3998 = vmatprep.mubr.f32.mxu0 0.0
        %3999 = vmatmul.mubr.f32.gmra.mrb[0].mxu0 %v3290
        %v4000 = vpop.f32.mrb[0].mxu0
        %v4001 = vadd.f32 0.0, %v4000
        %v4002 = vpop.f32.mrb[0].mxu0
        %4003 = vmatprep.mubr.f32.mxu0 0.0
        %4004 = vmatmul.mubr.f32.gmra.mrb[0].mxu0 %v3291
        %v4005 = vpop.f32.mrb[0].mxu0
        %v4006 = vadd.f32 0.0, %v4005
        %v4007 = vpop.f32.mrb[0].mxu0
        %4008 = vmatprep.mubr.f32.mxu0 0.0
        %4009 = vmatmul.mubr.f32.gmra.mrb[0].mxu0 %v3292
        %v4010 = vpop.f32.mrb[0].mxu0
        %v4011 = vadd.f32 0.0, %v4010
        %v4012 = vpop.f32.mrb[0].mxu0
        %4013 = vmatprep.mubr.f32.mxu0 0.0
        %4014 = vmatmul.mubr.f32.gmra.mrb[0].mxu0 %v3293
        %v4015 = vpop.f32.mrb[0].mxu0
        %v4016 = vadd.f32 0.0, %v4015
        %v4017 = vpop.f32.mrb[0].mxu0
        %4018 = vmatprep.mubr.f32.mxu0 0.0
        %4019 = vmatmul.mubr.f32.gmra.mrb[0].mxu0 %v3294
        %v4020 = vpop.f32.mrb[0].mxu0
        %v4021 = vadd.f32 0.0, %v4020
        %v4022 = vpop.f32.mrb[0].mxu0
        %4023 = vmatprep.mubr.f32.mxu0 0.0
        %4024 = vmatmul.mubr.f32.gmra.mrb[0].mxu0 %v3295
        %v4025 = vpop.f32.mrb[0].mxu0
        %v4026 = vadd.f32 0.0, %v4025
        %v4027 = vpop.f32.mrb[0].mxu0
        %4028 = vmatprep.mubr.f32.mxu0 0.0
        %4029 = vmatmul.mubr.f32.gmra.mrb[0].mxu0 %v3296
        %v4030 = vpop.f32.mrb[0].mxu0
        %v4031 = vadd.f32 0.0, %v4030
        %v4032 = vpop.f32.mrb[0].mxu0
        %4033 = vmatprep.mubr.f32.mxu0 0.0
        %4034 = vmatmul.mubr.f32.gmra.mrb[0].mxu0 %v3297
        %v4035 = vpop.f32.mrb[0].mxu0
        %v4036 = vadd.f32 0.0, %v4035
        %v4037 = vpop.f32.mrb[0].mxu0
        %4038 = vmatprep.mubr.f32.mxu0 0.0
        %4039 = vmatmul.mubr.f32.gmra.mrb[0].mxu0 %v3298
        %v4040 = vpop.f32.mrb[0].mxu0
        %v4041 = vadd.f32 0.0, %v4040
        %v4042 = vpop.f32.mrb[0].mxu0
        %4043 = vmatprep.mubr.f32.mxu0 0.0
        %4044 = vmatmul.mubr.f32.gmra.mrb[0].mxu0 %v3299
        %v4045 = vpop.f32.mrb[0].mxu0
        %v4046 = vadd.f32 0.0, %v4045
        %v4047 = vpop.f32.mrb[0].mxu0
        %4048 = vmatprep.mubr.f32.mxu0 0.0
        %4049 = vmatmul.mubr.f32.gmra.mrb[0].mxu0 %v3300
        %v4050 = vpop.f32.mrb[0].mxu0
        %v4051 = vadd.f32 0.0, %v4050
        %v4052 = vpop.f32.mrb[0].mxu0
        %4053 = vmatprep.mubr.f32.mxu0 0.0
        %4054 = vmatmul.mubr.f32.gmra.mrb[0].mxu0 %v3301
        %v4055 = vpop.f32.mrb[0].mxu0
        %v4056 = vadd.f32 0.0, %v4055
        %v4057 = vpop.f32.mrb[0].mxu0
        %4058 = vmatprep.mubr.f32.mxu0 0.0
        %4059 = vmatmul.mubr.f32.gmra.mrb[0].mxu0 %v3302
        %v4060 = vpop.f32.mrb[0].mxu0
        %v4061 = vadd.f32 0.0, %v4060
        %v4062 = vpop.f32.mrb[0].mxu0
        %4063 = vmatprep.mubr.f32.mxu0 0.0
        %4064 = vmatmul.mubr.f32.gmra.mrb[0].mxu0 %v3303
        %v4065 = vpop.f32.mrb[0].mxu0
        %v4066 = vadd.f32 0.0, %v4065
        %v4067 = vpop.f32.mrb[0].mxu0
        %4068 = vmatprep.mubr.f32.mxu0 0.0
        %4069 = vmatmul.mubr.f32.gmra.mrb[0].mxu0 %v3304
        %v4070 = vpop.f32.mrb[0].mxu0
        %v4071 = vadd.f32 0.0, %v4070
        %v4072 = vpop.f32.mrb[0].mxu0
        %4073 = vmatprep.mubr.f32.mxu0 0.0
        %4074 = vmatmul.mubr.f32.gmra.mrb[0].mxu0 %v3305
        %v4075 = vpop.f32.mrb[0].mxu0
        %v4076 = vadd.f32 0.0, %v4075
        %v4077 = vpop.f32.mrb[0].mxu0
        %4078 = vmatprep.mubr.f32.mxu0 0.0
        %4079 = vmatmul.mubr.f32.gmra.mrb[0].mxu0 %v3306
        %v4080 = vpop.f32.mrb[0].mxu0
        %v4081 = vadd.f32 0.0, %v4080
        %v4082 = vpop.f32.mrb[0].mxu0
        %4083 = vmatprep.mubr.f32.mxu0 0.0
        %4084 = vmatmul.mubr.f32.gmra.mrb[0].mxu0 %v3307
        %v4085 = vpop.f32.mrb[0].mxu0
        %v4086 = vadd.f32 0.0, %v4085
        %v4087 = vpop.f32.mrb[0].mxu0
        %4088 = vmatprep.mubr.f32.mxu0 0.0
        %4089 = vmatmul.mubr.f32.gmra.mrb[0].mxu0 %v3308
        %v4090 = vpop.f32.mrb[0].mxu0
        %v4091 = vadd.f32 0.0, %v4090
        %v4092 = vpop.f32.mrb[0].mxu0
        %4093 = vmatprep.mubr.f32.mxu0 0.0
        %4094 = vmatmul.mubr.f32.gmra.mrb[0].mxu0 %v3309
        %v4095 = vpop.f32.mrb[0].mxu0
        %v4096 = vadd.f32 0.0, %v4095
        %v4097 = vpop.f32.mrb[0].mxu0
        %4098 = vmatprep.mubr.f32.mxu0 0.0
        %4099 = vmatmul.mubr.f32.gmra.mrb[0].mxu0 %v3310
        %v4100 = vpop.f32.mrb[0].mxu0
        %v4101 = vadd.f32 0.0, %v4100
        %v4102 = vpop.f32.mrb[0].mxu0
        %4103 = vmatprep.mubr.f32.mxu0 0.0
        %4104 = vmatmul.mubr.f32.gmra.mrb[0].mxu0 %v3311
        %v4105 = vpop.f32.mrb[0].mxu0
        %v4106 = vadd.f32 0.0, %v4105
        %v4107 = vpop.f32.mrb[0].mxu0
        %4108 = vmatprep.mubr.f32.mxu0 0.0
        %4109 = vmatmul.mubr.f32.gmra.mrb[0].mxu0 %v3312
        %v4110 = vpop.f32.mrb[0].mxu0
        %v4111 = vadd.f32 0.0, %v4110
        %v4112 = vpop.f32.mrb[0].mxu0
        %4113 = vmatprep.mubr.f32.mxu0 0.0
        %4114 = vmatmul.mubr.f32.gmra.mrb[0].mxu0 %v3313
        %v4115 = vpop.f32.mrb[0].mxu0
        %v4116 = vadd.f32 0.0, %v4115
        %v4117 = vpop.f32.mrb[0].mxu0
        %4118 = vmatprep.mubr.f32.mxu0 0.0
        %4119 = vmatmul.mubr.f32.gmra.mrb[0].mxu0 %v3314
        %v4120 = vpop.f32.mrb[0].mxu0
        %v4121 = vadd.f32 0.0, %v4120
        %v4122 = vpop.f32.mrb[0].mxu0
        %4123 = vmatprep.mubr.f32.mxu0 0.0
        %4124 = vmatmul.mubr.f32.gmra.mrb[0].mxu0 %v3315
        %v4125 = vpop.f32.mrb[0].mxu0
        %v4126 = vadd.f32 0.0, %v4125
        %v4127 = vpop.f32.mrb[0].mxu0
        %4128 = vmatprep.mubr.f32.mxu0 0.0
        %4129 = vmatmul.mubr.f32.gmra.mrb[0].mxu0 %v3316
        %v4130 = vpop.f32.mrb[0].mxu0
        %v4131 = vadd.f32 0.0, %v4130
        %v4132 = vpop.f32.mrb[0].mxu0
        %4133 = vmatprep.mubr.f32.mxu0 0.0
        %4134 = vmatmul.mubr.f32.gmra.mrb[0].mxu0 %v3317
        %v4135 = vpop.f32.mrb[0].mxu0
        %v4136 = vadd.f32 0.0, %v4135
        %v4137 = vpop.f32.mrb[0].mxu0
        %4138 = vmatprep.mubr.f32.mxu0 0.0
        %4139 = vmatmul.mubr.f32.gmra.mrb[0].mxu0 %v3318
        %v4140 = vpop.f32.mrb[0].mxu0
        %v4141 = vadd.f32 0.0, %v4140
        %v4142 = vpop.f32.mrb[0].mxu0
        %4143 = vmatprep.mubr.f32.mxu0 0.0
        %4144 = vmatmul.mubr.f32.gmra.mrb[0].mxu0 %v3319
        %v4145 = vpop.f32.mrb[0].mxu0
        %v4146 = vadd.f32 0.0, %v4145
        %v4147 = vpop.f32.mrb[0].mxu0
        %4148 = vmatprep.mubr.f32.mxu0 0.0
        %4149 = vmatmul.mubr.f32.gmra.mrb[0].mxu0 %v3320
        %v4150 = vpop.f32.mrb[0].mxu0
        %v4151 = vadd.f32 0.0, %v4150
        %v4152 = vpop.f32.mrb[0].mxu0
        %4153 = vdwg.mxu0
        %v4154 = vadd.f32 %v3754, %v3996
        %v4155 = vadd.f32 %v3759, %v4001
        %v4156 = vadd.f32 %v3764, %v4006
        %v4157 = vadd.f32 %v3769, %v4011
        %v4158 = vadd.f32 %v3774, %v4016
        %v4159 = vadd.f32 %v3779, %v4021
        %v4160 = vadd.f32 %v3784, %v4026
        %v4161 = vadd.f32 %v3789, %v4031
        %v4162 = vadd.f32 %v3794, %v4036
        %v4163 = vadd.f32 %v3799, %v4041
        %v4164 = vadd.f32 %v3804, %v4046
        %v4165 = vadd.f32 %v3809, %v4051
        %v4166 = vadd.f32 %v3814, %v4056
        %v4167 = vadd.f32 %v3819, %v4061
        %v4168 = vadd.f32 %v3824, %v4066
        %v4169 = vadd.f32 %v3829, %v4071
        %v4170 = vadd.f32 %v3834, %v4076
        %v4171 = vadd.f32 %v3839, %v4081
        %v4172 = vadd.f32 %v3844, %v4086
        %v4173 = vadd.f32 %v3849, %v4091
        %v4174 = vadd.f32 %v3854, %v4096
        %v4175 = vadd.f32 %v3859, %v4101
        %v4176 = vadd.f32 %v3864, %v4106
        %v4177 = vadd.f32 %v3869, %v4111
        %v4178 = vadd.f32 %v3874, %v4116
        %v4179 = vadd.f32 %v3879, %v4121
        %v4180 = vadd.f32 %v3884, %v4126
        %v4181 = vadd.f32 %v3889, %v4131
        %v4182 = vadd.f32 %v3894, %v4136
        %v4183 = vadd.f32 %v3899, %v4141
        %v4184 = vadd.f32 %v3904, %v4146
        %v4185 = vadd.f32 %v3909, %v4151
        %s4186 = scalar_lea.vmem [#allocation8], 128
        %v4187 = vld [vmem:[%s4186] sm:$0xff]
        %v4188 = vld [vmem:[%s4186 + $0x8] sm:$0xff]
        %v4189 = vld [vmem:[%s4186 + $0x10] sm:$0xff]
        %v4190 = vld [vmem:[%s4186 + $0x18] sm:$0xff]
        %v4191 = vld [vmem:[%s4186 + $0x20] sm:$0xff]
        %v4192 = vld [vmem:[%s4186 + $0x28] sm:$0xff]
        %v4193 = vld [vmem:[%s4186 + $0x30] sm:$0xff]
        %v4194 = vld [vmem:[%s4186 + $0x38] sm:$0xff]
        %v4195 = vld [vmem:[%s4186 + $0x40] sm:$0xff]
        %v4196 = vld [vmem:[%s4186 + $0x48] sm:$0xff]
        %v4197 = vld [vmem:[%s4186 + $0x50] sm:$0xff]
        %v4198 = vld [vmem:[%s4186 + $0x58] sm:$0xff]
        %v4199 = vld [vmem:[%s4186 + $0x60] sm:$0xff]
        %v4200 = vld [vmem:[%s4186 + $0x68] sm:$0xff]
        %v4201 = vld [vmem:[%s4186 + $0x70] sm:$0xff]
        %v4202 = vld [vmem:[%s4186 + $0x78] sm:$0xff]
        %4203 = vmatprep.subr.mxu0 0.0
        %4204 = vmatpush1.msra.mxu0 %v4187
        %4205 = vmatprep.subr.mxu0 0.0
        %4206 = vmatpush1.msra.mxu0 %v4188
        %4207 = vmatprep.subr.mxu0 0.0
        %4208 = vmatpush1.msra.mxu0 %v4189
        %4209 = vmatprep.subr.mxu0 0.0
        %4210 = vmatpush1.msra.mxu0 %v4190
        %4211 = vmatprep.subr.mxu0 0.0
        %4212 = vmatpush1.msra.mxu0 %v4191
        %4213 = vmatprep.subr.mxu0 0.0
        %4214 = vmatpush1.msra.mxu0 %v4192
        %4215 = vmatprep.subr.mxu0 0.0
        %4216 = vmatpush1.msra.mxu0 %v4193
        %4217 = vmatprep.subr.mxu0 0.0
        %4218 = vmatpush1.msra.mxu0 %v4194
        %4219 = vmatprep.subr.mxu0 0.0
        %4220 = vmatpush1.msra.mxu0 %v4195
        %4221 = vmatprep.subr.mxu0 0.0
        %4222 = vmatpush1.msra.mxu0 %v4196
        %4223 = vmatprep.subr.mxu0 0.0
        %4224 = vmatpush1.msra.mxu0 %v4197
        %4225 = vmatprep.subr.mxu0 0.0
        %4226 = vmatpush1.msra.mxu0 %v4198
        %4227 = vmatprep.subr.mxu0 0.0
        %4228 = vmatpush1.msra.mxu0 %v4199
        %4229 = vmatprep.subr.mxu0 0.0
        %4230 = vmatpush1.msra.mxu0 %v4200
        %4231 = vmatprep.subr.mxu0 0.0
        %4232 = vmatpush1.msra.mxu0 %v4201
        %4233 = vmatprep.subr.mxu0 0.0
        %4234 = vmatpush1.msra.mxu0 %v4202
        %4235 = vmatprep.subr.mxu0 0.0
        %4236 = vmatpush1.msra.mxu0 0.0
        %4237 = vmatprep.subr.mxu0 0.0
        %4238 = vmatpush1.msra.mxu0 0.0
        %4239 = vmatprep.subr.mxu0 0.0
        %4240 = vmatpush1.msra.mxu0 0.0
        %4241 = vmatprep.subr.mxu0 0.0
        %4242 = vmatpush1.msra.mxu0 0.0
        %4243 = vmatprep.subr.mxu0 0.0
        %4244 = vmatpush1.msra.mxu0 0.0
        %4245 = vmatprep.subr.mxu0 0.0
        %4246 = vmatpush1.msra.mxu0 0.0
        %4247 = vmatprep.subr.mxu0 0.0
        %4248 = vmatpush1.msra.mxu0 0.0
        %4249 = vmatprep.subr.mxu0 0.0
        %4250 = vmatpush1.msra.mxu0 0.0
        %4251 = vmatprep.subr.mxu0 0.0
        %4252 = vmatpush1.msra.mxu0 0.0
        %4253 = vmatprep.subr.mxu0 0.0
        %4254 = vmatpush1.msra.mxu0 0.0
        %4255 = vmatprep.subr.mxu0 0.0
        %4256 = vmatpush1.msra.mxu0 0.0
        %4257 = vmatprep.subr.mxu0 0.0
        %4258 = vmatpush1.msra.mxu0 0.0
        %4259 = vmatprep.subr.mxu0 0.0
        %4260 = vmatpush1.msra.mxu0 0.0
        %4261 = vmatprep.subr.mxu0 0.0
        %4262 = vmatpush1.msra.mxu0 0.0
        %4263 = vmatprep.subr.mxu0 0.0
        %4264 = vmatpush1.msra.mxu0 0.0
        %4265 = vmatprep.subr.mxu0 0.0
        %4266 = vmatpush1.msra.mxu0 0.0
        %4267 = vmatprep.mubr.f32.mxu0 0.0
        %4268 = vmatmul.mubr.f32.gmra.mrb[0].mxu0 %v3177
        %v4269 = vpop.f32.mrb[0].mxu0
        %v4270 = vadd.f32 0.0, %v4269
        %v4271 = vpop.f32.mrb[0].mxu0
        %4272 = vmatprep.mubr.f32.mxu0 0.0
        %4273 = vmatmul.mubr.f32.gmra.mrb[0].mxu0 %v3178
        %v4274 = vpop.f32.mrb[0].mxu0
        %v4275 = vadd.f32 0.0, %v4274
        %v4276 = vpop.f32.mrb[0].mxu0
        %4277 = vmatprep.mubr.f32.mxu0 0.0
        %4278 = vmatmul.mubr.f32.gmra.mrb[0].mxu0 %v3179
        %v4279 = vpop.f32.mrb[0].mxu0
        %v4280 = vadd.f32 0.0, %v4279
        %v4281 = vpop.f32.mrb[0].mxu0
        %4282 = vmatprep.mubr.f32.mxu0 0.0
        %4283 = vmatmul.mubr.f32.gmra.mrb[0].mxu0 %v3180
        %v4284 = vpop.f32.mrb[0].mxu0
        %v4285 = vadd.f32 0.0, %v4284
        %v4286 = vpop.f32.mrb[0].mxu0
        %4287 = vmatprep.mubr.f32.mxu0 0.0
        %4288 = vmatmul.mubr.f32.gmra.mrb[0].mxu0 %v3181
        %v4289 = vpop.f32.mrb[0].mxu0
        %v4290 = vadd.f32 0.0, %v4289
        %v4291 = vpop.f32.mrb[0].mxu0
        %4292 = vmatprep.mubr.f32.mxu0 0.0
        %4293 = vmatmul.mubr.f32.gmra.mrb[0].mxu0 %v3182
        %v4294 = vpop.f32.mrb[0].mxu0
        %v4295 = vadd.f32 0.0, %v4294
        %v4296 = vpop.f32.mrb[0].mxu0
        %4297 = vmatprep.mubr.f32.mxu0 0.0
        %4298 = vmatmul.mubr.f32.gmra.mrb[0].mxu0 %v3183
        %v4299 = vpop.f32.mrb[0].mxu0
        %v4300 = vadd.f32 0.0, %v4299
        %v4301 = vpop.f32.mrb[0].mxu0
        %4302 = vmatprep.mubr.f32.mxu0 0.0
        %4303 = vmatmul.mubr.f32.gmra.mrb[0].mxu0 %v3184
        %v4304 = vpop.f32.mrb[0].mxu0
        %v4305 = vadd.f32 0.0, %v4304
        %v4306 = vpop.f32.mrb[0].mxu0
        %4307 = vmatprep.mubr.f32.mxu0 0.0
        %4308 = vmatmul.mubr.f32.gmra.mrb[0].mxu0 %v3185
        %v4309 = vpop.f32.mrb[0].mxu0
        %v4310 = vadd.f32 0.0, %v4309
        %v4311 = vpop.f32.mrb[0].mxu0
        %4312 = vmatprep.mubr.f32.mxu0 0.0
        %4313 = vmatmul.mubr.f32.gmra.mrb[0].mxu0 %v3186
        %v4314 = vpop.f32.mrb[0].mxu0
        %v4315 = vadd.f32 0.0, %v4314
        %v4316 = vpop.f32.mrb[0].mxu0
        %4317 = vmatprep.mubr.f32.mxu0 0.0
        %4318 = vmatmul.mubr.f32.gmra.mrb[0].mxu0 %v3187
        %v4319 = vpop.f32.mrb[0].mxu0
        %v4320 = vadd.f32 0.0, %v4319
        %v4321 = vpop.f32.mrb[0].mxu0
        %4322 = vmatprep.mubr.f32.mxu0 0.0
        %4323 = vmatmul.mubr.f32.gmra.mrb[0].mxu0 %v3188
        %v4324 = vpop.f32.mrb[0].mxu0
        %v4325 = vadd.f32 0.0, %v4324
        %v4326 = vpop.f32.mrb[0].mxu0
        %4327 = vmatprep.mubr.f32.mxu0 0.0
        %4328 = vmatmul.mubr.f32.gmra.mrb[0].mxu0 %v3189
        %v4329 = vpop.f32.mrb[0].mxu0
        %v4330 = vadd.f32 0.0, %v4329
        %v4331 = vpop.f32.mrb[0].mxu0
        %4332 = vmatprep.mubr.f32.mxu0 0.0
        %4333 = vmatmul.mubr.f32.gmra.mrb[0].mxu0 %v3190
        %v4334 = vpop.f32.mrb[0].mxu0
        %v4335 = vadd.f32 0.0, %v4334
        %v4336 = vpop.f32.mrb[0].mxu0
        %4337 = vmatprep.mubr.f32.mxu0 0.0
        %4338 = vmatmul.mubr.f32.gmra.mrb[0].mxu0 %v3191
        %v4339 = vpop.f32.mrb[0].mxu0
        %v4340 = vadd.f32 0.0, %v4339
        %v4341 = vpop.f32.mrb[0].mxu0
        %4342 = vmatprep.mubr.f32.mxu0 0.0
        %4343 = vmatmul.mubr.f32.gmra.mrb[0].mxu0 %v3192
        %v4344 = vpop.f32.mrb[0].mxu0
        %v4345 = vadd.f32 0.0, %v4344
        %v4346 = vpop.f32.mrb[0].mxu0
        %4347 = vmatprep.mubr.f32.mxu0 0.0
        %4348 = vmatmul.mubr.f32.gmra.mrb[0].mxu0 %v3193
        %v4349 = vpop.f32.mrb[0].mxu0
        %v4350 = vadd.f32 0.0, %v4349
        %v4351 = vpop.f32.mrb[0].mxu0
        %4352 = vmatprep.mubr.f32.mxu0 0.0
        %4353 = vmatmul.mubr.f32.gmra.mrb[0].mxu0 %v3194
        %v4354 = vpop.f32.mrb[0].mxu0
        %v4355 = vadd.f32 0.0, %v4354
        %v4356 = vpop.f32.mrb[0].mxu0
        %4357 = vmatprep.mubr.f32.mxu0 0.0
        %4358 = vmatmul.mubr.f32.gmra.mrb[0].mxu0 %v3195
        %v4359 = vpop.f32.mrb[0].mxu0
        %v4360 = vadd.f32 0.0, %v4359
        %v4361 = vpop.f32.mrb[0].mxu0
        %4362 = vmatprep.mubr.f32.mxu0 0.0
        %4363 = vmatmul.mubr.f32.gmra.mrb[0].mxu0 %v3196
        %v4364 = vpop.f32.mrb[0].mxu0
        %v4365 = vadd.f32 0.0, %v4364
        %v4366 = vpop.f32.mrb[0].mxu0
        %4367 = vmatprep.mubr.f32.mxu0 0.0
        %4368 = vmatmul.mubr.f32.gmra.mrb[0].mxu0 %v3197
        %v4369 = vpop.f32.mrb[0].mxu0
        %v4370 = vadd.f32 0.0, %v4369
        %v4371 = vpop.f32.mrb[0].mxu0
        %4372 = vmatprep.mubr.f32.mxu0 0.0
        %4373 = vmatmul.mubr.f32.gmra.mrb[0].mxu0 %v3198
        %v4374 = vpop.f32.mrb[0].mxu0
        %v4375 = vadd.f32 0.0, %v4374
        %v4376 = vpop.f32.mrb[0].mxu0
        %4377 = vmatprep.mubr.f32.mxu0 0.0
        %4378 = vmatmul.mubr.f32.gmra.mrb[0].mxu0 %v3199
        %v4379 = vpop.f32.mrb[0].mxu0
        %v4380 = vadd.f32 0.0, %v4379
        %v4381 = vpop.f32.mrb[0].mxu0
        %4382 = vmatprep.mubr.f32.mxu0 0.0
        %4383 = vmatmul.mubr.f32.gmra.mrb[0].mxu0 %v3200
        %v4384 = vpop.f32.mrb[0].mxu0
        %v4385 = vadd.f32 0.0, %v4384
        %v4386 = vpop.f32.mrb[0].mxu0
        %4387 = vmatprep.mubr.f32.mxu0 0.0
        %4388 = vmatmul.mubr.f32.gmra.mrb[0].mxu0 %v3201
        %v4389 = vpop.f32.mrb[0].mxu0
        %v4390 = vadd.f32 0.0, %v4389
        %v4391 = vpop.f32.mrb[0].mxu0
        %4392 = vmatprep.mubr.f32.mxu0 0.0
        %4393 = vmatmul.mubr.f32.gmra.mrb[0].mxu0 %v3202
        %v4394 = vpop.f32.mrb[0].mxu0
        %v4395 = vadd.f32 0.0, %v4394
        %v4396 = vpop.f32.mrb[0].mxu0
        %4397 = vmatprep.mubr.f32.mxu0 0.0
        %4398 = vmatmul.mubr.f32.gmra.mrb[0].mxu0 %v3203
        %v4399 = vpop.f32.mrb[0].mxu0
        %v4400 = vadd.f32 0.0, %v4399
        %v4401 = vpop.f32.mrb[0].mxu0
        %4402 = vmatprep.mubr.f32.mxu0 0.0
        %4403 = vmatmul.mubr.f32.gmra.mrb[0].mxu0 %v3204
        %v4404 = vpop.f32.mrb[0].mxu0
        %v4405 = vadd.f32 0.0, %v4404
        %v4406 = vpop.f32.mrb[0].mxu0
        %4407 = vmatprep.mubr.f32.mxu0 0.0
        %4408 = vmatmul.mubr.f32.gmra.mrb[0].mxu0 %v3205
        %v4409 = vpop.f32.mrb[0].mxu0
        %v4410 = vadd.f32 0.0, %v4409
        %v4411 = vpop.f32.mrb[0].mxu0
        %4412 = vmatprep.mubr.f32.mxu0 0.0
        %4413 = vmatmul.mubr.f32.gmra.mrb[0].mxu0 %v3206
        %v4414 = vpop.f32.mrb[0].mxu0
        %v4415 = vadd.f32 0.0, %v4414
        %v4416 = vpop.f32.mrb[0].mxu0
        %4417 = vmatprep.mubr.f32.mxu0 0.0
        %4418 = vmatmul.mubr.f32.gmra.mrb[0].mxu0 %v3207
        %v4419 = vpop.f32.mrb[0].mxu0
        %v4420 = vadd.f32 0.0, %v4419
        %v4421 = vpop.f32.mrb[0].mxu0
        %4422 = vmatprep.mubr.f32.mxu0 0.0
        %4423 = vmatmul.mubr.f32.gmra.mrb[0].mxu0 %v3208
        %v4424 = vpop.f32.mrb[0].mxu0
        %v4425 = vadd.f32 0.0, %v4424
        %v4426 = vpop.f32.mrb[0].mxu0
        %4427 = vdwg.mxu0
        %v4428 = vadd.f32 %v4154, %v4270
        %v4429 = vadd.f32 %v4155, %v4275
        %v4430 = vadd.f32 %v4156, %v4280
        %v4431 = vadd.f32 %v4157, %v4285
        %v4432 = vadd.f32 %v4158, %v4290
        %v4433 = vadd.f32 %v4159, %v4295
        %v4434 = vadd.f32 %v4160, %v4300
        %v4435 = vadd.f32 %v4161, %v4305
        %v4436 = vadd.f32 %v4162, %v4310
        %v4437 = vadd.f32 %v4163, %v4315
        %v4438 = vadd.f32 %v4164, %v4320
        %v4439 = vadd.f32 %v4165, %v4325
        %v4440 = vadd.f32 %v4166, %v4330
        %v4441 = vadd.f32 %v4167, %v4335
        %v4442 = vadd.f32 %v4168, %v4340
        %v4443 = vadd.f32 %v4169, %v4345
        %v4444 = vadd.f32 %v4170, %v4350
        %v4445 = vadd.f32 %v4171, %v4355
        %v4446 = vadd.f32 %v4172, %v4360
        %v4447 = vadd.f32 %v4173, %v4365
        %v4448 = vadd.f32 %v4174, %v4370
        %v4449 = vadd.f32 %v4175, %v4375
        %v4450 = vadd.f32 %v4176, %v4380
        %v4451 = vadd.f32 %v4177, %v4385
        %v4452 = vadd.f32 %v4178, %v4390
        %v4453 = vadd.f32 %v4179, %v4395
        %v4454 = vadd.f32 %v4180, %v4400
        %v4455 = vadd.f32 %v4181, %v4405
        %v4456 = vadd.f32 %v4182, %v4410
        %v4457 = vadd.f32 %v4183, %v4415
        %v4458 = vadd.f32 %v4184, %v4420
        %v4459 = vadd.f32 %v4185, %v4425
        %s4460 = scalar_lea.vmem [#allocation8], 512
        %v4461 = vld [vmem:[%s4460] sm:$0xff]
        %v4462 = vld [vmem:[%s4460 + $0x8] sm:$0xff]
        %v4463 = vld [vmem:[%s4460 + $0x10] sm:$0xff]
        %v4464 = vld [vmem:[%s4460 + $0x18] sm:$0xff]
        %v4465 = vld [vmem:[%s4460 + $0x20] sm:$0xff]
        %v4466 = vld [vmem:[%s4460 + $0x28] sm:$0xff]
        %v4467 = vld [vmem:[%s4460 + $0x30] sm:$0xff]
        %v4468 = vld [vmem:[%s4460 + $0x38] sm:$0xff]
        %v4469 = vld [vmem:[%s4460 + $0x40] sm:$0xff]
        %v4470 = vld [vmem:[%s4460 + $0x48] sm:$0xff]
        %v4471 = vld [vmem:[%s4460 + $0x50] sm:$0xff]
        %v4472 = vld [vmem:[%s4460 + $0x58] sm:$0xff]
        %v4473 = vld [vmem:[%s4460 + $0x60] sm:$0xff]
        %v4474 = vld [vmem:[%s4460 + $0x68] sm:$0xff]
        %v4475 = vld [vmem:[%s4460 + $0x70] sm:$0xff]
        %v4476 = vld [vmem:[%s4460 + $0x78] sm:$0xff]
        %4477 = vmatprep.subr.mxu0 0.0
        %4478 = vmatpush1.msra.mxu0 %v4461
        %4479 = vmatprep.subr.mxu0 0.0
        %4480 = vmatpush1.msra.mxu0 %v4462
        %4481 = vmatprep.subr.mxu0 0.0
        %4482 = vmatpush1.msra.mxu0 %v4463
        %4483 = vmatprep.subr.mxu0 0.0
        %4484 = vmatpush1.msra.mxu0 %v4464
        %4485 = vmatprep.subr.mxu0 0.0
        %4486 = vmatpush1.msra.mxu0 %v4465
        %4487 = vmatprep.subr.mxu0 0.0
        %4488 = vmatpush1.msra.mxu0 %v4466
        %4489 = vmatprep.subr.mxu0 0.0
        %4490 = vmatpush1.msra.mxu0 %v4467
        %4491 = vmatprep.subr.mxu0 0.0
        %4492 = vmatpush1.msra.mxu0 %v4468
        %4493 = vmatprep.subr.mxu0 0.0
        %4494 = vmatpush1.msra.mxu0 %v4469
        %4495 = vmatprep.subr.mxu0 0.0
        %4496 = vmatpush1.msra.mxu0 %v4470
        %4497 = vmatprep.subr.mxu0 0.0
        %4498 = vmatpush1.msra.mxu0 %v4471
        %4499 = vmatprep.subr.mxu0 0.0
        %4500 = vmatpush1.msra.mxu0 %v4472
        %4501 = vmatprep.subr.mxu0 0.0
        %4502 = vmatpush1.msra.mxu0 %v4473
        %4503 = vmatprep.subr.mxu0 0.0
        %4504 = vmatpush1.msra.mxu0 %v4474
        %4505 = vmatprep.subr.mxu0 0.0
        %4506 = vmatpush1.msra.mxu0 %v4475
        %4507 = vmatprep.subr.mxu0 0.0
        %4508 = vmatpush1.msra.mxu0 %v4476
        %4509 = vmatprep.subr.mxu0 0.0
        %4510 = vmatpush1.msra.mxu0 0.0
        %4511 = vmatprep.subr.mxu0 0.0
        %4512 = vmatpush1.msra.mxu0 0.0
        %4513 = vmatprep.subr.mxu0 0.0
        %4514 = vmatpush1.msra.mxu0 0.0
        %4515 = vmatprep.subr.mxu0 0.0
        %4516 = vmatpush1.msra.mxu0 0.0
        %4517 = vmatprep.subr.mxu0 0.0
        %4518 = vmatpush1.msra.mxu0 0.0
        %4519 = vmatprep.subr.mxu0 0.0
        %4520 = vmatpush1.msra.mxu0 0.0
        %4521 = vmatprep.subr.mxu0 0.0
        %4522 = vmatpush1.msra.mxu0 0.0
        %4523 = vmatprep.subr.mxu0 0.0
        %4524 = vmatpush1.msra.mxu0 0.0
        %4525 = vmatprep.subr.mxu0 0.0
        %4526 = vmatpush1.msra.mxu0 0.0
        %4527 = vmatprep.subr.mxu0 0.0
        %4528 = vmatpush1.msra.mxu0 0.0
        %4529 = vmatprep.subr.mxu0 0.0
        %4530 = vmatpush1.msra.mxu0 0.0
        %4531 = vmatprep.subr.mxu0 0.0
        %4532 = vmatpush1.msra.mxu0 0.0
        %4533 = vmatprep.subr.mxu0 0.0
        %4534 = vmatpush1.msra.mxu0 0.0
        %4535 = vmatprep.subr.mxu0 0.0
        %4536 = vmatpush1.msra.mxu0 0.0
        %4537 = vmatprep.subr.mxu0 0.0
        %4538 = vmatpush1.msra.mxu0 0.0
        %4539 = vmatprep.subr.mxu0 0.0
        %4540 = vmatpush1.msra.mxu0 0.0
        %4541 = vmatprep.mubr.f32.mxu0 0.0
        %4542 = vmatmul.mubr.f32.gmra.mrb[0].mxu0 %v3179
        %v4543 = vpop.f32.mrb[0].mxu0
        %v4544 = vadd.f32 0.0, %v4543
        %v4545 = vpop.f32.mrb[0].mxu0
        %4546 = vmatprep.mubr.f32.mxu0 0.0
        %4547 = vmatmul.mubr.f32.gmra.mrb[0].mxu0 %v3180
        %v4548 = vpop.f32.mrb[0].mxu0
        %v4549 = vadd.f32 0.0, %v4548
        %v4550 = vpop.f32.mrb[0].mxu0
        %4551 = vmatprep.mubr.f32.mxu0 0.0
        %4552 = vmatmul.mubr.f32.gmra.mrb[0].mxu0 %v3181
        %v4553 = vpop.f32.mrb[0].mxu0
        %v4554 = vadd.f32 0.0, %v4553
        %v4555 = vpop.f32.mrb[0].mxu0
        %4556 = vmatprep.mubr.f32.mxu0 0.0
        %4557 = vmatmul.mubr.f32.gmra.mrb[0].mxu0 %v3182
        %v4558 = vpop.f32.mrb[0].mxu0
        %v4559 = vadd.f32 0.0, %v4558
        %v4560 = vpop.f32.mrb[0].mxu0
        %4561 = vmatprep.mubr.f32.mxu0 0.0
        %4562 = vmatmul.mubr.f32.gmra.mrb[0].mxu0 %v3183
        %v4563 = vpop.f32.mrb[0].mxu0
        %v4564 = vadd.f32 0.0, %v4563
        %v4565 = vpop.f32.mrb[0].mxu0
        %4566 = vmatprep.mubr.f32.mxu0 0.0
        %4567 = vmatmul.mubr.f32.gmra.mrb[0].mxu0 %v3184
        %v4568 = vpop.f32.mrb[0].mxu0
        %v4569 = vadd.f32 0.0, %v4568
        %v4570 = vpop.f32.mrb[0].mxu0
        %4571 = vmatprep.mubr.f32.mxu0 0.0
        %4572 = vmatmul.mubr.f32.gmra.mrb[0].mxu0 %v3185
        %v4573 = vpop.f32.mrb[0].mxu0
        %v4574 = vadd.f32 0.0, %v4573
        %v4575 = vpop.f32.mrb[0].mxu0
        %4576 = vmatprep.mubr.f32.mxu0 0.0
        %4577 = vmatmul.mubr.f32.gmra.mrb[0].mxu0 %v3186
        %v4578 = vpop.f32.mrb[0].mxu0
        %v4579 = vadd.f32 0.0, %v4578
        %v4580 = vpop.f32.mrb[0].mxu0
        %4581 = vmatprep.mubr.f32.mxu0 0.0
        %4582 = vmatmul.mubr.f32.gmra.mrb[0].mxu0 %v3187
        %v4583 = vpop.f32.mrb[0].mxu0
        %v4584 = vadd.f32 0.0, %v4583
        %v4585 = vpop.f32.mrb[0].mxu0
        %4586 = vmatprep.mubr.f32.mxu0 0.0
        %4587 = vmatmul.mubr.f32.gmra.mrb[0].mxu0 %v3188
        %v4588 = vpop.f32.mrb[0].mxu0
        %v4589 = vadd.f32 0.0, %v4588
        %v4590 = vpop.f32.mrb[0].mxu0
        %4591 = vmatprep.mubr.f32.mxu0 0.0
        %4592 = vmatmul.mubr.f32.gmra.mrb[0].mxu0 %v3189
        %v4593 = vpop.f32.mrb[0].mxu0
        %v4594 = vadd.f32 0.0, %v4593
        %v4595 = vpop.f32.mrb[0].mxu0
        %4596 = vmatprep.mubr.f32.mxu0 0.0
        %4597 = vmatmul.mubr.f32.gmra.mrb[0].mxu0 %v3190
        %v4598 = vpop.f32.mrb[0].mxu0
        %v4599 = vadd.f32 0.0, %v4598
        %v4600 = vpop.f32.mrb[0].mxu0
        %4601 = vmatprep.mubr.f32.mxu0 0.0
        %4602 = vmatmul.mubr.f32.gmra.mrb[0].mxu0 %v3191
        %v4603 = vpop.f32.mrb[0].mxu0
        %v4604 = vadd.f32 0.0, %v4603
        %v4605 = vpop.f32.mrb[0].mxu0
        %4606 = vmatprep.mubr.f32.mxu0 0.0
        %4607 = vmatmul.mubr.f32.gmra.mrb[0].mxu0 %v3192
        %v4608 = vpop.f32.mrb[0].mxu0
        %v4609 = vadd.f32 0.0, %v4608
        %v4610 = vpop.f32.mrb[0].mxu0
        %4611 = vmatprep.mubr.f32.mxu0 0.0
        %4612 = vmatmul.mubr.f32.gmra.mrb[0].mxu0 %v3193
        %v4613 = vpop.f32.mrb[0].mxu0
        %v4614 = vadd.f32 0.0, %v4613
        %v4615 = vpop.f32.mrb[0].mxu0
        %4616 = vmatprep.mubr.f32.mxu0 0.0
        %4617 = vmatmul.mubr.f32.gmra.mrb[0].mxu0 %v3194
        %v4618 = vpop.f32.mrb[0].mxu0
        %v4619 = vadd.f32 0.0, %v4618
        %v4620 = vpop.f32.mrb[0].mxu0
        %4621 = vmatprep.mubr.f32.mxu0 0.0
        %4622 = vmatmul.mubr.f32.gmra.mrb[0].mxu0 %v3195
        %v4623 = vpop.f32.mrb[0].mxu0
        %v4624 = vadd.f32 0.0, %v4623
        %v4625 = vpop.f32.mrb[0].mxu0
        %4626 = vmatprep.mubr.f32.mxu0 0.0
        %4627 = vmatmul.mubr.f32.gmra.mrb[0].mxu0 %v3196
        %v4628 = vpop.f32.mrb[0].mxu0
        %v4629 = vadd.f32 0.0, %v4628
        %v4630 = vpop.f32.mrb[0].mxu0
        %4631 = vmatprep.mubr.f32.mxu0 0.0
        %4632 = vmatmul.mubr.f32.gmra.mrb[0].mxu0 %v3197
        %v4633 = vpop.f32.mrb[0].mxu0
        %v4634 = vadd.f32 0.0, %v4633
        %v4635 = vpop.f32.mrb[0].mxu0
        %4636 = vmatprep.mubr.f32.mxu0 0.0
        %4637 = vmatmul.mubr.f32.gmra.mrb[0].mxu0 %v3198
        %v4638 = vpop.f32.mrb[0].mxu0
        %v4639 = vadd.f32 0.0, %v4638
        %v4640 = vpop.f32.mrb[0].mxu0
        %4641 = vmatprep.mubr.f32.mxu0 0.0
        %4642 = vmatmul.mubr.f32.gmra.mrb[0].mxu0 %v3199
        %v4643 = vpop.f32.mrb[0].mxu0
        %v4644 = vadd.f32 0.0, %v4643
        %v4645 = vpop.f32.mrb[0].mxu0
        %4646 = vmatprep.mubr.f32.mxu0 0.0
        %4647 = vmatmul.mubr.f32.gmra.mrb[0].mxu0 %v3200
        %v4648 = vpop.f32.mrb[0].mxu0
        %v4649 = vadd.f32 0.0, %v4648
        %v4650 = vpop.f32.mrb[0].mxu0
        %4651 = vmatprep.mubr.f32.mxu0 0.0
        %4652 = vmatmul.mubr.f32.gmra.mrb[0].mxu0 %v3201
        %v4653 = vpop.f32.mrb[0].mxu0
        %v4654 = vadd.f32 0.0, %v4653
        %v4655 = vpop.f32.mrb[0].mxu0
        %4656 = vmatprep.mubr.f32.mxu0 0.0
        %4657 = vmatmul.mubr.f32.gmra.mrb[0].mxu0 %v3202
        %v4658 = vpop.f32.mrb[0].mxu0
        %v4659 = vadd.f32 0.0, %v4658
        %v4660 = vpop.f32.mrb[0].mxu0
        %4661 = vmatprep.mubr.f32.mxu0 0.0
        %4662 = vmatmul.mubr.f32.gmra.mrb[0].mxu0 %v3203
        %v4663 = vpop.f32.mrb[0].mxu0
        %v4664 = vadd.f32 0.0, %v4663
        %v4665 = vpop.f32.mrb[0].mxu0
        %4666 = vmatprep.mubr.f32.mxu0 0.0
        %4667 = vmatmul.mubr.f32.gmra.mrb[0].mxu0 %v3204
        %v4668 = vpop.f32.mrb[0].mxu0
        %v4669 = vadd.f32 0.0, %v4668
        %v4670 = vpop.f32.mrb[0].mxu0
        %4671 = vmatprep.mubr.f32.mxu0 0.0
        %4672 = vmatmul.mubr.f32.gmra.mrb[0].mxu0 %v3205
        %v4673 = vpop.f32.mrb[0].mxu0
        %v4674 = vadd.f32 0.0, %v4673
        %v4675 = vpop.f32.mrb[0].mxu0
        %4676 = vmatprep.mubr.f32.mxu0 0.0
        %4677 = vmatmul.mubr.f32.gmra.mrb[0].mxu0 %v3206
        %v4678 = vpop.f32.mrb[0].mxu0
        %v4679 = vadd.f32 0.0, %v4678
        %v4680 = vpop.f32.mrb[0].mxu0
        %4681 = vmatprep.mubr.f32.mxu0 0.0
        %4682 = vmatmul.mubr.f32.gmra.mrb[0].mxu0 %v3207
        %v4683 = vpop.f32.mrb[0].mxu0
        %v4684 = vadd.f32 0.0, %v4683
        %v4685 = vpop.f32.mrb[0].mxu0
        %4686 = vmatprep.mubr.f32.mxu0 0.0
        %4687 = vmatmul.mubr.f32.gmra.mrb[0].mxu0 %v3208
        %v4688 = vpop.f32.mrb[0].mxu0
        %v4689 = vadd.f32 0.0, %v4688
        %v4690 = vpop.f32.mrb[0].mxu0
        %4691 = vmatprep.mubr.f32.mxu0 0.0
        %4692 = vmatmul.mubr.f32.gmra.mrb[0].mxu0 %v3209
        %v4693 = vpop.f32.mrb[0].mxu0
        %v4694 = vadd.f32 0.0, %v4693
        %v4695 = vpop.f32.mrb[0].mxu0
        %4696 = vmatprep.mubr.f32.mxu0 0.0
        %4697 = vmatmul.mubr.f32.gmra.mrb[0].mxu0 %v3210
        %v4698 = vpop.f32.mrb[0].mxu0
        %v4699 = vadd.f32 0.0, %v4698
        %v4700 = vpop.f32.mrb[0].mxu0
        %4701 = vdwg.mxu0
        %v4702 = vadd.f32 %v4428, %v4544
        %v4703 = vadd.f32 %v4429, %v4549
        %v4704 = vadd.f32 %v4430, %v4554
        %v4705 = vadd.f32 %v4431, %v4559
        %v4706 = vadd.f32 %v4432, %v4564
        %v4707 = vadd.f32 %v4433, %v4569
        %v4708 = vadd.f32 %v4434, %v4574
        %v4709 = vadd.f32 %v4435, %v4579
        %v4710 = vadd.f32 %v4436, %v4584
        %v4711 = vadd.f32 %v4437, %v4589
        %v4712 = vadd.f32 %v4438, %v4594
        %v4713 = vadd.f32 %v4439, %v4599
        %v4714 = vadd.f32 %v4440, %v4604
        %v4715 = vadd.f32 %v4441, %v4609
        %v4716 = vadd.f32 %v4442, %v4614
        %v4717 = vadd.f32 %v4443, %v4619
        %v4718 = vadd.f32 %v4444, %v4624
        %v4719 = vadd.f32 %v4445, %v4629
        %v4720 = vadd.f32 %v4446, %v4634
        %v4721 = vadd.f32 %v4447, %v4639
        %v4722 = vadd.f32 %v4448, %v4644
        %v4723 = vadd.f32 %v4449, %v4649
        %v4724 = vadd.f32 %v4450, %v4654
        %v4725 = vadd.f32 %v4451, %v4659
        %v4726 = vadd.f32 %v4452, %v4664
        %v4727 = vadd.f32 %v4453, %v4669
        %v4728 = vadd.f32 %v4454, %v4674
        %v4729 = vadd.f32 %v4455, %v4679
        %v4730 = vadd.f32 %v4456, %v4684
        %v4731 = vadd.f32 %v4457, %v4689
        %v4732 = vadd.f32 %v4458, %v4694
        %v4733 = vadd.f32 %v4459, %v4699
        %s4734 = scalar_lea.vmem [#allocation8], 896
        %v4735 = vld [vmem:[%s4734] sm:$0xff]
        %v4736 = vld [vmem:[%s4734 + $0x8] sm:$0xff]
        %v4737 = vld [vmem:[%s4734 + $0x10] sm:$0xff]
        %v4738 = vld [vmem:[%s4734 + $0x18] sm:$0xff]
        %v4739 = vld [vmem:[%s4734 + $0x20] sm:$0xff]
        %v4740 = vld [vmem:[%s4734 + $0x28] sm:$0xff]
        %v4741 = vld [vmem:[%s4734 + $0x30] sm:$0xff]
        %v4742 = vld [vmem:[%s4734 + $0x38] sm:$0xff]
        %v4743 = vld [vmem:[%s4734 + $0x40] sm:$0xff]
        %v4744 = vld [vmem:[%s4734 + $0x48] sm:$0xff]
        %v4745 = vld [vmem:[%s4734 + $0x50] sm:$0xff]
        %v4746 = vld [vmem:[%s4734 + $0x58] sm:$0xff]
        %v4747 = vld [vmem:[%s4734 + $0x60] sm:$0xff]
        %v4748 = vld [vmem:[%s4734 + $0x68] sm:$0xff]
        %v4749 = vld [vmem:[%s4734 + $0x70] sm:$0xff]
        %v4750 = vld [vmem:[%s4734 + $0x78] sm:$0xff]
        %4751 = vmatprep.subr.mxu0 0.0
        %4752 = vmatpush1.msra.mxu0 %v4735
        %4753 = vmatprep.subr.mxu0 0.0
        %4754 = vmatpush1.msra.mxu0 %v4736
        %4755 = vmatprep.subr.mxu0 0.0
        %4756 = vmatpush1.msra.mxu0 %v4737
        %4757 = vmatprep.subr.mxu0 0.0
        %4758 = vmatpush1.msra.mxu0 %v4738
        %4759 = vmatprep.subr.mxu0 0.0
        %4760 = vmatpush1.msra.mxu0 %v4739
        %4761 = vmatprep.subr.mxu0 0.0
        %4762 = vmatpush1.msra.mxu0 %v4740
        %4763 = vmatprep.subr.mxu0 0.0
        %4764 = vmatpush1.msra.mxu0 %v4741
        %4765 = vmatprep.subr.mxu0 0.0
        %4766 = vmatpush1.msra.mxu0 %v4742
        %4767 = vmatprep.subr.mxu0 0.0
        %4768 = vmatpush1.msra.mxu0 %v4743
        %4769 = vmatprep.subr.mxu0 0.0
        %4770 = vmatpush1.msra.mxu0 %v4744
        %4771 = vmatprep.subr.mxu0 0.0
        %4772 = vmatpush1.msra.mxu0 %v4745
        %4773 = vmatprep.subr.mxu0 0.0
        %4774 = vmatpush1.msra.mxu0 %v4746
        %4775 = vmatprep.subr.mxu0 0.0
        %4776 = vmatpush1.msra.mxu0 %v4747
        %4777 = vmatprep.subr.mxu0 0.0
        %4778 = vmatpush1.msra.mxu0 %v4748
        %4779 = vmatprep.subr.mxu0 0.0
        %4780 = vmatpush1.msra.mxu0 %v4749
        %4781 = vmatprep.subr.mxu0 0.0
        %4782 = vmatpush1.msra.mxu0 %v4750
        %4783 = vmatprep.subr.mxu0 0.0
        %4784 = vmatpush1.msra.mxu0 0.0
        %4785 = vmatprep.subr.mxu0 0.0
        %4786 = vmatpush1.msra.mxu0 0.0
        %4787 = vmatprep.subr.mxu0 0.0
        %4788 = vmatpush1.msra.mxu0 0.0
        %4789 = vmatprep.subr.mxu0 0.0
        %4790 = vmatpush1.msra.mxu0 0.0
        %4791 = vmatprep.subr.mxu0 0.0
        %4792 = vmatpush1.msra.mxu0 0.0
        %4793 = vmatprep.subr.mxu0 0.0
        %4794 = vmatpush1.msra.mxu0 0.0
        %4795 = vmatprep.subr.mxu0 0.0
        %4796 = vmatpush1.msra.mxu0 0.0
        %4797 = vmatprep.subr.mxu0 0.0
        %4798 = vmatpush1.msra.mxu0 0.0
        %4799 = vmatprep.subr.mxu0 0.0
        %4800 = vmatpush1.msra.mxu0 0.0
        %4801 = vmatprep.subr.mxu0 0.0
        %4802 = vmatpush1.msra.mxu0 0.0
        %4803 = vmatprep.subr.mxu0 0.0
        %4804 = vmatpush1.msra.mxu0 0.0
        %4805 = vmatprep.subr.mxu0 0.0
        %4806 = vmatpush1.msra.mxu0 0.0
        %4807 = vmatprep.subr.mxu0 0.0
        %4808 = vmatpush1.msra.mxu0 0.0
        %4809 = vmatprep.subr.mxu0 0.0
        %4810 = vmatpush1.msra.mxu0 0.0
        %4811 = vmatprep.subr.mxu0 0.0
        %4812 = vmatpush1.msra.mxu0 0.0
        %4813 = vmatprep.subr.mxu0 0.0
        %4814 = vmatpush1.msra.mxu0 0.0
        %4815 = vmatprep.mubr.f32.mxu0 0.0
        %4816 = vmatmul.mubr.f32.gmra.mrb[0].mxu0 %v3181
        %v4817 = vpop.f32.mrb[0].mxu0
        %v4818 = vadd.f32 0.0, %v4817
        %v4819 = vpop.f32.mrb[0].mxu0
        %4820 = vmatprep.mubr.f32.mxu0 0.0
        %4821 = vmatmul.mubr.f32.gmra.mrb[0].mxu0 %v3182
        %v4822 = vpop.f32.mrb[0].mxu0
        %v4823 = vadd.f32 0.0, %v4822
        %v4824 = vpop.f32.mrb[0].mxu0
        %4825 = vmatprep.mubr.f32.mxu0 0.0
        %4826 = vmatmul.mubr.f32.gmra.mrb[0].mxu0 %v3183
        %v4827 = vpop.f32.mrb[0].mxu0
        %v4828 = vadd.f32 0.0, %v4827
        %v4829 = vpop.f32.mrb[0].mxu0
        %4830 = vmatprep.mubr.f32.mxu0 0.0
        %4831 = vmatmul.mubr.f32.gmra.mrb[0].mxu0 %v3184
        %v4832 = vpop.f32.mrb[0].mxu0
        %v4833 = vadd.f32 0.0, %v4832
        %v4834 = vpop.f32.mrb[0].mxu0
        %4835 = vmatprep.mubr.f32.mxu0 0.0
        %4836 = vmatmul.mubr.f32.gmra.mrb[0].mxu0 %v3185
        %v4837 = vpop.f32.mrb[0].mxu0
        %v4838 = vadd.f32 0.0, %v4837
        %v4839 = vpop.f32.mrb[0].mxu0
        %4840 = vmatprep.mubr.f32.mxu0 0.0
        %4841 = vmatmul.mubr.f32.gmra.mrb[0].mxu0 %v3186
        %v4842 = vpop.f32.mrb[0].mxu0
        %v4843 = vadd.f32 0.0, %v4842
        %v4844 = vpop.f32.mrb[0].mxu0
        %4845 = vmatprep.mubr.f32.mxu0 0.0
        %4846 = vmatmul.mubr.f32.gmra.mrb[0].mxu0 %v3187
        %v4847 = vpop.f32.mrb[0].mxu0
        %v4848 = vadd.f32 0.0, %v4847
        %v4849 = vpop.f32.mrb[0].mxu0
        %4850 = vmatprep.mubr.f32.mxu0 0.0
        %4851 = vmatmul.mubr.f32.gmra.mrb[0].mxu0 %v3188
        %v4852 = vpop.f32.mrb[0].mxu0
        %v4853 = vadd.f32 0.0, %v4852
        %v4854 = vpop.f32.mrb[0].mxu0
        %4855 = vmatprep.mubr.f32.mxu0 0.0
        %4856 = vmatmul.mubr.f32.gmra.mrb[0].mxu0 %v3189
        %v4857 = vpop.f32.mrb[0].mxu0
        %v4858 = vadd.f32 0.0, %v4857
        %v4859 = vpop.f32.mrb[0].mxu0
        %4860 = vmatprep.mubr.f32.mxu0 0.0
        %4861 = vmatmul.mubr.f32.gmra.mrb[0].mxu0 %v3190
        %v4862 = vpop.f32.mrb[0].mxu0
        %v4863 = vadd.f32 0.0, %v4862
        %v4864 = vpop.f32.mrb[0].mxu0
        %4865 = vmatprep.mubr.f32.mxu0 0.0
        %4866 = vmatmul.mubr.f32.gmra.mrb[0].mxu0 %v3191
        %v4867 = vpop.f32.mrb[0].mxu0
        %v4868 = vadd.f32 0.0, %v4867
        %v4869 = vpop.f32.mrb[0].mxu0
        %4870 = vmatprep.mubr.f32.mxu0 0.0
        %4871 = vmatmul.mubr.f32.gmra.mrb[0].mxu0 %v3192
        %v4872 = vpop.f32.mrb[0].mxu0
        %v4873 = vadd.f32 0.0, %v4872
        %v4874 = vpop.f32.mrb[0].mxu0
        %4875 = vmatprep.mubr.f32.mxu0 0.0
        %4876 = vmatmul.mubr.f32.gmra.mrb[0].mxu0 %v3193
        %v4877 = vpop.f32.mrb[0].mxu0
        %v4878 = vadd.f32 0.0, %v4877
        %v4879 = vpop.f32.mrb[0].mxu0
        %4880 = vmatprep.mubr.f32.mxu0 0.0
        %4881 = vmatmul.mubr.f32.gmra.mrb[0].mxu0 %v3194
        %v4882 = vpop.f32.mrb[0].mxu0
        %v4883 = vadd.f32 0.0, %v4882
        %v4884 = vpop.f32.mrb[0].mxu0
        %4885 = vmatprep.mubr.f32.mxu0 0.0
        %4886 = vmatmul.mubr.f32.gmra.mrb[0].mxu0 %v3195
        %v4887 = vpop.f32.mrb[0].mxu0
        %v4888 = vadd.f32 0.0, %v4887
        %v4889 = vpop.f32.mrb[0].mxu0
        %4890 = vmatprep.mubr.f32.mxu0 0.0
        %4891 = vmatmul.mubr.f32.gmra.mrb[0].mxu0 %v3196
        %v4892 = vpop.f32.mrb[0].mxu0
        %v4893 = vadd.f32 0.0, %v4892
        %v4894 = vpop.f32.mrb[0].mxu0
        %4895 = vmatprep.mubr.f32.mxu0 0.0
        %4896 = vmatmul.mubr.f32.gmra.mrb[0].mxu0 %v3197
        %v4897 = vpop.f32.mrb[0].mxu0
        %v4898 = vadd.f32 0.0, %v4897
        %v4899 = vpop.f32.mrb[0].mxu0
        %4900 = vmatprep.mubr.f32.mxu0 0.0
        %4901 = vmatmul.mubr.f32.gmra.mrb[0].mxu0 %v3198
        %v4902 = vpop.f32.mrb[0].mxu0
        %v4903 = vadd.f32 0.0, %v4902
        %v4904 = vpop.f32.mrb[0].mxu0
        %4905 = vmatprep.mubr.f32.mxu0 0.0
        %4906 = vmatmul.mubr.f32.gmra.mrb[0].mxu0 %v3199
        %v4907 = vpop.f32.mrb[0].mxu0
        %v4908 = vadd.f32 0.0, %v4907
        %v4909 = vpop.f32.mrb[0].mxu0
        %4910 = vmatprep.mubr.f32.mxu0 0.0
        %4911 = vmatmul.mubr.f32.gmra.mrb[0].mxu0 %v3200
        %v4912 = vpop.f32.mrb[0].mxu0
        %v4913 = vadd.f32 0.0, %v4912
        %v4914 = vpop.f32.mrb[0].mxu0
        %4915 = vmatprep.mubr.f32.mxu0 0.0
        %4916 = vmatmul.mubr.f32.gmra.mrb[0].mxu0 %v3201
        %v4917 = vpop.f32.mrb[0].mxu0
        %v4918 = vadd.f32 0.0, %v4917
        %v4919 = vpop.f32.mrb[0].mxu0
        %4920 = vmatprep.mubr.f32.mxu0 0.0
        %4921 = vmatmul.mubr.f32.gmra.mrb[0].mxu0 %v3202
        %v4922 = vpop.f32.mrb[0].mxu0
        %v4923 = vadd.f32 0.0, %v4922
        %v4924 = vpop.f32.mrb[0].mxu0
        %4925 = vmatprep.mubr.f32.mxu0 0.0
        %4926 = vmatmul.mubr.f32.gmra.mrb[0].mxu0 %v3203
        %v4927 = vpop.f32.mrb[0].mxu0
        %v4928 = vadd.f32 0.0, %v4927
        %v4929 = vpop.f32.mrb[0].mxu0
        %4930 = vmatprep.mubr.f32.mxu0 0.0
        %4931 = vmatmul.mubr.f32.gmra.mrb[0].mxu0 %v3204
        %v4932 = vpop.f32.mrb[0].mxu0
        %v4933 = vadd.f32 0.0, %v4932
        %v4934 = vpop.f32.mrb[0].mxu0
        %4935 = vmatprep.mubr.f32.mxu0 0.0
        %4936 = vmatmul.mubr.f32.gmra.mrb[0].mxu0 %v3205
        %v4937 = vpop.f32.mrb[0].mxu0
        %v4938 = vadd.f32 0.0, %v4937
        %v4939 = vpop.f32.mrb[0].mxu0
        %4940 = vmatprep.mubr.f32.mxu0 0.0
        %4941 = vmatmul.mubr.f32.gmra.mrb[0].mxu0 %v3206
        %v4942 = vpop.f32.mrb[0].mxu0
        %v4943 = vadd.f32 0.0, %v4942
        %v4944 = vpop.f32.mrb[0].mxu0
        %4945 = vmatprep.mubr.f32.mxu0 0.0
        %4946 = vmatmul.mubr.f32.gmra.mrb[0].mxu0 %v3207
        %v4947 = vpop.f32.mrb[0].mxu0
        %v4948 = vadd.f32 0.0, %v4947
        %v4949 = vpop.f32.mrb[0].mxu0
        %4950 = vmatprep.mubr.f32.mxu0 0.0
        %4951 = vmatmul.mubr.f32.gmra.mrb[0].mxu0 %v3208
        %v4952 = vpop.f32.mrb[0].mxu0
        %v4953 = vadd.f32 0.0, %v4952
        %v4954 = vpop.f32.mrb[0].mxu0
        %4955 = vmatprep.mubr.f32.mxu0 0.0
        %4956 = vmatmul.mubr.f32.gmra.mrb[0].mxu0 %v3209
        %v4957 = vpop.f32.mrb[0].mxu0
        %v4958 = vadd.f32 0.0, %v4957
        %v4959 = vpop.f32.mrb[0].mxu0
        %4960 = vmatprep.mubr.f32.mxu0 0.0
        %4961 = vmatmul.mubr.f32.gmra.mrb[0].mxu0 %v3210
        %v4962 = vpop.f32.mrb[0].mxu0
        %v4963 = vadd.f32 0.0, %v4962
        %v4964 = vpop.f32.mrb[0].mxu0
        %4965 = vmatprep.mubr.f32.mxu0 0.0
        %4966 = vmatmul.mubr.f32.gmra.mrb[0].mxu0 %v3211
        %v4967 = vpop.f32.mrb[0].mxu0
        %v4968 = vadd.f32 0.0, %v4967
        %v4969 = vpop.f32.mrb[0].mxu0
        %4970 = vmatprep.mubr.f32.mxu0 0.0
        %4971 = vmatmul.mubr.f32.gmra.mrb[0].mxu0 %v3212
        %v4972 = vpop.f32.mrb[0].mxu0
        %v4973 = vadd.f32 0.0, %v4972
        %v4974 = vpop.f32.mrb[0].mxu0
        %4975 = vdwg.mxu0
        %v4976 = vadd.f32 %v4702, %v4818
        %v4977 = vadd.f32 %v4703, %v4823
        %v4978 = vadd.f32 %v4704, %v4828
        %v4979 = vadd.f32 %v4705, %v4833
        %v4980 = vadd.f32 %v4706, %v4838
        %v4981 = vadd.f32 %v4707, %v4843
        %v4982 = vadd.f32 %v4708, %v4848
        %v4983 = vadd.f32 %v4709, %v4853
        %v4984 = vadd.f32 %v4710, %v4858
        %v4985 = vadd.f32 %v4711, %v4863
        %v4986 = vadd.f32 %v4712, %v4868
        %v4987 = vadd.f32 %v4713, %v4873
        %v4988 = vadd.f32 %v4714, %v4878
        %v4989 = vadd.f32 %v4715, %v4883
        %v4990 = vadd.f32 %v4716, %v4888
        %v4991 = vadd.f32 %v4717, %v4893
        %v4992 = vadd.f32 %v4718, %v4898
        %v4993 = vadd.f32 %v4719, %v4903
        %v4994 = vadd.f32 %v4720, %v4908
        %v4995 = vadd.f32 %v4721, %v4913
        %v4996 = vadd.f32 %v4722, %v4918
        %v4997 = vadd.f32 %v4723, %v4923
        %v4998 = vadd.f32 %v4724, %v4928
        %v4999 = vadd.f32 %v4725, %v4933
        %v5000 = vadd.f32 %v4726, %v4938
        %v5001 = vadd.f32 %v4727, %v4943
        %v5002 = vadd.f32 %v4728, %v4948
        %v5003 = vadd.f32 %v4729, %v4953
        %v5004 = vadd.f32 %v4730, %v4958
        %v5005 = vadd.f32 %v4731, %v4963
        %v5006 = vadd.f32 %v4732, %v4968
        %v5007 = vadd.f32 %v4733, %v4973
        %s5008 = scalar_lea.vmem [#allocation8], 256
        %v5009 = vld [vmem:[%s5008] sm:$0xff]
        %v5010 = vld [vmem:[%s5008 + $0x8] sm:$0xff]
        %v5011 = vld [vmem:[%s5008 + $0x10] sm:$0xff]
        %v5012 = vld [vmem:[%s5008 + $0x18] sm:$0xff]
        %v5013 = vld [vmem:[%s5008 + $0x20] sm:$0xff]
        %v5014 = vld [vmem:[%s5008 + $0x28] sm:$0xff]
        %v5015 = vld [vmem:[%s5008 + $0x30] sm:$0xff]
        %v5016 = vld [vmem:[%s5008 + $0x38] sm:$0xff]
        %v5017 = vld [vmem:[%s5008 + $0x40] sm:$0xff]
        %v5018 = vld [vmem:[%s5008 + $0x48] sm:$0xff]
        %v5019 = vld [vmem:[%s5008 + $0x50] sm:$0xff]
        %v5020 = vld [vmem:[%s5008 + $0x58] sm:$0xff]
        %v5021 = vld [vmem:[%s5008 + $0x60] sm:$0xff]
        %v5022 = vld [vmem:[%s5008 + $0x68] sm:$0xff]
        %v5023 = vld [vmem:[%s5008 + $0x70] sm:$0xff]
        %v5024 = vld [vmem:[%s5008 + $0x78] sm:$0xff]
        %5025 = vmatprep.subr.mxu0 0.0
        %5026 = vmatpush1.msra.mxu0 %v5009
        %5027 = vmatprep.subr.mxu0 0.0
        %5028 = vmatpush1.msra.mxu0 %v5010
        %5029 = vmatprep.subr.mxu0 0.0
        %5030 = vmatpush1.msra.mxu0 %v5011
        %5031 = vmatprep.subr.mxu0 0.0
        %5032 = vmatpush1.msra.mxu0 %v5012
        %5033 = vmatprep.subr.mxu0 0.0
        %5034 = vmatpush1.msra.mxu0 %v5013
        %5035 = vmatprep.subr.mxu0 0.0
        %5036 = vmatpush1.msra.mxu0 %v5014
        %5037 = vmatprep.subr.mxu0 0.0
        %5038 = vmatpush1.msra.mxu0 %v5015
        %5039 = vmatprep.subr.mxu0 0.0
        %5040 = vmatpush1.msra.mxu0 %v5016
        %5041 = vmatprep.subr.mxu0 0.0
        %5042 = vmatpush1.msra.mxu0 %v5017
        %5043 = vmatprep.subr.mxu0 0.0
        %5044 = vmatpush1.msra.mxu0 %v5018
        %5045 = vmatprep.subr.mxu0 0.0
        %5046 = vmatpush1.msra.mxu0 %v5019
        %5047 = vmatprep.subr.mxu0 0.0
        %5048 = vmatpush1.msra.mxu0 %v5020
        %5049 = vmatprep.subr.mxu0 0.0
        %5050 = vmatpush1.msra.mxu0 %v5021
        %5051 = vmatprep.subr.mxu0 0.0
        %5052 = vmatpush1.msra.mxu0 %v5022
        %5053 = vmatprep.subr.mxu0 0.0
        %5054 = vmatpush1.msra.mxu0 %v5023
        %5055 = vmatprep.subr.mxu0 0.0
        %5056 = vmatpush1.msra.mxu0 %v5024
        %5057 = vmatprep.subr.mxu0 0.0
        %5058 = vmatpush1.msra.mxu0 0.0
        %5059 = vmatprep.subr.mxu0 0.0
        %5060 = vmatpush1.msra.mxu0 0.0
        %5061 = vmatprep.subr.mxu0 0.0
        %5062 = vmatpush1.msra.mxu0 0.0
        %5063 = vmatprep.subr.mxu0 0.0
        %5064 = vmatpush1.msra.mxu0 0.0
        %5065 = vmatprep.subr.mxu0 0.0
        %5066 = vmatpush1.msra.mxu0 0.0
        %5067 = vmatprep.subr.mxu0 0.0
        %5068 = vmatpush1.msra.mxu0 0.0
        %5069 = vmatprep.subr.mxu0 0.0
        %5070 = vmatpush1.msra.mxu0 0.0
        %5071 = vmatprep.subr.mxu0 0.0
        %5072 = vmatpush1.msra.mxu0 0.0
        %5073 = vmatprep.subr.mxu0 0.0
        %5074 = vmatpush1.msra.mxu0 0.0
        %5075 = vmatprep.subr.mxu0 0.0
        %5076 = vmatpush1.msra.mxu0 0.0
        %5077 = vmatprep.subr.mxu0 0.0
        %5078 = vmatpush1.msra.mxu0 0.0
        %5079 = vmatprep.subr.mxu0 0.0
        %5080 = vmatpush1.msra.mxu0 0.0
        %5081 = vmatprep.subr.mxu0 0.0
        %5082 = vmatpush1.msra.mxu0 0.0
        %5083 = vmatprep.subr.mxu0 0.0
        %5084 = vmatpush1.msra.mxu0 0.0
        %5085 = vmatprep.subr.mxu0 0.0
        %5086 = vmatpush1.msra.mxu0 0.0
        %5087 = vmatprep.subr.mxu0 0.0
        %5088 = vmatpush1.msra.mxu0 0.0
        %5089 = vmatprep.mubr.f32.mxu0 0.0
        %5090 = vmatmul.mubr.f32.gmra.mrb[0].mxu0 %v3393
        %v5091 = vpop.f32.mrb[0].mxu0
        %v5092 = vadd.f32 0.0, %v5091
        %v5093 = vpop.f32.mrb[0].mxu0
        %5094 = vmatprep.mubr.f32.mxu0 0.0
        %5095 = vmatmul.mubr.f32.gmra.mrb[0].mxu0 %v3394
        %v5096 = vpop.f32.mrb[0].mxu0
        %v5097 = vadd.f32 0.0, %v5096
        %v5098 = vpop.f32.mrb[0].mxu0
        %5099 = vmatprep.mubr.f32.mxu0 0.0
        %5100 = vmatmul.mubr.f32.gmra.mrb[0].mxu0 %v3395
        %v5101 = vpop.f32.mrb[0].mxu0
        %v5102 = vadd.f32 0.0, %v5101
        %v5103 = vpop.f32.mrb[0].mxu0
        %5104 = vmatprep.mubr.f32.mxu0 0.0
        %5105 = vmatmul.mubr.f32.gmra.mrb[0].mxu0 %v3396
        %v5106 = vpop.f32.mrb[0].mxu0
        %v5107 = vadd.f32 0.0, %v5106
        %v5108 = vpop.f32.mrb[0].mxu0
        %5109 = vmatprep.mubr.f32.mxu0 0.0
        %5110 = vmatmul.mubr.f32.gmra.mrb[0].mxu0 %v3397
        %v5111 = vpop.f32.mrb[0].mxu0
        %v5112 = vadd.f32 0.0, %v5111
        %v5113 = vpop.f32.mrb[0].mxu0
        %5114 = vmatprep.mubr.f32.mxu0 0.0
        %5115 = vmatmul.mubr.f32.gmra.mrb[0].mxu0 %v3398
        %v5116 = vpop.f32.mrb[0].mxu0
        %v5117 = vadd.f32 0.0, %v5116
        %v5118 = vpop.f32.mrb[0].mxu0
        %5119 = vmatprep.mubr.f32.mxu0 0.0
        %5120 = vmatmul.mubr.f32.gmra.mrb[0].mxu0 %v3399
        %v5121 = vpop.f32.mrb[0].mxu0
        %v5122 = vadd.f32 0.0, %v5121
        %v5123 = vpop.f32.mrb[0].mxu0
        %5124 = vmatprep.mubr.f32.mxu0 0.0
        %5125 = vmatmul.mubr.f32.gmra.mrb[0].mxu0 %v3400
        %v5126 = vpop.f32.mrb[0].mxu0
        %v5127 = vadd.f32 0.0, %v5126
        %v5128 = vpop.f32.mrb[0].mxu0
        %5129 = vmatprep.mubr.f32.mxu0 0.0
        %5130 = vmatmul.mubr.f32.gmra.mrb[0].mxu0 %v3401
        %v5131 = vpop.f32.mrb[0].mxu0
        %v5132 = vadd.f32 0.0, %v5131
        %v5133 = vpop.f32.mrb[0].mxu0
        %5134 = vmatprep.mubr.f32.mxu0 0.0
        %5135 = vmatmul.mubr.f32.gmra.mrb[0].mxu0 %v3402
        %v5136 = vpop.f32.mrb[0].mxu0
        %v5137 = vadd.f32 0.0, %v5136
        %v5138 = vpop.f32.mrb[0].mxu0
        %5139 = vmatprep.mubr.f32.mxu0 0.0
        %5140 = vmatmul.mubr.f32.gmra.mrb[0].mxu0 %v3403
        %v5141 = vpop.f32.mrb[0].mxu0
        %v5142 = vadd.f32 0.0, %v5141
        %v5143 = vpop.f32.mrb[0].mxu0
        %5144 = vmatprep.mubr.f32.mxu0 0.0
        %5145 = vmatmul.mubr.f32.gmra.mrb[0].mxu0 %v3404
        %v5146 = vpop.f32.mrb[0].mxu0
        %v5147 = vadd.f32 0.0, %v5146
        %v5148 = vpop.f32.mrb[0].mxu0
        %5149 = vmatprep.mubr.f32.mxu0 0.0
        %5150 = vmatmul.mubr.f32.gmra.mrb[0].mxu0 %v3405
        %v5151 = vpop.f32.mrb[0].mxu0
        %v5152 = vadd.f32 0.0, %v5151
        %v5153 = vpop.f32.mrb[0].mxu0
        %5154 = vmatprep.mubr.f32.mxu0 0.0
        %5155 = vmatmul.mubr.f32.gmra.mrb[0].mxu0 %v3406
        %v5156 = vpop.f32.mrb[0].mxu0
        %v5157 = vadd.f32 0.0, %v5156
        %v5158 = vpop.f32.mrb[0].mxu0
        %5159 = vmatprep.mubr.f32.mxu0 0.0
        %5160 = vmatmul.mubr.f32.gmra.mrb[0].mxu0 %v3407
        %v5161 = vpop.f32.mrb[0].mxu0
        %v5162 = vadd.f32 0.0, %v5161
        %v5163 = vpop.f32.mrb[0].mxu0
        %5164 = vmatprep.mubr.f32.mxu0 0.0
        %5165 = vmatmul.mubr.f32.gmra.mrb[0].mxu0 %v3408
        %v5166 = vpop.f32.mrb[0].mxu0
        %v5167 = vadd.f32 0.0, %v5166
        %v5168 = vpop.f32.mrb[0].mxu0
        %5169 = vmatprep.mubr.f32.mxu0 0.0
        %5170 = vmatmul.mubr.f32.gmra.mrb[0].mxu0 %v3409
        %v5171 = vpop.f32.mrb[0].mxu0
        %v5172 = vadd.f32 0.0, %v5171
        %v5173 = vpop.f32.mrb[0].mxu0
        %5174 = vmatprep.mubr.f32.mxu0 0.0
        %5175 = vmatmul.mubr.f32.gmra.mrb[0].mxu0 %v3410
        %v5176 = vpop.f32.mrb[0].mxu0
        %v5177 = vadd.f32 0.0, %v5176
        %v5178 = vpop.f32.mrb[0].mxu0
        %5179 = vmatprep.mubr.f32.mxu0 0.0
        %5180 = vmatmul.mubr.f32.gmra.mrb[0].mxu0 %v3411
        %v5181 = vpop.f32.mrb[0].mxu0
        %v5182 = vadd.f32 0.0, %v5181
        %v5183 = vpop.f32.mrb[0].mxu0
        %5184 = vmatprep.mubr.f32.mxu0 0.0
        %5185 = vmatmul.mubr.f32.gmra.mrb[0].mxu0 %v3412
        %v5186 = vpop.f32.mrb[0].mxu0
        %v5187 = vadd.f32 0.0, %v5186
        %v5188 = vpop.f32.mrb[0].mxu0
        %5189 = vmatprep.mubr.f32.mxu0 0.0
        %5190 = vmatmul.mubr.f32.gmra.mrb[0].mxu0 %v3413
        %v5191 = vpop.f32.mrb[0].mxu0
        %v5192 = vadd.f32 0.0, %v5191
        %v5193 = vpop.f32.mrb[0].mxu0
        %5194 = vmatprep.mubr.f32.mxu0 0.0
        %5195 = vmatmul.mubr.f32.gmra.mrb[0].mxu0 %v3414
        %v5196 = vpop.f32.mrb[0].mxu0
        %v5197 = vadd.f32 0.0, %v5196
        %v5198 = vpop.f32.mrb[0].mxu0
        %5199 = vmatprep.mubr.f32.mxu0 0.0
        %5200 = vmatmul.mubr.f32.gmra.mrb[0].mxu0 %v3415
        %v5201 = vpop.f32.mrb[0].mxu0
        %v5202 = vadd.f32 0.0, %v5201
        %v5203 = vpop.f32.mrb[0].mxu0
        %5204 = vmatprep.mubr.f32.mxu0 0.0
        %5205 = vmatmul.mubr.f32.gmra.mrb[0].mxu0 %v3416
        %v5206 = vpop.f32.mrb[0].mxu0
        %v5207 = vadd.f32 0.0, %v5206
        %v5208 = vpop.f32.mrb[0].mxu0
        %5209 = vmatprep.mubr.f32.mxu0 0.0
        %5210 = vmatmul.mubr.f32.gmra.mrb[0].mxu0 %v3417
        %v5211 = vpop.f32.mrb[0].mxu0
        %v5212 = vadd.f32 0.0, %v5211
        %v5213 = vpop.f32.mrb[0].mxu0
        %5214 = vmatprep.mubr.f32.mxu0 0.0
        %5215 = vmatmul.mubr.f32.gmra.mrb[0].mxu0 %v3418
        %v5216 = vpop.f32.mrb[0].mxu0
        %v5217 = vadd.f32 0.0, %v5216
        %v5218 = vpop.f32.mrb[0].mxu0
        %5219 = vmatprep.mubr.f32.mxu0 0.0
        %5220 = vmatmul.mubr.f32.gmra.mrb[0].mxu0 %v3419
        %v5221 = vpop.f32.mrb[0].mxu0
        %v5222 = vadd.f32 0.0, %v5221
        %v5223 = vpop.f32.mrb[0].mxu0
        %5224 = vmatprep.mubr.f32.mxu0 0.0
        %5225 = vmatmul.mubr.f32.gmra.mrb[0].mxu0 %v3420
        %v5226 = vpop.f32.mrb[0].mxu0
        %v5227 = vadd.f32 0.0, %v5226
        %v5228 = vpop.f32.mrb[0].mxu0
        %5229 = vmatprep.mubr.f32.mxu0 0.0
        %5230 = vmatmul.mubr.f32.gmra.mrb[0].mxu0 %v3421
        %v5231 = vpop.f32.mrb[0].mxu0
        %v5232 = vadd.f32 0.0, %v5231
        %v5233 = vpop.f32.mrb[0].mxu0
        %5234 = vmatprep.mubr.f32.mxu0 0.0
        %5235 = vmatmul.mubr.f32.gmra.mrb[0].mxu0 %v3422
        %v5236 = vpop.f32.mrb[0].mxu0
        %v5237 = vadd.f32 0.0, %v5236
        %v5238 = vpop.f32.mrb[0].mxu0
        %5239 = vmatprep.mubr.f32.mxu0 0.0
        %5240 = vmatmul.mubr.f32.gmra.mrb[0].mxu0 %v3423
        %v5241 = vpop.f32.mrb[0].mxu0
        %v5242 = vadd.f32 0.0, %v5241
        %v5243 = vpop.f32.mrb[0].mxu0
        %5244 = vmatprep.mubr.f32.mxu0 0.0
        %5245 = vmatmul.mubr.f32.gmra.mrb[0].mxu0 %v3424
        %v5246 = vpop.f32.mrb[0].mxu0
        %v5247 = vadd.f32 0.0, %v5246
        %v5248 = vpop.f32.mrb[0].mxu0
        %5249 = vdwg.mxu0
        %v5250 = vadd.f32 %v4976, %v5092
        %v5251 = vadd.f32 %v4977, %v5097
        %v5252 = vadd.f32 %v4978, %v5102
        %v5253 = vadd.f32 %v4979, %v5107
        %v5254 = vadd.f32 %v4980, %v5112
        %v5255 = vadd.f32 %v4981, %v5117
        %v5256 = vadd.f32 %v4982, %v5122
        %v5257 = vadd.f32 %v4983, %v5127
        %v5258 = vadd.f32 %v4984, %v5132
        %v5259 = vadd.f32 %v4985, %v5137
        %v5260 = vadd.f32 %v4986, %v5142
        %v5261 = vadd.f32 %v4987, %v5147
        %v5262 = vadd.f32 %v4988, %v5152
        %v5263 = vadd.f32 %v4989, %v5157
        %v5264 = vadd.f32 %v4990, %v5162
        %v5265 = vadd.f32 %v4991, %v5167
        %v5266 = vadd.f32 %v4992, %v5172
        %v5267 = vadd.f32 %v4993, %v5177
        %v5268 = vadd.f32 %v4994, %v5182
        %v5269 = vadd.f32 %v4995, %v5187
        %v5270 = vadd.f32 %v4996, %v5192
        %v5271 = vadd.f32 %v4997, %v5197
        %v5272 = vadd.f32 %v4998, %v5202
        %v5273 = vadd.f32 %v4999, %v5207
        %v5274 = vadd.f32 %v5000, %v5212
        %v5275 = vadd.f32 %v5001, %v5217
        %v5276 = vadd.f32 %v5002, %v5222
        %v5277 = vadd.f32 %v5003, %v5227
        %v5278 = vadd.f32 %v5004, %v5232
        %v5279 = vadd.f32 %v5005, %v5237
        %v5280 = vadd.f32 %v5006, %v5242
        %v5281 = vadd.f32 %v5007, %v5247
        %s5282 = scalar_lea.vmem [#allocation8], 640
        %v5283 = vld [vmem:[%s5282] sm:$0xff]
        %v5284 = vld [vmem:[%s5282 + $0x8] sm:$0xff]
        %v5285 = vld [vmem:[%s5282 + $0x10] sm:$0xff]
        %v5286 = vld [vmem:[%s5282 + $0x18] sm:$0xff]
        %v5287 = vld [vmem:[%s5282 + $0x20] sm:$0xff]
        %v5288 = vld [vmem:[%s5282 + $0x28] sm:$0xff]
        %v5289 = vld [vmem:[%s5282 + $0x30] sm:$0xff]
        %v5290 = vld [vmem:[%s5282 + $0x38] sm:$0xff]
        %v5291 = vld [vmem:[%s5282 + $0x40] sm:$0xff]
        %v5292 = vld [vmem:[%s5282 + $0x48] sm:$0xff]
        %v5293 = vld [vmem:[%s5282 + $0x50] sm:$0xff]
        %v5294 = vld [vmem:[%s5282 + $0x58] sm:$0xff]
        %v5295 = vld [vmem:[%s5282 + $0x60] sm:$0xff]
        %v5296 = vld [vmem:[%s5282 + $0x68] sm:$0xff]
        %v5297 = vld [vmem:[%s5282 + $0x70] sm:$0xff]
        %v5298 = vld [vmem:[%s5282 + $0x78] sm:$0xff]
        %5299 = vmatprep.subr.mxu0 0.0
        %5300 = vmatpush1.msra.mxu0 %v5283
        %5301 = vmatprep.subr.mxu0 0.0
        %5302 = vmatpush1.msra.mxu0 %v5284
        %5303 = vmatprep.subr.mxu0 0.0
        %5304 = vmatpush1.msra.mxu0 %v5285
        %5305 = vmatprep.subr.mxu0 0.0
        %5306 = vmatpush1.msra.mxu0 %v5286
        %5307 = vmatprep.subr.mxu0 0.0
        %5308 = vmatpush1.msra.mxu0 %v5287
        %5309 = vmatprep.subr.mxu0 0.0
        %5310 = vmatpush1.msra.mxu0 %v5288
        %5311 = vmatprep.subr.mxu0 0.0
        %5312 = vmatpush1.msra.mxu0 %v5289
        %5313 = vmatprep.subr.mxu0 0.0
        %5314 = vmatpush1.msra.mxu0 %v5290
        %5315 = vmatprep.subr.mxu0 0.0
        %5316 = vmatpush1.msra.mxu0 %v5291
        %5317 = vmatprep.subr.mxu0 0.0
        %5318 = vmatpush1.msra.mxu0 %v5292
        %5319 = vmatprep.subr.mxu0 0.0
        %5320 = vmatpush1.msra.mxu0 %v5293
        %5321 = vmatprep.subr.mxu0 0.0
        %5322 = vmatpush1.msra.mxu0 %v5294
        %5323 = vmatprep.subr.mxu0 0.0
        %5324 = vmatpush1.msra.mxu0 %v5295
        %5325 = vmatprep.subr.mxu0 0.0
        %5326 = vmatpush1.msra.mxu0 %v5296
        %5327 = vmatprep.subr.mxu0 0.0
        %5328 = vmatpush1.msra.mxu0 %v5297
        %5329 = vmatprep.subr.mxu0 0.0
        %5330 = vmatpush1.msra.mxu0 %v5298
        %5331 = vmatprep.subr.mxu0 0.0
        %5332 = vmatpush1.msra.mxu0 0.0
        %5333 = vmatprep.subr.mxu0 0.0
        %5334 = vmatpush1.msra.mxu0 0.0
        %5335 = vmatprep.subr.mxu0 0.0
        %5336 = vmatpush1.msra.mxu0 0.0
        %5337 = vmatprep.subr.mxu0 0.0
        %5338 = vmatpush1.msra.mxu0 0.0
        %5339 = vmatprep.subr.mxu0 0.0
        %5340 = vmatpush1.msra.mxu0 0.0
        %5341 = vmatprep.subr.mxu0 0.0
        %5342 = vmatpush1.msra.mxu0 0.0
        %5343 = vmatprep.subr.mxu0 0.0
        %5344 = vmatpush1.msra.mxu0 0.0
        %5345 = vmatprep.subr.mxu0 0.0
        %5346 = vmatpush1.msra.mxu0 0.0
        %5347 = vmatprep.subr.mxu0 0.0
        %5348 = vmatpush1.msra.mxu0 0.0
        %5349 = vmatprep.subr.mxu0 0.0
        %5350 = vmatpush1.msra.mxu0 0.0
        %5351 = vmatprep.subr.mxu0 0.0
        %5352 = vmatpush1.msra.mxu0 0.0
        %5353 = vmatprep.subr.mxu0 0.0
        %5354 = vmatpush1.msra.mxu0 0.0
        %5355 = vmatprep.subr.mxu0 0.0
        %5356 = vmatpush1.msra.mxu0 0.0
        %5357 = vmatprep.subr.mxu0 0.0
        %5358 = vmatpush1.msra.mxu0 0.0
        %5359 = vmatprep.subr.mxu0 0.0
        %5360 = vmatpush1.msra.mxu0 0.0
        %5361 = vmatprep.subr.mxu0 0.0
        %5362 = vmatpush1.msra.mxu0 0.0
        %5363 = vmatprep.mubr.f32.mxu0 0.0
        %5364 = vmatmul.mubr.f32.gmra.mrb[0].mxu0 %v3395
        %v5365 = vpop.f32.mrb[0].mxu0
        %v5366 = vadd.f32 0.0, %v5365
        %v5367 = vpop.f32.mrb[0].mxu0
        %5368 = vmatprep.mubr.f32.mxu0 0.0
        %5369 = vmatmul.mubr.f32.gmra.mrb[0].mxu0 %v3396
        %v5370 = vpop.f32.mrb[0].mxu0
        %v5371 = vadd.f32 0.0, %v5370
        %v5372 = vpop.f32.mrb[0].mxu0
        %5373 = vmatprep.mubr.f32.mxu0 0.0
        %5374 = vmatmul.mubr.f32.gmra.mrb[0].mxu0 %v3397
        %v5375 = vpop.f32.mrb[0].mxu0
        %v5376 = vadd.f32 0.0, %v5375
        %v5377 = vpop.f32.mrb[0].mxu0
        %5378 = vmatprep.mubr.f32.mxu0 0.0
        %5379 = vmatmul.mubr.f32.gmra.mrb[0].mxu0 %v3398
        %v5380 = vpop.f32.mrb[0].mxu0
        %v5381 = vadd.f32 0.0, %v5380
        %v5382 = vpop.f32.mrb[0].mxu0
        %5383 = vmatprep.mubr.f32.mxu0 0.0
        %5384 = vmatmul.mubr.f32.gmra.mrb[0].mxu0 %v3399
        %v5385 = vpop.f32.mrb[0].mxu0
        %v5386 = vadd.f32 0.0, %v5385
        %v5387 = vpop.f32.mrb[0].mxu0
        %5388 = vmatprep.mubr.f32.mxu0 0.0
        %5389 = vmatmul.mubr.f32.gmra.mrb[0].mxu0 %v3400
        %v5390 = vpop.f32.mrb[0].mxu0
        %v5391 = vadd.f32 0.0, %v5390
        %v5392 = vpop.f32.mrb[0].mxu0
        %5393 = vmatprep.mubr.f32.mxu0 0.0
        %5394 = vmatmul.mubr.f32.gmra.mrb[0].mxu0 %v3401
        %v5395 = vpop.f32.mrb[0].mxu0
        %v5396 = vadd.f32 0.0, %v5395
        %v5397 = vpop.f32.mrb[0].mxu0
        %5398 = vmatprep.mubr.f32.mxu0 0.0
        %5399 = vmatmul.mubr.f32.gmra.mrb[0].mxu0 %v3402
        %v5400 = vpop.f32.mrb[0].mxu0
        %v5401 = vadd.f32 0.0, %v5400
        %v5402 = vpop.f32.mrb[0].mxu0
        %5403 = vmatprep.mubr.f32.mxu0 0.0
        %5404 = vmatmul.mubr.f32.gmra.mrb[0].mxu0 %v3403
        %v5405 = vpop.f32.mrb[0].mxu0
        %v5406 = vadd.f32 0.0, %v5405
        %v5407 = vpop.f32.mrb[0].mxu0
        %5408 = vmatprep.mubr.f32.mxu0 0.0
        %5409 = vmatmul.mubr.f32.gmra.mrb[0].mxu0 %v3404
        %v5410 = vpop.f32.mrb[0].mxu0
        %v5411 = vadd.f32 0.0, %v5410
        %v5412 = vpop.f32.mrb[0].mxu0
        %5413 = vmatprep.mubr.f32.mxu0 0.0
        %5414 = vmatmul.mubr.f32.gmra.mrb[0].mxu0 %v3405
        %v5415 = vpop.f32.mrb[0].mxu0
        %v5416 = vadd.f32 0.0, %v5415
        %v5417 = vpop.f32.mrb[0].mxu0
        %5418 = vmatprep.mubr.f32.mxu0 0.0
        %5419 = vmatmul.mubr.f32.gmra.mrb[0].mxu0 %v3406
        %v5420 = vpop.f32.mrb[0].mxu0
        %v5421 = vadd.f32 0.0, %v5420
        %v5422 = vpop.f32.mrb[0].mxu0
        %5423 = vmatprep.mubr.f32.mxu0 0.0
        %5424 = vmatmul.mubr.f32.gmra.mrb[0].mxu0 %v3407
        %v5425 = vpop.f32.mrb[0].mxu0
        %v5426 = vadd.f32 0.0, %v5425
        %v5427 = vpop.f32.mrb[0].mxu0
        %5428 = vmatprep.mubr.f32.mxu0 0.0
        %5429 = vmatmul.mubr.f32.gmra.mrb[0].mxu0 %v3408
        %v5430 = vpop.f32.mrb[0].mxu0
        %v5431 = vadd.f32 0.0, %v5430
        %v5432 = vpop.f32.mrb[0].mxu0
        %5433 = vmatprep.mubr.f32.mxu0 0.0
        %5434 = vmatmul.mubr.f32.gmra.mrb[0].mxu0 %v3409
        %v5435 = vpop.f32.mrb[0].mxu0
        %v5436 = vadd.f32 0.0, %v5435
        %v5437 = vpop.f32.mrb[0].mxu0
        %5438 = vmatprep.mubr.f32.mxu0 0.0
        %5439 = vmatmul.mubr.f32.gmra.mrb[0].mxu0 %v3410
        %v5440 = vpop.f32.mrb[0].mxu0
        %v5441 = vadd.f32 0.0, %v5440
        %v5442 = vpop.f32.mrb[0].mxu0
        %5443 = vmatprep.mubr.f32.mxu0 0.0
        %5444 = vmatmul.mubr.f32.gmra.mrb[0].mxu0 %v3411
        %v5445 = vpop.f32.mrb[0].mxu0
        %v5446 = vadd.f32 0.0, %v5445
        %v5447 = vpop.f32.mrb[0].mxu0
        %5448 = vmatprep.mubr.f32.mxu0 0.0
        %5449 = vmatmul.mubr.f32.gmra.mrb[0].mxu0 %v3412
        %v5450 = vpop.f32.mrb[0].mxu0
        %v5451 = vadd.f32 0.0, %v5450
        %v5452 = vpop.f32.mrb[0].mxu0
        %5453 = vmatprep.mubr.f32.mxu0 0.0
        %5454 = vmatmul.mubr.f32.gmra.mrb[0].mxu0 %v3413
        %v5455 = vpop.f32.mrb[0].mxu0
        %v5456 = vadd.f32 0.0, %v5455
        %v5457 = vpop.f32.mrb[0].mxu0
        %5458 = vmatprep.mubr.f32.mxu0 0.0
        %5459 = vmatmul.mubr.f32.gmra.mrb[0].mxu0 %v3414
        %v5460 = vpop.f32.mrb[0].mxu0
        %v5461 = vadd.f32 0.0, %v5460
        %v5462 = vpop.f32.mrb[0].mxu0
        %5463 = vmatprep.mubr.f32.mxu0 0.0
        %5464 = vmatmul.mubr.f32.gmra.mrb[0].mxu0 %v3415
        %v5465 = vpop.f32.mrb[0].mxu0
        %v5466 = vadd.f32 0.0, %v5465
        %v5467 = vpop.f32.mrb[0].mxu0
        %5468 = vmatprep.mubr.f32.mxu0 0.0
        %5469 = vmatmul.mubr.f32.gmra.mrb[0].mxu0 %v3416
        %v5470 = vpop.f32.mrb[0].mxu0
        %v5471 = vadd.f32 0.0, %v5470
        %v5472 = vpop.f32.mrb[0].mxu0
        %5473 = vmatprep.mubr.f32.mxu0 0.0
        %5474 = vmatmul.mubr.f32.gmra.mrb[0].mxu0 %v3417
        %v5475 = vpop.f32.mrb[0].mxu0
        %v5476 = vadd.f32 0.0, %v5475
        %v5477 = vpop.f32.mrb[0].mxu0
        %5478 = vmatprep.mubr.f32.mxu0 0.0
        %5479 = vmatmul.mubr.f32.gmra.mrb[0].mxu0 %v3418
        %v5480 = vpop.f32.mrb[0].mxu0
        %v5481 = vadd.f32 0.0, %v5480
        %v5482 = vpop.f32.mrb[0].mxu0
        %5483 = vmatprep.mubr.f32.mxu0 0.0
        %5484 = vmatmul.mubr.f32.gmra.mrb[0].mxu0 %v3419
        %v5485 = vpop.f32.mrb[0].mxu0
        %v5486 = vadd.f32 0.0, %v5485
        %v5487 = vpop.f32.mrb[0].mxu0
        %5488 = vmatprep.mubr.f32.mxu0 0.0
        %5489 = vmatmul.mubr.f32.gmra.mrb[0].mxu0 %v3420
        %v5490 = vpop.f32.mrb[0].mxu0
        %v5491 = vadd.f32 0.0, %v5490
        %v5492 = vpop.f32.mrb[0].mxu0
        %5493 = vmatprep.mubr.f32.mxu0 0.0
        %5494 = vmatmul.mubr.f32.gmra.mrb[0].mxu0 %v3421
        %v5495 = vpop.f32.mrb[0].mxu0
        %v5496 = vadd.f32 0.0, %v5495
        %v5497 = vpop.f32.mrb[0].mxu0
        %5498 = vmatprep.mubr.f32.mxu0 0.0
        %5499 = vmatmul.mubr.f32.gmra.mrb[0].mxu0 %v3422
        %v5500 = vpop.f32.mrb[0].mxu0
        %v5501 = vadd.f32 0.0, %v5500
        %v5502 = vpop.f32.mrb[0].mxu0
        %5503 = vmatprep.mubr.f32.mxu0 0.0
        %5504 = vmatmul.mubr.f32.gmra.mrb[0].mxu0 %v3423
        %v5505 = vpop.f32.mrb[0].mxu0
        %v5506 = vadd.f32 0.0, %v5505
        %v5507 = vpop.f32.mrb[0].mxu0
        %5508 = vmatprep.mubr.f32.mxu0 0.0
        %5509 = vmatmul.mubr.f32.gmra.mrb[0].mxu0 %v3424
        %v5510 = vpop.f32.mrb[0].mxu0
        %v5511 = vadd.f32 0.0, %v5510
        %v5512 = vpop.f32.mrb[0].mxu0
        %5513 = vmatprep.mubr.f32.mxu0 0.0
        %5514 = vmatmul.mubr.f32.gmra.mrb[0].mxu0 %v3425
        %v5515 = vpop.f32.mrb[0].mxu0
        %v5516 = vadd.f32 0.0, %v5515
        %v5517 = vpop.f32.mrb[0].mxu0
        %5518 = vmatprep.mubr.f32.mxu0 0.0
        %5519 = vmatmul.mubr.f32.gmra.mrb[0].mxu0 %v3426
        %v5520 = vpop.f32.mrb[0].mxu0
        %v5521 = vadd.f32 0.0, %v5520
        %v5522 = vpop.f32.mrb[0].mxu0
        %5523 = vdwg.mxu0
        %v5524 = vadd.f32 %v5250, %v5366
        %v5525 = vadd.f32 %v5251, %v5371
        %v5526 = vadd.f32 %v5252, %v5376
        %v5527 = vadd.f32 %v5253, %v5381
        %v5528 = vadd.f32 %v5254, %v5386
        %v5529 = vadd.f32 %v5255, %v5391
        %v5530 = vadd.f32 %v5256, %v5396
        %v5531 = vadd.f32 %v5257, %v5401
        %v5532 = vadd.f32 %v5258, %v5406
        %v5533 = vadd.f32 %v5259, %v5411
        %v5534 = vadd.f32 %v5260, %v5416
        %v5535 = vadd.f32 %v5261, %v5421
        %v5536 = vadd.f32 %v5262, %v5426
        %v5537 = vadd.f32 %v5263, %v5431
        %v5538 = vadd.f32 %v5264, %v5436
        %v5539 = vadd.f32 %v5265, %v5441
        %v5540 = vadd.f32 %v5266, %v5446
        %v5541 = vadd.f32 %v5267, %v5451
        %v5542 = vadd.f32 %v5268, %v5456
        %v5543 = vadd.f32 %v5269, %v5461
        %v5544 = vadd.f32 %v5270, %v5466
        %v5545 = vadd.f32 %v5271, %v5471
        %v5546 = vadd.f32 %v5272, %v5476
        %v5547 = vadd.f32 %v5273, %v5481
        %v5548 = vadd.f32 %v5274, %v5486
        %v5549 = vadd.f32 %v5275, %v5491
        %v5550 = vadd.f32 %v5276, %v5496
        %v5551 = vadd.f32 %v5277, %v5501
        %v5552 = vadd.f32 %v5278, %v5506
        %v5553 = vadd.f32 %v5279, %v5511
        %v5554 = vadd.f32 %v5280, %v5516
        %v5555 = vadd.f32 %v5281, %v5521
        %s5556 = scalar_lea.vmem [#allocation8], 1024
        %v5557 = vld [vmem:[%s5556] sm:$0xff]
        %v5558 = vld [vmem:[%s5556 + $0x8] sm:$0xff]
        %v5559 = vld [vmem:[%s5556 + $0x10] sm:$0xff]
        %v5560 = vld [vmem:[%s5556 + $0x18] sm:$0xff]
        %v5561 = vld [vmem:[%s5556 + $0x20] sm:$0xff]
        %v5562 = vld [vmem:[%s5556 + $0x28] sm:$0xff]
        %v5563 = vld [vmem:[%s5556 + $0x30] sm:$0xff]
        %v5564 = vld [vmem:[%s5556 + $0x38] sm:$0xff]
        %v5565 = vld [vmem:[%s5556 + $0x40] sm:$0xff]
        %v5566 = vld [vmem:[%s5556 + $0x48] sm:$0xff]
        %v5567 = vld [vmem:[%s5556 + $0x50] sm:$0xff]
        %v5568 = vld [vmem:[%s5556 + $0x58] sm:$0xff]
        %v5569 = vld [vmem:[%s5556 + $0x60] sm:$0xff]
        %v5570 = vld [vmem:[%s5556 + $0x68] sm:$0xff]
        %v5571 = vld [vmem:[%s5556 + $0x70] sm:$0xff]
        %v5572 = vld [vmem:[%s5556 + $0x78] sm:$0xff]
        %5573 = vmatprep.subr.mxu0 0.0
        %5574 = vmatpush1.msra.mxu0 %v5557
        %5575 = vmatprep.subr.mxu0 0.0
        %5576 = vmatpush1.msra.mxu0 %v5558
        %5577 = vmatprep.subr.mxu0 0.0
        %5578 = vmatpush1.msra.mxu0 %v5559
        %5579 = vmatprep.subr.mxu0 0.0
        %5580 = vmatpush1.msra.mxu0 %v5560
        %5581 = vmatprep.subr.mxu0 0.0
        %5582 = vmatpush1.msra.mxu0 %v5561
        %5583 = vmatprep.subr.mxu0 0.0
        %5584 = vmatpush1.msra.mxu0 %v5562
        %5585 = vmatprep.subr.mxu0 0.0
        %5586 = vmatpush1.msra.mxu0 %v5563
        %5587 = vmatprep.subr.mxu0 0.0
        %5588 = vmatpush1.msra.mxu0 %v5564
        %5589 = vmatprep.subr.mxu0 0.0
        %5590 = vmatpush1.msra.mxu0 %v5565
        %5591 = vmatprep.subr.mxu0 0.0
        %5592 = vmatpush1.msra.mxu0 %v5566
        %5593 = vmatprep.subr.mxu0 0.0
        %5594 = vmatpush1.msra.mxu0 %v5567
        %5595 = vmatprep.subr.mxu0 0.0
        %5596 = vmatpush1.msra.mxu0 %v5568
        %5597 = vmatprep.subr.mxu0 0.0
        %5598 = vmatpush1.msra.mxu0 %v5569
        %5599 = vmatprep.subr.mxu0 0.0
        %5600 = vmatpush1.msra.mxu0 %v5570
        %5601 = vmatprep.subr.mxu0 0.0
        %5602 = vmatpush1.msra.mxu0 %v5571
        %5603 = vmatprep.subr.mxu0 0.0
        %5604 = vmatpush1.msra.mxu0 %v5572
        %5605 = vmatprep.subr.mxu0 0.0
        %5606 = vmatpush1.msra.mxu0 0.0
        %5607 = vmatprep.subr.mxu0 0.0
        %5608 = vmatpush1.msra.mxu0 0.0
        %5609 = vmatprep.subr.mxu0 0.0
        %5610 = vmatpush1.msra.mxu0 0.0
        %5611 = vmatprep.subr.mxu0 0.0
        %5612 = vmatpush1.msra.mxu0 0.0
        %5613 = vmatprep.subr.mxu0 0.0
        %5614 = vmatpush1.msra.mxu0 0.0
        %5615 = vmatprep.subr.mxu0 0.0
        %5616 = vmatpush1.msra.mxu0 0.0
        %5617 = vmatprep.subr.mxu0 0.0
        %5618 = vmatpush1.msra.mxu0 0.0
        %5619 = vmatprep.subr.mxu0 0.0
        %5620 = vmatpush1.msra.mxu0 0.0
        %5621 = vmatprep.subr.mxu0 0.0
        %5622 = vmatpush1.msra.mxu0 0.0
        %5623 = vmatprep.subr.mxu0 0.0
        %5624 = vmatpush1.msra.mxu0 0.0
        %5625 = vmatprep.subr.mxu0 0.0
        %5626 = vmatpush1.msra.mxu0 0.0
        %5627 = vmatprep.subr.mxu0 0.0
        %5628 = vmatpush1.msra.mxu0 0.0
        %5629 = vmatprep.subr.mxu0 0.0
        %5630 = vmatpush1.msra.mxu0 0.0
        %5631 = vmatprep.subr.mxu0 0.0
        %5632 = vmatpush1.msra.mxu0 0.0
        %5633 = vmatprep.subr.mxu0 0.0
        %5634 = vmatpush1.msra.mxu0 0.0
        %5635 = vmatprep.subr.mxu0 0.0
        %5636 = vmatpush1.msra.mxu0 0.0
        %5637 = vmatprep.mubr.f32.mxu0 0.0
        %5638 = vmatmul.mubr.f32.gmra.mrb[0].mxu0 %v3397
        %v5639 = vpop.f32.mrb[0].mxu0
        %v5640 = vadd.f32 0.0, %v5639
        %v5641 = vpop.f32.mrb[0].mxu0
        %5642 = vmatprep.mubr.f32.mxu0 0.0
        %5643 = vmatmul.mubr.f32.gmra.mrb[0].mxu0 %v3398
        %v5644 = vpop.f32.mrb[0].mxu0
        %v5645 = vadd.f32 0.0, %v5644
        %v5646 = vpop.f32.mrb[0].mxu0
        %5647 = vmatprep.mubr.f32.mxu0 0.0
        %5648 = vmatmul.mubr.f32.gmra.mrb[0].mxu0 %v3399
        %v5649 = vpop.f32.mrb[0].mxu0
        %v5650 = vadd.f32 0.0, %v5649
        %v5651 = vpop.f32.mrb[0].mxu0
        %5652 = vmatprep.mubr.f32.mxu0 0.0
        %5653 = vmatmul.mubr.f32.gmra.mrb[0].mxu0 %v3400
        %v5654 = vpop.f32.mrb[0].mxu0
        %v5655 = vadd.f32 0.0, %v5654
        %v5656 = vpop.f32.mrb[0].mxu0
        %5657 = vmatprep.mubr.f32.mxu0 0.0
        %5658 = vmatmul.mubr.f32.gmra.mrb[0].mxu0 %v3401
        %v5659 = vpop.f32.mrb[0].mxu0
        %v5660 = vadd.f32 0.0, %v5659
        %v5661 = vpop.f32.mrb[0].mxu0
        %5662 = vmatprep.mubr.f32.mxu0 0.0
        %5663 = vmatmul.mubr.f32.gmra.mrb[0].mxu0 %v3402
        %v5664 = vpop.f32.mrb[0].mxu0
        %v5665 = vadd.f32 0.0, %v5664
        %v5666 = vpop.f32.mrb[0].mxu0
        %5667 = vmatprep.mubr.f32.mxu0 0.0
        %5668 = vmatmul.mubr.f32.gmra.mrb[0].mxu0 %v3403
        %v5669 = vpop.f32.mrb[0].mxu0
        %v5670 = vadd.f32 0.0, %v5669
        %v5671 = vpop.f32.mrb[0].mxu0
        %5672 = vmatprep.mubr.f32.mxu0 0.0
        %5673 = vmatmul.mubr.f32.gmra.mrb[0].mxu0 %v3404
        %v5674 = vpop.f32.mrb[0].mxu0
        %v5675 = vadd.f32 0.0, %v5674
        %v5676 = vpop.f32.mrb[0].mxu0
        %5677 = vmatprep.mubr.f32.mxu0 0.0
        %5678 = vmatmul.mubr.f32.gmra.mrb[0].mxu0 %v3405
        %v5679 = vpop.f32.mrb[0].mxu0
        %v5680 = vadd.f32 0.0, %v5679
        %v5681 = vpop.f32.mrb[0].mxu0
        %5682 = vmatprep.mubr.f32.mxu0 0.0
        %5683 = vmatmul.mubr.f32.gmra.mrb[0].mxu0 %v3406
        %v5684 = vpop.f32.mrb[0].mxu0
        %v5685 = vadd.f32 0.0, %v5684
        %v5686 = vpop.f32.mrb[0].mxu0
        %5687 = vmatprep.mubr.f32.mxu0 0.0
        %5688 = vmatmul.mubr.f32.gmra.mrb[0].mxu0 %v3407
        %v5689 = vpop.f32.mrb[0].mxu0
        %v5690 = vadd.f32 0.0, %v5689
        %v5691 = vpop.f32.mrb[0].mxu0
        %5692 = vmatprep.mubr.f32.mxu0 0.0
        %5693 = vmatmul.mubr.f32.gmra.mrb[0].mxu0 %v3408
        %v5694 = vpop.f32.mrb[0].mxu0
        %v5695 = vadd.f32 0.0, %v5694
        %v5696 = vpop.f32.mrb[0].mxu0
        %5697 = vmatprep.mubr.f32.mxu0 0.0
        %5698 = vmatmul.mubr.f32.gmra.mrb[0].mxu0 %v3409
        %v5699 = vpop.f32.mrb[0].mxu0
        %v5700 = vadd.f32 0.0, %v5699
        %v5701 = vpop.f32.mrb[0].mxu0
        %5702 = vmatprep.mubr.f32.mxu0 0.0
        %5703 = vmatmul.mubr.f32.gmra.mrb[0].mxu0 %v3410
        %v5704 = vpop.f32.mrb[0].mxu0
        %v5705 = vadd.f32 0.0, %v5704
        %v5706 = vpop.f32.mrb[0].mxu0
        %5707 = vmatprep.mubr.f32.mxu0 0.0
        %5708 = vmatmul.mubr.f32.gmra.mrb[0].mxu0 %v3411
        %v5709 = vpop.f32.mrb[0].mxu0
        %v5710 = vadd.f32 0.0, %v5709
        %v5711 = vpop.f32.mrb[0].mxu0
        %5712 = vmatprep.mubr.f32.mxu0 0.0
        %5713 = vmatmul.mubr.f32.gmra.mrb[0].mxu0 %v3412
        %v5714 = vpop.f32.mrb[0].mxu0
        %v5715 = vadd.f32 0.0, %v5714
        %v5716 = vpop.f32.mrb[0].mxu0
        %5717 = vmatprep.mubr.f32.mxu0 0.0
        %5718 = vmatmul.mubr.f32.gmra.mrb[0].mxu0 %v3413
        %v5719 = vpop.f32.mrb[0].mxu0
        %v5720 = vadd.f32 0.0, %v5719
        %v5721 = vpop.f32.mrb[0].mxu0
        %5722 = vmatprep.mubr.f32.mxu0 0.0
        %5723 = vmatmul.mubr.f32.gmra.mrb[0].mxu0 %v3414
        %v5724 = vpop.f32.mrb[0].mxu0
        %v5725 = vadd.f32 0.0, %v5724
        %v5726 = vpop.f32.mrb[0].mxu0
        %5727 = vmatprep.mubr.f32.mxu0 0.0
        %5728 = vmatmul.mubr.f32.gmra.mrb[0].mxu0 %v3415
        %v5729 = vpop.f32.mrb[0].mxu0
        %v5730 = vadd.f32 0.0, %v5729
        %v5731 = vpop.f32.mrb[0].mxu0
        %5732 = vmatprep.mubr.f32.mxu0 0.0
        %5733 = vmatmul.mubr.f32.gmra.mrb[0].mxu0 %v3416
        %v5734 = vpop.f32.mrb[0].mxu0
        %v5735 = vadd.f32 0.0, %v5734
        %v5736 = vpop.f32.mrb[0].mxu0
        %5737 = vmatprep.mubr.f32.mxu0 0.0
        %5738 = vmatmul.mubr.f32.gmra.mrb[0].mxu0 %v3417
        %v5739 = vpop.f32.mrb[0].mxu0
        %v5740 = vadd.f32 0.0, %v5739
        %v5741 = vpop.f32.mrb[0].mxu0
        %5742 = vmatprep.mubr.f32.mxu0 0.0
        %5743 = vmatmul.mubr.f32.gmra.mrb[0].mxu0 %v3418
        %v5744 = vpop.f32.mrb[0].mxu0
        %v5745 = vadd.f32 0.0, %v5744
        %v5746 = vpop.f32.mrb[0].mxu0
        %5747 = vmatprep.mubr.f32.mxu0 0.0
        %5748 = vmatmul.mubr.f32.gmra.mrb[0].mxu0 %v3419
        %v5749 = vpop.f32.mrb[0].mxu0
        %v5750 = vadd.f32 0.0, %v5749
        %v5751 = vpop.f32.mrb[0].mxu0
        %5752 = vmatprep.mubr.f32.mxu0 0.0
        %5753 = vmatmul.mubr.f32.gmra.mrb[0].mxu0 %v3420
        %v5754 = vpop.f32.mrb[0].mxu0
        %v5755 = vadd.f32 0.0, %v5754
        %v5756 = vpop.f32.mrb[0].mxu0
        %5757 = vmatprep.mubr.f32.mxu0 0.0
        %5758 = vmatmul.mubr.f32.gmra.mrb[0].mxu0 %v3421
        %v5759 = vpop.f32.mrb[0].mxu0
        %v5760 = vadd.f32 0.0, %v5759
        %v5761 = vpop.f32.mrb[0].mxu0
        %5762 = vmatprep.mubr.f32.mxu0 0.0
        %5763 = vmatmul.mubr.f32.gmra.mrb[0].mxu0 %v3422
        %v5764 = vpop.f32.mrb[0].mxu0
        %v5765 = vadd.f32 0.0, %v5764
        %v5766 = vpop.f32.mrb[0].mxu0
        %5767 = vmatprep.mubr.f32.mxu0 0.0
        %5768 = vmatmul.mubr.f32.gmra.mrb[0].mxu0 %v3423
        %v5769 = vpop.f32.mrb[0].mxu0
        %v5770 = vadd.f32 0.0, %v5769
        %v5771 = vpop.f32.mrb[0].mxu0
        %5772 = vmatprep.mubr.f32.mxu0 0.0
        %5773 = vmatmul.mubr.f32.gmra.mrb[0].mxu0 %v3424
        %v5774 = vpop.f32.mrb[0].mxu0
        %v5775 = vadd.f32 0.0, %v5774
        %v5776 = vpop.f32.mrb[0].mxu0
        %5777 = vmatprep.mubr.f32.mxu0 0.0
        %5778 = vmatmul.mubr.f32.gmra.mrb[0].mxu0 %v3425
        %v5779 = vpop.f32.mrb[0].mxu0
        %v5780 = vadd.f32 0.0, %v5779
        %v5781 = vpop.f32.mrb[0].mxu0
        %5782 = vmatprep.mubr.f32.mxu0 0.0
        %5783 = vmatmul.mubr.f32.gmra.mrb[0].mxu0 %v3426
        %v5784 = vpop.f32.mrb[0].mxu0
        %v5785 = vadd.f32 0.0, %v5784
        %v5786 = vpop.f32.mrb[0].mxu0
        %5787 = vmatprep.mubr.f32.mxu0 0.0
        %5788 = vmatmul.mubr.f32.gmra.mrb[0].mxu0 %v3427
        %v5789 = vpop.f32.mrb[0].mxu0
        %v5790 = vadd.f32 0.0, %v5789
        %v5791 = vpop.f32.mrb[0].mxu0
        %5792 = vmatprep.mubr.f32.mxu0 0.0
        %5793 = vmatmul.mubr.f32.gmra.mrb[0].mxu0 %v3428
        %v5794 = vpop.f32.mrb[0].mxu0
        %v5795 = vadd.f32 0.0, %v5794
        %v5796 = vpop.f32.mrb[0].mxu0
        %5797 = vdwg.mxu0
        %v5798 = vadd.f32 %v5524, %v5640
        %v5799 = vadd.f32 %v5525, %v5645
        %v5800 = vadd.f32 %v5526, %v5650
        %v5801 = vadd.f32 %v5527, %v5655
        %v5802 = vadd.f32 %v5528, %v5660
        %v5803 = vadd.f32 %v5529, %v5665
        %v5804 = vadd.f32 %v5530, %v5670
        %v5805 = vadd.f32 %v5531, %v5675
        %v5806 = vadd.f32 %v5532, %v5680
        %v5807 = vadd.f32 %v5533, %v5685
        %v5808 = vadd.f32 %v5534, %v5690
        %v5809 = vadd.f32 %v5535, %v5695
        %v5810 = vadd.f32 %v5536, %v5700
        %v5811 = vadd.f32 %v5537, %v5705
        %v5812 = vadd.f32 %v5538, %v5710
        %v5813 = vadd.f32 %v5539, %v5715
        %v5814 = vadd.f32 %v5540, %v5720
        %v5815 = vadd.f32 %v5541, %v5725
        %v5816 = vadd.f32 %v5542, %v5730
        %v5817 = vadd.f32 %v5543, %v5735
        %v5818 = vadd.f32 %v5544, %v5740
        %v5819 = vadd.f32 %v5545, %v5745
        %v5820 = vadd.f32 %v5546, %v5750
        %v5821 = vadd.f32 %v5547, %v5755
        %v5822 = vadd.f32 %v5548, %v5760
        %v5823 = vadd.f32 %v5549, %v5765
        %v5824 = vadd.f32 %v5550, %v5770
        %v5825 = vadd.f32 %v5551, %v5775
        %v5826 = vadd.f32 %v5552, %v5780
        %v5827 = vadd.f32 %v5553, %v5785
        %v5828 = vadd.f32 %v5554, %v5790
        %v5829 = vadd.f32 %v5555, %v5795
        %v5830 = vld [vmem:[%s4] sm:$0x1]
        %v5832 = vlaneseq
        %v5833 = vshrl.u32 %v5832, 7
        %v5834 = vsub.s32 0, %v5833
        %v5835 = vrot.slane %v5830, %v5834
        %v5837 = vadd.f32 %v5798, %v5835
        %v5838 = vadd.f32 %v5799, %v5835
        %v5839 = vadd.f32 %v5800, %v5835
        %v5840 = vadd.f32 %v5801, %v5835
        %v5841 = vadd.f32 %v5802, %v5835
        %v5842 = vadd.f32 %v5803, %v5835
        %v5843 = vadd.f32 %v5804, %v5835
        %v5844 = vadd.f32 %v5805, %v5835
        %v5845 = vadd.f32 %v5806, %v5835
        %v5846 = vadd.f32 %v5807, %v5835
        %v5847 = vadd.f32 %v5808, %v5835
        %v5848 = vadd.f32 %v5809, %v5835
        %v5849 = vadd.f32 %v5810, %v5835
        %v5850 = vadd.f32 %v5811, %v5835
        %v5851 = vadd.f32 %v5812, %v5835
        %v5852 = vadd.f32 %v5813, %v5835
        %v5853 = vadd.f32 %v5814, %v5835
        %v5854 = vadd.f32 %v5815, %v5835
        %v5855 = vadd.f32 %v5816, %v5835
        %v5856 = vadd.f32 %v5817, %v5835
        %v5857 = vadd.f32 %v5818, %v5835
        %v5858 = vadd.f32 %v5819, %v5835
        %v5859 = vadd.f32 %v5820, %v5835
        %v5860 = vadd.f32 %v5821, %v5835
        %v5861 = vadd.f32 %v5822, %v5835
        %v5862 = vadd.f32 %v5823, %v5835
        %v5863 = vadd.f32 %v5824, %v5835
        %v5864 = vadd.f32 %v5825, %v5835
        %v5865 = vadd.f32 %v5826, %v5835
        %v5866 = vadd.f32 %v5827, %v5835
        %v5867 = vadd.f32 %v5828, %v5835
        %v5868 = vadd.f32 %v5829, %v5835
        %vm5869 = vcmp.ge.f32.partialorder %v5837, 0.0
        %vm5870 = vcmp.ge.f32.partialorder %v5838, 0.0
        %vm5871 = vcmp.ge.f32.partialorder %v5839, 0.0
        %vm5872 = vcmp.ge.f32.partialorder %v5840, 0.0
        %vm5873 = vcmp.ge.f32.partialorder %v5841, 0.0
        %vm5874 = vcmp.ge.f32.partialorder %v5842, 0.0
        %vm5875 = vcmp.ge.f32.partialorder %v5843, 0.0
        %vm5876 = vcmp.ge.f32.partialorder %v5844, 0.0
        %vm5877 = vcmp.ge.f32.partialorder %v5845, 0.0
        %vm5878 = vcmp.ge.f32.partialorder %v5846, 0.0
        %vm5879 = vcmp.ge.f32.partialorder %v5847, 0.0
        %vm5880 = vcmp.ge.f32.partialorder %v5848, 0.0
        %vm5881 = vcmp.ge.f32.partialorder %v5849, 0.0
        %vm5882 = vcmp.ge.f32.partialorder %v5850, 0.0
        %vm5883 = vcmp.ge.f32.partialorder %v5851, 0.0
        %vm5884 = vcmp.ge.f32.partialorder %v5852, 0.0
        %vm5885 = vcmp.ge.f32.partialorder %v5853, 0.0
        %vm5886 = vcmp.ge.f32.partialorder %v5854, 0.0
        %vm5887 = vcmp.ge.f32.partialorder %v5855, 0.0
        %vm5888 = vcmp.ge.f32.partialorder %v5856, 0.0
        %vm5889 = vcmp.ge.f32.partialorder %v5857, 0.0
        %vm5890 = vcmp.ge.f32.partialorder %v5858, 0.0
        %vm5891 = vcmp.ge.f32.partialorder %v5859, 0.0
        %vm5892 = vcmp.ge.f32.partialorder %v5860, 0.0
        %vm5893 = vcmp.ge.f32.partialorder %v5861, 0.0
        %vm5894 = vcmp.ge.f32.partialorder %v5862, 0.0
        %vm5895 = vcmp.ge.f32.partialorder %v5863, 0.0
        %vm5896 = vcmp.ge.f32.partialorder %v5864, 0.0
        %vm5897 = vcmp.ge.f32.partialorder %v5865, 0.0
        %vm5898 = vcmp.ge.f32.partialorder %v5866, 0.0
        %vm5899 = vcmp.ge.f32.partialorder %v5867, 0.0
        %vm5900 = vcmp.ge.f32.partialorder %v5868, 0.0
        %v5901 = vmul.f32 %v5837, 0.01
        %v5902 = vmul.f32 %v5838, 0.01
        %v5903 = vmul.f32 %v5839, 0.01
        %v5904 = vmul.f32 %v5840, 0.01
        %v5905 = vmul.f32 %v5841, 0.01
        %v5906 = vmul.f32 %v5842, 0.01
        %v5907 = vmul.f32 %v5843, 0.01
        %v5908 = vmul.f32 %v5844, 0.01
        %v5909 = vmul.f32 %v5845, 0.01
        %v5910 = vmul.f32 %v5846, 0.01
        %v5911 = vmul.f32 %v5847, 0.01
        %v5912 = vmul.f32 %v5848, 0.01
        %v5913 = vmul.f32 %v5849, 0.01
        %v5914 = vmul.f32 %v5850, 0.01
        %v5915 = vmul.f32 %v5851, 0.01
        %v5916 = vmul.f32 %v5852, 0.01
        %v5917 = vmul.f32 %v5853, 0.01
        %v5918 = vmul.f32 %v5854, 0.01
        %v5919 = vmul.f32 %v5855, 0.01
        %v5920 = vmul.f32 %v5856, 0.01
        %v5921 = vmul.f32 %v5857, 0.01
        %v5922 = vmul.f32 %v5858, 0.01
        %v5923 = vmul.f32 %v5859, 0.01
        %v5924 = vmul.f32 %v5860, 0.01
        %v5925 = vmul.f32 %v5861, 0.01
        %v5926 = vmul.f32 %v5862, 0.01
        %v5927 = vmul.f32 %v5863, 0.01
        %v5928 = vmul.f32 %v5864, 0.01
        %v5929 = vmul.f32 %v5865, 0.01
        %v5930 = vmul.f32 %v5866, 0.01
        %v5931 = vmul.f32 %v5867, 0.01
        %v5932 = vmul.f32 %v5868, 0.01
        %v5933 = vsel %vm5869, %v5837, %v5901
        %v5934 = vsel %vm5870, %v5838, %v5902
        %v5935 = vsel %vm5871, %v5839, %v5903
        %v5936 = vsel %vm5872, %v5840, %v5904
        %v5937 = vsel %vm5873, %v5841, %v5905
        %v5938 = vsel %vm5874, %v5842, %v5906
        %v5939 = vsel %vm5875, %v5843, %v5907
        %v5940 = vsel %vm5876, %v5844, %v5908
        %v5941 = vsel %vm5877, %v5845, %v5909
        %v5942 = vsel %vm5878, %v5846, %v5910
        %v5943 = vsel %vm5879, %v5847, %v5911
        %v5944 = vsel %vm5880, %v5848, %v5912
        %v5945 = vsel %vm5881, %v5849, %v5913
        %v5946 = vsel %vm5882, %v5850, %v5914
        %v5947 = vsel %vm5883, %v5851, %v5915
        %v5948 = vsel %vm5884, %v5852, %v5916
        %v5949 = vsel %vm5885, %v5853, %v5917
        %v5950 = vsel %vm5886, %v5854, %v5918
        %v5951 = vsel %vm5887, %v5855, %v5919
        %v5952 = vsel %vm5888, %v5856, %v5920
        %v5953 = vsel %vm5889, %v5857, %v5921
        %v5954 = vsel %vm5890, %v5858, %v5922
        %v5955 = vsel %vm5891, %v5859, %v5923
        %v5956 = vsel %vm5892, %v5860, %v5924
        %v5957 = vsel %vm5893, %v5861, %v5925
        %v5958 = vsel %vm5894, %v5862, %v5926
        %v5959 = vsel %vm5895, %v5863, %v5927
        %v5960 = vsel %vm5896, %v5864, %v5928
        %v5961 = vsel %vm5897, %v5865, %v5929
        %v5962 = vsel %vm5898, %v5866, %v5930
        %v5963 = vsel %vm5899, %v5867, %v5931
        %v5964 = vsel %vm5900, %v5868, %v5932
        %5965 = vst [vmem:[%s271] sm:$0xff] %v5933
        %5966 = vst [vmem:[%s271 + $0x8] sm:$0xff] %v5934
        %5967 = vst [vmem:[%s271 + $0x10] sm:$0xff] %v5935
        %5968 = vst [vmem:[%s271 + $0x18] sm:$0xff] %v5936
        %5969 = vst [vmem:[%s271 + $0x20] sm:$0xff] %v5937
        %5970 = vst [vmem:[%s271 + $0x28] sm:$0xff] %v5938
        %5971 = vst [vmem:[%s271 + $0x30] sm:$0xff] %v5939
        %5972 = vst [vmem:[%s271 + $0x38] sm:$0xff] %v5940
        %5973 = vst [vmem:[%s271 + $0x40] sm:$0xff] %v5941
        %5974 = vst [vmem:[%s271 + $0x48] sm:$0xff] %v5942
        %5975 = vst [vmem:[%s271 + $0x50] sm:$0xff] %v5943
        %5976 = vst [vmem:[%s271 + $0x58] sm:$0xff] %v5944
        %5977 = vst [vmem:[%s271 + $0x60] sm:$0xff] %v5945
        %5978 = vst [vmem:[%s271 + $0x68] sm:$0xff] %v5946
        %5979 = vst [vmem:[%s271 + $0x70] sm:$0xff] %v5947
        %5980 = vst [vmem:[%s271 + $0x78] sm:$0xff] %v5948
        %5981 = vst [vmem:[%s271 + $0x80] sm:$0xff] %v5949
        %5982 = vst [vmem:[%s271 + $0x88] sm:$0xff] %v5950
        %5983 = vst [vmem:[%s271 + $0x90] sm:$0xff] %v5951
        %5984 = vst [vmem:[%s271 + $0x98] sm:$0xff] %v5952
        %5985 = vst [vmem:[%s271 + $0xa0] sm:$0xff] %v5953
        %5986 = vst [vmem:[%s271 + $0xa8] sm:$0xff] %v5954
        %5987 = vst [vmem:[%s271 + $0xb0] sm:$0xff] %v5955
        %5988 = vst [vmem:[%s271 + $0xb8] sm:$0xff] %v5956
        %5989 = vst [vmem:[%s271 + $0xc0] sm:$0xff] %v5957
        %5990 = vst [vmem:[%s271 + $0xc8] sm:$0xff] %v5958
        %5991 = vst [vmem:[%s271 + $0xd0] sm:$0xff] %v5959
        %5992 = vst [vmem:[%s271 + $0xd8] sm:$0xff] %v5960
        %5993 = vst [vmem:[%s271 + $0xe0] sm:$0xff] %v5961
        %5994 = vst [vmem:[%s271 + $0xe8] sm:$0xff] %v5962
        %5995 = vst [vmem:[%s271 + $0xf0] sm:$0xff] %v5963
        %5996 = vst [vmem:[%s271 + $0xf8] sm:$0xff] %v5964
        %s5997 = sand.u32 %s141, 1
        %s5998 = scalar_lea.sflag [#allocation5], %s5997
        %s5999 = sand.u32 %s141, 1
        %s6000 = smul.addr %s5999, 256
        %s6001 = scalar_lea.vmem [#allocation9], %s6000
        // Predicated region
        $region53: #{tpu_custom_call.1} parent=39 // pred_check
          %p6002 = pneg %p151
        $region54: #{tpu_custom_call.1} parent=39 // pred_check_branch
          %6004 = sbr.rel (%p6002) target = $region56
        $region55: #{tpu_custom_call.1} parent=39 // pred_region
          %s6006 = ssub.s32 4096, 4096
          %6007 = vsyncadd %s5998, %s6006
          %s6008 = smul.addr %s23, 32
          %s6009 = smul.addr %s6008, 128
          %s6010 = scalar_lea.hbm %s5, %s6009
          %s6011 = sshll.u32 %s6001, 4
          %s6012 = int_to_ptr.vmem [resolvable:$true] %s6011
          %6017 = dma.vmem_to_hbm [thread:$0]  %s6012, 4096, %s6010, %s5998, 128, 128, 8
        $region56: #{tpu_custom_call.1} parent=39 // pred_fallthru
          _
      $region40: #{tpu_custom_call.1} parent=5 // pred_fallthru
        _
      %p6018 = scmp.le.s32.totalorder 2, %s18
      // Predicated region
      $region57: #{tpu_custom_call.1} parent=5 // pred_check
        %p6019 = pneg %p6018
      $region58: #{tpu_custom_call.1} parent=5 // pred_check_branch
        %6021 = sbr.rel (%p6019) target = $region60
      $region59: #{tpu_custom_call.1} parent=5 // pred_region
        %s6022 = ssub.s32 %s18, 2
        // Predicated region
        $region61: #{tpu_custom_call.1} parent=59 // pred_check
          %p6023 = pneg %p157
        $region62: #{tpu_custom_call.1} parent=59 // pred_check_branch
          %6025 = sbr.rel (%p6023) target = $region64
        $region63: #{tpu_custom_call.1} parent=59 // pred_region
          %s6026 = sand.u32 %s142, 1
          %s6027 = scalar_lea.sflag [#allocation5], %s6026
          %s6028 = sand.u32 %s142, 1
          %s6029 = smul.addr %s6028, 256
          %s6030 = scalar_lea.vmem [#allocation9], %s6029
          %6031 = dma.done %s6027, 4096
        $region64: #{tpu_custom_call.1} parent=59 // pred_fallthru
          _
      $region60: #{tpu_custom_call.1} parent=5 // pred_fallthru
        _
    $region6: #{tpu_custom_call.1} parent=1 // loop_footer
      %s22 = sadd.s32 1, %s18
    $region7: #{tpu_custom_call.1} parent=1 // loop_footer_branch
      %17 = sbr.rel target = $region3
    $region8: #{tpu_custom_call.1} parent=1 // loop_exit
      _
    %6032 = vsyncpa [#allocation4], 1
    %s6033 = scalar_lea.sflag [#allocation4], 1
    %6034 = vsyncpa %s6033, 1
    %6035 = vsyncpa [#allocation7], 1
    %6036 = vsyncpa [#allocation5], 1
    %s6037 = scalar_lea.sflag [#allocation5], 1
    %6038 = vsyncpa %s6037, 1

</llo_original>
